<compile_context>
chip_gen: v7x
topology: tpu7x:2x2x1
jax: 0.10.0
libtpu: 0.0.40
codegen_flags: <defaults>
</compile_context>

<pallas_src>
import functools

import jax
import jax.numpy as jnp
from jax.experimental import pallas as pl
from jax.experimental.pallas import tpu as pltpu

HIDDEN = 768          # BERT hidden size (fixed by the module: Linear(768, 2048))
INTERMEDIATE = 2048   # classifier hidden size (fixed by the module)
LANE = 128
SUBLANE_BF16 = 16     # bf16 vregs pack (16, 128): round batch tiles to 16 rows
MAX_TB = 512          # max batch-tile rows; footprint still well under 64 MiB VMEM


def _cdiv(a, b):
    return -(-a // b)


def _round_up(x, m):
    return _cdiv(x, m) * m


def _gelu_tanh(x):
    # tanh-approximate GELU: the transcendental lowers to the EUP slot
    # (separate bundle slot) instead of a long erf polynomial on the VALU.
    # ~1e-3 relative deviation from nn.GELU()'s exact-erf default.
    c = jnp.float32(0.7978845608028654)  # sqrt(2/pi)
    return 0.5 * x * (1.0 + jnp.tanh(c * (x + jnp.float32(0.044715) * x * x * x)))


def _bert_classifier_kernel(cls_ref, wp_ref, bp_ref, w1_ref, b1_ref,
                            w2_ref, b2_ref, out_ref):
    """Fused BERT pooler + classifier head for one batch tile.

    cls_ref : (TB, 768) bf16                       CLS-token hidden states
    wp/bp   : (768, 768) bf16, (1, 768) f32        BERT pooler dense
    w1/b1   : (768, 2048) bf16, (1, 2048) f32      classifier Linear 1
    w2/b2   : (2048, Lp) bf16, (1, Lp) f32         classifier Linear 2 (padded)
    out_ref : (TB, Lp) f32
    """
    cls = cls_ref[...]                                   # already bf16

    # BERT pooler: pooled = tanh(h_CLS @ Wp + bp)  (bf16 operands, f32 accum,
    # tanh on the EUP).  Cast to bf16 only for the next MXU push.
    pooled = jnp.tanh(
        jnp.dot(cls, wp_ref[...], preferred_element_type=jnp.float32)
        + bp_ref[...]
    ).astype(jnp.bfloat16)

    # Dropout(0.1) -> identity at inference (see TODO above).

    # Linear(768, 2048) + GELU (tanh form -> EUP).  Elementwise math stays f32
    # (v5e has no bf16 VPU/EUP); result cast to bf16 for the last matmul so the
    # (TB, 2048) activation carries half the live/spill bytes.
    h = _gelu_tanh(
        jnp.dot(pooled, w1_ref[...], preferred_element_type=jnp.float32)
        + b1_ref[...]
    ).astype(jnp.bfloat16)

    # Linear(2048, n_labels)
    out_ref[...] = (
        jnp.dot(h, w2_ref[...], preferred_element_type=jnp.float32)
        + b2_ref[...]
    ).astype(out_ref.dtype)


def _batch_tiling(B):
    """Pick (TB, B_pad, n_steps).  Single grid step unless the batch exceeds
    MAX_TB rows — splitting small batches only duplicates the ~5 MB weight DMA
    on v7x's 2 TCs and adds serial-loop overhead on v5e/v6e."""
    b_pad = _round_up(max(B, SUBLANE_BF16), SUBLANE_BF16)
    n_steps = _cdiv(b_pad, MAX_TB)
    tb = _round_up(_cdiv(b_pad, n_steps), SUBLANE_BF16)
    return tb, tb * n_steps, n_steps


def _vmem_limit_bytes(tb, l_pad):
    """Accurate footprint: constant weights are single-buffered
    (pipeline_mode=Buffered(1)); only the streaming cls/out tiles double-buffer."""
    bf16, f32 = 2, 4
    weights = (HIDDEN * HIDDEN + HIDDEN * INTERMEDIATE + INTERMEDIATE * l_pad) * bf16
    biases = (HIDDEN + INTERMEDIATE + l_pad) * f32
    cls_io = 2 * tb * HIDDEN * bf16                       # double-buffered input tile
    out_io = 2 * tb * l_pad * f32                         # double-buffered output tile
    live = tb * (HIDDEN + 2 * INTERMEDIATE) * f32         # f32 intermediates in body
    footprint = weights + biases + cls_io + out_io + live
    return int(min(max(footprint + (4 << 20), 16 << 20), 56 << 20))


def prepare_inference_params(params, n_labels):
    """One-time (outside jit) weight preparation: bf16 casts and label-axis
    padding, so the hot forward path does zero per-call weight reformatting."""
    l_pad = _round_up(max(n_labels, LANE), LANE)
    return {
        "emb": params["emb"].astype(jnp.bfloat16),                       # synthetic bert stand-in
        "wp": params["wp"].astype(jnp.bfloat16),
        "bp": params["bp"],                                              # (1, 768) f32
        "w1": params["w1"].astype(jnp.bfloat16),
        "b1": params["b1"],                                              # (1, 2048) f32
        "w2": jnp.pad(params["w2"],
                      ((0, 0), (0, l_pad - n_labels))).astype(jnp.bfloat16),
        "b2": jnp.pad(params["b2"], ((0, 0), (0, l_pad - n_labels))),    # (1, l_pad) f32
    }


@functools.partial(jax.jit, static_argnames=("n_labels",))
def bert_classifier_forward(seqs, features, prep, *, n_labels):
    """JAX wrapper. `features` is accepted but unused, exactly as in the
    PyTorch forward()."""
    del features  # unused in the reference forward pass

    B = seqs.shape[0]
    TB, B_pad, n_steps = _batch_tiling(B)
    L_pad = prep["w2"].shape[1]

    # ---- glue (plain JAX): synthetic "bert" embedding of the CLS token ----
    cls_hidden = jnp.take(prep["emb"], seqs[:, 0], axis=0)          # (B, 768) bf16
    cls_hidden = jnp.pad(cls_hidden, ((0, B_pad - B), (0, 0)))

    def const_spec(shape):
        # Constant across the batch grid: fetched once, single-buffered.
        return pl.BlockSpec(shape, lambda i: (0, 0),
                            pipeline_mode=pl.Buffered(1))

    logits_pad = pl.pallas_call(
        _bert_classifier_kernel,
        out_shape=jax.ShapeDtypeStruct((B_pad, L_pad), jnp.float32),
        grid_spec=pltpu.PrefetchScalarGridSpec(
            num_scalar_prefetch=0,
            grid=(n_steps,),
            in_specs=[
                pl.BlockSpec((TB, HIDDEN), lambda i: (i, 0)),   # cls tile (streams)
                const_spec((HIDDEN, HIDDEN)),                   # Wp
                const_spec((1, HIDDEN)),                        # bp
                const_spec((HIDDEN, INTERMEDIATE)),             # W1
                const_spec((1, INTERMEDIATE)),                  # b1
                const_spec((INTERMEDIATE, L_pad)),              # W2
                const_spec((1, L_pad)),                         # b2
            ],
            out_specs=pl.BlockSpec((TB, L_pad), lambda i: (i, 0)),
        ),
        compiler_params=pltpu.CompilerParams(
            # Only shard across TensorCores when there is real per-core work;
            # otherwise a split just duplicates weight DMA (v7x) / adds serial
            # step overhead (v5e/v6e).
            dimension_semantics=("parallel",) if n_steps > 1 else ("arbitrary",),
            vmem_limit_bytes=_vmem_limit_bytes(TB, L_pad),
        ),
    )(
        cls_hidden,
        prep["wp"], prep["bp"],
        prep["w1"], prep["b1"],
        prep["w2"], prep["b2"],
    )

    return logits_pad[:B, :n_labels]


def _reference_forward(seqs, params, n_labels):
    """Pure-JAX f32 golden (same synthetic 'bert' stand-in) for validation."""
    cls = jnp.take(params["emb"], seqs[:, 0], axis=0)
    pooled = jnp.tanh(cls @ params["wp"] + params["bp"])
    h = _gelu_tanh(pooled @ params["w1"] + params["b1"])
    return h @ params["w2"] + params["b2"]


def init_params(key, vocab_size, n_labels):
    """Deterministic synthetic parameters with the shapes implied by __init__."""
    ks = jax.random.split(key, 7)
    s = lambda fan_in: 1.0 / jnp.sqrt(jnp.float32(fan_in))
    return {
        # synthetic stand-in for the frozen BERT embedding / encoder output
        "emb": jax.random.normal(ks[0], (vocab_size, HIDDEN), jnp.float32) * 0.02,
        # BERT pooler dense (768 -> 768), tanh applied in kernel
        "wp": jax.random.normal(ks[1], (HIDDEN, HIDDEN), jnp.float32) * s(HIDDEN),
        "bp": jax.random.normal(ks[2], (1, HIDDEN), jnp.float32) * 0.01,
        # nn.Linear(768, 2048)
        "w1": jax.random.normal(ks[3], (HIDDEN, INTERMEDIATE), jnp.float32) * s(HIDDEN),
        "b1": jax.random.normal(ks[4], (1, INTERMEDIATE), jnp.float32) * 0.01,
        # nn.Linear(2048, n_labels)
        "w2": jax.random.normal(ks[5], (INTERMEDIATE, n_labels), jnp.float32) * s(INTERMEDIATE),
        "b2": jax.random.normal(ks[6], (1, n_labels), jnp.float32) * 0.01,
    }


if __name__ == "__main__":
    key = jax.random.PRNGKey(0)
    k_param, k_seq, k_feat, k_seq2 = jax.random.split(key, 4)

    batch, seq_len, vocab, n_labels = 2, 8, 128, 4

    params = init_params(k_param, vocab, n_labels)
    prep = prepare_inference_params(params, n_labels)    # one-time cast/pad (hoisted)

    seqs = jax.random.randint(k_seq, (batch, seq_len), 0, vocab, dtype=jnp.int32)
    features = jax.random.normal(k_feat, (batch, 5), jnp.float32)  # unused, as in torch forward

    logits = bert_classifier_forward(seqs, features, prep, n_labels=n_labels)
    logits = jax.block_until_ready(logits)
    assert logits.shape == (batch, n_labels)
    assert logits.dtype == jnp.float32
    ref = _reference_forward(seqs, params, n_labels)
    assert float(jnp.max(jnp.abs(logits - ref))) < 5e-2  # bf16-operand tolerance

    # Second shape exercises a bigger (single-step) tile: TB = 64, grid = (1,).
    batch2 = 64
    seqs2 = jax.random.randint(k_seq2, (batch2, seq_len), 0, vocab, dtype=jnp.int32)
    feats2 = jnp.zeros((batch2, 5), jnp.float32)
    logits2 = jax.block_until_ready(
        bert_classifier_forward(seqs2, feats2, prep, n_labels=n_labels))
    assert logits2.shape == (batch2, n_labels)
    ref2 = _reference_forward(seqs2, params, n_labels)
    assert float(jnp.max(jnp.abs(logits2 - ref2))) < 5e-2

    print("KERNEL_OK")
</pallas_src>

<mosaic_0001>
module attributes {stable_mosaic.version = 11 : i64} {
  func.func @_bert_classifier_kernel(%arg0: i32, %arg1: memref<16x768xbf16, #tpu.memory_space<vmem>>, %arg2: memref<768x768xbf16, #tpu.memory_space<vmem>>, %arg3: memref<1x768xf32, #tpu.memory_space<vmem>>, %arg4: memref<768x2048xbf16, #tpu.memory_space<vmem>>, %arg5: memref<1x2048xf32, #tpu.memory_space<vmem>>, %arg6: memref<2048x128xbf16, #tpu.memory_space<vmem>>, %arg7: memref<1x128xf32, #tpu.memory_space<vmem>>, %arg8: memref<16x128xf32, #tpu.memory_space<vmem>>) attributes {dimension_semantics = [#tpu.dimension_semantics<arbitrary>], iteration_bounds = array<i64: 1>, scalar_prefetch = 0 : i64, scratch_operands = 0 : i64, tpu.core_type = #tpu.core_type<tc>, window_params = [{transform_indices = @transform_0, window_bounds = array<i64: 16, 768>}, {pipeline_mode = #tpu.pipeline_mode<synchronous>, transform_indices = @transform_1, window_bounds = array<i64: 768, 768>}, {pipeline_mode = #tpu.pipeline_mode<synchronous>, transform_indices = @transform_2, window_bounds = array<i64: 1, 768>}, {pipeline_mode = #tpu.pipeline_mode<synchronous>, transform_indices = @transform_3, window_bounds = array<i64: 768, 2048>}, {pipeline_mode = #tpu.pipeline_mode<synchronous>, transform_indices = @transform_4, window_bounds = array<i64: 1, 2048>}, {pipeline_mode = #tpu.pipeline_mode<synchronous>, transform_indices = @transform_5, window_bounds = array<i64: 2048, 128>}, {pipeline_mode = #tpu.pipeline_mode<synchronous>, transform_indices = @transform_6, window_bounds = array<i64: 1, 128>}, {transform_indices = @transform_7, window_bounds = array<i64: 16, 128>}]} {
    %c0 = arith.constant 0 : index
    %c0_0 = arith.constant 0 : index
    %0 = vector.load %arg1[%c0, %c0_0] : memref<16x768xbf16, #tpu.memory_space<vmem>>, vector<16x768xbf16>
    %c0_1 = arith.constant 0 : index
    %c0_2 = arith.constant 0 : index
    %1 = vector.load %arg2[%c0_1, %c0_2] : memref<768x768xbf16, #tpu.memory_space<vmem>>, vector<768x768xbf16>
    %cst = arith.constant dense<0.000000e+00> : vector<16x768xf32>
    %2 = tpu.matmul %0, %1, %cst {dimension_numbers = #tpu.dot_dimension_numbers<[1], [0], [0], [1], [0, 0, 1, 1], [], []>} : vector<16x768xbf16>, vector<768x768xbf16>, vector<16x768xf32> -> vector<16x768xf32>
    %c0_3 = arith.constant 0 : index
    %c0_4 = arith.constant 0 : index
    %3 = vector.load %arg3[%c0_3, %c0_4] : memref<1x768xf32, #tpu.memory_space<vmem>>, vector<1x768xf32>
    %4 = vector.broadcast %3 : vector<1x768xf32> to vector<16x768xf32>
    %5 = arith.addf %2, %4 : vector<16x768xf32>
    %6 = math.tanh %5 : vector<16x768xf32>
    %7 = arith.truncf %6 : vector<16x768xf32> to vector<16x768xbf16>
    %c0_5 = arith.constant 0 : index
    %c0_6 = arith.constant 0 : index
    %8 = vector.load %arg4[%c0_5, %c0_6] : memref<768x2048xbf16, #tpu.memory_space<vmem>>, vector<768x2048xbf16>
    %cst_7 = arith.constant dense<0.000000e+00> : vector<16x2048xf32>
    %9 = tpu.matmul %7, %8, %cst_7 {dimension_numbers = #tpu.dot_dimension_numbers<[1], [0], [0], [1], [0, 0, 1, 1], [], []>} : vector<16x768xbf16>, vector<768x2048xbf16>, vector<16x2048xf32> -> vector<16x2048xf32>
    %c0_8 = arith.constant 0 : index
    %c0_9 = arith.constant 0 : index
    %10 = vector.load %arg5[%c0_8, %c0_9] : memref<1x2048xf32, #tpu.memory_space<vmem>>, vector<1x2048xf32>
    %11 = vector.broadcast %10 : vector<1x2048xf32> to vector<16x2048xf32>
    %12 = arith.addf %9, %11 : vector<16x2048xf32>
    %cst_10 = arith.constant 5.000000e-01 : f32
    %13 = vector.broadcast %cst_10 : f32 to vector<16x2048xf32>
    %14 = arith.mulf %13, %12 : vector<16x2048xf32>
    %cst_11 = arith.constant 4.471500e-02 : f32
    %15 = vector.broadcast %cst_11 : f32 to vector<16x2048xf32>
    %16 = arith.mulf %15, %12 : vector<16x2048xf32>
    %17 = arith.mulf %16, %12 : vector<16x2048xf32>
    %18 = arith.mulf %17, %12 : vector<16x2048xf32>
    %19 = arith.addf %12, %18 : vector<16x2048xf32>
    %cst_12 = arith.constant 0.797884583 : f32
    %20 = vector.broadcast %cst_12 : f32 to vector<16x2048xf32>
    %21 = arith.mulf %20, %19 : vector<16x2048xf32>
    %22 = math.tanh %21 : vector<16x2048xf32>
    %cst_13 = arith.constant 1.000000e+00 : f32
    %23 = vector.broadcast %cst_13 : f32 to vector<16x2048xf32>
    %24 = arith.addf %23, %22 : vector<16x2048xf32>
    %25 = arith.mulf %14, %24 : vector<16x2048xf32>
    %26 = arith.truncf %25 : vector<16x2048xf32> to vector<16x2048xbf16>
    %c0_14 = arith.constant 0 : index
    %c0_15 = arith.constant 0 : index
    %27 = vector.load %arg6[%c0_14, %c0_15] : memref<2048x128xbf16, #tpu.memory_space<vmem>>, vector<2048x128xbf16>
    %cst_16 = arith.constant dense<0.000000e+00> : vector<16x128xf32>
    %28 = tpu.matmul %26, %27, %cst_16 {dimension_numbers = #tpu.dot_dimension_numbers<[1], [0], [0], [1], [0, 0, 1, 1], [], []>} : vector<16x2048xbf16>, vector<2048x128xbf16>, vector<16x128xf32> -> vector<16x128xf32>
    %c0_17 = arith.constant 0 : index
    %c0_18 = arith.constant 0 : index
    %29 = vector.load %arg7[%c0_17, %c0_18] : memref<1x128xf32, #tpu.memory_space<vmem>>, vector<1x128xf32>
    %30 = vector.broadcast %29 : vector<1x128xf32> to vector<16x128xf32>
    %31 = arith.addf %28, %30 : vector<16x128xf32>
    %c0_19 = arith.constant 0 : index
    %c0_20 = arith.constant 0 : index
    %32 = vector.load %arg8[%c0_19, %c0_20] : memref<16x128xf32, #tpu.memory_space<vmem>>, vector<16x128xf32>
    tpu.vector_store %arg8[%c0_19, %c0_20], %31 {strides = array<i32>} : memref<16x128xf32, #tpu.memory_space<vmem>>, vector<16x128xf32>,
    return
  }
  func.func @transform_0(%arg0: i32) -> (i32, i32) {
    %c0_i32 = arith.constant 0 : i32
    %c0_i32_0 = arith.constant 0 : i32
    return %arg0, %c0_i32 : i32, i32
  }
  func.func @transform_1(%arg0: i32) -> (i32, i32) {
    %c0_i32 = arith.constant 0 : i32
    %c0_i32_0 = arith.constant 0 : i32
    %c0_i32_1 = arith.constant 0 : i32
    return %c0_i32, %c0_i32_0 : i32, i32
  }
  func.func @transform_2(%arg0: i32) -> (i32, i32) {
    %c0_i32 = arith.constant 0 : i32
    %c0_i32_0 = arith.constant 0 : i32
    %c0_i32_1 = arith.constant 0 : i32
    return %c0_i32, %c0_i32_0 : i32, i32
  }
  func.func @transform_3(%arg0: i32) -> (i32, i32) {
    %c0_i32 = arith.constant 0 : i32
    %c0_i32_0 = arith.constant 0 : i32
    %c0_i32_1 = arith.constant 0 : i32
    return %c0_i32, %c0_i32_0 : i32, i32
  }
  func.func @transform_4(%arg0: i32) -> (i32, i32) {
    %c0_i32 = arith.constant 0 : i32
    %c0_i32_0 = arith.constant 0 : i32
    %c0_i32_1 = arith.constant 0 : i32
    return %c0_i32, %c0_i32_0 : i32, i32
  }
  func.func @transform_5(%arg0: i32) -> (i32, i32) {
    %c0_i32 = arith.constant 0 : i32
    %c0_i32_0 = arith.constant 0 : i32
    %c0_i32_1 = arith.constant 0 : i32
    return %c0_i32, %c0_i32_0 : i32, i32
  }
  func.func @transform_6(%arg0: i32) -> (i32, i32) {
    %c0_i32 = arith.constant 0 : i32
    %c0_i32_0 = arith.constant 0 : i32
    %c0_i32_1 = arith.constant 0 : i32
    return %c0_i32, %c0_i32_0 : i32, i32
  }
  func.func @transform_7(%arg0: i32) -> (i32, i32) {
    %c0_i32 = arith.constant 0 : i32
    %c0_i32_0 = arith.constant 0 : i32
    return %arg0, %c0_i32 : i32, i32
  }
}

</mosaic_0001>

<llo_original>
// kernel: bert_classifier_forward.1
$region0: #{bert_classifier_forward.1}
  #allocation0 [shape = 'u32[]', space=smem, size = 0x4, offset = 0x4, fixed_abs, tag = 'smem constant byte address 0x4 - core index']
  #allocation1 [shape = 'u32[144,128]{1,0:T(1,128)}', space=vmem, size = 0x12000, scoped, tag = 'internal scratch']
  %s0 = inlined_call_operand.vmem [shape: bf16[16,768], index: 0, kind: input, shape index: {}]
  %s1 = inlined_call_operand.hbm [shape: bf16[768,768], index: 1, kind: input, shape index: {}]
  %s2 = inlined_call_operand.hbm [shape: f32[1,768], index: 2, kind: input, shape index: {}]
  %s3 = inlined_call_operand.hbm [shape: bf16[768,2048], index: 3, kind: input, shape index: {}]
  %s4 = inlined_call_operand.hbm [shape: f32[1,2048], index: 4, kind: input, shape index: {}]
  %s5 = inlined_call_operand.hbm [shape: bf16[2048,128], index: 5, kind: input, shape index: {}]
  %s6 = inlined_call_operand.hbm [shape: f32[1,128], index: 6, kind: input, shape index: {}]
  %s7 = inlined_call_operand.vmem [shape: f32[16,128], index: 7, kind: output, shape index: {}]
  %s8 = sld [smem:[#allocation0]]
  $region62: #{bert_classifier_forward.1} parent=0
    _
  %s10 = ssub.s32 1, %s8
  %s11 = scalar_select 0, %s10, %s8
  $region1: #{bert_classifier_forward.1} parent=0
    #allocation2 [shape = 'u8[1179648]{0}', space=vmem, size = 0x120000, scoped, tag = 'input window, operand 1, single buffered']
    #allocation3 [shape = 's32[1]{0}', space=sflag, size = 0x4, scoped, tag = 'scoped memory for bert_classifier_forward.1']
    #allocation4 [shape = 'u8[3072]{0}', space=vmem, size = 0xc00, scoped, tag = 'input window, operand 2, single buffered']
    #allocation5 [shape = 's32[1]{0}', space=sflag, size = 0x4, scoped, tag = 'scoped memory for bert_classifier_forward.1']
    #allocation6 [shape = 'u8[3145728]{0}', space=vmem, size = 0x300000, scoped, tag = 'input window, operand 3, single buffered']
    #allocation7 [shape = 'u8[8192]{0}', space=vmem, size = 0x2000, scoped, tag = 'input window, operand 4, single buffered']
    #allocation8 [shape = 's32[1]{0}', space=sflag, size = 0x4, scoped, tag = 'scoped memory for bert_classifier_forward.1']
    #allocation9 [shape = 'u8[524288]{0}', space=vmem, size = 0x80000, scoped, tag = 'input window, operand 5, single buffered']
    #allocation10 [shape = 'u8[512]{0}', space=vmem, size = 0x400, scoped, tag = 'input window, operand 6, single buffered']
    #allocation11 [shape = 's32[1]{0}', space=sflag, size = 0x4, scoped, tag = 'scoped memory for bert_classifier_forward.1']
    %12 = vsyncpa [#allocation3], 0
    %13 = vsyncpa [#allocation5], 0
    %14 = vsyncpa [#allocation8], 0
    %15 = vsyncpa [#allocation11], 0
    // Predicated region
    $region2: #{bert_classifier_forward.1} parent=1 // pred_check
      _
    $region3: #{bert_classifier_forward.1} parent=1 // pred_check_branch
      %17 = sbr.rel (0) target = $region5
    $region4: #{bert_classifier_forward.1} parent=1 // pred_region
      _
    $region5: #{bert_classifier_forward.1} parent=1 // pred_fallthru
      _
    // Predicated region
    $region6: #{bert_classifier_forward.1} parent=1 // pred_check
      _
    $region7: #{bert_classifier_forward.1} parent=1 // pred_check_branch
      %19 = sbr.rel (0) target = $region9
    $region8: #{bert_classifier_forward.1} parent=1 // pred_region
      %s21 = ssub.s32 36864, 36864
      %22 = vsyncadd [#allocation3], %s21
      %s23 = sshll.u32 [#allocation2], 4
      %s24 = int_to_ptr.vmem [resolvable:$true] %s23
      %29 = dma.hbm_to_vmem [thread:$0]  %s1, 36864, %s24, [#allocation3], 384, 384, 24
    $region9: #{bert_classifier_forward.1} parent=1 // pred_fallthru
      _
    // Predicated region
    $region10: #{bert_classifier_forward.1} parent=1 // pred_check
      _
    $region11: #{bert_classifier_forward.1} parent=1 // pred_check_branch
      %31 = sbr.rel (0) target = $region13
    $region12: #{bert_classifier_forward.1} parent=1 // pred_region
      %s33 = ssub.s32 96, 96
      %34 = vsyncadd [#allocation5], %s33
      %s36 = sshll.u32 [#allocation4], 4
      %s37 = int_to_ptr.vmem [resolvable:$true] %s36
      %39 = dma.hbm_to_vmem [thread:$0]  %s2, 96, %s37, [#allocation5]
    $region13: #{bert_classifier_forward.1} parent=1 // pred_fallthru
      _
    // Predicated region
    $region14: #{bert_classifier_forward.1} parent=1 // pred_check
      _
    $region15: #{bert_classifier_forward.1} parent=1 // pred_check_branch
      %41 = sbr.rel (0) target = $region17
    $region16: #{bert_classifier_forward.1} parent=1 // pred_region
      %s43 = ssub.s32 98304, 98304
      %44 = vsyncadd [#allocation5], %s43
      %s45 = sshll.u32 [#allocation6], 4
      %s46 = int_to_ptr.vmem [resolvable:$true] %s45
      %51 = dma.hbm_to_vmem [thread:$0]  %s3, 98304, %s46, [#allocation5], 1024, 1024, 64
    $region17: #{bert_classifier_forward.1} parent=1 // pred_fallthru
      _
    // Predicated region
    $region18: #{bert_classifier_forward.1} parent=1 // pred_check
      _
    $region19: #{bert_classifier_forward.1} parent=1 // pred_check_branch
      %53 = sbr.rel (0) target = $region21
    $region20: #{bert_classifier_forward.1} parent=1 // pred_region
      %s55 = ssub.s32 256, 256
      %56 = vsyncadd [#allocation8], %s55
      %s58 = sshll.u32 [#allocation7], 4
      %s59 = int_to_ptr.vmem [resolvable:$true] %s58
      %61 = dma.hbm_to_vmem [thread:$0]  %s4, 256, %s59, [#allocation8]
    $region21: #{bert_classifier_forward.1} parent=1 // pred_fallthru
      _
    // Predicated region
    $region22: #{bert_classifier_forward.1} parent=1 // pred_check
      _
    $region23: #{bert_classifier_forward.1} parent=1 // pred_check_branch
      %63 = sbr.rel (0) target = $region25
    $region24: #{bert_classifier_forward.1} parent=1 // pred_region
      %s65 = ssub.s32 16384, 16384
      %66 = vsyncadd [#allocation8], %s65
      %s67 = sshll.u32 [#allocation9], 4
      %s68 = int_to_ptr.vmem [resolvable:$true] %s67
      %73 = dma.hbm_to_vmem [thread:$0]  %s5, 16384, %s68, [#allocation8], 64, 64, 4
    $region25: #{bert_classifier_forward.1} parent=1 // pred_fallthru
      _
    // Predicated region
    $region26: #{bert_classifier_forward.1} parent=1 // pred_check
      _
    $region27: #{bert_classifier_forward.1} parent=1 // pred_check_branch
      %75 = sbr.rel (0) target = $region29
    $region28: #{bert_classifier_forward.1} parent=1 // pred_region
      %s77 = ssub.s32 16, 16
      %78 = vsyncadd [#allocation11], %s77
      %s80 = sshll.u32 [#allocation10], 4
      %s81 = int_to_ptr.vmem [resolvable:$true] %s80
      %83 = dma.hbm_to_vmem [thread:$0]  %s6, 16, %s81, [#allocation11]
    $region29: #{bert_classifier_forward.1} parent=1 // pred_fallthru
      _
    // Predicated region
    $region30: #{bert_classifier_forward.1} parent=1 // pred_check
      _
    $region31: #{bert_classifier_forward.1} parent=1 // pred_check_branch
      %85 = sbr.rel (0) target = $region33
    $region32: #{bert_classifier_forward.1} parent=1 // pred_region
      %86 = dma.done [#allocation3], 36864
    $region33: #{bert_classifier_forward.1} parent=1 // pred_fallthru
      _
    // Predicated region
    $region34: #{bert_classifier_forward.1} parent=1 // pred_check
      _
    $region35: #{bert_classifier_forward.1} parent=1 // pred_check_branch
      %88 = sbr.rel (0) target = $region37
    $region36: #{bert_classifier_forward.1} parent=1 // pred_region
      %89 = dma.done [#allocation5], 96
    $region37: #{bert_classifier_forward.1} parent=1 // pred_fallthru
      _
    // Predicated region
    $region38: #{bert_classifier_forward.1} parent=1 // pred_check
      _
    $region39: #{bert_classifier_forward.1} parent=1 // pred_check_branch
      %91 = sbr.rel (0) target = $region41
    $region40: #{bert_classifier_forward.1} parent=1 // pred_region
      %92 = dma.done [#allocation5], 98304
    $region41: #{bert_classifier_forward.1} parent=1 // pred_fallthru
      _
    // Predicated region
    $region42: #{bert_classifier_forward.1} parent=1 // pred_check
      _
    $region43: #{bert_classifier_forward.1} parent=1 // pred_check_branch
      %94 = sbr.rel (0) target = $region45
    $region44: #{bert_classifier_forward.1} parent=1 // pred_region
      %95 = dma.done [#allocation8], 256
    $region45: #{bert_classifier_forward.1} parent=1 // pred_fallthru
      _
    // Predicated region
    $region46: #{bert_classifier_forward.1} parent=1 // pred_check
      _
    $region47: #{bert_classifier_forward.1} parent=1 // pred_check_branch
      %97 = sbr.rel (0) target = $region49
    $region48: #{bert_classifier_forward.1} parent=1 // pred_region
      %98 = dma.done [#allocation8], 16384
    $region49: #{bert_classifier_forward.1} parent=1 // pred_fallthru
      _
    // Predicated region
    $region50: #{bert_classifier_forward.1} parent=1 // pred_check
      _
    $region51: #{bert_classifier_forward.1} parent=1 // pred_check_branch
      %100 = sbr.rel (0) target = $region53
    $region52: #{bert_classifier_forward.1} parent=1 // pred_region
      %101 = dma.done [#allocation11], 16
    $region53: #{bert_classifier_forward.1} parent=1 // pred_fallthru
      _
    %v103 = vld [vmem:[%s0] sm:$0xff]
    %v104 = vld [vmem:[%s0 + $0x8] sm:$0xff]
    %v105 = vld [vmem:[%s0 + $0x10] sm:$0xff]
    %v106 = vld [vmem:[%s0 + $0x18] sm:$0xff]
    %v107 = vld [vmem:[%s0 + $0x20] sm:$0xff]
    %v108 = vld [vmem:[%s0 + $0x28] sm:$0xff]
    %v109 = vld [vmem:[#allocation2] sm:$0xff]
    %v110 = vld [vmem:[#allocation2 + $0x8] sm:$0xff]
    %v111 = vld [vmem:[#allocation2 + $0x10] sm:$0xff]
    %v112 = vld [vmem:[#allocation2 + $0x18] sm:$0xff]
    %v113 = vld [vmem:[#allocation2 + $0x20] sm:$0xff]
    %v114 = vld [vmem:[#allocation2 + $0x28] sm:$0xff]
    %v115 = vld [vmem:[#allocation2 + $0x30] sm:$0xff]
    %v116 = vld [vmem:[#allocation2 + $0x38] sm:$0xff]
    %v117 = vld [vmem:[#allocation2 + $0x40] sm:$0xff]
    %v118 = vld [vmem:[#allocation2 + $0x48] sm:$0xff]
    %v119 = vld [vmem:[#allocation2 + $0x50] sm:$0xff]
    %v120 = vld [vmem:[#allocation2 + $0x58] sm:$0xff]
    %v121 = vld [vmem:[#allocation2 + $0x60] sm:$0xff]
    %v122 = vld [vmem:[#allocation2 + $0x68] sm:$0xff]
    %v123 = vld [vmem:[#allocation2 + $0x70] sm:$0xff]
    %v124 = vld [vmem:[#allocation2 + $0x78] sm:$0xff]
    %v125 = vld [vmem:[#allocation2 + $0x80] sm:$0xff]
    %v126 = vld [vmem:[#allocation2 + $0x88] sm:$0xff]
    %v127 = vld [vmem:[#allocation2 + $0x90] sm:$0xff]
    %v128 = vld [vmem:[#allocation2 + $0x98] sm:$0xff]
    %v129 = vld [vmem:[#allocation2 + $0xa0] sm:$0xff]
    %v130 = vld [vmem:[#allocation2 + $0xa8] sm:$0xff]
    %v131 = vld [vmem:[#allocation2 + $0xb0] sm:$0xff]
    %v132 = vld [vmem:[#allocation2 + $0xb8] sm:$0xff]
    %v133 = vld [vmem:[#allocation2 + $0xc0] sm:$0xff]
    %v134 = vld [vmem:[#allocation2 + $0xc8] sm:$0xff]
    %v135 = vld [vmem:[#allocation2 + $0xd0] sm:$0xff]
    %v136 = vld [vmem:[#allocation2 + $0xd8] sm:$0xff]
    %v137 = vld [vmem:[#allocation2 + $0xe0] sm:$0xff]
    %v138 = vld [vmem:[#allocation2 + $0xe8] sm:$0xff]
    %v139 = vld [vmem:[#allocation2 + $0xf0] sm:$0xff]
    %v140 = vld [vmem:[#allocation2 + $0xf8] sm:$0xff]
    %v141 = vld [vmem:[#allocation2 + $0x100] sm:$0xff]
    %v142 = vld [vmem:[#allocation2 + $0x108] sm:$0xff]
    %v143 = vld [vmem:[#allocation2 + $0x110] sm:$0xff]
    %v144 = vld [vmem:[#allocation2 + $0x118] sm:$0xff]
    %v145 = vld [vmem:[#allocation2 + $0x120] sm:$0xff]
    %v146 = vld [vmem:[#allocation2 + $0x128] sm:$0xff]
    %v147 = vld [vmem:[#allocation2 + $0x130] sm:$0xff]
    %v148 = vld [vmem:[#allocation2 + $0x138] sm:$0xff]
    %v149 = vld [vmem:[#allocation2 + $0x140] sm:$0xff]
    %v150 = vld [vmem:[#allocation2 + $0x148] sm:$0xff]
    %v151 = vld [vmem:[#allocation2 + $0x150] sm:$0xff]
    %v152 = vld [vmem:[#allocation2 + $0x158] sm:$0xff]
    %v153 = vld [vmem:[#allocation2 + $0x160] sm:$0xff]
    %v154 = vld [vmem:[#allocation2 + $0x168] sm:$0xff]
    %v155 = vld [vmem:[#allocation2 + $0x170] sm:$0xff]
    %v156 = vld [vmem:[#allocation2 + $0x178] sm:$0xff]
    %v157 = vld [vmem:[#allocation2 + $0x180] sm:$0xff]
    %v158 = vld [vmem:[#allocation2 + $0x188] sm:$0xff]
    %v159 = vld [vmem:[#allocation2 + $0x190] sm:$0xff]
    %v160 = vld [vmem:[#allocation2 + $0x198] sm:$0xff]
    %v161 = vld [vmem:[#allocation2 + $0x1a0] sm:$0xff]
    %v162 = vld [vmem:[#allocation2 + $0x1a8] sm:$0xff]
    %v163 = vld [vmem:[#allocation2 + $0x1b0] sm:$0xff]
    %v164 = vld [vmem:[#allocation2 + $0x1b8] sm:$0xff]
    %v165 = vld [vmem:[#allocation2 + $0x1c0] sm:$0xff]
    %v166 = vld [vmem:[#allocation2 + $0x1c8] sm:$0xff]
    %v167 = vld [vmem:[#allocation2 + $0x1d0] sm:$0xff]
    %v168 = vld [vmem:[#allocation2 + $0x1d8] sm:$0xff]
    %v169 = vld [vmem:[#allocation2 + $0x1e0] sm:$0xff]
    %v170 = vld [vmem:[#allocation2 + $0x1e8] sm:$0xff]
    %v171 = vld [vmem:[#allocation2 + $0x1f0] sm:$0xff]
    %v172 = vld [vmem:[#allocation2 + $0x1f8] sm:$0xff]
    %v173 = vld [vmem:[#allocation2 + $0x200] sm:$0xff]
    %v174 = vld [vmem:[#allocation2 + $0x208] sm:$0xff]
    %v175 = vld [vmem:[#allocation2 + $0x210] sm:$0xff]
    %v176 = vld [vmem:[#allocation2 + $0x218] sm:$0xff]
    %v177 = vld [vmem:[#allocation2 + $0x220] sm:$0xff]
    %v178 = vld [vmem:[#allocation2 + $0x228] sm:$0xff]
    %v179 = vld [vmem:[#allocation2 + $0x230] sm:$0xff]
    %v180 = vld [vmem:[#allocation2 + $0x238] sm:$0xff]
    %v181 = vld [vmem:[#allocation2 + $0x240] sm:$0xff]
    %v182 = vld [vmem:[#allocation2 + $0x248] sm:$0xff]
    %v183 = vld [vmem:[#allocation2 + $0x250] sm:$0xff]
    %v184 = vld [vmem:[#allocation2 + $0x258] sm:$0xff]
    %v185 = vld [vmem:[#allocation2 + $0x260] sm:$0xff]
    %v186 = vld [vmem:[#allocation2 + $0x268] sm:$0xff]
    %v187 = vld [vmem:[#allocation2 + $0x270] sm:$0xff]
    %v188 = vld [vmem:[#allocation2 + $0x278] sm:$0xff]
    %v189 = vld [vmem:[#allocation2 + $0x280] sm:$0xff]
    %v190 = vld [vmem:[#allocation2 + $0x288] sm:$0xff]
    %v191 = vld [vmem:[#allocation2 + $0x290] sm:$0xff]
    %v192 = vld [vmem:[#allocation2 + $0x298] sm:$0xff]
    %v193 = vld [vmem:[#allocation2 + $0x2a0] sm:$0xff]
    %v194 = vld [vmem:[#allocation2 + $0x2a8] sm:$0xff]
    %v195 = vld [vmem:[#allocation2 + $0x2b0] sm:$0xff]
    %v196 = vld [vmem:[#allocation2 + $0x2b8] sm:$0xff]
    %v197 = vld [vmem:[#allocation2 + $0x2c0] sm:$0xff]
    %v198 = vld [vmem:[#allocation2 + $0x2c8] sm:$0xff]
    %v199 = vld [vmem:[#allocation2 + $0x2d0] sm:$0xff]
    %v200 = vld [vmem:[#allocation2 + $0x2d8] sm:$0xff]
    %v201 = vld [vmem:[#allocation2 + $0x2e0] sm:$0xff]
    %v202 = vld [vmem:[#allocation2 + $0x2e8] sm:$0xff]
    %v203 = vld [vmem:[#allocation2 + $0x2f0] sm:$0xff]
    %v204 = vld [vmem:[#allocation2 + $0x2f8] sm:$0xff]
    %v205 = vld [vmem:[#allocation2 + $0x300] sm:$0xff]
    %v206 = vld [vmem:[#allocation2 + $0x308] sm:$0xff]
    %v207 = vld [vmem:[#allocation2 + $0x310] sm:$0xff]
    %v208 = vld [vmem:[#allocation2 + $0x318] sm:$0xff]
    %v209 = vld [vmem:[#allocation2 + $0x320] sm:$0xff]
    %v210 = vld [vmem:[#allocation2 + $0x328] sm:$0xff]
    %v211 = vld [vmem:[#allocation2 + $0x330] sm:$0xff]
    %v212 = vld [vmem:[#allocation2 + $0x338] sm:$0xff]
    %v213 = vld [vmem:[#allocation2 + $0x340] sm:$0xff]
    %v214 = vld [vmem:[#allocation2 + $0x348] sm:$0xff]
    %v215 = vld [vmem:[#allocation2 + $0x350] sm:$0xff]
    %v216 = vld [vmem:[#allocation2 + $0x358] sm:$0xff]
    %v217 = vld [vmem:[#allocation2 + $0x360] sm:$0xff]
    %v218 = vld [vmem:[#allocation2 + $0x368] sm:$0xff]
    %v219 = vld [vmem:[#allocation2 + $0x370] sm:$0xff]
    %v220 = vld [vmem:[#allocation2 + $0x378] sm:$0xff]
    %v221 = vld [vmem:[#allocation2 + $0x380] sm:$0xff]
    %v222 = vld [vmem:[#allocation2 + $0x388] sm:$0xff]
    %v223 = vld [vmem:[#allocation2 + $0x390] sm:$0xff]
    %v224 = vld [vmem:[#allocation2 + $0x398] sm:$0xff]
    %v225 = vld [vmem:[#allocation2 + $0x3a0] sm:$0xff]
    %v226 = vld [vmem:[#allocation2 + $0x3a8] sm:$0xff]
    %v227 = vld [vmem:[#allocation2 + $0x3b0] sm:$0xff]
    %v228 = vld [vmem:[#allocation2 + $0x3b8] sm:$0xff]
    %v229 = vld [vmem:[#allocation2 + $0x3c0] sm:$0xff]
    %v230 = vld [vmem:[#allocation2 + $0x3c8] sm:$0xff]
    %v231 = vld [vmem:[#allocation2 + $0x3d0] sm:$0xff]
    %v232 = vld [vmem:[#allocation2 + $0x3d8] sm:$0xff]
    %v233 = vld [vmem:[#allocation2 + $0x3e0] sm:$0xff]
    %v234 = vld [vmem:[#allocation2 + $0x3e8] sm:$0xff]
    %v235 = vld [vmem:[#allocation2 + $0x3f0] sm:$0xff]
    %v236 = vld [vmem:[#allocation2 + $0x3f8] sm:$0xff]
    %v237 = vld [vmem:[#allocation2 + $0x400] sm:$0xff]
    %v238 = vld [vmem:[#allocation2 + $0x408] sm:$0xff]
    %v239 = vld [vmem:[#allocation2 + $0x410] sm:$0xff]
    %v240 = vld [vmem:[#allocation2 + $0x418] sm:$0xff]
    %v241 = vld [vmem:[#allocation2 + $0x420] sm:$0xff]
    %v242 = vld [vmem:[#allocation2 + $0x428] sm:$0xff]
    %v243 = vld [vmem:[#allocation2 + $0x430] sm:$0xff]
    %v244 = vld [vmem:[#allocation2 + $0x438] sm:$0xff]
    %v245 = vld [vmem:[#allocation2 + $0x440] sm:$0xff]
    %v246 = vld [vmem:[#allocation2 + $0x448] sm:$0xff]
    %v247 = vld [vmem:[#allocation2 + $0x450] sm:$0xff]
    %v248 = vld [vmem:[#allocation2 + $0x458] sm:$0xff]
    %v249 = vld [vmem:[#allocation2 + $0x460] sm:$0xff]
    %v250 = vld [vmem:[#allocation2 + $0x468] sm:$0xff]
    %v251 = vld [vmem:[#allocation2 + $0x470] sm:$0xff]
    %v252 = vld [vmem:[#allocation2 + $0x478] sm:$0xff]
    %v253 = vld [vmem:[#allocation2 + $0x480] sm:$0xff]
    %v254 = vld [vmem:[#allocation2 + $0x488] sm:$0xff]
    %v255 = vld [vmem:[#allocation2 + $0x490] sm:$0xff]
    %v256 = vld [vmem:[#allocation2 + $0x498] sm:$0xff]
    %v257 = vld [vmem:[#allocation2 + $0x4a0] sm:$0xff]
    %v258 = vld [vmem:[#allocation2 + $0x4a8] sm:$0xff]
    %v259 = vld [vmem:[#allocation2 + $0x4b0] sm:$0xff]
    %v260 = vld [vmem:[#allocation2 + $0x4b8] sm:$0xff]
    %v261 = vld [vmem:[#allocation2 + $0x4c0] sm:$0xff]
    %v262 = vld [vmem:[#allocation2 + $0x4c8] sm:$0xff]
    %v263 = vld [vmem:[#allocation2 + $0x4d0] sm:$0xff]
    %v264 = vld [vmem:[#allocation2 + $0x4d8] sm:$0xff]
    %v265 = vld [vmem:[#allocation2 + $0x4e0] sm:$0xff]
    %v266 = vld [vmem:[#allocation2 + $0x4e8] sm:$0xff]
    %v267 = vld [vmem:[#allocation2 + $0x4f0] sm:$0xff]
    %v268 = vld [vmem:[#allocation2 + $0x4f8] sm:$0xff]
    %v269 = vld [vmem:[#allocation2 + $0x500] sm:$0xff]
    %v270 = vld [vmem:[#allocation2 + $0x508] sm:$0xff]
    %v271 = vld [vmem:[#allocation2 + $0x510] sm:$0xff]
    %v272 = vld [vmem:[#allocation2 + $0x518] sm:$0xff]
    %v273 = vld [vmem:[#allocation2 + $0x520] sm:$0xff]
    %v274 = vld [vmem:[#allocation2 + $0x528] sm:$0xff]
    %v275 = vld [vmem:[#allocation2 + $0x530] sm:$0xff]
    %v276 = vld [vmem:[#allocation2 + $0x538] sm:$0xff]
    %v277 = vld [vmem:[#allocation2 + $0x540] sm:$0xff]
    %v278 = vld [vmem:[#allocation2 + $0x548] sm:$0xff]
    %v279 = vld [vmem:[#allocation2 + $0x550] sm:$0xff]
    %v280 = vld [vmem:[#allocation2 + $0x558] sm:$0xff]
    %v281 = vld [vmem:[#allocation2 + $0x560] sm:$0xff]
    %v282 = vld [vmem:[#allocation2 + $0x568] sm:$0xff]
    %v283 = vld [vmem:[#allocation2 + $0x570] sm:$0xff]
    %v284 = vld [vmem:[#allocation2 + $0x578] sm:$0xff]
    %v285 = vld [vmem:[#allocation2 + $0x580] sm:$0xff]
    %v286 = vld [vmem:[#allocation2 + $0x588] sm:$0xff]
    %v287 = vld [vmem:[#allocation2 + $0x590] sm:$0xff]
    %v288 = vld [vmem:[#allocation2 + $0x598] sm:$0xff]
    %v289 = vld [vmem:[#allocation2 + $0x5a0] sm:$0xff]
    %v290 = vld [vmem:[#allocation2 + $0x5a8] sm:$0xff]
    %v291 = vld [vmem:[#allocation2 + $0x5b0] sm:$0xff]
    %v292 = vld [vmem:[#allocation2 + $0x5b8] sm:$0xff]
    %v293 = vld [vmem:[#allocation2 + $0x5c0] sm:$0xff]
    %v294 = vld [vmem:[#allocation2 + $0x5c8] sm:$0xff]
    %v295 = vld [vmem:[#allocation2 + $0x5d0] sm:$0xff]
    %v296 = vld [vmem:[#allocation2 + $0x5d8] sm:$0xff]
    %v297 = vld [vmem:[#allocation2 + $0x5e0] sm:$0xff]
    %v298 = vld [vmem:[#allocation2 + $0x5e8] sm:$0xff]
    %v299 = vld [vmem:[#allocation2 + $0x5f0] sm:$0xff]
    %v300 = vld [vmem:[#allocation2 + $0x5f8] sm:$0xff]
    %v301 = vld [vmem:[#allocation2 + $0x600] sm:$0xff]
    %v302 = vld [vmem:[#allocation2 + $0x608] sm:$0xff]
    %v303 = vld [vmem:[#allocation2 + $0x610] sm:$0xff]
    %v304 = vld [vmem:[#allocation2 + $0x618] sm:$0xff]
    %v305 = vld [vmem:[#allocation2 + $0x620] sm:$0xff]
    %v306 = vld [vmem:[#allocation2 + $0x628] sm:$0xff]
    %v307 = vld [vmem:[#allocation2 + $0x630] sm:$0xff]
    %v308 = vld [vmem:[#allocation2 + $0x638] sm:$0xff]
    %v309 = vld [vmem:[#allocation2 + $0x640] sm:$0xff]
    %v310 = vld [vmem:[#allocation2 + $0x648] sm:$0xff]
    %v311 = vld [vmem:[#allocation2 + $0x650] sm:$0xff]
    %v312 = vld [vmem:[#allocation2 + $0x658] sm:$0xff]
    %v313 = vld [vmem:[#allocation2 + $0x660] sm:$0xff]
    %v314 = vld [vmem:[#allocation2 + $0x668] sm:$0xff]
    %v315 = vld [vmem:[#allocation2 + $0x670] sm:$0xff]
    %v316 = vld [vmem:[#allocation2 + $0x678] sm:$0xff]
    %v317 = vld [vmem:[#allocation2 + $0x680] sm:$0xff]
    %v318 = vld [vmem:[#allocation2 + $0x688] sm:$0xff]
    %v319 = vld [vmem:[#allocation2 + $0x690] sm:$0xff]
    %v320 = vld [vmem:[#allocation2 + $0x698] sm:$0xff]
    %v321 = vld [vmem:[#allocation2 + $0x6a0] sm:$0xff]
    %v322 = vld [vmem:[#allocation2 + $0x6a8] sm:$0xff]
    %v323 = vld [vmem:[#allocation2 + $0x6b0] sm:$0xff]
    %v324 = vld [vmem:[#allocation2 + $0x6b8] sm:$0xff]
    %v325 = vld [vmem:[#allocation2 + $0x6c0] sm:$0xff]
    %v326 = vld [vmem:[#allocation2 + $0x6c8] sm:$0xff]
    %v327 = vld [vmem:[#allocation2 + $0x6d0] sm:$0xff]
    %v328 = vld [vmem:[#allocation2 + $0x6d8] sm:$0xff]
    %v329 = vld [vmem:[#allocation2 + $0x6e0] sm:$0xff]
    %v330 = vld [vmem:[#allocation2 + $0x6e8] sm:$0xff]
    %v331 = vld [vmem:[#allocation2 + $0x6f0] sm:$0xff]
    %v332 = vld [vmem:[#allocation2 + $0x6f8] sm:$0xff]
    %v333 = vld [vmem:[#allocation2 + $0x700] sm:$0xff]
    %v334 = vld [vmem:[#allocation2 + $0x708] sm:$0xff]
    %v335 = vld [vmem:[#allocation2 + $0x710] sm:$0xff]
    %v336 = vld [vmem:[#allocation2 + $0x718] sm:$0xff]
    %v337 = vld [vmem:[#allocation2 + $0x720] sm:$0xff]
    %v338 = vld [vmem:[#allocation2 + $0x728] sm:$0xff]
    %v339 = vld [vmem:[#allocation2 + $0x730] sm:$0xff]
    %v340 = vld [vmem:[#allocation2 + $0x738] sm:$0xff]
    %v341 = vld [vmem:[#allocation2 + $0x740] sm:$0xff]
    %v342 = vld [vmem:[#allocation2 + $0x748] sm:$0xff]
    %v343 = vld [vmem:[#allocation2 + $0x750] sm:$0xff]
    %v344 = vld [vmem:[#allocation2 + $0x758] sm:$0xff]
    %v345 = vld [vmem:[#allocation2 + $0x760] sm:$0xff]
    %v346 = vld [vmem:[#allocation2 + $0x768] sm:$0xff]
    %v347 = vld [vmem:[#allocation2 + $0x770] sm:$0xff]
    %v348 = vld [vmem:[#allocation2 + $0x778] sm:$0xff]
    %v349 = vld [vmem:[#allocation2 + $0x780] sm:$0xff]
    %v350 = vld [vmem:[#allocation2 + $0x788] sm:$0xff]
    %v351 = vld [vmem:[#allocation2 + $0x790] sm:$0xff]
    %v352 = vld [vmem:[#allocation2 + $0x798] sm:$0xff]
    %v353 = vld [vmem:[#allocation2 + $0x7a0] sm:$0xff]
    %v354 = vld [vmem:[#allocation2 + $0x7a8] sm:$0xff]
    %v355 = vld [vmem:[#allocation2 + $0x7b0] sm:$0xff]
    %v356 = vld [vmem:[#allocation2 + $0x7b8] sm:$0xff]
    %v357 = vld [vmem:[#allocation2 + $0x7c0] sm:$0xff]
    %v358 = vld [vmem:[#allocation2 + $0x7c8] sm:$0xff]
    %v359 = vld [vmem:[#allocation2 + $0x7d0] sm:$0xff]
    %v360 = vld [vmem:[#allocation2 + $0x7d8] sm:$0xff]
    %v361 = vld [vmem:[#allocation2 + $0x7e0] sm:$0xff]
    %v362 = vld [vmem:[#allocation2 + $0x7e8] sm:$0xff]
    %v363 = vld [vmem:[#allocation2 + $0x7f0] sm:$0xff]
    %v364 = vld [vmem:[#allocation2 + $0x7f8] sm:$0xff]
    %v365 = vld [vmem:[#allocation2 + $0x800] sm:$0xff]
    %v366 = vld [vmem:[#allocation2 + $0x808] sm:$0xff]
    %v367 = vld [vmem:[#allocation2 + $0x810] sm:$0xff]
    %v368 = vld [vmem:[#allocation2 + $0x818] sm:$0xff]
    %v369 = vld [vmem:[#allocation2 + $0x820] sm:$0xff]
    %v370 = vld [vmem:[#allocation2 + $0x828] sm:$0xff]
    %v371 = vld [vmem:[#allocation2 + $0x830] sm:$0xff]
    %v372 = vld [vmem:[#allocation2 + $0x838] sm:$0xff]
    %v373 = vld [vmem:[#allocation2 + $0x840] sm:$0xff]
    %v374 = vld [vmem:[#allocation2 + $0x848] sm:$0xff]
    %v375 = vld [vmem:[#allocation2 + $0x850] sm:$0xff]
    %v376 = vld [vmem:[#allocation2 + $0x858] sm:$0xff]
    %v377 = vld [vmem:[#allocation2 + $0x860] sm:$0xff]
    %v378 = vld [vmem:[#allocation2 + $0x868] sm:$0xff]
    %v379 = vld [vmem:[#allocation2 + $0x870] sm:$0xff]
    %v380 = vld [vmem:[#allocation2 + $0x878] sm:$0xff]
    %v381 = vld [vmem:[#allocation2 + $0x880] sm:$0xff]
    %v382 = vld [vmem:[#allocation2 + $0x888] sm:$0xff]
    %v383 = vld [vmem:[#allocation2 + $0x890] sm:$0xff]
    %v384 = vld [vmem:[#allocation2 + $0x898] sm:$0xff]
    %v385 = vld [vmem:[#allocation2 + $0x8a0] sm:$0xff]
    %v386 = vld [vmem:[#allocation2 + $0x8a8] sm:$0xff]
    %v387 = vld [vmem:[#allocation2 + $0x8b0] sm:$0xff]
    %v388 = vld [vmem:[#allocation2 + $0x8b8] sm:$0xff]
    %v389 = vld [vmem:[#allocation2 + $0x8c0] sm:$0xff]
    %v390 = vld [vmem:[#allocation2 + $0x8c8] sm:$0xff]
    %v391 = vld [vmem:[#allocation2 + $0x8d0] sm:$0xff]
    %v392 = vld [vmem:[#allocation2 + $0x8d8] sm:$0xff]
    %v393 = vld [vmem:[#allocation2 + $0x8e0] sm:$0xff]
    %v394 = vld [vmem:[#allocation2 + $0x8e8] sm:$0xff]
    %v395 = vld [vmem:[#allocation2 + $0x8f0] sm:$0xff]
    %v396 = vld [vmem:[#allocation2 + $0x8f8] sm:$0xff]
    %v397 = vld [vmem:[#allocation4] sm:$0x3f]
    %v399 = vlaneseq
    %v400 = vshrl.u32 %v399, 7
    %v401 = vsub.s32 0, %v400
    %v402 = vrot.slane %v397, %v401
    %v403 = vlaneseq
    %v404 = vshrl.u32 %v403, 7
    %v405 = vsub.s32 1, %v404
    %v406 = vrot.slane %v397, %v405
    %v407 = vlaneseq
    %v408 = vshrl.u32 %v407, 7
    %v409 = vsub.s32 2, %v408
    %v410 = vrot.slane %v397, %v409
    %v411 = vlaneseq
    %v412 = vshrl.u32 %v411, 7
    %v413 = vsub.s32 3, %v412
    %v414 = vrot.slane %v397, %v413
    %v415 = vlaneseq
    %v416 = vshrl.u32 %v415, 7
    %v417 = vsub.s32 4, %v416
    %v418 = vrot.slane %v397, %v417
    %v419 = vlaneseq
    %v420 = vshrl.u32 %v419, 7
    %v421 = vsub.s32 5, %v420
    %v422 = vrot.slane %v397, %v421
    %v435 = vunpack.c.l.b16 %v103
    %v436 = vunpack.c.h.b16 %v103
    %v437 = vunpack.c.l.b16 %v104
    %v438 = vunpack.c.h.b16 %v104
    %v439 = vunpack.c.l.b16 %v105
    %v440 = vunpack.c.h.b16 %v105
    %v441 = vunpack.c.l.b16 %v106
    %v442 = vunpack.c.h.b16 %v106
    %v443 = vunpack.c.l.b16 %v107
    %v444 = vunpack.c.h.b16 %v107
    %v445 = vunpack.c.l.b16 %v108
    %v446 = vunpack.c.h.b16 %v108
    %v447 = vpack.c.b16 %v441, %v435
    %v448 = vpack.c.b16 %v442, %v436
    %v449 = vpack.c.b16 %v443, %v437
    %v450 = vpack.c.b16 %v444, %v438
    %v451 = vpack.c.b16 %v445, %v439
    %v452 = vpack.c.b16 %v446, %v440
    %v747 = vunpack.c.l.b16 %v109
    %v748 = vunpack.c.h.b16 %v109
    %v749 = vunpack.c.l.b16 %v110
    %v750 = vunpack.c.h.b16 %v110
    %v751 = vunpack.c.l.b16 %v111
    %v752 = vunpack.c.h.b16 %v111
    %v753 = vunpack.c.l.b16 %v112
    %v754 = vunpack.c.h.b16 %v112
    %v755 = vunpack.c.l.b16 %v113
    %v756 = vunpack.c.h.b16 %v113
    %v757 = vunpack.c.l.b16 %v114
    %v758 = vunpack.c.h.b16 %v114
    %v759 = vunpack.c.l.b16 %v115
    %v760 = vunpack.c.h.b16 %v115
    %v761 = vunpack.c.l.b16 %v116
    %v762 = vunpack.c.h.b16 %v116
    %v763 = vunpack.c.l.b16 %v117
    %v764 = vunpack.c.h.b16 %v117
    %v765 = vunpack.c.l.b16 %v118
    %v766 = vunpack.c.h.b16 %v118
    %v767 = vunpack.c.l.b16 %v119
    %v768 = vunpack.c.h.b16 %v119
    %v769 = vunpack.c.l.b16 %v120
    %v770 = vunpack.c.h.b16 %v120
    %v771 = vunpack.c.l.b16 %v121
    %v772 = vunpack.c.h.b16 %v121
    %v773 = vunpack.c.l.b16 %v122
    %v774 = vunpack.c.h.b16 %v122
    %v775 = vunpack.c.l.b16 %v123
    %v776 = vunpack.c.h.b16 %v123
    %v777 = vunpack.c.l.b16 %v124
    %v778 = vunpack.c.h.b16 %v124
    %v779 = vunpack.c.l.b16 %v125
    %v780 = vunpack.c.h.b16 %v125
    %v781 = vunpack.c.l.b16 %v126
    %v782 = vunpack.c.h.b16 %v126
    %v783 = vunpack.c.l.b16 %v127
    %v784 = vunpack.c.h.b16 %v127
    %v785 = vunpack.c.l.b16 %v128
    %v786 = vunpack.c.h.b16 %v128
    %v787 = vunpack.c.l.b16 %v129
    %v788 = vunpack.c.h.b16 %v129
    %v789 = vunpack.c.l.b16 %v130
    %v790 = vunpack.c.h.b16 %v130
    %v791 = vunpack.c.l.b16 %v131
    %v792 = vunpack.c.h.b16 %v131
    %v793 = vunpack.c.l.b16 %v132
    %v794 = vunpack.c.h.b16 %v132
    %v795 = vunpack.c.l.b16 %v133
    %v796 = vunpack.c.h.b16 %v133
    %v797 = vunpack.c.l.b16 %v134
    %v798 = vunpack.c.h.b16 %v134
    %v799 = vunpack.c.l.b16 %v135
    %v800 = vunpack.c.h.b16 %v135
    %v801 = vunpack.c.l.b16 %v136
    %v802 = vunpack.c.h.b16 %v136
    %v803 = vunpack.c.l.b16 %v137
    %v804 = vunpack.c.h.b16 %v137
    %v805 = vunpack.c.l.b16 %v138
    %v806 = vunpack.c.h.b16 %v138
    %v807 = vunpack.c.l.b16 %v139
    %v808 = vunpack.c.h.b16 %v139
    %v809 = vunpack.c.l.b16 %v140
    %v810 = vunpack.c.h.b16 %v140
    %v811 = vunpack.c.l.b16 %v141
    %v812 = vunpack.c.h.b16 %v141
    %v813 = vunpack.c.l.b16 %v142
    %v814 = vunpack.c.h.b16 %v142
    %v815 = vunpack.c.l.b16 %v143
    %v816 = vunpack.c.h.b16 %v143
    %v817 = vunpack.c.l.b16 %v144
    %v818 = vunpack.c.h.b16 %v144
    %v819 = vunpack.c.l.b16 %v145
    %v820 = vunpack.c.h.b16 %v145
    %v821 = vunpack.c.l.b16 %v146
    %v822 = vunpack.c.h.b16 %v146
    %v823 = vunpack.c.l.b16 %v147
    %v824 = vunpack.c.h.b16 %v147
    %v825 = vunpack.c.l.b16 %v148
    %v826 = vunpack.c.h.b16 %v148
    %v827 = vunpack.c.l.b16 %v149
    %v828 = vunpack.c.h.b16 %v149
    %v829 = vunpack.c.l.b16 %v150
    %v830 = vunpack.c.h.b16 %v150
    %v831 = vunpack.c.l.b16 %v151
    %v832 = vunpack.c.h.b16 %v151
    %v833 = vunpack.c.l.b16 %v152
    %v834 = vunpack.c.h.b16 %v152
    %v835 = vunpack.c.l.b16 %v153
    %v836 = vunpack.c.h.b16 %v153
    %v837 = vunpack.c.l.b16 %v154
    %v838 = vunpack.c.h.b16 %v154
    %v839 = vunpack.c.l.b16 %v155
    %v840 = vunpack.c.h.b16 %v155
    %v841 = vunpack.c.l.b16 %v156
    %v842 = vunpack.c.h.b16 %v156
    %v843 = vunpack.c.l.b16 %v157
    %v844 = vunpack.c.h.b16 %v157
    %v845 = vunpack.c.l.b16 %v158
    %v846 = vunpack.c.h.b16 %v158
    %v847 = vunpack.c.l.b16 %v159
    %v848 = vunpack.c.h.b16 %v159
    %v849 = vunpack.c.l.b16 %v160
    %v850 = vunpack.c.h.b16 %v160
    %v851 = vunpack.c.l.b16 %v161
    %v852 = vunpack.c.h.b16 %v161
    %v853 = vunpack.c.l.b16 %v162
    %v854 = vunpack.c.h.b16 %v162
    %v855 = vunpack.c.l.b16 %v163
    %v856 = vunpack.c.h.b16 %v163
    %v857 = vunpack.c.l.b16 %v164
    %v858 = vunpack.c.h.b16 %v164
    %v859 = vunpack.c.l.b16 %v165
    %v860 = vunpack.c.h.b16 %v165
    %v861 = vunpack.c.l.b16 %v166
    %v862 = vunpack.c.h.b16 %v166
    %v863 = vunpack.c.l.b16 %v167
    %v864 = vunpack.c.h.b16 %v167
    %v865 = vunpack.c.l.b16 %v168
    %v866 = vunpack.c.h.b16 %v168
    %v867 = vunpack.c.l.b16 %v169
    %v868 = vunpack.c.h.b16 %v169
    %v869 = vunpack.c.l.b16 %v170
    %v870 = vunpack.c.h.b16 %v170
    %v871 = vunpack.c.l.b16 %v171
    %v872 = vunpack.c.h.b16 %v171
    %v873 = vunpack.c.l.b16 %v172
    %v874 = vunpack.c.h.b16 %v172
    %v875 = vunpack.c.l.b16 %v173
    %v876 = vunpack.c.h.b16 %v173
    %v877 = vunpack.c.l.b16 %v174
    %v878 = vunpack.c.h.b16 %v174
    %v879 = vunpack.c.l.b16 %v175
    %v880 = vunpack.c.h.b16 %v175
    %v881 = vunpack.c.l.b16 %v176
    %v882 = vunpack.c.h.b16 %v176
    %v883 = vunpack.c.l.b16 %v177
    %v884 = vunpack.c.h.b16 %v177
    %v885 = vunpack.c.l.b16 %v178
    %v886 = vunpack.c.h.b16 %v178
    %v887 = vunpack.c.l.b16 %v179
    %v888 = vunpack.c.h.b16 %v179
    %v889 = vunpack.c.l.b16 %v180
    %v890 = vunpack.c.h.b16 %v180
    %v891 = vunpack.c.l.b16 %v181
    %v892 = vunpack.c.h.b16 %v181
    %v893 = vunpack.c.l.b16 %v182
    %v894 = vunpack.c.h.b16 %v182
    %v895 = vunpack.c.l.b16 %v183
    %v896 = vunpack.c.h.b16 %v183
    %v897 = vunpack.c.l.b16 %v184
    %v898 = vunpack.c.h.b16 %v184
    %v899 = vunpack.c.l.b16 %v185
    %v900 = vunpack.c.h.b16 %v185
    %v901 = vunpack.c.l.b16 %v186
    %v902 = vunpack.c.h.b16 %v186
    %v903 = vunpack.c.l.b16 %v187
    %v904 = vunpack.c.h.b16 %v187
    %v905 = vunpack.c.l.b16 %v188
    %v906 = vunpack.c.h.b16 %v188
    %v907 = vunpack.c.l.b16 %v189
    %v908 = vunpack.c.h.b16 %v189
    %v909 = vunpack.c.l.b16 %v190
    %v910 = vunpack.c.h.b16 %v190
    %v911 = vunpack.c.l.b16 %v191
    %v912 = vunpack.c.h.b16 %v191
    %v913 = vunpack.c.l.b16 %v192
    %v914 = vunpack.c.h.b16 %v192
    %v915 = vunpack.c.l.b16 %v193
    %v916 = vunpack.c.h.b16 %v193
    %v917 = vunpack.c.l.b16 %v194
    %v918 = vunpack.c.h.b16 %v194
    %v919 = vunpack.c.l.b16 %v195
    %v920 = vunpack.c.h.b16 %v195
    %v921 = vunpack.c.l.b16 %v196
    %v922 = vunpack.c.h.b16 %v196
    %v923 = vunpack.c.l.b16 %v197
    %v924 = vunpack.c.h.b16 %v197
    %v925 = vunpack.c.l.b16 %v198
    %v926 = vunpack.c.h.b16 %v198
    %v927 = vunpack.c.l.b16 %v199
    %v928 = vunpack.c.h.b16 %v199
    %v929 = vunpack.c.l.b16 %v200
    %v930 = vunpack.c.h.b16 %v200
    %v931 = vunpack.c.l.b16 %v201
    %v932 = vunpack.c.h.b16 %v201
    %v933 = vunpack.c.l.b16 %v202
    %v934 = vunpack.c.h.b16 %v202
    %v935 = vunpack.c.l.b16 %v203
    %v936 = vunpack.c.h.b16 %v203
    %v937 = vunpack.c.l.b16 %v204
    %v938 = vunpack.c.h.b16 %v204
    %v939 = vunpack.c.l.b16 %v205
    %v940 = vunpack.c.h.b16 %v205
    %v941 = vunpack.c.l.b16 %v206
    %v942 = vunpack.c.h.b16 %v206
    %v943 = vunpack.c.l.b16 %v207
    %v944 = vunpack.c.h.b16 %v207
    %v945 = vunpack.c.l.b16 %v208
    %v946 = vunpack.c.h.b16 %v208
    %v947 = vunpack.c.l.b16 %v209
    %v948 = vunpack.c.h.b16 %v209
    %v949 = vunpack.c.l.b16 %v210
    %v950 = vunpack.c.h.b16 %v210
    %v951 = vunpack.c.l.b16 %v211
    %v952 = vunpack.c.h.b16 %v211
    %v953 = vunpack.c.l.b16 %v212
    %v954 = vunpack.c.h.b16 %v212
    %v955 = vunpack.c.l.b16 %v213
    %v956 = vunpack.c.h.b16 %v213
    %v957 = vunpack.c.l.b16 %v214
    %v958 = vunpack.c.h.b16 %v214
    %v959 = vunpack.c.l.b16 %v215
    %v960 = vunpack.c.h.b16 %v215
    %v961 = vunpack.c.l.b16 %v216
    %v962 = vunpack.c.h.b16 %v216
    %v963 = vunpack.c.l.b16 %v217
    %v964 = vunpack.c.h.b16 %v217
    %v965 = vunpack.c.l.b16 %v218
    %v966 = vunpack.c.h.b16 %v218
    %v967 = vunpack.c.l.b16 %v219
    %v968 = vunpack.c.h.b16 %v219
    %v969 = vunpack.c.l.b16 %v220
    %v970 = vunpack.c.h.b16 %v220
    %v971 = vunpack.c.l.b16 %v221
    %v972 = vunpack.c.h.b16 %v221
    %v973 = vunpack.c.l.b16 %v222
    %v974 = vunpack.c.h.b16 %v222
    %v975 = vunpack.c.l.b16 %v223
    %v976 = vunpack.c.h.b16 %v223
    %v977 = vunpack.c.l.b16 %v224
    %v978 = vunpack.c.h.b16 %v224
    %v979 = vunpack.c.l.b16 %v225
    %v980 = vunpack.c.h.b16 %v225
    %v981 = vunpack.c.l.b16 %v226
    %v982 = vunpack.c.h.b16 %v226
    %v983 = vunpack.c.l.b16 %v227
    %v984 = vunpack.c.h.b16 %v227
    %v985 = vunpack.c.l.b16 %v228
    %v986 = vunpack.c.h.b16 %v228
    %v987 = vunpack.c.l.b16 %v229
    %v988 = vunpack.c.h.b16 %v229
    %v989 = vunpack.c.l.b16 %v230
    %v990 = vunpack.c.h.b16 %v230
    %v991 = vunpack.c.l.b16 %v231
    %v992 = vunpack.c.h.b16 %v231
    %v993 = vunpack.c.l.b16 %v232
    %v994 = vunpack.c.h.b16 %v232
    %v995 = vunpack.c.l.b16 %v233
    %v996 = vunpack.c.h.b16 %v233
    %v997 = vunpack.c.l.b16 %v234
    %v998 = vunpack.c.h.b16 %v234
    %v999 = vunpack.c.l.b16 %v235
    %v1000 = vunpack.c.h.b16 %v235
    %v1001 = vunpack.c.l.b16 %v236
    %v1002 = vunpack.c.h.b16 %v236
    %v1003 = vunpack.c.l.b16 %v237
    %v1004 = vunpack.c.h.b16 %v237
    %v1005 = vunpack.c.l.b16 %v238
    %v1006 = vunpack.c.h.b16 %v238
    %v1007 = vunpack.c.l.b16 %v239
    %v1008 = vunpack.c.h.b16 %v239
    %v1009 = vunpack.c.l.b16 %v240
    %v1010 = vunpack.c.h.b16 %v240
    %v1011 = vunpack.c.l.b16 %v241
    %v1012 = vunpack.c.h.b16 %v241
    %v1013 = vunpack.c.l.b16 %v242
    %v1014 = vunpack.c.h.b16 %v242
    %v1015 = vunpack.c.l.b16 %v243
    %v1016 = vunpack.c.h.b16 %v243
    %v1017 = vunpack.c.l.b16 %v244
    %v1018 = vunpack.c.h.b16 %v244
    %v1019 = vunpack.c.l.b16 %v245
    %v1020 = vunpack.c.h.b16 %v245
    %v1021 = vunpack.c.l.b16 %v246
    %v1022 = vunpack.c.h.b16 %v246
    %v1023 = vunpack.c.l.b16 %v247
    %v1024 = vunpack.c.h.b16 %v247
    %v1025 = vunpack.c.l.b16 %v248
    %v1026 = vunpack.c.h.b16 %v248
    %v1027 = vunpack.c.l.b16 %v249
    %v1028 = vunpack.c.h.b16 %v249
    %v1029 = vunpack.c.l.b16 %v250
    %v1030 = vunpack.c.h.b16 %v250
    %v1031 = vunpack.c.l.b16 %v251
    %v1032 = vunpack.c.h.b16 %v251
    %v1033 = vunpack.c.l.b16 %v252
    %v1034 = vunpack.c.h.b16 %v252
    %v1035 = vunpack.c.l.b16 %v253
    %v1036 = vunpack.c.h.b16 %v253
    %v1037 = vunpack.c.l.b16 %v254
    %v1038 = vunpack.c.h.b16 %v254
    %v1039 = vunpack.c.l.b16 %v255
    %v1040 = vunpack.c.h.b16 %v255
    %v1041 = vunpack.c.l.b16 %v256
    %v1042 = vunpack.c.h.b16 %v256
    %v1043 = vunpack.c.l.b16 %v257
    %v1044 = vunpack.c.h.b16 %v257
    %v1045 = vunpack.c.l.b16 %v258
    %v1046 = vunpack.c.h.b16 %v258
    %v1047 = vunpack.c.l.b16 %v259
    %v1048 = vunpack.c.h.b16 %v259
    %v1049 = vunpack.c.l.b16 %v260
    %v1050 = vunpack.c.h.b16 %v260
    %v1051 = vunpack.c.l.b16 %v261
    %v1052 = vunpack.c.h.b16 %v261
    %v1053 = vunpack.c.l.b16 %v262
    %v1054 = vunpack.c.h.b16 %v262
    %v1055 = vunpack.c.l.b16 %v263
    %v1056 = vunpack.c.h.b16 %v263
    %v1057 = vunpack.c.l.b16 %v264
    %v1058 = vunpack.c.h.b16 %v264
    %v1059 = vunpack.c.l.b16 %v265
    %v1060 = vunpack.c.h.b16 %v265
    %v1061 = vunpack.c.l.b16 %v266
    %v1062 = vunpack.c.h.b16 %v266
    %v1063 = vunpack.c.l.b16 %v267
    %v1064 = vunpack.c.h.b16 %v267
    %v1065 = vunpack.c.l.b16 %v268
    %v1066 = vunpack.c.h.b16 %v268
    %v1067 = vunpack.c.l.b16 %v269
    %v1068 = vunpack.c.h.b16 %v269
    %v1069 = vunpack.c.l.b16 %v270
    %v1070 = vunpack.c.h.b16 %v270
    %v1071 = vunpack.c.l.b16 %v271
    %v1072 = vunpack.c.h.b16 %v271
    %v1073 = vunpack.c.l.b16 %v272
    %v1074 = vunpack.c.h.b16 %v272
    %v1075 = vunpack.c.l.b16 %v273
    %v1076 = vunpack.c.h.b16 %v273
    %v1077 = vunpack.c.l.b16 %v274
    %v1078 = vunpack.c.h.b16 %v274
    %v1079 = vunpack.c.l.b16 %v275
    %v1080 = vunpack.c.h.b16 %v275
    %v1081 = vunpack.c.l.b16 %v276
    %v1082 = vunpack.c.h.b16 %v276
    %v1083 = vunpack.c.l.b16 %v277
    %v1084 = vunpack.c.h.b16 %v277
    %v1085 = vunpack.c.l.b16 %v278
    %v1086 = vunpack.c.h.b16 %v278
    %v1087 = vunpack.c.l.b16 %v279
    %v1088 = vunpack.c.h.b16 %v279
    %v1089 = vunpack.c.l.b16 %v280
    %v1090 = vunpack.c.h.b16 %v280
    %v1091 = vunpack.c.l.b16 %v281
    %v1092 = vunpack.c.h.b16 %v281
    %v1093 = vunpack.c.l.b16 %v282
    %v1094 = vunpack.c.h.b16 %v282
    %v1095 = vunpack.c.l.b16 %v283
    %v1096 = vunpack.c.h.b16 %v283
    %v1097 = vunpack.c.l.b16 %v284
    %v1098 = vunpack.c.h.b16 %v284
    %v1099 = vunpack.c.l.b16 %v285
    %v1100 = vunpack.c.h.b16 %v285
    %v1101 = vunpack.c.l.b16 %v286
    %v1102 = vunpack.c.h.b16 %v286
    %v1103 = vunpack.c.l.b16 %v287
    %v1104 = vunpack.c.h.b16 %v287
    %v1105 = vunpack.c.l.b16 %v288
    %v1106 = vunpack.c.h.b16 %v288
    %v1107 = vunpack.c.l.b16 %v289
    %v1108 = vunpack.c.h.b16 %v289
    %v1109 = vunpack.c.l.b16 %v290
    %v1110 = vunpack.c.h.b16 %v290
    %v1111 = vunpack.c.l.b16 %v291
    %v1112 = vunpack.c.h.b16 %v291
    %v1113 = vunpack.c.l.b16 %v292
    %v1114 = vunpack.c.h.b16 %v292
    %v1115 = vunpack.c.l.b16 %v293
    %v1116 = vunpack.c.h.b16 %v293
    %v1117 = vunpack.c.l.b16 %v294
    %v1118 = vunpack.c.h.b16 %v294
    %v1119 = vunpack.c.l.b16 %v295
    %v1120 = vunpack.c.h.b16 %v295
    %v1121 = vunpack.c.l.b16 %v296
    %v1122 = vunpack.c.h.b16 %v296
    %v1123 = vunpack.c.l.b16 %v297
    %v1124 = vunpack.c.h.b16 %v297
    %v1125 = vunpack.c.l.b16 %v298
    %v1126 = vunpack.c.h.b16 %v298
    %v1127 = vunpack.c.l.b16 %v299
    %v1128 = vunpack.c.h.b16 %v299
    %v1129 = vunpack.c.l.b16 %v300
    %v1130 = vunpack.c.h.b16 %v300
    %v1131 = vunpack.c.l.b16 %v301
    %v1132 = vunpack.c.h.b16 %v301
    %v1133 = vunpack.c.l.b16 %v302
    %v1134 = vunpack.c.h.b16 %v302
    %v1135 = vunpack.c.l.b16 %v303
    %v1136 = vunpack.c.h.b16 %v303
    %v1137 = vunpack.c.l.b16 %v304
    %v1138 = vunpack.c.h.b16 %v304
    %v1139 = vunpack.c.l.b16 %v305
    %v1140 = vunpack.c.h.b16 %v305
    %v1141 = vunpack.c.l.b16 %v306
    %v1142 = vunpack.c.h.b16 %v306
    %v1143 = vunpack.c.l.b16 %v307
    %v1144 = vunpack.c.h.b16 %v307
    %v1145 = vunpack.c.l.b16 %v308
    %v1146 = vunpack.c.h.b16 %v308
    %v1147 = vunpack.c.l.b16 %v309
    %v1148 = vunpack.c.h.b16 %v309
    %v1149 = vunpack.c.l.b16 %v310
    %v1150 = vunpack.c.h.b16 %v310
    %v1151 = vunpack.c.l.b16 %v311
    %v1152 = vunpack.c.h.b16 %v311
    %v1153 = vunpack.c.l.b16 %v312
    %v1154 = vunpack.c.h.b16 %v312
    %v1155 = vunpack.c.l.b16 %v313
    %v1156 = vunpack.c.h.b16 %v313
    %v1157 = vunpack.c.l.b16 %v314
    %v1158 = vunpack.c.h.b16 %v314
    %v1159 = vunpack.c.l.b16 %v315
    %v1160 = vunpack.c.h.b16 %v315
    %v1161 = vunpack.c.l.b16 %v316
    %v1162 = vunpack.c.h.b16 %v316
    %v1163 = vunpack.c.l.b16 %v317
    %v1164 = vunpack.c.h.b16 %v317
    %v1165 = vunpack.c.l.b16 %v318
    %v1166 = vunpack.c.h.b16 %v318
    %v1167 = vunpack.c.l.b16 %v319
    %v1168 = vunpack.c.h.b16 %v319
    %v1169 = vunpack.c.l.b16 %v320
    %v1170 = vunpack.c.h.b16 %v320
    %v1171 = vunpack.c.l.b16 %v321
    %v1172 = vunpack.c.h.b16 %v321
    %v1173 = vunpack.c.l.b16 %v322
    %v1174 = vunpack.c.h.b16 %v322
    %v1175 = vunpack.c.l.b16 %v323
    %v1176 = vunpack.c.h.b16 %v323
    %v1177 = vunpack.c.l.b16 %v324
    %v1178 = vunpack.c.h.b16 %v324
    %v1179 = vunpack.c.l.b16 %v325
    %v1180 = vunpack.c.h.b16 %v325
    %v1181 = vunpack.c.l.b16 %v326
    %v1182 = vunpack.c.h.b16 %v326
    %v1183 = vunpack.c.l.b16 %v327
    %v1184 = vunpack.c.h.b16 %v327
    %v1185 = vunpack.c.l.b16 %v328
    %v1186 = vunpack.c.h.b16 %v328
    %v1187 = vunpack.c.l.b16 %v329
    %v1188 = vunpack.c.h.b16 %v329
    %v1189 = vunpack.c.l.b16 %v330
    %v1190 = vunpack.c.h.b16 %v330
    %v1191 = vunpack.c.l.b16 %v331
    %v1192 = vunpack.c.h.b16 %v331
    %v1193 = vunpack.c.l.b16 %v332
    %v1194 = vunpack.c.h.b16 %v332
    %v1195 = vunpack.c.l.b16 %v333
    %v1196 = vunpack.c.h.b16 %v333
    %v1197 = vunpack.c.l.b16 %v334
    %v1198 = vunpack.c.h.b16 %v334
    %v1199 = vunpack.c.l.b16 %v335
    %v1200 = vunpack.c.h.b16 %v335
    %v1201 = vunpack.c.l.b16 %v336
    %v1202 = vunpack.c.h.b16 %v336
    %v1203 = vunpack.c.l.b16 %v337
    %v1204 = vunpack.c.h.b16 %v337
    %v1205 = vunpack.c.l.b16 %v338
    %v1206 = vunpack.c.h.b16 %v338
    %v1207 = vunpack.c.l.b16 %v339
    %v1208 = vunpack.c.h.b16 %v339
    %v1209 = vunpack.c.l.b16 %v340
    %v1210 = vunpack.c.h.b16 %v340
    %v1211 = vunpack.c.l.b16 %v341
    %v1212 = vunpack.c.h.b16 %v341
    %v1213 = vunpack.c.l.b16 %v342
    %v1214 = vunpack.c.h.b16 %v342
    %v1215 = vunpack.c.l.b16 %v343
    %v1216 = vunpack.c.h.b16 %v343
    %v1217 = vunpack.c.l.b16 %v344
    %v1218 = vunpack.c.h.b16 %v344
    %v1219 = vunpack.c.l.b16 %v345
    %v1220 = vunpack.c.h.b16 %v345
    %v1221 = vunpack.c.l.b16 %v346
    %v1222 = vunpack.c.h.b16 %v346
    %v1223 = vunpack.c.l.b16 %v347
    %v1224 = vunpack.c.h.b16 %v347
    %v1225 = vunpack.c.l.b16 %v348
    %v1226 = vunpack.c.h.b16 %v348
    %v1227 = vunpack.c.l.b16 %v349
    %v1228 = vunpack.c.h.b16 %v349
    %v1229 = vunpack.c.l.b16 %v350
    %v1230 = vunpack.c.h.b16 %v350
    %v1231 = vunpack.c.l.b16 %v351
    %v1232 = vunpack.c.h.b16 %v351
    %v1233 = vunpack.c.l.b16 %v352
    %v1234 = vunpack.c.h.b16 %v352
    %v1235 = vunpack.c.l.b16 %v353
    %v1236 = vunpack.c.h.b16 %v353
    %v1237 = vunpack.c.l.b16 %v354
    %v1238 = vunpack.c.h.b16 %v354
    %v1239 = vunpack.c.l.b16 %v355
    %v1240 = vunpack.c.h.b16 %v355
    %v1241 = vunpack.c.l.b16 %v356
    %v1242 = vunpack.c.h.b16 %v356
    %v1243 = vunpack.c.l.b16 %v357
    %v1244 = vunpack.c.h.b16 %v357
    %v1245 = vunpack.c.l.b16 %v358
    %v1246 = vunpack.c.h.b16 %v358
    %v1247 = vunpack.c.l.b16 %v359
    %v1248 = vunpack.c.h.b16 %v359
    %v1249 = vunpack.c.l.b16 %v360
    %v1250 = vunpack.c.h.b16 %v360
    %v1251 = vunpack.c.l.b16 %v361
    %v1252 = vunpack.c.h.b16 %v361
    %v1253 = vunpack.c.l.b16 %v362
    %v1254 = vunpack.c.h.b16 %v362
    %v1255 = vunpack.c.l.b16 %v363
    %v1256 = vunpack.c.h.b16 %v363
    %v1257 = vunpack.c.l.b16 %v364
    %v1258 = vunpack.c.h.b16 %v364
    %v1259 = vunpack.c.l.b16 %v365
    %v1260 = vunpack.c.h.b16 %v365
    %v1261 = vunpack.c.l.b16 %v366
    %v1262 = vunpack.c.h.b16 %v366
    %v1263 = vunpack.c.l.b16 %v367
    %v1264 = vunpack.c.h.b16 %v367
    %v1265 = vunpack.c.l.b16 %v368
    %v1266 = vunpack.c.h.b16 %v368
    %v1267 = vunpack.c.l.b16 %v369
    %v1268 = vunpack.c.h.b16 %v369
    %v1269 = vunpack.c.l.b16 %v370
    %v1270 = vunpack.c.h.b16 %v370
    %v1271 = vunpack.c.l.b16 %v371
    %v1272 = vunpack.c.h.b16 %v371
    %v1273 = vunpack.c.l.b16 %v372
    %v1274 = vunpack.c.h.b16 %v372
    %v1275 = vunpack.c.l.b16 %v373
    %v1276 = vunpack.c.h.b16 %v373
    %v1277 = vunpack.c.l.b16 %v374
    %v1278 = vunpack.c.h.b16 %v374
    %v1279 = vunpack.c.l.b16 %v375
    %v1280 = vunpack.c.h.b16 %v375
    %v1281 = vunpack.c.l.b16 %v376
    %v1282 = vunpack.c.h.b16 %v376
    %v1283 = vunpack.c.l.b16 %v377
    %v1284 = vunpack.c.h.b16 %v377
    %v1285 = vunpack.c.l.b16 %v378
    %v1286 = vunpack.c.h.b16 %v378
    %v1287 = vunpack.c.l.b16 %v379
    %v1288 = vunpack.c.h.b16 %v379
    %v1289 = vunpack.c.l.b16 %v380
    %v1290 = vunpack.c.h.b16 %v380
    %v1291 = vunpack.c.l.b16 %v381
    %v1292 = vunpack.c.h.b16 %v381
    %v1293 = vunpack.c.l.b16 %v382
    %v1294 = vunpack.c.h.b16 %v382
    %v1295 = vunpack.c.l.b16 %v383
    %v1296 = vunpack.c.h.b16 %v383
    %v1297 = vunpack.c.l.b16 %v384
    %v1298 = vunpack.c.h.b16 %v384
    %v1299 = vunpack.c.l.b16 %v385
    %v1300 = vunpack.c.h.b16 %v385
    %v1301 = vunpack.c.l.b16 %v386
    %v1302 = vunpack.c.h.b16 %v386
    %v1303 = vunpack.c.l.b16 %v387
    %v1304 = vunpack.c.h.b16 %v387
    %v1305 = vunpack.c.l.b16 %v388
    %v1306 = vunpack.c.h.b16 %v388
    %v1307 = vunpack.c.l.b16 %v389
    %v1308 = vunpack.c.h.b16 %v389
    %v1309 = vunpack.c.l.b16 %v390
    %v1310 = vunpack.c.h.b16 %v390
    %v1311 = vunpack.c.l.b16 %v391
    %v1312 = vunpack.c.h.b16 %v391
    %v1313 = vunpack.c.l.b16 %v392
    %v1314 = vunpack.c.h.b16 %v392
    %v1315 = vunpack.c.l.b16 %v393
    %v1316 = vunpack.c.h.b16 %v393
    %v1317 = vunpack.c.l.b16 %v394
    %v1318 = vunpack.c.h.b16 %v394
    %v1319 = vunpack.c.l.b16 %v395
    %v1320 = vunpack.c.h.b16 %v395
    %v1321 = vunpack.c.l.b16 %v396
    %v1322 = vunpack.c.h.b16 %v396
    %v1323 = vpack.c.b16 %v753, %v747
    %v1324 = vpack.c.b16 %v754, %v748
    %v1325 = vpack.c.b16 %v755, %v749
    %v1326 = vpack.c.b16 %v756, %v750
    %v1327 = vpack.c.b16 %v757, %v751
    %v1328 = vpack.c.b16 %v758, %v752
    %v1329 = vpack.c.b16 %v765, %v759
    %v1330 = vpack.c.b16 %v766, %v760
    %v1331 = vpack.c.b16 %v767, %v761
    %v1332 = vpack.c.b16 %v768, %v762
    %v1333 = vpack.c.b16 %v769, %v763
    %v1334 = vpack.c.b16 %v770, %v764
    %v1335 = vpack.c.b16 %v777, %v771
    %v1336 = vpack.c.b16 %v778, %v772
    %v1337 = vpack.c.b16 %v779, %v773
    %v1338 = vpack.c.b16 %v780, %v774
    %v1339 = vpack.c.b16 %v781, %v775
    %v1340 = vpack.c.b16 %v782, %v776
    %v1341 = vpack.c.b16 %v789, %v783
    %v1342 = vpack.c.b16 %v790, %v784
    %v1343 = vpack.c.b16 %v791, %v785
    %v1344 = vpack.c.b16 %v792, %v786
    %v1345 = vpack.c.b16 %v793, %v787
    %v1346 = vpack.c.b16 %v794, %v788
    %v1347 = vpack.c.b16 %v801, %v795
    %v1348 = vpack.c.b16 %v802, %v796
    %v1349 = vpack.c.b16 %v803, %v797
    %v1350 = vpack.c.b16 %v804, %v798
    %v1351 = vpack.c.b16 %v805, %v799
    %v1352 = vpack.c.b16 %v806, %v800
    %v1353 = vpack.c.b16 %v813, %v807
    %v1354 = vpack.c.b16 %v814, %v808
    %v1355 = vpack.c.b16 %v815, %v809
    %v1356 = vpack.c.b16 %v816, %v810
    %v1357 = vpack.c.b16 %v817, %v811
    %v1358 = vpack.c.b16 %v818, %v812
    %v1359 = vpack.c.b16 %v825, %v819
    %v1360 = vpack.c.b16 %v826, %v820
    %v1361 = vpack.c.b16 %v827, %v821
    %v1362 = vpack.c.b16 %v828, %v822
    %v1363 = vpack.c.b16 %v829, %v823
    %v1364 = vpack.c.b16 %v830, %v824
    %v1365 = vpack.c.b16 %v837, %v831
    %v1366 = vpack.c.b16 %v838, %v832
    %v1367 = vpack.c.b16 %v839, %v833
    %v1368 = vpack.c.b16 %v840, %v834
    %v1369 = vpack.c.b16 %v841, %v835
    %v1370 = vpack.c.b16 %v842, %v836
    %v1371 = vpack.c.b16 %v849, %v843
    %v1372 = vpack.c.b16 %v850, %v844
    %v1373 = vpack.c.b16 %v851, %v845
    %v1374 = vpack.c.b16 %v852, %v846
    %v1375 = vpack.c.b16 %v853, %v847
    %v1376 = vpack.c.b16 %v854, %v848
    %v1377 = vpack.c.b16 %v861, %v855
    %v1378 = vpack.c.b16 %v862, %v856
    %v1379 = vpack.c.b16 %v863, %v857
    %v1380 = vpack.c.b16 %v864, %v858
    %v1381 = vpack.c.b16 %v865, %v859
    %v1382 = vpack.c.b16 %v866, %v860
    %v1383 = vpack.c.b16 %v873, %v867
    %v1384 = vpack.c.b16 %v874, %v868
    %v1385 = vpack.c.b16 %v875, %v869
    %v1386 = vpack.c.b16 %v876, %v870
    %v1387 = vpack.c.b16 %v877, %v871
    %v1388 = vpack.c.b16 %v878, %v872
    %v1389 = vpack.c.b16 %v885, %v879
    %v1390 = vpack.c.b16 %v886, %v880
    %v1391 = vpack.c.b16 %v887, %v881
    %v1392 = vpack.c.b16 %v888, %v882
    %v1393 = vpack.c.b16 %v889, %v883
    %v1394 = vpack.c.b16 %v890, %v884
    %v1395 = vpack.c.b16 %v897, %v891
    %v1396 = vpack.c.b16 %v898, %v892
    %v1397 = vpack.c.b16 %v899, %v893
    %v1398 = vpack.c.b16 %v900, %v894
    %v1399 = vpack.c.b16 %v901, %v895
    %v1400 = vpack.c.b16 %v902, %v896
    %v1401 = vpack.c.b16 %v909, %v903
    %v1402 = vpack.c.b16 %v910, %v904
    %v1403 = vpack.c.b16 %v911, %v905
    %v1404 = vpack.c.b16 %v912, %v906
    %v1405 = vpack.c.b16 %v913, %v907
    %v1406 = vpack.c.b16 %v914, %v908
    %v1407 = vpack.c.b16 %v921, %v915
    %v1408 = vpack.c.b16 %v922, %v916
    %v1409 = vpack.c.b16 %v923, %v917
    %v1410 = vpack.c.b16 %v924, %v918
    %v1411 = vpack.c.b16 %v925, %v919
    %v1412 = vpack.c.b16 %v926, %v920
    %v1413 = vpack.c.b16 %v933, %v927
    %v1414 = vpack.c.b16 %v934, %v928
    %v1415 = vpack.c.b16 %v935, %v929
    %v1416 = vpack.c.b16 %v936, %v930
    %v1417 = vpack.c.b16 %v937, %v931
    %v1418 = vpack.c.b16 %v938, %v932
    %v1419 = vpack.c.b16 %v945, %v939
    %v1420 = vpack.c.b16 %v946, %v940
    %v1421 = vpack.c.b16 %v947, %v941
    %v1422 = vpack.c.b16 %v948, %v942
    %v1423 = vpack.c.b16 %v949, %v943
    %v1424 = vpack.c.b16 %v950, %v944
    %v1425 = vpack.c.b16 %v957, %v951
    %v1426 = vpack.c.b16 %v958, %v952
    %v1427 = vpack.c.b16 %v959, %v953
    %v1428 = vpack.c.b16 %v960, %v954
    %v1429 = vpack.c.b16 %v961, %v955
    %v1430 = vpack.c.b16 %v962, %v956
    %v1431 = vpack.c.b16 %v969, %v963
    %v1432 = vpack.c.b16 %v970, %v964
    %v1433 = vpack.c.b16 %v971, %v965
    %v1434 = vpack.c.b16 %v972, %v966
    %v1435 = vpack.c.b16 %v973, %v967
    %v1436 = vpack.c.b16 %v974, %v968
    %v1437 = vpack.c.b16 %v981, %v975
    %v1438 = vpack.c.b16 %v982, %v976
    %v1439 = vpack.c.b16 %v983, %v977
    %v1440 = vpack.c.b16 %v984, %v978
    %v1441 = vpack.c.b16 %v985, %v979
    %v1442 = vpack.c.b16 %v986, %v980
    %v1443 = vpack.c.b16 %v993, %v987
    %v1444 = vpack.c.b16 %v994, %v988
    %v1445 = vpack.c.b16 %v995, %v989
    %v1446 = vpack.c.b16 %v996, %v990
    %v1447 = vpack.c.b16 %v997, %v991
    %v1448 = vpack.c.b16 %v998, %v992
    %v1449 = vpack.c.b16 %v1005, %v999
    %v1450 = vpack.c.b16 %v1006, %v1000
    %v1451 = vpack.c.b16 %v1007, %v1001
    %v1452 = vpack.c.b16 %v1008, %v1002
    %v1453 = vpack.c.b16 %v1009, %v1003
    %v1454 = vpack.c.b16 %v1010, %v1004
    %v1455 = vpack.c.b16 %v1017, %v1011
    %v1456 = vpack.c.b16 %v1018, %v1012
    %v1457 = vpack.c.b16 %v1019, %v1013
    %v1458 = vpack.c.b16 %v1020, %v1014
    %v1459 = vpack.c.b16 %v1021, %v1015
    %v1460 = vpack.c.b16 %v1022, %v1016
    %v1461 = vpack.c.b16 %v1029, %v1023
    %v1462 = vpack.c.b16 %v1030, %v1024
    %v1463 = vpack.c.b16 %v1031, %v1025
    %v1464 = vpack.c.b16 %v1032, %v1026
    %v1465 = vpack.c.b16 %v1033, %v1027
    %v1466 = vpack.c.b16 %v1034, %v1028
    %v1467 = vpack.c.b16 %v1041, %v1035
    %v1468 = vpack.c.b16 %v1042, %v1036
    %v1469 = vpack.c.b16 %v1043, %v1037
    %v1470 = vpack.c.b16 %v1044, %v1038
    %v1471 = vpack.c.b16 %v1045, %v1039
    %v1472 = vpack.c.b16 %v1046, %v1040
    %v1473 = vpack.c.b16 %v1053, %v1047
    %v1474 = vpack.c.b16 %v1054, %v1048
    %v1475 = vpack.c.b16 %v1055, %v1049
    %v1476 = vpack.c.b16 %v1056, %v1050
    %v1477 = vpack.c.b16 %v1057, %v1051
    %v1478 = vpack.c.b16 %v1058, %v1052
    %v1479 = vpack.c.b16 %v1065, %v1059
    %v1480 = vpack.c.b16 %v1066, %v1060
    %v1481 = vpack.c.b16 %v1067, %v1061
    %v1482 = vpack.c.b16 %v1068, %v1062
    %v1483 = vpack.c.b16 %v1069, %v1063
    %v1484 = vpack.c.b16 %v1070, %v1064
    %v1485 = vpack.c.b16 %v1077, %v1071
    %v1486 = vpack.c.b16 %v1078, %v1072
    %v1487 = vpack.c.b16 %v1079, %v1073
    %v1488 = vpack.c.b16 %v1080, %v1074
    %v1489 = vpack.c.b16 %v1081, %v1075
    %v1490 = vpack.c.b16 %v1082, %v1076
    %v1491 = vpack.c.b16 %v1089, %v1083
    %v1492 = vpack.c.b16 %v1090, %v1084
    %v1493 = vpack.c.b16 %v1091, %v1085
    %v1494 = vpack.c.b16 %v1092, %v1086
    %v1495 = vpack.c.b16 %v1093, %v1087
    %v1496 = vpack.c.b16 %v1094, %v1088
    %v1497 = vpack.c.b16 %v1101, %v1095
    %v1498 = vpack.c.b16 %v1102, %v1096
    %v1499 = vpack.c.b16 %v1103, %v1097
    %v1500 = vpack.c.b16 %v1104, %v1098
    %v1501 = vpack.c.b16 %v1105, %v1099
    %v1502 = vpack.c.b16 %v1106, %v1100
    %v1503 = vpack.c.b16 %v1113, %v1107
    %v1504 = vpack.c.b16 %v1114, %v1108
    %v1505 = vpack.c.b16 %v1115, %v1109
    %v1506 = vpack.c.b16 %v1116, %v1110
    %v1507 = vpack.c.b16 %v1117, %v1111
    %v1508 = vpack.c.b16 %v1118, %v1112
    %v1509 = vpack.c.b16 %v1125, %v1119
    %v1510 = vpack.c.b16 %v1126, %v1120
    %v1511 = vpack.c.b16 %v1127, %v1121
    %v1512 = vpack.c.b16 %v1128, %v1122
    %v1513 = vpack.c.b16 %v1129, %v1123
    %v1514 = vpack.c.b16 %v1130, %v1124
    %v1515 = vpack.c.b16 %v1137, %v1131
    %v1516 = vpack.c.b16 %v1138, %v1132
    %v1517 = vpack.c.b16 %v1139, %v1133
    %v1518 = vpack.c.b16 %v1140, %v1134
    %v1519 = vpack.c.b16 %v1141, %v1135
    %v1520 = vpack.c.b16 %v1142, %v1136
    %v1521 = vpack.c.b16 %v1149, %v1143
    %v1522 = vpack.c.b16 %v1150, %v1144
    %v1523 = vpack.c.b16 %v1151, %v1145
    %v1524 = vpack.c.b16 %v1152, %v1146
    %v1525 = vpack.c.b16 %v1153, %v1147
    %v1526 = vpack.c.b16 %v1154, %v1148
    %v1527 = vpack.c.b16 %v1161, %v1155
    %v1528 = vpack.c.b16 %v1162, %v1156
    %v1529 = vpack.c.b16 %v1163, %v1157
    %v1530 = vpack.c.b16 %v1164, %v1158
    %v1531 = vpack.c.b16 %v1165, %v1159
    %v1532 = vpack.c.b16 %v1166, %v1160
    %v1533 = vpack.c.b16 %v1173, %v1167
    %v1534 = vpack.c.b16 %v1174, %v1168
    %v1535 = vpack.c.b16 %v1175, %v1169
    %v1536 = vpack.c.b16 %v1176, %v1170
    %v1537 = vpack.c.b16 %v1177, %v1171
    %v1538 = vpack.c.b16 %v1178, %v1172
    %v1539 = vpack.c.b16 %v1185, %v1179
    %v1540 = vpack.c.b16 %v1186, %v1180
    %v1541 = vpack.c.b16 %v1187, %v1181
    %v1542 = vpack.c.b16 %v1188, %v1182
    %v1543 = vpack.c.b16 %v1189, %v1183
    %v1544 = vpack.c.b16 %v1190, %v1184
    %v1545 = vpack.c.b16 %v1197, %v1191
    %v1546 = vpack.c.b16 %v1198, %v1192
    %v1547 = vpack.c.b16 %v1199, %v1193
    %v1548 = vpack.c.b16 %v1200, %v1194
    %v1549 = vpack.c.b16 %v1201, %v1195
    %v1550 = vpack.c.b16 %v1202, %v1196
    %v1551 = vpack.c.b16 %v1209, %v1203
    %v1552 = vpack.c.b16 %v1210, %v1204
    %v1553 = vpack.c.b16 %v1211, %v1205
    %v1554 = vpack.c.b16 %v1212, %v1206
    %v1555 = vpack.c.b16 %v1213, %v1207
    %v1556 = vpack.c.b16 %v1214, %v1208
    %v1557 = vpack.c.b16 %v1221, %v1215
    %v1558 = vpack.c.b16 %v1222, %v1216
    %v1559 = vpack.c.b16 %v1223, %v1217
    %v1560 = vpack.c.b16 %v1224, %v1218
    %v1561 = vpack.c.b16 %v1225, %v1219
    %v1562 = vpack.c.b16 %v1226, %v1220
    %v1563 = vpack.c.b16 %v1233, %v1227
    %v1564 = vpack.c.b16 %v1234, %v1228
    %v1565 = vpack.c.b16 %v1235, %v1229
    %v1566 = vpack.c.b16 %v1236, %v1230
    %v1567 = vpack.c.b16 %v1237, %v1231
    %v1568 = vpack.c.b16 %v1238, %v1232
    %v1569 = vpack.c.b16 %v1245, %v1239
    %v1570 = vpack.c.b16 %v1246, %v1240
    %v1571 = vpack.c.b16 %v1247, %v1241
    %v1572 = vpack.c.b16 %v1248, %v1242
    %v1573 = vpack.c.b16 %v1249, %v1243
    %v1574 = vpack.c.b16 %v1250, %v1244
    %v1575 = vpack.c.b16 %v1257, %v1251
    %v1576 = vpack.c.b16 %v1258, %v1252
    %v1577 = vpack.c.b16 %v1259, %v1253
    %v1578 = vpack.c.b16 %v1260, %v1254
    %v1579 = vpack.c.b16 %v1261, %v1255
    %v1580 = vpack.c.b16 %v1262, %v1256
    %v1581 = vpack.c.b16 %v1269, %v1263
    %v1582 = vpack.c.b16 %v1270, %v1264
    %v1583 = vpack.c.b16 %v1271, %v1265
    %v1584 = vpack.c.b16 %v1272, %v1266
    %v1585 = vpack.c.b16 %v1273, %v1267
    %v1586 = vpack.c.b16 %v1274, %v1268
    %v1587 = vpack.c.b16 %v1281, %v1275
    %v1588 = vpack.c.b16 %v1282, %v1276
    %v1589 = vpack.c.b16 %v1283, %v1277
    %v1590 = vpack.c.b16 %v1284, %v1278
    %v1591 = vpack.c.b16 %v1285, %v1279
    %v1592 = vpack.c.b16 %v1286, %v1280
    %v1593 = vpack.c.b16 %v1293, %v1287
    %v1594 = vpack.c.b16 %v1294, %v1288
    %v1595 = vpack.c.b16 %v1295, %v1289
    %v1596 = vpack.c.b16 %v1296, %v1290
    %v1597 = vpack.c.b16 %v1297, %v1291
    %v1598 = vpack.c.b16 %v1298, %v1292
    %v1599 = vpack.c.b16 %v1305, %v1299
    %v1600 = vpack.c.b16 %v1306, %v1300
    %v1601 = vpack.c.b16 %v1307, %v1301
    %v1602 = vpack.c.b16 %v1308, %v1302
    %v1603 = vpack.c.b16 %v1309, %v1303
    %v1604 = vpack.c.b16 %v1310, %v1304
    %v1605 = vpack.c.b16 %v1317, %v1311
    %v1606 = vpack.c.b16 %v1318, %v1312
    %v1607 = vpack.c.b16 %v1319, %v1313
    %v1608 = vpack.c.b16 %v1320, %v1314
    %v1609 = vpack.c.b16 %v1321, %v1315
    %v1610 = vpack.c.b16 %v1322, %v1316
    %1899 = vmatprep.subr.bf16.mxu0 %v1324
    %1900 = vmatpush1.bf16.msra.mxu0 %v1323
    %1901 = vmatprep.subr.bf16.mxu0 %v1330
    %1902 = vmatpush1.bf16.msra.mxu0 %v1329
    %1903 = vmatprep.subr.bf16.mxu0 %v1336
    %1904 = vmatpush1.bf16.msra.mxu0 %v1335
    %1905 = vmatprep.subr.bf16.mxu0 %v1342
    %1906 = vmatpush1.bf16.msra.mxu0 %v1341
    %1907 = vmatprep.subr.bf16.mxu0 %v1348
    %1908 = vmatpush1.bf16.msra.mxu0 %v1347
    %1909 = vmatprep.subr.bf16.mxu0 %v1354
    %1910 = vmatpush1.bf16.msra.mxu0 %v1353
    %1911 = vmatprep.subr.bf16.mxu0 %v1360
    %1912 = vmatpush1.bf16.msra.mxu0 %v1359
    %1913 = vmatprep.subr.bf16.mxu0 %v1366
    %1914 = vmatpush1.bf16.msra.mxu0 %v1365
    %1915 = vmatprep.subr.bf16.mxu0 %v1372
    %1916 = vmatpush1.bf16.msra.mxu0 %v1371
    %1917 = vmatprep.subr.bf16.mxu0 %v1378
    %1918 = vmatpush1.bf16.msra.mxu0 %v1377
    %1919 = vmatprep.subr.bf16.mxu0 %v1384
    %1920 = vmatpush1.bf16.msra.mxu0 %v1383
    %1921 = vmatprep.subr.bf16.mxu0 %v1390
    %1922 = vmatpush1.bf16.msra.mxu0 %v1389
    %1923 = vmatprep.subr.bf16.mxu0 %v1396
    %1924 = vmatpush1.bf16.msra.mxu0 %v1395
    %1925 = vmatprep.subr.bf16.mxu0 %v1402
    %1926 = vmatpush1.bf16.msra.mxu0 %v1401
    %1927 = vmatprep.subr.bf16.mxu0 %v1408
    %1928 = vmatpush1.bf16.msra.mxu0 %v1407
    %1929 = vmatprep.subr.bf16.mxu0 %v1414
    %1930 = vmatpush1.bf16.msra.mxu0 %v1413
    %1931 = vmatprep.mubr.bf16.mxu0 %v448
    %1932 = vmatmul.mubr.bf16.gmra.mrb[0].mxu0 %v447
    %v1933 = vpop.f32.mrb[0].mxu0
    %v1934 = vadd.f32 %v402, %v1933
    %v1935 = vpop.f32.mrb[0].mxu0
    %v1936 = vadd.f32 %v406, %v1935
    %v1937 = vpop.f32.mrb[0].mxu0
    %v1938 = vadd.f32 %v402, %v1937
    %v1939 = vpop.f32.mrb[0].mxu0
    %v1940 = vadd.f32 %v406, %v1939
    %1941 = vdwg.mxu0
    %1942 = vmatprep.subr.bf16.mxu0 %v1420
    %1943 = vmatpush1.bf16.msra.mxu0 %v1419
    %1944 = vmatprep.subr.bf16.mxu0 %v1426
    %1945 = vmatpush1.bf16.msra.mxu0 %v1425
    %1946 = vmatprep.subr.bf16.mxu0 %v1432
    %1947 = vmatpush1.bf16.msra.mxu0 %v1431
    %1948 = vmatprep.subr.bf16.mxu0 %v1438
    %1949 = vmatpush1.bf16.msra.mxu0 %v1437
    %1950 = vmatprep.subr.bf16.mxu0 %v1444
    %1951 = vmatpush1.bf16.msra.mxu0 %v1443
    %1952 = vmatprep.subr.bf16.mxu0 %v1450
    %1953 = vmatpush1.bf16.msra.mxu0 %v1449
    %1954 = vmatprep.subr.bf16.mxu0 %v1456
    %1955 = vmatpush1.bf16.msra.mxu0 %v1455
    %1956 = vmatprep.subr.bf16.mxu0 %v1462
    %1957 = vmatpush1.bf16.msra.mxu0 %v1461
    %1958 = vmatprep.subr.bf16.mxu0 %v1468
    %1959 = vmatpush1.bf16.msra.mxu0 %v1467
    %1960 = vmatprep.subr.bf16.mxu0 %v1474
    %1961 = vmatpush1.bf16.msra.mxu0 %v1473
    %1962 = vmatprep.subr.bf16.mxu0 %v1480
    %1963 = vmatpush1.bf16.msra.mxu0 %v1479
    %1964 = vmatprep.subr.bf16.mxu0 %v1486
    %1965 = vmatpush1.bf16.msra.mxu0 %v1485
    %1966 = vmatprep.subr.bf16.mxu0 %v1492
    %1967 = vmatpush1.bf16.msra.mxu0 %v1491
    %1968 = vmatprep.subr.bf16.mxu0 %v1498
    %1969 = vmatpush1.bf16.msra.mxu0 %v1497
    %1970 = vmatprep.subr.bf16.mxu0 %v1504
    %1971 = vmatpush1.bf16.msra.mxu0 %v1503
    %1972 = vmatprep.subr.bf16.mxu0 %v1510
    %1973 = vmatpush1.bf16.msra.mxu0 %v1509
    %1974 = vmatprep.mubr.bf16.mxu0 %v450
    %1975 = vmatmul.mubr.bf16.gmra.mrb[0].mxu0 %v449
    %v1976 = vpop.f32.mrb[0].mxu0
    %v1977 = vadd.f32 %v1934, %v1976
    %v1978 = vpop.f32.mrb[0].mxu0
    %v1979 = vadd.f32 %v1936, %v1978
    %v1980 = vpop.f32.mrb[0].mxu0
    %v1981 = vadd.f32 %v1938, %v1980
    %v1982 = vpop.f32.mrb[0].mxu0
    %v1983 = vadd.f32 %v1940, %v1982
    %1984 = vdwg.mxu0
    %1985 = vmatprep.subr.bf16.mxu0 %v1516
    %1986 = vmatpush1.bf16.msra.mxu0 %v1515
    %1987 = vmatprep.subr.bf16.mxu0 %v1522
    %1988 = vmatpush1.bf16.msra.mxu0 %v1521
    %1989 = vmatprep.subr.bf16.mxu0 %v1528
    %1990 = vmatpush1.bf16.msra.mxu0 %v1527
    %1991 = vmatprep.subr.bf16.mxu0 %v1534
    %1992 = vmatpush1.bf16.msra.mxu0 %v1533
    %1993 = vmatprep.subr.bf16.mxu0 %v1540
    %1994 = vmatpush1.bf16.msra.mxu0 %v1539
    %1995 = vmatprep.subr.bf16.mxu0 %v1546
    %1996 = vmatpush1.bf16.msra.mxu0 %v1545
    %1997 = vmatprep.subr.bf16.mxu0 %v1552
    %1998 = vmatpush1.bf16.msra.mxu0 %v1551
    %1999 = vmatprep.subr.bf16.mxu0 %v1558
    %2000 = vmatpush1.bf16.msra.mxu0 %v1557
    %2001 = vmatprep.subr.bf16.mxu0 %v1564
    %2002 = vmatpush1.bf16.msra.mxu0 %v1563
    %2003 = vmatprep.subr.bf16.mxu0 %v1570
    %2004 = vmatpush1.bf16.msra.mxu0 %v1569
    %2005 = vmatprep.subr.bf16.mxu0 %v1576
    %2006 = vmatpush1.bf16.msra.mxu0 %v1575
    %2007 = vmatprep.subr.bf16.mxu0 %v1582
    %2008 = vmatpush1.bf16.msra.mxu0 %v1581
    %2009 = vmatprep.subr.bf16.mxu0 %v1588
    %2010 = vmatpush1.bf16.msra.mxu0 %v1587
    %2011 = vmatprep.subr.bf16.mxu0 %v1594
    %2012 = vmatpush1.bf16.msra.mxu0 %v1593
    %2013 = vmatprep.subr.bf16.mxu0 %v1600
    %2014 = vmatpush1.bf16.msra.mxu0 %v1599
    %2015 = vmatprep.subr.bf16.mxu0 %v1606
    %2016 = vmatpush1.bf16.msra.mxu0 %v1605
    %2017 = vmatprep.mubr.bf16.mxu0 %v452
    %2018 = vmatmul.mubr.bf16.gmra.mrb[0].mxu0 %v451
    %v2019 = vpop.f32.mrb[0].mxu0
    %v2020 = vadd.f32 %v1977, %v2019
    %v2021 = vpop.f32.mrb[0].mxu0
    %v2022 = vadd.f32 %v1979, %v2021
    %v2023 = vpop.f32.mrb[0].mxu0
    %v2024 = vadd.f32 %v1981, %v2023
    %v2025 = vpop.f32.mrb[0].mxu0
    %v2026 = vadd.f32 %v1983, %v2025
    %2027 = vdwg.mxu0
    %2028 = vmatprep.subr.bf16.mxu0 %v1326
    %2029 = vmatpush1.bf16.msra.mxu0 %v1325
    %2030 = vmatprep.subr.bf16.mxu0 %v1332
    %2031 = vmatpush1.bf16.msra.mxu0 %v1331
    %2032 = vmatprep.subr.bf16.mxu0 %v1338
    %2033 = vmatpush1.bf16.msra.mxu0 %v1337
    %2034 = vmatprep.subr.bf16.mxu0 %v1344
    %2035 = vmatpush1.bf16.msra.mxu0 %v1343
    %2036 = vmatprep.subr.bf16.mxu0 %v1350
    %2037 = vmatpush1.bf16.msra.mxu0 %v1349
    %2038 = vmatprep.subr.bf16.mxu0 %v1356
    %2039 = vmatpush1.bf16.msra.mxu0 %v1355
    %2040 = vmatprep.subr.bf16.mxu0 %v1362
    %2041 = vmatpush1.bf16.msra.mxu0 %v1361
    %2042 = vmatprep.subr.bf16.mxu0 %v1368
    %2043 = vmatpush1.bf16.msra.mxu0 %v1367
    %2044 = vmatprep.subr.bf16.mxu0 %v1374
    %2045 = vmatpush1.bf16.msra.mxu0 %v1373
    %2046 = vmatprep.subr.bf16.mxu0 %v1380
    %2047 = vmatpush1.bf16.msra.mxu0 %v1379
    %2048 = vmatprep.subr.bf16.mxu0 %v1386
    %2049 = vmatpush1.bf16.msra.mxu0 %v1385
    %2050 = vmatprep.subr.bf16.mxu0 %v1392
    %2051 = vmatpush1.bf16.msra.mxu0 %v1391
    %2052 = vmatprep.subr.bf16.mxu0 %v1398
    %2053 = vmatpush1.bf16.msra.mxu0 %v1397
    %2054 = vmatprep.subr.bf16.mxu0 %v1404
    %2055 = vmatpush1.bf16.msra.mxu0 %v1403
    %2056 = vmatprep.subr.bf16.mxu0 %v1410
    %2057 = vmatpush1.bf16.msra.mxu0 %v1409
    %2058 = vmatprep.subr.bf16.mxu0 %v1416
    %2059 = vmatpush1.bf16.msra.mxu0 %v1415
    %2060 = vmatprep.mubr.bf16.mxu0 %v448
    %2061 = vmatmul.mubr.bf16.gmra.mrb[0].mxu0 %v447
    %v2062 = vpop.f32.mrb[0].mxu0
    %v2063 = vadd.f32 %v410, %v2062
    %v2064 = vpop.f32.mrb[0].mxu0
    %v2065 = vadd.f32 %v414, %v2064
    %v2066 = vpop.f32.mrb[0].mxu0
    %v2067 = vadd.f32 %v410, %v2066
    %v2068 = vpop.f32.mrb[0].mxu0
    %v2069 = vadd.f32 %v414, %v2068
    %2070 = vdwg.mxu0
    %2071 = vmatprep.subr.bf16.mxu0 %v1422
    %2072 = vmatpush1.bf16.msra.mxu0 %v1421
    %2073 = vmatprep.subr.bf16.mxu0 %v1428
    %2074 = vmatpush1.bf16.msra.mxu0 %v1427
    %2075 = vmatprep.subr.bf16.mxu0 %v1434
    %2076 = vmatpush1.bf16.msra.mxu0 %v1433
    %2077 = vmatprep.subr.bf16.mxu0 %v1440
    %2078 = vmatpush1.bf16.msra.mxu0 %v1439
    %2079 = vmatprep.subr.bf16.mxu0 %v1446
    %2080 = vmatpush1.bf16.msra.mxu0 %v1445
    %2081 = vmatprep.subr.bf16.mxu0 %v1452
    %2082 = vmatpush1.bf16.msra.mxu0 %v1451
    %2083 = vmatprep.subr.bf16.mxu0 %v1458
    %2084 = vmatpush1.bf16.msra.mxu0 %v1457
    %2085 = vmatprep.subr.bf16.mxu0 %v1464
    %2086 = vmatpush1.bf16.msra.mxu0 %v1463
    %2087 = vmatprep.subr.bf16.mxu0 %v1470
    %2088 = vmatpush1.bf16.msra.mxu0 %v1469
    %2089 = vmatprep.subr.bf16.mxu0 %v1476
    %2090 = vmatpush1.bf16.msra.mxu0 %v1475
    %2091 = vmatprep.subr.bf16.mxu0 %v1482
    %2092 = vmatpush1.bf16.msra.mxu0 %v1481
    %2093 = vmatprep.subr.bf16.mxu0 %v1488
    %2094 = vmatpush1.bf16.msra.mxu0 %v1487
    %2095 = vmatprep.subr.bf16.mxu0 %v1494
    %2096 = vmatpush1.bf16.msra.mxu0 %v1493
    %2097 = vmatprep.subr.bf16.mxu0 %v1500
    %2098 = vmatpush1.bf16.msra.mxu0 %v1499
    %2099 = vmatprep.subr.bf16.mxu0 %v1506
    %2100 = vmatpush1.bf16.msra.mxu0 %v1505
    %2101 = vmatprep.subr.bf16.mxu0 %v1512
    %2102 = vmatpush1.bf16.msra.mxu0 %v1511
    %2103 = vmatprep.mubr.bf16.mxu0 %v450
    %2104 = vmatmul.mubr.bf16.gmra.mrb[0].mxu0 %v449
    %v2105 = vpop.f32.mrb[0].mxu0
    %v2106 = vadd.f32 %v2063, %v2105
    %v2107 = vpop.f32.mrb[0].mxu0
    %v2108 = vadd.f32 %v2065, %v2107
    %v2109 = vpop.f32.mrb[0].mxu0
    %v2110 = vadd.f32 %v2067, %v2109
    %v2111 = vpop.f32.mrb[0].mxu0
    %v2112 = vadd.f32 %v2069, %v2111
    %2113 = vdwg.mxu0
    %2114 = vmatprep.subr.bf16.mxu0 %v1518
    %2115 = vmatpush1.bf16.msra.mxu0 %v1517
    %2116 = vmatprep.subr.bf16.mxu0 %v1524
    %2117 = vmatpush1.bf16.msra.mxu0 %v1523
    %2118 = vmatprep.subr.bf16.mxu0 %v1530
    %2119 = vmatpush1.bf16.msra.mxu0 %v1529
    %2120 = vmatprep.subr.bf16.mxu0 %v1536
    %2121 = vmatpush1.bf16.msra.mxu0 %v1535
    %2122 = vmatprep.subr.bf16.mxu0 %v1542
    %2123 = vmatpush1.bf16.msra.mxu0 %v1541
    %2124 = vmatprep.subr.bf16.mxu0 %v1548
    %2125 = vmatpush1.bf16.msra.mxu0 %v1547
    %2126 = vmatprep.subr.bf16.mxu0 %v1554
    %2127 = vmatpush1.bf16.msra.mxu0 %v1553
    %2128 = vmatprep.subr.bf16.mxu0 %v1560
    %2129 = vmatpush1.bf16.msra.mxu0 %v1559
    %2130 = vmatprep.subr.bf16.mxu0 %v1566
    %2131 = vmatpush1.bf16.msra.mxu0 %v1565
    %2132 = vmatprep.subr.bf16.mxu0 %v1572
    %2133 = vmatpush1.bf16.msra.mxu0 %v1571
    %2134 = vmatprep.subr.bf16.mxu0 %v1578
    %2135 = vmatpush1.bf16.msra.mxu0 %v1577
    %2136 = vmatprep.subr.bf16.mxu0 %v1584
    %2137 = vmatpush1.bf16.msra.mxu0 %v1583
    %2138 = vmatprep.subr.bf16.mxu0 %v1590
    %2139 = vmatpush1.bf16.msra.mxu0 %v1589
    %2140 = vmatprep.subr.bf16.mxu0 %v1596
    %2141 = vmatpush1.bf16.msra.mxu0 %v1595
    %2142 = vmatprep.subr.bf16.mxu0 %v1602
    %2143 = vmatpush1.bf16.msra.mxu0 %v1601
    %2144 = vmatprep.subr.bf16.mxu0 %v1608
    %2145 = vmatpush1.bf16.msra.mxu0 %v1607
    %2146 = vmatprep.mubr.bf16.mxu0 %v452
    %2147 = vmatmul.mubr.bf16.gmra.mrb[0].mxu0 %v451
    %v2148 = vpop.f32.mrb[0].mxu0
    %v2149 = vadd.f32 %v2106, %v2148
    %v2150 = vpop.f32.mrb[0].mxu0
    %v2151 = vadd.f32 %v2108, %v2150
    %v2152 = vpop.f32.mrb[0].mxu0
    %v2153 = vadd.f32 %v2110, %v2152
    %v2154 = vpop.f32.mrb[0].mxu0
    %v2155 = vadd.f32 %v2112, %v2154
    %2156 = vdwg.mxu0
    %2157 = vmatprep.subr.bf16.mxu0 %v1328
    %2158 = vmatpush1.bf16.msra.mxu0 %v1327
    %2159 = vmatprep.subr.bf16.mxu0 %v1334
    %2160 = vmatpush1.bf16.msra.mxu0 %v1333
    %2161 = vmatprep.subr.bf16.mxu0 %v1340
    %2162 = vmatpush1.bf16.msra.mxu0 %v1339
    %2163 = vmatprep.subr.bf16.mxu0 %v1346
    %2164 = vmatpush1.bf16.msra.mxu0 %v1345
    %2165 = vmatprep.subr.bf16.mxu0 %v1352
    %2166 = vmatpush1.bf16.msra.mxu0 %v1351
    %2167 = vmatprep.subr.bf16.mxu0 %v1358
    %2168 = vmatpush1.bf16.msra.mxu0 %v1357
    %2169 = vmatprep.subr.bf16.mxu0 %v1364
    %2170 = vmatpush1.bf16.msra.mxu0 %v1363
    %2171 = vmatprep.subr.bf16.mxu0 %v1370
    %2172 = vmatpush1.bf16.msra.mxu0 %v1369
    %2173 = vmatprep.subr.bf16.mxu0 %v1376
    %2174 = vmatpush1.bf16.msra.mxu0 %v1375
    %2175 = vmatprep.subr.bf16.mxu0 %v1382
    %2176 = vmatpush1.bf16.msra.mxu0 %v1381
    %2177 = vmatprep.subr.bf16.mxu0 %v1388
    %2178 = vmatpush1.bf16.msra.mxu0 %v1387
    %2179 = vmatprep.subr.bf16.mxu0 %v1394
    %2180 = vmatpush1.bf16.msra.mxu0 %v1393
    %2181 = vmatprep.subr.bf16.mxu0 %v1400
    %2182 = vmatpush1.bf16.msra.mxu0 %v1399
    %2183 = vmatprep.subr.bf16.mxu0 %v1406
    %2184 = vmatpush1.bf16.msra.mxu0 %v1405
    %2185 = vmatprep.subr.bf16.mxu0 %v1412
    %2186 = vmatpush1.bf16.msra.mxu0 %v1411
    %2187 = vmatprep.subr.bf16.mxu0 %v1418
    %2188 = vmatpush1.bf16.msra.mxu0 %v1417
    %2189 = vmatprep.mubr.bf16.mxu0 %v448
    %2190 = vmatmul.mubr.bf16.gmra.mrb[0].mxu0 %v447
    %v2191 = vpop.f32.mrb[0].mxu0
    %v2192 = vadd.f32 %v418, %v2191
    %v2193 = vpop.f32.mrb[0].mxu0
    %v2194 = vadd.f32 %v422, %v2193
    %v2195 = vpop.f32.mrb[0].mxu0
    %v2196 = vadd.f32 %v418, %v2195
    %v2197 = vpop.f32.mrb[0].mxu0
    %v2198 = vadd.f32 %v422, %v2197
    %2199 = vdwg.mxu0
    %2200 = vmatprep.subr.bf16.mxu0 %v1424
    %2201 = vmatpush1.bf16.msra.mxu0 %v1423
    %2202 = vmatprep.subr.bf16.mxu0 %v1430
    %2203 = vmatpush1.bf16.msra.mxu0 %v1429
    %2204 = vmatprep.subr.bf16.mxu0 %v1436
    %2205 = vmatpush1.bf16.msra.mxu0 %v1435
    %2206 = vmatprep.subr.bf16.mxu0 %v1442
    %2207 = vmatpush1.bf16.msra.mxu0 %v1441
    %2208 = vmatprep.subr.bf16.mxu0 %v1448
    %2209 = vmatpush1.bf16.msra.mxu0 %v1447
    %2210 = vmatprep.subr.bf16.mxu0 %v1454
    %2211 = vmatpush1.bf16.msra.mxu0 %v1453
    %2212 = vmatprep.subr.bf16.mxu0 %v1460
    %2213 = vmatpush1.bf16.msra.mxu0 %v1459
    %2214 = vmatprep.subr.bf16.mxu0 %v1466
    %2215 = vmatpush1.bf16.msra.mxu0 %v1465
    %2216 = vmatprep.subr.bf16.mxu0 %v1472
    %2217 = vmatpush1.bf16.msra.mxu0 %v1471
    %2218 = vmatprep.subr.bf16.mxu0 %v1478
    %2219 = vmatpush1.bf16.msra.mxu0 %v1477
    %2220 = vmatprep.subr.bf16.mxu0 %v1484
    %2221 = vmatpush1.bf16.msra.mxu0 %v1483
    %2222 = vmatprep.subr.bf16.mxu0 %v1490
    %2223 = vmatpush1.bf16.msra.mxu0 %v1489
    %2224 = vmatprep.subr.bf16.mxu0 %v1496
    %2225 = vmatpush1.bf16.msra.mxu0 %v1495
    %2226 = vmatprep.subr.bf16.mxu0 %v1502
    %2227 = vmatpush1.bf16.msra.mxu0 %v1501
    %2228 = vmatprep.subr.bf16.mxu0 %v1508
    %2229 = vmatpush1.bf16.msra.mxu0 %v1507
    %2230 = vmatprep.subr.bf16.mxu0 %v1514
    %2231 = vmatpush1.bf16.msra.mxu0 %v1513
    %2232 = vmatprep.mubr.bf16.mxu0 %v450
    %2233 = vmatmul.mubr.bf16.gmra.mrb[0].mxu0 %v449
    %v2234 = vpop.f32.mrb[0].mxu0
    %v2235 = vadd.f32 %v2192, %v2234
    %v2236 = vpop.f32.mrb[0].mxu0
    %v2237 = vadd.f32 %v2194, %v2236
    %v2238 = vpop.f32.mrb[0].mxu0
    %v2239 = vadd.f32 %v2196, %v2238
    %v2240 = vpop.f32.mrb[0].mxu0
    %v2241 = vadd.f32 %v2198, %v2240
    %2242 = vdwg.mxu0
    %2243 = vmatprep.subr.bf16.mxu0 %v1520
    %2244 = vmatpush1.bf16.msra.mxu0 %v1519
    %2245 = vmatprep.subr.bf16.mxu0 %v1526
    %2246 = vmatpush1.bf16.msra.mxu0 %v1525
    %2247 = vmatprep.subr.bf16.mxu0 %v1532
    %2248 = vmatpush1.bf16.msra.mxu0 %v1531
    %2249 = vmatprep.subr.bf16.mxu0 %v1538
    %2250 = vmatpush1.bf16.msra.mxu0 %v1537
    %2251 = vmatprep.subr.bf16.mxu0 %v1544
    %2252 = vmatpush1.bf16.msra.mxu0 %v1543
    %2253 = vmatprep.subr.bf16.mxu0 %v1550
    %2254 = vmatpush1.bf16.msra.mxu0 %v1549
    %2255 = vmatprep.subr.bf16.mxu0 %v1556
    %2256 = vmatpush1.bf16.msra.mxu0 %v1555
    %2257 = vmatprep.subr.bf16.mxu0 %v1562
    %2258 = vmatpush1.bf16.msra.mxu0 %v1561
    %2259 = vmatprep.subr.bf16.mxu0 %v1568
    %2260 = vmatpush1.bf16.msra.mxu0 %v1567
    %2261 = vmatprep.subr.bf16.mxu0 %v1574
    %2262 = vmatpush1.bf16.msra.mxu0 %v1573
    %2263 = vmatprep.subr.bf16.mxu0 %v1580
    %2264 = vmatpush1.bf16.msra.mxu0 %v1579
    %2265 = vmatprep.subr.bf16.mxu0 %v1586
    %2266 = vmatpush1.bf16.msra.mxu0 %v1585
    %2267 = vmatprep.subr.bf16.mxu0 %v1592
    %2268 = vmatpush1.bf16.msra.mxu0 %v1591
    %2269 = vmatprep.subr.bf16.mxu0 %v1598
    %2270 = vmatpush1.bf16.msra.mxu0 %v1597
    %2271 = vmatprep.subr.bf16.mxu0 %v1604
    %2272 = vmatpush1.bf16.msra.mxu0 %v1603
    %2273 = vmatprep.subr.bf16.mxu0 %v1610
    %2274 = vmatpush1.bf16.msra.mxu0 %v1609
    %2275 = vmatprep.mubr.bf16.mxu0 %v452
    %2276 = vmatmul.mubr.bf16.gmra.mrb[0].mxu0 %v451
    %v2277 = vpop.f32.mrb[0].mxu0
    %v2278 = vadd.f32 %v2235, %v2277
    %v2279 = vpop.f32.mrb[0].mxu0
    %v2280 = vadd.f32 %v2237, %v2279
    %v2281 = vpop.f32.mrb[0].mxu0
    %v2282 = vadd.f32 %v2239, %v2281
    %v2283 = vpop.f32.mrb[0].mxu0
    %v2284 = vadd.f32 %v2241, %v2283
    %2285 = vdwg.mxu0
    %v2286 = vtanh.pop %v2020
    %v2287 = vtanh.pop %v2022
    %v2288 = vtanh.pop %v2149
    %v2289 = vtanh.pop %v2151
    %v2290 = vtanh.pop %v2278
    %v2291 = vtanh.pop %v2280
    %v2292 = vtanh.pop %v2024
    %v2293 = vtanh.pop %v2026
    %v2294 = vtanh.pop %v2153
    %v2295 = vtanh.pop %v2155
    %v2296 = vtanh.pop %v2282
    %v2297 = vtanh.pop %v2284
    %v2298 = vpack.c.bf16 %v2292, %v2286
    %v2299 = vpack.c.bf16 %v2293, %v2287
    %v2300 = vpack.c.bf16 %v2294, %v2288
    %v2301 = vpack.c.bf16 %v2295, %v2289
    %v2302 = vpack.c.bf16 %v2296, %v2290
    %v2303 = vpack.c.bf16 %v2297, %v2291
    %v2304 = vld [vmem:[#allocation6] sm:$0xff]
    %v2305 = vld [vmem:[#allocation6 + $0x8] sm:$0xff]
    %v2306 = vld [vmem:[#allocation6 + $0x10] sm:$0xff]
    %v2307 = vld [vmem:[#allocation6 + $0x18] sm:$0xff]
    %v2308 = vld [vmem:[#allocation6 + $0x20] sm:$0xff]
    %v2309 = vld [vmem:[#allocation6 + $0x28] sm:$0xff]
    %v2310 = vld [vmem:[#allocation6 + $0x30] sm:$0xff]
    %v2311 = vld [vmem:[#allocation6 + $0x38] sm:$0xff]
    %v2312 = vld [vmem:[#allocation6 + $0x40] sm:$0xff]
    %v2313 = vld [vmem:[#allocation6 + $0x48] sm:$0xff]
    %v2314 = vld [vmem:[#allocation6 + $0x50] sm:$0xff]
    %v2315 = vld [vmem:[#allocation6 + $0x58] sm:$0xff]
    %v2316 = vld [vmem:[#allocation6 + $0x60] sm:$0xff]
    %v2317 = vld [vmem:[#allocation6 + $0x68] sm:$0xff]
    %v2318 = vld [vmem:[#allocation6 + $0x70] sm:$0xff]
    %v2319 = vld [vmem:[#allocation6 + $0x78] sm:$0xff]
    %v2320 = vld [vmem:[#allocation6 + $0x80] sm:$0xff]
    %v2321 = vld [vmem:[#allocation6 + $0x88] sm:$0xff]
    %v2322 = vld [vmem:[#allocation6 + $0x90] sm:$0xff]
    %v2323 = vld [vmem:[#allocation6 + $0x98] sm:$0xff]
    %v2324 = vld [vmem:[#allocation6 + $0xa0] sm:$0xff]
    %v2325 = vld [vmem:[#allocation6 + $0xa8] sm:$0xff]
    %v2326 = vld [vmem:[#allocation6 + $0xb0] sm:$0xff]
    %v2327 = vld [vmem:[#allocation6 + $0xb8] sm:$0xff]
    %v2328 = vld [vmem:[#allocation6 + $0xc0] sm:$0xff]
    %v2329 = vld [vmem:[#allocation6 + $0xc8] sm:$0xff]
    %v2330 = vld [vmem:[#allocation6 + $0xd0] sm:$0xff]
    %v2331 = vld [vmem:[#allocation6 + $0xd8] sm:$0xff]
    %v2332 = vld [vmem:[#allocation6 + $0xe0] sm:$0xff]
    %v2333 = vld [vmem:[#allocation6 + $0xe8] sm:$0xff]
    %v2334 = vld [vmem:[#allocation6 + $0xf0] sm:$0xff]
    %v2335 = vld [vmem:[#allocation6 + $0xf8] sm:$0xff]
    %v2336 = vld [vmem:[#allocation6 + $0x100] sm:$0xff]
    %v2337 = vld [vmem:[#allocation6 + $0x108] sm:$0xff]
    %v2338 = vld [vmem:[#allocation6 + $0x110] sm:$0xff]
    %v2339 = vld [vmem:[#allocation6 + $0x118] sm:$0xff]
    %v2340 = vld [vmem:[#allocation6 + $0x120] sm:$0xff]
    %v2341 = vld [vmem:[#allocation6 + $0x128] sm:$0xff]
    %v2342 = vld [vmem:[#allocation6 + $0x130] sm:$0xff]
    %v2343 = vld [vmem:[#allocation6 + $0x138] sm:$0xff]
    %v2344 = vld [vmem:[#allocation6 + $0x140] sm:$0xff]
    %v2345 = vld [vmem:[#allocation6 + $0x148] sm:$0xff]
    %v2346 = vld [vmem:[#allocation6 + $0x150] sm:$0xff]
    %v2347 = vld [vmem:[#allocation6 + $0x158] sm:$0xff]
    %v2348 = vld [vmem:[#allocation6 + $0x160] sm:$0xff]
    %v2349 = vld [vmem:[#allocation6 + $0x168] sm:$0xff]
    %v2350 = vld [vmem:[#allocation6 + $0x170] sm:$0xff]
    %v2351 = vld [vmem:[#allocation6 + $0x178] sm:$0xff]
    %v2352 = vld [vmem:[#allocation6 + $0x180] sm:$0xff]
    %v2353 = vld [vmem:[#allocation6 + $0x188] sm:$0xff]
    %v2354 = vld [vmem:[#allocation6 + $0x190] sm:$0xff]
    %v2355 = vld [vmem:[#allocation6 + $0x198] sm:$0xff]
    %v2356 = vld [vmem:[#allocation6 + $0x1a0] sm:$0xff]
    %v2357 = vld [vmem:[#allocation6 + $0x1a8] sm:$0xff]
    %v2358 = vld [vmem:[#allocation6 + $0x1b0] sm:$0xff]
    %v2359 = vld [vmem:[#allocation6 + $0x1b8] sm:$0xff]
    %v2360 = vld [vmem:[#allocation6 + $0x1c0] sm:$0xff]
    %v2361 = vld [vmem:[#allocation6 + $0x1c8] sm:$0xff]
    %v2362 = vld [vmem:[#allocation6 + $0x1d0] sm:$0xff]
    %v2363 = vld [vmem:[#allocation6 + $0x1d8] sm:$0xff]
    %v2364 = vld [vmem:[#allocation6 + $0x1e0] sm:$0xff]
    %v2365 = vld [vmem:[#allocation6 + $0x1e8] sm:$0xff]
    %v2366 = vld [vmem:[#allocation6 + $0x1f0] sm:$0xff]
    %v2367 = vld [vmem:[#allocation6 + $0x1f8] sm:$0xff]
    %v2368 = vld [vmem:[#allocation6 + $0x200] sm:$0xff]
    %v2369 = vld [vmem:[#allocation6 + $0x208] sm:$0xff]
    %v2370 = vld [vmem:[#allocation6 + $0x210] sm:$0xff]
    %v2371 = vld [vmem:[#allocation6 + $0x218] sm:$0xff]
    %v2372 = vld [vmem:[#allocation6 + $0x220] sm:$0xff]
    %v2373 = vld [vmem:[#allocation6 + $0x228] sm:$0xff]
    %v2374 = vld [vmem:[#allocation6 + $0x230] sm:$0xff]
    %v2375 = vld [vmem:[#allocation6 + $0x238] sm:$0xff]
    %v2376 = vld [vmem:[#allocation6 + $0x240] sm:$0xff]
    %v2377 = vld [vmem:[#allocation6 + $0x248] sm:$0xff]
    %v2378 = vld [vmem:[#allocation6 + $0x250] sm:$0xff]
    %v2379 = vld [vmem:[#allocation6 + $0x258] sm:$0xff]
    %v2380 = vld [vmem:[#allocation6 + $0x260] sm:$0xff]
    %v2381 = vld [vmem:[#allocation6 + $0x268] sm:$0xff]
    %v2382 = vld [vmem:[#allocation6 + $0x270] sm:$0xff]
    %v2383 = vld [vmem:[#allocation6 + $0x278] sm:$0xff]
    %v2384 = vld [vmem:[#allocation6 + $0x280] sm:$0xff]
    %v2385 = vld [vmem:[#allocation6 + $0x288] sm:$0xff]
    %v2386 = vld [vmem:[#allocation6 + $0x290] sm:$0xff]
    %v2387 = vld [vmem:[#allocation6 + $0x298] sm:$0xff]
    %v2388 = vld [vmem:[#allocation6 + $0x2a0] sm:$0xff]
    %v2389 = vld [vmem:[#allocation6 + $0x2a8] sm:$0xff]
    %v2390 = vld [vmem:[#allocation6 + $0x2b0] sm:$0xff]
    %v2391 = vld [vmem:[#allocation6 + $0x2b8] sm:$0xff]
    %v2392 = vld [vmem:[#allocation6 + $0x2c0] sm:$0xff]
    %v2393 = vld [vmem:[#allocation6 + $0x2c8] sm:$0xff]
    %v2394 = vld [vmem:[#allocation6 + $0x2d0] sm:$0xff]
    %v2395 = vld [vmem:[#allocation6 + $0x2d8] sm:$0xff]
    %v2396 = vld [vmem:[#allocation6 + $0x2e0] sm:$0xff]
    %v2397 = vld [vmem:[#allocation6 + $0x2e8] sm:$0xff]
    %v2398 = vld [vmem:[#allocation6 + $0x2f0] sm:$0xff]
    %v2399 = vld [vmem:[#allocation6 + $0x2f8] sm:$0xff]
    %v2400 = vld [vmem:[#allocation6 + $0x300] sm:$0xff]
    %v2401 = vld [vmem:[#allocation6 + $0x308] sm:$0xff]
    %v2402 = vld [vmem:[#allocation6 + $0x310] sm:$0xff]
    %v2403 = vld [vmem:[#allocation6 + $0x318] sm:$0xff]
    %v2404 = vld [vmem:[#allocation6 + $0x320] sm:$0xff]
    %v2405 = vld [vmem:[#allocation6 + $0x328] sm:$0xff]
    %v2406 = vld [vmem:[#allocation6 + $0x330] sm:$0xff]
    %v2407 = vld [vmem:[#allocation6 + $0x338] sm:$0xff]
    %v2408 = vld [vmem:[#allocation6 + $0x340] sm:$0xff]
    %v2409 = vld [vmem:[#allocation6 + $0x348] sm:$0xff]
    %v2410 = vld [vmem:[#allocation6 + $0x350] sm:$0xff]
    %v2411 = vld [vmem:[#allocation6 + $0x358] sm:$0xff]
    %v2412 = vld [vmem:[#allocation6 + $0x360] sm:$0xff]
    %v2413 = vld [vmem:[#allocation6 + $0x368] sm:$0xff]
    %v2414 = vld [vmem:[#allocation6 + $0x370] sm:$0xff]
    %v2415 = vld [vmem:[#allocation6 + $0x378] sm:$0xff]
    %v2416 = vld [vmem:[#allocation6 + $0x380] sm:$0xff]
    %v2417 = vld [vmem:[#allocation6 + $0x388] sm:$0xff]
    %v2418 = vld [vmem:[#allocation6 + $0x390] sm:$0xff]
    %v2419 = vld [vmem:[#allocation6 + $0x398] sm:$0xff]
    %v2420 = vld [vmem:[#allocation6 + $0x3a0] sm:$0xff]
    %v2421 = vld [vmem:[#allocation6 + $0x3a8] sm:$0xff]
    %v2422 = vld [vmem:[#allocation6 + $0x3b0] sm:$0xff]
    %v2423 = vld [vmem:[#allocation6 + $0x3b8] sm:$0xff]
    %v2424 = vld [vmem:[#allocation6 + $0x3c0] sm:$0xff]
    %v2425 = vld [vmem:[#allocation6 + $0x3c8] sm:$0xff]
    %v2426 = vld [vmem:[#allocation6 + $0x3d0] sm:$0xff]
    %v2427 = vld [vmem:[#allocation6 + $0x3d8] sm:$0xff]
    %v2428 = vld [vmem:[#allocation6 + $0x3e0] sm:$0xff]
    %v2429 = vld [vmem:[#allocation6 + $0x3e8] sm:$0xff]
    %v2430 = vld [vmem:[#allocation6 + $0x3f0] sm:$0xff]
    %v2431 = vld [vmem:[#allocation6 + $0x3f8] sm:$0xff]
    %v2432 = vld [vmem:[#allocation6 + $0x400] sm:$0xff]
    %v2433 = vld [vmem:[#allocation6 + $0x408] sm:$0xff]
    %v2434 = vld [vmem:[#allocation6 + $0x410] sm:$0xff]
    %v2435 = vld [vmem:[#allocation6 + $0x418] sm:$0xff]
    %v2436 = vld [vmem:[#allocation6 + $0x420] sm:$0xff]
    %v2437 = vld [vmem:[#allocation6 + $0x428] sm:$0xff]
    %v2438 = vld [vmem:[#allocation6 + $0x430] sm:$0xff]
    %v2439 = vld [vmem:[#allocation6 + $0x438] sm:$0xff]
    %v2440 = vld [vmem:[#allocation6 + $0x440] sm:$0xff]
    %v2441 = vld [vmem:[#allocation6 + $0x448] sm:$0xff]
    %v2442 = vld [vmem:[#allocation6 + $0x450] sm:$0xff]
    %v2443 = vld [vmem:[#allocation6 + $0x458] sm:$0xff]
    %v2444 = vld [vmem:[#allocation6 + $0x460] sm:$0xff]
    %v2445 = vld [vmem:[#allocation6 + $0x468] sm:$0xff]
    %v2446 = vld [vmem:[#allocation6 + $0x470] sm:$0xff]
    %v2447 = vld [vmem:[#allocation6 + $0x478] sm:$0xff]
    %v2448 = vld [vmem:[#allocation6 + $0x480] sm:$0xff]
    %v2449 = vld [vmem:[#allocation6 + $0x488] sm:$0xff]
    %v2450 = vld [vmem:[#allocation6 + $0x490] sm:$0xff]
    %v2451 = vld [vmem:[#allocation6 + $0x498] sm:$0xff]
    %v2452 = vld [vmem:[#allocation6 + $0x4a0] sm:$0xff]
    %v2453 = vld [vmem:[#allocation6 + $0x4a8] sm:$0xff]
    %v2454 = vld [vmem:[#allocation6 + $0x4b0] sm:$0xff]
    %v2455 = vld [vmem:[#allocation6 + $0x4b8] sm:$0xff]
    %v2456 = vld [vmem:[#allocation6 + $0x4c0] sm:$0xff]
    %v2457 = vld [vmem:[#allocation6 + $0x4c8] sm:$0xff]
    %v2458 = vld [vmem:[#allocation6 + $0x4d0] sm:$0xff]
    %v2459 = vld [vmem:[#allocation6 + $0x4d8] sm:$0xff]
    %v2460 = vld [vmem:[#allocation6 + $0x4e0] sm:$0xff]
    %v2461 = vld [vmem:[#allocation6 + $0x4e8] sm:$0xff]
    %v2462 = vld [vmem:[#allocation6 + $0x4f0] sm:$0xff]
    %v2463 = vld [vmem:[#allocation6 + $0x4f8] sm:$0xff]
    %v2464 = vld [vmem:[#allocation6 + $0x500] sm:$0xff]
    %v2465 = vld [vmem:[#allocation6 + $0x508] sm:$0xff]
    %v2466 = vld [vmem:[#allocation6 + $0x510] sm:$0xff]
    %v2467 = vld [vmem:[#allocation6 + $0x518] sm:$0xff]
    %v2468 = vld [vmem:[#allocation6 + $0x520] sm:$0xff]
    %v2469 = vld [vmem:[#allocation6 + $0x528] sm:$0xff]
    %v2470 = vld [vmem:[#allocation6 + $0x530] sm:$0xff]
    %v2471 = vld [vmem:[#allocation6 + $0x538] sm:$0xff]
    %v2472 = vld [vmem:[#allocation6 + $0x540] sm:$0xff]
    %v2473 = vld [vmem:[#allocation6 + $0x548] sm:$0xff]
    %v2474 = vld [vmem:[#allocation6 + $0x550] sm:$0xff]
    %v2475 = vld [vmem:[#allocation6 + $0x558] sm:$0xff]
    %v2476 = vld [vmem:[#allocation6 + $0x560] sm:$0xff]
    %v2477 = vld [vmem:[#allocation6 + $0x568] sm:$0xff]
    %v2478 = vld [vmem:[#allocation6 + $0x570] sm:$0xff]
    %v2479 = vld [vmem:[#allocation6 + $0x578] sm:$0xff]
    %v2480 = vld [vmem:[#allocation6 + $0x580] sm:$0xff]
    %v2481 = vld [vmem:[#allocation6 + $0x588] sm:$0xff]
    %v2482 = vld [vmem:[#allocation6 + $0x590] sm:$0xff]
    %v2483 = vld [vmem:[#allocation6 + $0x598] sm:$0xff]
    %v2484 = vld [vmem:[#allocation6 + $0x5a0] sm:$0xff]
    %v2485 = vld [vmem:[#allocation6 + $0x5a8] sm:$0xff]
    %v2486 = vld [vmem:[#allocation6 + $0x5b0] sm:$0xff]
    %v2487 = vld [vmem:[#allocation6 + $0x5b8] sm:$0xff]
    %v2488 = vld [vmem:[#allocation6 + $0x5c0] sm:$0xff]
    %v2489 = vld [vmem:[#allocation6 + $0x5c8] sm:$0xff]
    %v2490 = vld [vmem:[#allocation6 + $0x5d0] sm:$0xff]
    %v2491 = vld [vmem:[#allocation6 + $0x5d8] sm:$0xff]
    %v2492 = vld [vmem:[#allocation6 + $0x5e0] sm:$0xff]
    %v2493 = vld [vmem:[#allocation6 + $0x5e8] sm:$0xff]
    %v2494 = vld [vmem:[#allocation6 + $0x5f0] sm:$0xff]
    %v2495 = vld [vmem:[#allocation6 + $0x5f8] sm:$0xff]
    %v2496 = vld [vmem:[#allocation6 + $0x600] sm:$0xff]
    %v2497 = vld [vmem:[#allocation6 + $0x608] sm:$0xff]
    %v2498 = vld [vmem:[#allocation6 + $0x610] sm:$0xff]
    %v2499 = vld [vmem:[#allocation6 + $0x618] sm:$0xff]
    %v2500 = vld [vmem:[#allocation6 + $0x620] sm:$0xff]
    %v2501 = vld [vmem:[#allocation6 + $0x628] sm:$0xff]
    %v2502 = vld [vmem:[#allocation6 + $0x630] sm:$0xff]
    %v2503 = vld [vmem:[#allocation6 + $0x638] sm:$0xff]
    %v2504 = vld [vmem:[#allocation6 + $0x640] sm:$0xff]
    %v2505 = vld [vmem:[#allocation6 + $0x648] sm:$0xff]
    %v2506 = vld [vmem:[#allocation6 + $0x650] sm:$0xff]
    %v2507 = vld [vmem:[#allocation6 + $0x658] sm:$0xff]
    %v2508 = vld [vmem:[#allocation6 + $0x660] sm:$0xff]
    %v2509 = vld [vmem:[#allocation6 + $0x668] sm:$0xff]
    %v2510 = vld [vmem:[#allocation6 + $0x670] sm:$0xff]
    %v2511 = vld [vmem:[#allocation6 + $0x678] sm:$0xff]
    %v2512 = vld [vmem:[#allocation6 + $0x680] sm:$0xff]
    %v2513 = vld [vmem:[#allocation6 + $0x688] sm:$0xff]
    %v2514 = vld [vmem:[#allocation6 + $0x690] sm:$0xff]
    %v2515 = vld [vmem:[#allocation6 + $0x698] sm:$0xff]
    %v2516 = vld [vmem:[#allocation6 + $0x6a0] sm:$0xff]
    %v2517 = vld [vmem:[#allocation6 + $0x6a8] sm:$0xff]
    %v2518 = vld [vmem:[#allocation6 + $0x6b0] sm:$0xff]
    %v2519 = vld [vmem:[#allocation6 + $0x6b8] sm:$0xff]
    %v2520 = vld [vmem:[#allocation6 + $0x6c0] sm:$0xff]
    %v2521 = vld [vmem:[#allocation6 + $0x6c8] sm:$0xff]
    %v2522 = vld [vmem:[#allocation6 + $0x6d0] sm:$0xff]
    %v2523 = vld [vmem:[#allocation6 + $0x6d8] sm:$0xff]
    %v2524 = vld [vmem:[#allocation6 + $0x6e0] sm:$0xff]
    %v2525 = vld [vmem:[#allocation6 + $0x6e8] sm:$0xff]
    %v2526 = vld [vmem:[#allocation6 + $0x6f0] sm:$0xff]
    %v2527 = vld [vmem:[#allocation6 + $0x6f8] sm:$0xff]
    %v2528 = vld [vmem:[#allocation6 + $0x700] sm:$0xff]
    %v2529 = vld [vmem:[#allocation6 + $0x708] sm:$0xff]
    %v2530 = vld [vmem:[#allocation6 + $0x710] sm:$0xff]
    %v2531 = vld [vmem:[#allocation6 + $0x718] sm:$0xff]
    %v2532 = vld [vmem:[#allocation6 + $0x720] sm:$0xff]
    %v2533 = vld [vmem:[#allocation6 + $0x728] sm:$0xff]
    %v2534 = vld [vmem:[#allocation6 + $0x730] sm:$0xff]
    %v2535 = vld [vmem:[#allocation6 + $0x738] sm:$0xff]
    %v2536 = vld [vmem:[#allocation6 + $0x740] sm:$0xff]
    %v2537 = vld [vmem:[#allocation6 + $0x748] sm:$0xff]
    %v2538 = vld [vmem:[#allocation6 + $0x750] sm:$0xff]
    %v2539 = vld [vmem:[#allocation6 + $0x758] sm:$0xff]
    %v2540 = vld [vmem:[#allocation6 + $0x760] sm:$0xff]
    %v2541 = vld [vmem:[#allocation6 + $0x768] sm:$0xff]
    %v2542 = vld [vmem:[#allocation6 + $0x770] sm:$0xff]
    %v2543 = vld [vmem:[#allocation6 + $0x778] sm:$0xff]
    %v2544 = vld [vmem:[#allocation6 + $0x780] sm:$0xff]
    %v2545 = vld [vmem:[#allocation6 + $0x788] sm:$0xff]
    %v2546 = vld [vmem:[#allocation6 + $0x790] sm:$0xff]
    %v2547 = vld [vmem:[#allocation6 + $0x798] sm:$0xff]
    %v2548 = vld [vmem:[#allocation6 + $0x7a0] sm:$0xff]
    %v2549 = vld [vmem:[#allocation6 + $0x7a8] sm:$0xff]
    %v2550 = vld [vmem:[#allocation6 + $0x7b0] sm:$0xff]
    %v2551 = vld [vmem:[#allocation6 + $0x7b8] sm:$0xff]
    %v2552 = vld [vmem:[#allocation6 + $0x7c0] sm:$0xff]
    %v2553 = vld [vmem:[#allocation6 + $0x7c8] sm:$0xff]
    %v2554 = vld [vmem:[#allocation6 + $0x7d0] sm:$0xff]
    %v2555 = vld [vmem:[#allocation6 + $0x7d8] sm:$0xff]
    %v2556 = vld [vmem:[#allocation6 + $0x7e0] sm:$0xff]
    %v2557 = vld [vmem:[#allocation6 + $0x7e8] sm:$0xff]
    %v2558 = vld [vmem:[#allocation6 + $0x7f0] sm:$0xff]
    %v2559 = vld [vmem:[#allocation6 + $0x7f8] sm:$0xff]
    %v2560 = vld [vmem:[#allocation6 + $0x800] sm:$0xff]
    %v2561 = vld [vmem:[#allocation6 + $0x808] sm:$0xff]
    %v2562 = vld [vmem:[#allocation6 + $0x810] sm:$0xff]
    %v2563 = vld [vmem:[#allocation6 + $0x818] sm:$0xff]
    %v2564 = vld [vmem:[#allocation6 + $0x820] sm:$0xff]
    %v2565 = vld [vmem:[#allocation6 + $0x828] sm:$0xff]
    %v2566 = vld [vmem:[#allocation6 + $0x830] sm:$0xff]
    %v2567 = vld [vmem:[#allocation6 + $0x838] sm:$0xff]
    %v2568 = vld [vmem:[#allocation6 + $0x840] sm:$0xff]
    %v2569 = vld [vmem:[#allocation6 + $0x848] sm:$0xff]
    %v2570 = vld [vmem:[#allocation6 + $0x850] sm:$0xff]
    %v2571 = vld [vmem:[#allocation6 + $0x858] sm:$0xff]
    %v2572 = vld [vmem:[#allocation6 + $0x860] sm:$0xff]
    %v2573 = vld [vmem:[#allocation6 + $0x868] sm:$0xff]
    %v2574 = vld [vmem:[#allocation6 + $0x870] sm:$0xff]
    %v2575 = vld [vmem:[#allocation6 + $0x878] sm:$0xff]
    %v2576 = vld [vmem:[#allocation6 + $0x880] sm:$0xff]
    %v2577 = vld [vmem:[#allocation6 + $0x888] sm:$0xff]
    %v2578 = vld [vmem:[#allocation6 + $0x890] sm:$0xff]
    %v2579 = vld [vmem:[#allocation6 + $0x898] sm:$0xff]
    %v2580 = vld [vmem:[#allocation6 + $0x8a0] sm:$0xff]
    %v2581 = vld [vmem:[#allocation6 + $0x8a8] sm:$0xff]
    %v2582 = vld [vmem:[#allocation6 + $0x8b0] sm:$0xff]
    %v2583 = vld [vmem:[#allocation6 + $0x8b8] sm:$0xff]
    %v2584 = vld [vmem:[#allocation6 + $0x8c0] sm:$0xff]
    %v2585 = vld [vmem:[#allocation6 + $0x8c8] sm:$0xff]
    %v2586 = vld [vmem:[#allocation6 + $0x8d0] sm:$0xff]
    %v2587 = vld [vmem:[#allocation6 + $0x8d8] sm:$0xff]
    %v2588 = vld [vmem:[#allocation6 + $0x8e0] sm:$0xff]
    %v2589 = vld [vmem:[#allocation6 + $0x8e8] sm:$0xff]
    %v2590 = vld [vmem:[#allocation6 + $0x8f0] sm:$0xff]
    %v2591 = vld [vmem:[#allocation6 + $0x8f8] sm:$0xff]
    %v2592 = vld [vmem:[#allocation6 + $0x900] sm:$0xff]
    %v2593 = vld [vmem:[#allocation6 + $0x908] sm:$0xff]
    %v2594 = vld [vmem:[#allocation6 + $0x910] sm:$0xff]
    %v2595 = vld [vmem:[#allocation6 + $0x918] sm:$0xff]
    %v2596 = vld [vmem:[#allocation6 + $0x920] sm:$0xff]
    %v2597 = vld [vmem:[#allocation6 + $0x928] sm:$0xff]
    %v2598 = vld [vmem:[#allocation6 + $0x930] sm:$0xff]
    %v2599 = vld [vmem:[#allocation6 + $0x938] sm:$0xff]
    %v2600 = vld [vmem:[#allocation6 + $0x940] sm:$0xff]
    %v2601 = vld [vmem:[#allocation6 + $0x948] sm:$0xff]
    %v2602 = vld [vmem:[#allocation6 + $0x950] sm:$0xff]
    %v2603 = vld [vmem:[#allocation6 + $0x958] sm:$0xff]
    %v2604 = vld [vmem:[#allocation6 + $0x960] sm:$0xff]
    %v2605 = vld [vmem:[#allocation6 + $0x968] sm:$0xff]
    %v2606 = vld [vmem:[#allocation6 + $0x970] sm:$0xff]
    %v2607 = vld [vmem:[#allocation6 + $0x978] sm:$0xff]
    %v2608 = vld [vmem:[#allocation6 + $0x980] sm:$0xff]
    %v2609 = vld [vmem:[#allocation6 + $0x988] sm:$0xff]
    %v2610 = vld [vmem:[#allocation6 + $0x990] sm:$0xff]
    %v2611 = vld [vmem:[#allocation6 + $0x998] sm:$0xff]
    %v2612 = vld [vmem:[#allocation6 + $0x9a0] sm:$0xff]
    %v2613 = vld [vmem:[#allocation6 + $0x9a8] sm:$0xff]
    %v2614 = vld [vmem:[#allocation6 + $0x9b0] sm:$0xff]
    %v2615 = vld [vmem:[#allocation6 + $0x9b8] sm:$0xff]
    %v2616 = vld [vmem:[#allocation6 + $0x9c0] sm:$0xff]
    %v2617 = vld [vmem:[#allocation6 + $0x9c8] sm:$0xff]
    %v2618 = vld [vmem:[#allocation6 + $0x9d0] sm:$0xff]
    %v2619 = vld [vmem:[#allocation6 + $0x9d8] sm:$0xff]
    %v2620 = vld [vmem:[#allocation6 + $0x9e0] sm:$0xff]
    %v2621 = vld [vmem:[#allocation6 + $0x9e8] sm:$0xff]
    %v2622 = vld [vmem:[#allocation6 + $0x9f0] sm:$0xff]
    %v2623 = vld [vmem:[#allocation6 + $0x9f8] sm:$0xff]
    %v2624 = vld [vmem:[#allocation6 + $0xa00] sm:$0xff]
    %v2625 = vld [vmem:[#allocation6 + $0xa08] sm:$0xff]
    %v2626 = vld [vmem:[#allocation6 + $0xa10] sm:$0xff]
    %v2627 = vld [vmem:[#allocation6 + $0xa18] sm:$0xff]
    %v2628 = vld [vmem:[#allocation6 + $0xa20] sm:$0xff]
    %v2629 = vld [vmem:[#allocation6 + $0xa28] sm:$0xff]
    %v2630 = vld [vmem:[#allocation6 + $0xa30] sm:$0xff]
    %v2631 = vld [vmem:[#allocation6 + $0xa38] sm:$0xff]
    %v2632 = vld [vmem:[#allocation6 + $0xa40] sm:$0xff]
    %v2633 = vld [vmem:[#allocation6 + $0xa48] sm:$0xff]
    %v2634 = vld [vmem:[#allocation6 + $0xa50] sm:$0xff]
    %v2635 = vld [vmem:[#allocation6 + $0xa58] sm:$0xff]
    %v2636 = vld [vmem:[#allocation6 + $0xa60] sm:$0xff]
    %v2637 = vld [vmem:[#allocation6 + $0xa68] sm:$0xff]
    %v2638 = vld [vmem:[#allocation6 + $0xa70] sm:$0xff]
    %v2639 = vld [vmem:[#allocation6 + $0xa78] sm:$0xff]
    %v2640 = vld [vmem:[#allocation6 + $0xa80] sm:$0xff]
    %v2641 = vld [vmem:[#allocation6 + $0xa88] sm:$0xff]
    %v2642 = vld [vmem:[#allocation6 + $0xa90] sm:$0xff]
    %v2643 = vld [vmem:[#allocation6 + $0xa98] sm:$0xff]
    %v2644 = vld [vmem:[#allocation6 + $0xaa0] sm:$0xff]
    %v2645 = vld [vmem:[#allocation6 + $0xaa8] sm:$0xff]
    %v2646 = vld [vmem:[#allocation6 + $0xab0] sm:$0xff]
    %v2647 = vld [vmem:[#allocation6 + $0xab8] sm:$0xff]
    %v2648 = vld [vmem:[#allocation6 + $0xac0] sm:$0xff]
    %v2649 = vld [vmem:[#allocation6 + $0xac8] sm:$0xff]
    %v2650 = vld [vmem:[#allocation6 + $0xad0] sm:$0xff]
    %v2651 = vld [vmem:[#allocation6 + $0xad8] sm:$0xff]
    %v2652 = vld [vmem:[#allocation6 + $0xae0] sm:$0xff]
    %v2653 = vld [vmem:[#allocation6 + $0xae8] sm:$0xff]
    %v2654 = vld [vmem:[#allocation6 + $0xaf0] sm:$0xff]
    %v2655 = vld [vmem:[#allocation6 + $0xaf8] sm:$0xff]
    %v2656 = vld [vmem:[#allocation6 + $0xb00] sm:$0xff]
    %v2657 = vld [vmem:[#allocation6 + $0xb08] sm:$0xff]
    %v2658 = vld [vmem:[#allocation6 + $0xb10] sm:$0xff]
    %v2659 = vld [vmem:[#allocation6 + $0xb18] sm:$0xff]
    %v2660 = vld [vmem:[#allocation6 + $0xb20] sm:$0xff]
    %v2661 = vld [vmem:[#allocation6 + $0xb28] sm:$0xff]
    %v2662 = vld [vmem:[#allocation6 + $0xb30] sm:$0xff]
    %v2663 = vld [vmem:[#allocation6 + $0xb38] sm:$0xff]
    %v2664 = vld [vmem:[#allocation6 + $0xb40] sm:$0xff]
    %v2665 = vld [vmem:[#allocation6 + $0xb48] sm:$0xff]
    %v2666 = vld [vmem:[#allocation6 + $0xb50] sm:$0xff]
    %v2667 = vld [vmem:[#allocation6 + $0xb58] sm:$0xff]
    %v2668 = vld [vmem:[#allocation6 + $0xb60] sm:$0xff]
    %v2669 = vld [vmem:[#allocation6 + $0xb68] sm:$0xff]
    %v2670 = vld [vmem:[#allocation6 + $0xb70] sm:$0xff]
    %v2671 = vld [vmem:[#allocation6 + $0xb78] sm:$0xff]
    %v2672 = vld [vmem:[#allocation6 + $0xb80] sm:$0xff]
    %v2673 = vld [vmem:[#allocation6 + $0xb88] sm:$0xff]
    %v2674 = vld [vmem:[#allocation6 + $0xb90] sm:$0xff]
    %v2675 = vld [vmem:[#allocation6 + $0xb98] sm:$0xff]
    %v2676 = vld [vmem:[#allocation6 + $0xba0] sm:$0xff]
    %v2677 = vld [vmem:[#allocation6 + $0xba8] sm:$0xff]
    %v2678 = vld [vmem:[#allocation6 + $0xbb0] sm:$0xff]
    %v2679 = vld [vmem:[#allocation6 + $0xbb8] sm:$0xff]
    %v2680 = vld [vmem:[#allocation6 + $0xbc0] sm:$0xff]
    %v2681 = vld [vmem:[#allocation6 + $0xbc8] sm:$0xff]
    %v2682 = vld [vmem:[#allocation6 + $0xbd0] sm:$0xff]
    %v2683 = vld [vmem:[#allocation6 + $0xbd8] sm:$0xff]
    %v2684 = vld [vmem:[#allocation6 + $0xbe0] sm:$0xff]
    %v2685 = vld [vmem:[#allocation6 + $0xbe8] sm:$0xff]
    %v2686 = vld [vmem:[#allocation6 + $0xbf0] sm:$0xff]
    %v2687 = vld [vmem:[#allocation6 + $0xbf8] sm:$0xff]
    %v2688 = vld [vmem:[#allocation6 + $0xc00] sm:$0xff]
    %v2689 = vld [vmem:[#allocation6 + $0xc08] sm:$0xff]
    %v2690 = vld [vmem:[#allocation6 + $0xc10] sm:$0xff]
    %v2691 = vld [vmem:[#allocation6 + $0xc18] sm:$0xff]
    %v2692 = vld [vmem:[#allocation6 + $0xc20] sm:$0xff]
    %v2693 = vld [vmem:[#allocation6 + $0xc28] sm:$0xff]
    %v2694 = vld [vmem:[#allocation6 + $0xc30] sm:$0xff]
    %v2695 = vld [vmem:[#allocation6 + $0xc38] sm:$0xff]
    %v2696 = vld [vmem:[#allocation6 + $0xc40] sm:$0xff]
    %v2697 = vld [vmem:[#allocation6 + $0xc48] sm:$0xff]
    %v2698 = vld [vmem:[#allocation6 + $0xc50] sm:$0xff]
    %v2699 = vld [vmem:[#allocation6 + $0xc58] sm:$0xff]
    %v2700 = vld [vmem:[#allocation6 + $0xc60] sm:$0xff]
    %v2701 = vld [vmem:[#allocation6 + $0xc68] sm:$0xff]
    %v2702 = vld [vmem:[#allocation6 + $0xc70] sm:$0xff]
    %v2703 = vld [vmem:[#allocation6 + $0xc78] sm:$0xff]
    %v2704 = vld [vmem:[#allocation6 + $0xc80] sm:$0xff]
    %v2705 = vld [vmem:[#allocation6 + $0xc88] sm:$0xff]
    %v2706 = vld [vmem:[#allocation6 + $0xc90] sm:$0xff]
    %v2707 = vld [vmem:[#allocation6 + $0xc98] sm:$0xff]
    %v2708 = vld [vmem:[#allocation6 + $0xca0] sm:$0xff]
    %v2709 = vld [vmem:[#allocation6 + $0xca8] sm:$0xff]
    %v2710 = vld [vmem:[#allocation6 + $0xcb0] sm:$0xff]
    %v2711 = vld [vmem:[#allocation6 + $0xcb8] sm:$0xff]
    %v2712 = vld [vmem:[#allocation6 + $0xcc0] sm:$0xff]
    %v2713 = vld [vmem:[#allocation6 + $0xcc8] sm:$0xff]
    %v2714 = vld [vmem:[#allocation6 + $0xcd0] sm:$0xff]
    %v2715 = vld [vmem:[#allocation6 + $0xcd8] sm:$0xff]
    %v2716 = vld [vmem:[#allocation6 + $0xce0] sm:$0xff]
    %v2717 = vld [vmem:[#allocation6 + $0xce8] sm:$0xff]
    %v2718 = vld [vmem:[#allocation6 + $0xcf0] sm:$0xff]
    %v2719 = vld [vmem:[#allocation6 + $0xcf8] sm:$0xff]
    %v2720 = vld [vmem:[#allocation6 + $0xd00] sm:$0xff]
    %v2721 = vld [vmem:[#allocation6 + $0xd08] sm:$0xff]
    %v2722 = vld [vmem:[#allocation6 + $0xd10] sm:$0xff]
    %v2723 = vld [vmem:[#allocation6 + $0xd18] sm:$0xff]
    %v2724 = vld [vmem:[#allocation6 + $0xd20] sm:$0xff]
    %v2725 = vld [vmem:[#allocation6 + $0xd28] sm:$0xff]
    %v2726 = vld [vmem:[#allocation6 + $0xd30] sm:$0xff]
    %v2727 = vld [vmem:[#allocation6 + $0xd38] sm:$0xff]
    %v2728 = vld [vmem:[#allocation6 + $0xd40] sm:$0xff]
    %v2729 = vld [vmem:[#allocation6 + $0xd48] sm:$0xff]
    %v2730 = vld [vmem:[#allocation6 + $0xd50] sm:$0xff]
    %v2731 = vld [vmem:[#allocation6 + $0xd58] sm:$0xff]
    %v2732 = vld [vmem:[#allocation6 + $0xd60] sm:$0xff]
    %v2733 = vld [vmem:[#allocation6 + $0xd68] sm:$0xff]
    %v2734 = vld [vmem:[#allocation6 + $0xd70] sm:$0xff]
    %v2735 = vld [vmem:[#allocation6 + $0xd78] sm:$0xff]
    %v2736 = vld [vmem:[#allocation6 + $0xd80] sm:$0xff]
    %v2737 = vld [vmem:[#allocation6 + $0xd88] sm:$0xff]
    %v2738 = vld [vmem:[#allocation6 + $0xd90] sm:$0xff]
    %v2739 = vld [vmem:[#allocation6 + $0xd98] sm:$0xff]
    %v2740 = vld [vmem:[#allocation6 + $0xda0] sm:$0xff]
    %v2741 = vld [vmem:[#allocation6 + $0xda8] sm:$0xff]
    %v2742 = vld [vmem:[#allocation6 + $0xdb0] sm:$0xff]
    %v2743 = vld [vmem:[#allocation6 + $0xdb8] sm:$0xff]
    %v2744 = vld [vmem:[#allocation6 + $0xdc0] sm:$0xff]
    %v2745 = vld [vmem:[#allocation6 + $0xdc8] sm:$0xff]
    %v2746 = vld [vmem:[#allocation6 + $0xdd0] sm:$0xff]
    %v2747 = vld [vmem:[#allocation6 + $0xdd8] sm:$0xff]
    %v2748 = vld [vmem:[#allocation6 + $0xde0] sm:$0xff]
    %v2749 = vld [vmem:[#allocation6 + $0xde8] sm:$0xff]
    %v2750 = vld [vmem:[#allocation6 + $0xdf0] sm:$0xff]
    %v2751 = vld [vmem:[#allocation6 + $0xdf8] sm:$0xff]
    %v2752 = vld [vmem:[#allocation6 + $0xe00] sm:$0xff]
    %v2753 = vld [vmem:[#allocation6 + $0xe08] sm:$0xff]
    %v2754 = vld [vmem:[#allocation6 + $0xe10] sm:$0xff]
    %v2755 = vld [vmem:[#allocation6 + $0xe18] sm:$0xff]
    %v2756 = vld [vmem:[#allocation6 + $0xe20] sm:$0xff]
    %v2757 = vld [vmem:[#allocation6 + $0xe28] sm:$0xff]
    %v2758 = vld [vmem:[#allocation6 + $0xe30] sm:$0xff]
    %v2759 = vld [vmem:[#allocation6 + $0xe38] sm:$0xff]
    %v2760 = vld [vmem:[#allocation6 + $0xe40] sm:$0xff]
    %v2761 = vld [vmem:[#allocation6 + $0xe48] sm:$0xff]
    %v2762 = vld [vmem:[#allocation6 + $0xe50] sm:$0xff]
    %v2763 = vld [vmem:[#allocation6 + $0xe58] sm:$0xff]
    %v2764 = vld [vmem:[#allocation6 + $0xe60] sm:$0xff]
    %v2765 = vld [vmem:[#allocation6 + $0xe68] sm:$0xff]
    %v2766 = vld [vmem:[#allocation6 + $0xe70] sm:$0xff]
    %v2767 = vld [vmem:[#allocation6 + $0xe78] sm:$0xff]
    %v2768 = vld [vmem:[#allocation6 + $0xe80] sm:$0xff]
    %v2769 = vld [vmem:[#allocation6 + $0xe88] sm:$0xff]
    %v2770 = vld [vmem:[#allocation6 + $0xe90] sm:$0xff]
    %v2771 = vld [vmem:[#allocation6 + $0xe98] sm:$0xff]
    %v2772 = vld [vmem:[#allocation6 + $0xea0] sm:$0xff]
    %v2773 = vld [vmem:[#allocation6 + $0xea8] sm:$0xff]
    %v2774 = vld [vmem:[#allocation6 + $0xeb0] sm:$0xff]
    %v2775 = vld [vmem:[#allocation6 + $0xeb8] sm:$0xff]
    %v2776 = vld [vmem:[#allocation6 + $0xec0] sm:$0xff]
    %v2777 = vld [vmem:[#allocation6 + $0xec8] sm:$0xff]
    %v2778 = vld [vmem:[#allocation6 + $0xed0] sm:$0xff]
    %v2779 = vld [vmem:[#allocation6 + $0xed8] sm:$0xff]
    %v2780 = vld [vmem:[#allocation6 + $0xee0] sm:$0xff]
    %v2781 = vld [vmem:[#allocation6 + $0xee8] sm:$0xff]
    %v2782 = vld [vmem:[#allocation6 + $0xef0] sm:$0xff]
    %v2783 = vld [vmem:[#allocation6 + $0xef8] sm:$0xff]
    %v2784 = vld [vmem:[#allocation6 + $0xf00] sm:$0xff]
    %v2785 = vld [vmem:[#allocation6 + $0xf08] sm:$0xff]
    %v2786 = vld [vmem:[#allocation6 + $0xf10] sm:$0xff]
    %v2787 = vld [vmem:[#allocation6 + $0xf18] sm:$0xff]
    %v2788 = vld [vmem:[#allocation6 + $0xf20] sm:$0xff]
    %v2789 = vld [vmem:[#allocation6 + $0xf28] sm:$0xff]
    %v2790 = vld [vmem:[#allocation6 + $0xf30] sm:$0xff]
    %v2791 = vld [vmem:[#allocation6 + $0xf38] sm:$0xff]
    %v2792 = vld [vmem:[#allocation6 + $0xf40] sm:$0xff]
    %v2793 = vld [vmem:[#allocation6 + $0xf48] sm:$0xff]
    %v2794 = vld [vmem:[#allocation6 + $0xf50] sm:$0xff]
    %v2795 = vld [vmem:[#allocation6 + $0xf58] sm:$0xff]
    %v2796 = vld [vmem:[#allocation6 + $0xf60] sm:$0xff]
    %v2797 = vld [vmem:[#allocation6 + $0xf68] sm:$0xff]
    %v2798 = vld [vmem:[#allocation6 + $0xf70] sm:$0xff]
    %v2799 = vld [vmem:[#allocation6 + $0xf78] sm:$0xff]
    %v2800 = vld [vmem:[#allocation6 + $0xf80] sm:$0xff]
    %v2801 = vld [vmem:[#allocation6 + $0xf88] sm:$0xff]
    %v2802 = vld [vmem:[#allocation6 + $0xf90] sm:$0xff]
    %v2803 = vld [vmem:[#allocation6 + $0xf98] sm:$0xff]
    %v2804 = vld [vmem:[#allocation6 + $0xfa0] sm:$0xff]
    %v2805 = vld [vmem:[#allocation6 + $0xfa8] sm:$0xff]
    %v2806 = vld [vmem:[#allocation6 + $0xfb0] sm:$0xff]
    %v2807 = vld [vmem:[#allocation6 + $0xfb8] sm:$0xff]
    %v2808 = vld [vmem:[#allocation6 + $0xfc0] sm:$0xff]
    %v2809 = vld [vmem:[#allocation6 + $0xfc8] sm:$0xff]
    %v2810 = vld [vmem:[#allocation6 + $0xfd0] sm:$0xff]
    %v2811 = vld [vmem:[#allocation6 + $0xfd8] sm:$0xff]
    %v2812 = vld [vmem:[#allocation6 + $0xfe0] sm:$0xff]
    %v2813 = vld [vmem:[#allocation6 + $0xfe8] sm:$0xff]
    %v2814 = vld [vmem:[#allocation6 + $0xff0] sm:$0xff]
    %v2815 = vld [vmem:[#allocation6 + $0xff8] sm:$0xff]
    %v2816 = vld [vmem:[#allocation6 + $0x1000] sm:$0xff]
    %v2817 = vld [vmem:[#allocation6 + $0x1008] sm:$0xff]
    %v2818 = vld [vmem:[#allocation6 + $0x1010] sm:$0xff]
    %v2819 = vld [vmem:[#allocation6 + $0x1018] sm:$0xff]
    %v2820 = vld [vmem:[#allocation6 + $0x1020] sm:$0xff]
    %v2821 = vld [vmem:[#allocation6 + $0x1028] sm:$0xff]
    %v2822 = vld [vmem:[#allocation6 + $0x1030] sm:$0xff]
    %v2823 = vld [vmem:[#allocation6 + $0x1038] sm:$0xff]
    %v2824 = vld [vmem:[#allocation6 + $0x1040] sm:$0xff]
    %v2825 = vld [vmem:[#allocation6 + $0x1048] sm:$0xff]
    %v2826 = vld [vmem:[#allocation6 + $0x1050] sm:$0xff]
    %v2827 = vld [vmem:[#allocation6 + $0x1058] sm:$0xff]
    %v2828 = vld [vmem:[#allocation6 + $0x1060] sm:$0xff]
    %v2829 = vld [vmem:[#allocation6 + $0x1068] sm:$0xff]
    %v2830 = vld [vmem:[#allocation6 + $0x1070] sm:$0xff]
    %v2831 = vld [vmem:[#allocation6 + $0x1078] sm:$0xff]
    %v2832 = vld [vmem:[#allocation6 + $0x1080] sm:$0xff]
    %v2833 = vld [vmem:[#allocation6 + $0x1088] sm:$0xff]
    %v2834 = vld [vmem:[#allocation6 + $0x1090] sm:$0xff]
    %v2835 = vld [vmem:[#allocation6 + $0x1098] sm:$0xff]
    %v2836 = vld [vmem:[#allocation6 + $0x10a0] sm:$0xff]
    %v2837 = vld [vmem:[#allocation6 + $0x10a8] sm:$0xff]
    %v2838 = vld [vmem:[#allocation6 + $0x10b0] sm:$0xff]
    %v2839 = vld [vmem:[#allocation6 + $0x10b8] sm:$0xff]
    %v2840 = vld [vmem:[#allocation6 + $0x10c0] sm:$0xff]
    %v2841 = vld [vmem:[#allocation6 + $0x10c8] sm:$0xff]
    %v2842 = vld [vmem:[#allocation6 + $0x10d0] sm:$0xff]
    %v2843 = vld [vmem:[#allocation6 + $0x10d8] sm:$0xff]
    %v2844 = vld [vmem:[#allocation6 + $0x10e0] sm:$0xff]
    %v2845 = vld [vmem:[#allocation6 + $0x10e8] sm:$0xff]
    %v2846 = vld [vmem:[#allocation6 + $0x10f0] sm:$0xff]
    %v2847 = vld [vmem:[#allocation6 + $0x10f8] sm:$0xff]
    %v2848 = vld [vmem:[#allocation6 + $0x1100] sm:$0xff]
    %v2849 = vld [vmem:[#allocation6 + $0x1108] sm:$0xff]
    %v2850 = vld [vmem:[#allocation6 + $0x1110] sm:$0xff]
    %v2851 = vld [vmem:[#allocation6 + $0x1118] sm:$0xff]
    %v2852 = vld [vmem:[#allocation6 + $0x1120] sm:$0xff]
    %v2853 = vld [vmem:[#allocation6 + $0x1128] sm:$0xff]
    %v2854 = vld [vmem:[#allocation6 + $0x1130] sm:$0xff]
    %v2855 = vld [vmem:[#allocation6 + $0x1138] sm:$0xff]
    %v2856 = vld [vmem:[#allocation6 + $0x1140] sm:$0xff]
    %v2857 = vld [vmem:[#allocation6 + $0x1148] sm:$0xff]
    %v2858 = vld [vmem:[#allocation6 + $0x1150] sm:$0xff]
    %v2859 = vld [vmem:[#allocation6 + $0x1158] sm:$0xff]
    %v2860 = vld [vmem:[#allocation6 + $0x1160] sm:$0xff]
    %v2861 = vld [vmem:[#allocation6 + $0x1168] sm:$0xff]
    %v2862 = vld [vmem:[#allocation6 + $0x1170] sm:$0xff]
    %v2863 = vld [vmem:[#allocation6 + $0x1178] sm:$0xff]
    %v2864 = vld [vmem:[#allocation6 + $0x1180] sm:$0xff]
    %v2865 = vld [vmem:[#allocation6 + $0x1188] sm:$0xff]
    %v2866 = vld [vmem:[#allocation6 + $0x1190] sm:$0xff]
    %v2867 = vld [vmem:[#allocation6 + $0x1198] sm:$0xff]
    %v2868 = vld [vmem:[#allocation6 + $0x11a0] sm:$0xff]
    %v2869 = vld [vmem:[#allocation6 + $0x11a8] sm:$0xff]
    %v2870 = vld [vmem:[#allocation6 + $0x11b0] sm:$0xff]
    %v2871 = vld [vmem:[#allocation6 + $0x11b8] sm:$0xff]
    %v2872 = vld [vmem:[#allocation6 + $0x11c0] sm:$0xff]
    %v2873 = vld [vmem:[#allocation6 + $0x11c8] sm:$0xff]
    %v2874 = vld [vmem:[#allocation6 + $0x11d0] sm:$0xff]
    %v2875 = vld [vmem:[#allocation6 + $0x11d8] sm:$0xff]
    %v2876 = vld [vmem:[#allocation6 + $0x11e0] sm:$0xff]
    %v2877 = vld [vmem:[#allocation6 + $0x11e8] sm:$0xff]
    %v2878 = vld [vmem:[#allocation6 + $0x11f0] sm:$0xff]
    %v2879 = vld [vmem:[#allocation6 + $0x11f8] sm:$0xff]
    %v2880 = vld [vmem:[#allocation6 + $0x1200] sm:$0xff]
    %v2881 = vld [vmem:[#allocation6 + $0x1208] sm:$0xff]
    %v2882 = vld [vmem:[#allocation6 + $0x1210] sm:$0xff]
    %v2883 = vld [vmem:[#allocation6 + $0x1218] sm:$0xff]
    %v2884 = vld [vmem:[#allocation6 + $0x1220] sm:$0xff]
    %v2885 = vld [vmem:[#allocation6 + $0x1228] sm:$0xff]
    %v2886 = vld [vmem:[#allocation6 + $0x1230] sm:$0xff]
    %v2887 = vld [vmem:[#allocation6 + $0x1238] sm:$0xff]
    %v2888 = vld [vmem:[#allocation6 + $0x1240] sm:$0xff]
    %v2889 = vld [vmem:[#allocation6 + $0x1248] sm:$0xff]
    %v2890 = vld [vmem:[#allocation6 + $0x1250] sm:$0xff]
    %v2891 = vld [vmem:[#allocation6 + $0x1258] sm:$0xff]
    %v2892 = vld [vmem:[#allocation6 + $0x1260] sm:$0xff]
    %v2893 = vld [vmem:[#allocation6 + $0x1268] sm:$0xff]
    %v2894 = vld [vmem:[#allocation6 + $0x1270] sm:$0xff]
    %v2895 = vld [vmem:[#allocation6 + $0x1278] sm:$0xff]
    %v2896 = vld [vmem:[#allocation6 + $0x1280] sm:$0xff]
    %v2897 = vld [vmem:[#allocation6 + $0x1288] sm:$0xff]
    %v2898 = vld [vmem:[#allocation6 + $0x1290] sm:$0xff]
    %v2899 = vld [vmem:[#allocation6 + $0x1298] sm:$0xff]
    %v2900 = vld [vmem:[#allocation6 + $0x12a0] sm:$0xff]
    %v2901 = vld [vmem:[#allocation6 + $0x12a8] sm:$0xff]
    %v2902 = vld [vmem:[#allocation6 + $0x12b0] sm:$0xff]
    %v2903 = vld [vmem:[#allocation6 + $0x12b8] sm:$0xff]
    %v2904 = vld [vmem:[#allocation6 + $0x12c0] sm:$0xff]
    %v2905 = vld [vmem:[#allocation6 + $0x12c8] sm:$0xff]
    %v2906 = vld [vmem:[#allocation6 + $0x12d0] sm:$0xff]
    %v2907 = vld [vmem:[#allocation6 + $0x12d8] sm:$0xff]
    %v2908 = vld [vmem:[#allocation6 + $0x12e0] sm:$0xff]
    %v2909 = vld [vmem:[#allocation6 + $0x12e8] sm:$0xff]
    %v2910 = vld [vmem:[#allocation6 + $0x12f0] sm:$0xff]
    %v2911 = vld [vmem:[#allocation6 + $0x12f8] sm:$0xff]
    %v2912 = vld [vmem:[#allocation6 + $0x1300] sm:$0xff]
    %v2913 = vld [vmem:[#allocation6 + $0x1308] sm:$0xff]
    %v2914 = vld [vmem:[#allocation6 + $0x1310] sm:$0xff]
    %v2915 = vld [vmem:[#allocation6 + $0x1318] sm:$0xff]
    %v2916 = vld [vmem:[#allocation6 + $0x1320] sm:$0xff]
    %v2917 = vld [vmem:[#allocation6 + $0x1328] sm:$0xff]
    %v2918 = vld [vmem:[#allocation6 + $0x1330] sm:$0xff]
    %v2919 = vld [vmem:[#allocation6 + $0x1338] sm:$0xff]
    %v2920 = vld [vmem:[#allocation6 + $0x1340] sm:$0xff]
    %v2921 = vld [vmem:[#allocation6 + $0x1348] sm:$0xff]
    %v2922 = vld [vmem:[#allocation6 + $0x1350] sm:$0xff]
    %v2923 = vld [vmem:[#allocation6 + $0x1358] sm:$0xff]
    %v2924 = vld [vmem:[#allocation6 + $0x1360] sm:$0xff]
    %v2925 = vld [vmem:[#allocation6 + $0x1368] sm:$0xff]
    %v2926 = vld [vmem:[#allocation6 + $0x1370] sm:$0xff]
    %v2927 = vld [vmem:[#allocation6 + $0x1378] sm:$0xff]
    %v2928 = vld [vmem:[#allocation6 + $0x1380] sm:$0xff]
    %v2929 = vld [vmem:[#allocation6 + $0x1388] sm:$0xff]
    %v2930 = vld [vmem:[#allocation6 + $0x1390] sm:$0xff]
    %v2931 = vld [vmem:[#allocation6 + $0x1398] sm:$0xff]
    %v2932 = vld [vmem:[#allocation6 + $0x13a0] sm:$0xff]
    %v2933 = vld [vmem:[#allocation6 + $0x13a8] sm:$0xff]
    %v2934 = vld [vmem:[#allocation6 + $0x13b0] sm:$0xff]
    %v2935 = vld [vmem:[#allocation6 + $0x13b8] sm:$0xff]
    %v2936 = vld [vmem:[#allocation6 + $0x13c0] sm:$0xff]
    %v2937 = vld [vmem:[#allocation6 + $0x13c8] sm:$0xff]
    %v2938 = vld [vmem:[#allocation6 + $0x13d0] sm:$0xff]
    %v2939 = vld [vmem:[#allocation6 + $0x13d8] sm:$0xff]
    %v2940 = vld [vmem:[#allocation6 + $0x13e0] sm:$0xff]
    %v2941 = vld [vmem:[#allocation6 + $0x13e8] sm:$0xff]
    %v2942 = vld [vmem:[#allocation6 + $0x13f0] sm:$0xff]
    %v2943 = vld [vmem:[#allocation6 + $0x13f8] sm:$0xff]
    %v2944 = vld [vmem:[#allocation6 + $0x1400] sm:$0xff]
    %v2945 = vld [vmem:[#allocation6 + $0x1408] sm:$0xff]
    %v2946 = vld [vmem:[#allocation6 + $0x1410] sm:$0xff]
    %v2947 = vld [vmem:[#allocation6 + $0x1418] sm:$0xff]
    %v2948 = vld [vmem:[#allocation6 + $0x1420] sm:$0xff]
    %v2949 = vld [vmem:[#allocation6 + $0x1428] sm:$0xff]
    %v2950 = vld [vmem:[#allocation6 + $0x1430] sm:$0xff]
    %v2951 = vld [vmem:[#allocation6 + $0x1438] sm:$0xff]
    %v2952 = vld [vmem:[#allocation6 + $0x1440] sm:$0xff]
    %v2953 = vld [vmem:[#allocation6 + $0x1448] sm:$0xff]
    %v2954 = vld [vmem:[#allocation6 + $0x1450] sm:$0xff]
    %v2955 = vld [vmem:[#allocation6 + $0x1458] sm:$0xff]
    %v2956 = vld [vmem:[#allocation6 + $0x1460] sm:$0xff]
    %v2957 = vld [vmem:[#allocation6 + $0x1468] sm:$0xff]
    %v2958 = vld [vmem:[#allocation6 + $0x1470] sm:$0xff]
    %v2959 = vld [vmem:[#allocation6 + $0x1478] sm:$0xff]
    %v2960 = vld [vmem:[#allocation6 + $0x1480] sm:$0xff]
    %v2961 = vld [vmem:[#allocation6 + $0x1488] sm:$0xff]
    %v2962 = vld [vmem:[#allocation6 + $0x1490] sm:$0xff]
    %v2963 = vld [vmem:[#allocation6 + $0x1498] sm:$0xff]
    %v2964 = vld [vmem:[#allocation6 + $0x14a0] sm:$0xff]
    %v2965 = vld [vmem:[#allocation6 + $0x14a8] sm:$0xff]
    %v2966 = vld [vmem:[#allocation6 + $0x14b0] sm:$0xff]
    %v2967 = vld [vmem:[#allocation6 + $0x14b8] sm:$0xff]
    %v2968 = vld [vmem:[#allocation6 + $0x14c0] sm:$0xff]
    %v2969 = vld [vmem:[#allocation6 + $0x14c8] sm:$0xff]
    %v2970 = vld [vmem:[#allocation6 + $0x14d0] sm:$0xff]
    %v2971 = vld [vmem:[#allocation6 + $0x14d8] sm:$0xff]
    %v2972 = vld [vmem:[#allocation6 + $0x14e0] sm:$0xff]
    %v2973 = vld [vmem:[#allocation6 + $0x14e8] sm:$0xff]
    %v2974 = vld [vmem:[#allocation6 + $0x14f0] sm:$0xff]
    %v2975 = vld [vmem:[#allocation6 + $0x14f8] sm:$0xff]
    %v2976 = vld [vmem:[#allocation6 + $0x1500] sm:$0xff]
    %v2977 = vld [vmem:[#allocation6 + $0x1508] sm:$0xff]
    %v2978 = vld [vmem:[#allocation6 + $0x1510] sm:$0xff]
    %v2979 = vld [vmem:[#allocation6 + $0x1518] sm:$0xff]
    %v2980 = vld [vmem:[#allocation6 + $0x1520] sm:$0xff]
    %v2981 = vld [vmem:[#allocation6 + $0x1528] sm:$0xff]
    %v2982 = vld [vmem:[#allocation6 + $0x1530] sm:$0xff]
    %v2983 = vld [vmem:[#allocation6 + $0x1538] sm:$0xff]
    %v2984 = vld [vmem:[#allocation6 + $0x1540] sm:$0xff]
    %v2985 = vld [vmem:[#allocation6 + $0x1548] sm:$0xff]
    %v2986 = vld [vmem:[#allocation6 + $0x1550] sm:$0xff]
    %v2987 = vld [vmem:[#allocation6 + $0x1558] sm:$0xff]
    %v2988 = vld [vmem:[#allocation6 + $0x1560] sm:$0xff]
    %v2989 = vld [vmem:[#allocation6 + $0x1568] sm:$0xff]
    %v2990 = vld [vmem:[#allocation6 + $0x1570] sm:$0xff]
    %v2991 = vld [vmem:[#allocation6 + $0x1578] sm:$0xff]
    %v2992 = vld [vmem:[#allocation6 + $0x1580] sm:$0xff]
    %v2993 = vld [vmem:[#allocation6 + $0x1588] sm:$0xff]
    %v2994 = vld [vmem:[#allocation6 + $0x1590] sm:$0xff]
    %v2995 = vld [vmem:[#allocation6 + $0x1598] sm:$0xff]
    %v2996 = vld [vmem:[#allocation6 + $0x15a0] sm:$0xff]
    %v2997 = vld [vmem:[#allocation6 + $0x15a8] sm:$0xff]
    %v2998 = vld [vmem:[#allocation6 + $0x15b0] sm:$0xff]
    %v2999 = vld [vmem:[#allocation6 + $0x15b8] sm:$0xff]
    %v3000 = vld [vmem:[#allocation6 + $0x15c0] sm:$0xff]
    %v3001 = vld [vmem:[#allocation6 + $0x15c8] sm:$0xff]
    %v3002 = vld [vmem:[#allocation6 + $0x15d0] sm:$0xff]
    %v3003 = vld [vmem:[#allocation6 + $0x15d8] sm:$0xff]
    %v3004 = vld [vmem:[#allocation6 + $0x15e0] sm:$0xff]
    %v3005 = vld [vmem:[#allocation6 + $0x15e8] sm:$0xff]
    %v3006 = vld [vmem:[#allocation6 + $0x15f0] sm:$0xff]
    %v3007 = vld [vmem:[#allocation6 + $0x15f8] sm:$0xff]
    %v3008 = vld [vmem:[#allocation6 + $0x1600] sm:$0xff]
    %v3009 = vld [vmem:[#allocation6 + $0x1608] sm:$0xff]
    %v3010 = vld [vmem:[#allocation6 + $0x1610] sm:$0xff]
    %v3011 = vld [vmem:[#allocation6 + $0x1618] sm:$0xff]
    %v3012 = vld [vmem:[#allocation6 + $0x1620] sm:$0xff]
    %v3013 = vld [vmem:[#allocation6 + $0x1628] sm:$0xff]
    %v3014 = vld [vmem:[#allocation6 + $0x1630] sm:$0xff]
    %v3015 = vld [vmem:[#allocation6 + $0x1638] sm:$0xff]
    %v3016 = vld [vmem:[#allocation6 + $0x1640] sm:$0xff]
    %v3017 = vld [vmem:[#allocation6 + $0x1648] sm:$0xff]
    %v3018 = vld [vmem:[#allocation6 + $0x1650] sm:$0xff]
    %v3019 = vld [vmem:[#allocation6 + $0x1658] sm:$0xff]
    %v3020 = vld [vmem:[#allocation6 + $0x1660] sm:$0xff]
    %v3021 = vld [vmem:[#allocation6 + $0x1668] sm:$0xff]
    %v3022 = vld [vmem:[#allocation6 + $0x1670] sm:$0xff]
    %v3023 = vld [vmem:[#allocation6 + $0x1678] sm:$0xff]
    %v3024 = vld [vmem:[#allocation6 + $0x1680] sm:$0xff]
    %v3025 = vld [vmem:[#allocation6 + $0x1688] sm:$0xff]
    %v3026 = vld [vmem:[#allocation6 + $0x1690] sm:$0xff]
    %v3027 = vld [vmem:[#allocation6 + $0x1698] sm:$0xff]
    %v3028 = vld [vmem:[#allocation6 + $0x16a0] sm:$0xff]
    %v3029 = vld [vmem:[#allocation6 + $0x16a8] sm:$0xff]
    %v3030 = vld [vmem:[#allocation6 + $0x16b0] sm:$0xff]
    %v3031 = vld [vmem:[#allocation6 + $0x16b8] sm:$0xff]
    %v3032 = vld [vmem:[#allocation6 + $0x16c0] sm:$0xff]
    %v3033 = vld [vmem:[#allocation6 + $0x16c8] sm:$0xff]
    %v3034 = vld [vmem:[#allocation6 + $0x16d0] sm:$0xff]
    %v3035 = vld [vmem:[#allocation6 + $0x16d8] sm:$0xff]
    %v3036 = vld [vmem:[#allocation6 + $0x16e0] sm:$0xff]
    %v3037 = vld [vmem:[#allocation6 + $0x16e8] sm:$0xff]
    %v3038 = vld [vmem:[#allocation6 + $0x16f0] sm:$0xff]
    %v3039 = vld [vmem:[#allocation6 + $0x16f8] sm:$0xff]
    %v3040 = vld [vmem:[#allocation6 + $0x1700] sm:$0xff]
    %v3041 = vld [vmem:[#allocation6 + $0x1708] sm:$0xff]
    %v3042 = vld [vmem:[#allocation6 + $0x1710] sm:$0xff]
    %v3043 = vld [vmem:[#allocation6 + $0x1718] sm:$0xff]
    %v3044 = vld [vmem:[#allocation6 + $0x1720] sm:$0xff]
    %v3045 = vld [vmem:[#allocation6 + $0x1728] sm:$0xff]
    %v3046 = vld [vmem:[#allocation6 + $0x1730] sm:$0xff]
    %v3047 = vld [vmem:[#allocation6 + $0x1738] sm:$0xff]
    %v3048 = vld [vmem:[#allocation6 + $0x1740] sm:$0xff]
    %v3049 = vld [vmem:[#allocation6 + $0x1748] sm:$0xff]
    %v3050 = vld [vmem:[#allocation6 + $0x1750] sm:$0xff]
    %v3051 = vld [vmem:[#allocation6 + $0x1758] sm:$0xff]
    %v3052 = vld [vmem:[#allocation6 + $0x1760] sm:$0xff]
    %v3053 = vld [vmem:[#allocation6 + $0x1768] sm:$0xff]
    %v3054 = vld [vmem:[#allocation6 + $0x1770] sm:$0xff]
    %v3055 = vld [vmem:[#allocation6 + $0x1778] sm:$0xff]
    %v3056 = vld [vmem:[#allocation6 + $0x1780] sm:$0xff]
    %v3057 = vld [vmem:[#allocation6 + $0x1788] sm:$0xff]
    %v3058 = vld [vmem:[#allocation6 + $0x1790] sm:$0xff]
    %v3059 = vld [vmem:[#allocation6 + $0x1798] sm:$0xff]
    %v3060 = vld [vmem:[#allocation6 + $0x17a0] sm:$0xff]
    %v3061 = vld [vmem:[#allocation6 + $0x17a8] sm:$0xff]
    %v3062 = vld [vmem:[#allocation6 + $0x17b0] sm:$0xff]
    %v3063 = vld [vmem:[#allocation6 + $0x17b8] sm:$0xff]
    %v3064 = vld [vmem:[#allocation6 + $0x17c0] sm:$0xff]
    %v3065 = vld [vmem:[#allocation6 + $0x17c8] sm:$0xff]
    %v3066 = vld [vmem:[#allocation6 + $0x17d0] sm:$0xff]
    %v3067 = vld [vmem:[#allocation6 + $0x17d8] sm:$0xff]
    %v3068 = vld [vmem:[#allocation6 + $0x17e0] sm:$0xff]
    %v3069 = vld [vmem:[#allocation6 + $0x17e8] sm:$0xff]
    %v3070 = vld [vmem:[#allocation6 + $0x17f0] sm:$0xff]
    %v3071 = vld [vmem:[#allocation6 + $0x17f8] sm:$0xff]
    %v3072 = vld [vmem:[#allocation7] sm:$0xff]
    %v3073 = vld [vmem:[#allocation7 + $0x8] sm:$0xff]
    %v3076 = vlaneseq
    %v3077 = vshrl.u32 %v3076, 7
    %v3078 = vsub.s32 0, %v3077
    %v3079 = vrot.slane %v3072, %v3078
    %v3080 = vlaneseq
    %v3081 = vshrl.u32 %v3080, 7
    %v3082 = vsub.s32 1, %v3081
    %v3083 = vrot.slane %v3072, %v3082
    %v3084 = vlaneseq
    %v3085 = vshrl.u32 %v3084, 7
    %v3086 = vsub.s32 2, %v3085
    %v3087 = vrot.slane %v3072, %v3086
    %v3088 = vlaneseq
    %v3089 = vshrl.u32 %v3088, 7
    %v3090 = vsub.s32 3, %v3089
    %v3091 = vrot.slane %v3072, %v3090
    %v3092 = vlaneseq
    %v3093 = vshrl.u32 %v3092, 7
    %v3094 = vsub.s32 4, %v3093
    %v3095 = vrot.slane %v3072, %v3094
    %v3096 = vlaneseq
    %v3097 = vshrl.u32 %v3096, 7
    %v3098 = vsub.s32 5, %v3097
    %v3099 = vrot.slane %v3072, %v3098
    %v3100 = vlaneseq
    %v3101 = vshrl.u32 %v3100, 7
    %v3102 = vsub.s32 6, %v3101
    %v3103 = vrot.slane %v3072, %v3102
    %v3104 = vlaneseq
    %v3105 = vshrl.u32 %v3104, 7
    %v3106 = vsub.s32 7, %v3105
    %v3107 = vrot.slane %v3072, %v3106
    %v3108 = vlaneseq
    %v3109 = vshrl.u32 %v3108, 7
    %v3110 = vsub.s32 0, %v3109
    %v3111 = vrot.slane %v3073, %v3110
    %v3112 = vlaneseq
    %v3113 = vshrl.u32 %v3112, 7
    %v3114 = vsub.s32 1, %v3113
    %v3115 = vrot.slane %v3073, %v3114
    %v3116 = vlaneseq
    %v3117 = vshrl.u32 %v3116, 7
    %v3118 = vsub.s32 2, %v3117
    %v3119 = vrot.slane %v3073, %v3118
    %v3120 = vlaneseq
    %v3121 = vshrl.u32 %v3120, 7
    %v3122 = vsub.s32 3, %v3121
    %v3123 = vrot.slane %v3073, %v3122
    %v3124 = vlaneseq
    %v3125 = vshrl.u32 %v3124, 7
    %v3126 = vsub.s32 4, %v3125
    %v3127 = vrot.slane %v3073, %v3126
    %v3128 = vlaneseq
    %v3129 = vshrl.u32 %v3128, 7
    %v3130 = vsub.s32 5, %v3129
    %v3131 = vrot.slane %v3073, %v3130
    %v3132 = vlaneseq
    %v3133 = vshrl.u32 %v3132, 7
    %v3134 = vsub.s32 6, %v3133
    %v3135 = vrot.slane %v3073, %v3134
    %v3136 = vlaneseq
    %v3137 = vshrl.u32 %v3136, 7
    %v3138 = vsub.s32 7, %v3137
    %v3139 = vrot.slane %v3073, %v3138
    %v3924 = vunpack.c.l.b16 %v2304
    %v3925 = vunpack.c.h.b16 %v2304
    %v3926 = vunpack.c.l.b16 %v2305
    %v3927 = vunpack.c.h.b16 %v2305
    %v3928 = vunpack.c.l.b16 %v2306
    %v3929 = vunpack.c.h.b16 %v2306
    %v3930 = vunpack.c.l.b16 %v2307
    %v3931 = vunpack.c.h.b16 %v2307
    %v3932 = vunpack.c.l.b16 %v2308
    %v3933 = vunpack.c.h.b16 %v2308
    %v3934 = vunpack.c.l.b16 %v2309
    %v3935 = vunpack.c.h.b16 %v2309
    %v3936 = vunpack.c.l.b16 %v2310
    %v3937 = vunpack.c.h.b16 %v2310
    %v3938 = vunpack.c.l.b16 %v2311
    %v3939 = vunpack.c.h.b16 %v2311
    %v3940 = vunpack.c.l.b16 %v2312
    %v3941 = vunpack.c.h.b16 %v2312
    %v3942 = vunpack.c.l.b16 %v2313
    %v3943 = vunpack.c.h.b16 %v2313
    %v3944 = vunpack.c.l.b16 %v2314
    %v3945 = vunpack.c.h.b16 %v2314
    %v3946 = vunpack.c.l.b16 %v2315
    %v3947 = vunpack.c.h.b16 %v2315
    %v3948 = vunpack.c.l.b16 %v2316
    %v3949 = vunpack.c.h.b16 %v2316
    %v3950 = vunpack.c.l.b16 %v2317
    %v3951 = vunpack.c.h.b16 %v2317
    %v3952 = vunpack.c.l.b16 %v2318
    %v3953 = vunpack.c.h.b16 %v2318
    %v3954 = vunpack.c.l.b16 %v2319
    %v3955 = vunpack.c.h.b16 %v2319
    %v3956 = vunpack.c.l.b16 %v2320
    %v3957 = vunpack.c.h.b16 %v2320
    %v3958 = vunpack.c.l.b16 %v2321
    %v3959 = vunpack.c.h.b16 %v2321
    %v3960 = vunpack.c.l.b16 %v2322
    %v3961 = vunpack.c.h.b16 %v2322
    %v3962 = vunpack.c.l.b16 %v2323
    %v3963 = vunpack.c.h.b16 %v2323
    %v3964 = vunpack.c.l.b16 %v2324
    %v3965 = vunpack.c.h.b16 %v2324
    %v3966 = vunpack.c.l.b16 %v2325
    %v3967 = vunpack.c.h.b16 %v2325
    %v3968 = vunpack.c.l.b16 %v2326
    %v3969 = vunpack.c.h.b16 %v2326
    %v3970 = vunpack.c.l.b16 %v2327
    %v3971 = vunpack.c.h.b16 %v2327
    %v3972 = vunpack.c.l.b16 %v2328
    %v3973 = vunpack.c.h.b16 %v2328
    %v3974 = vunpack.c.l.b16 %v2329
    %v3975 = vunpack.c.h.b16 %v2329
    %v3976 = vunpack.c.l.b16 %v2330
    %v3977 = vunpack.c.h.b16 %v2330
    %v3978 = vunpack.c.l.b16 %v2331
    %v3979 = vunpack.c.h.b16 %v2331
    %v3980 = vunpack.c.l.b16 %v2332
    %v3981 = vunpack.c.h.b16 %v2332
    %v3982 = vunpack.c.l.b16 %v2333
    %v3983 = vunpack.c.h.b16 %v2333
    %v3984 = vunpack.c.l.b16 %v2334
    %v3985 = vunpack.c.h.b16 %v2334
    %v3986 = vunpack.c.l.b16 %v2335
    %v3987 = vunpack.c.h.b16 %v2335
    %v3988 = vunpack.c.l.b16 %v2336
    %v3989 = vunpack.c.h.b16 %v2336
    %v3990 = vunpack.c.l.b16 %v2337
    %v3991 = vunpack.c.h.b16 %v2337
    %v3992 = vunpack.c.l.b16 %v2338
    %v3993 = vunpack.c.h.b16 %v2338
    %v3994 = vunpack.c.l.b16 %v2339
    %v3995 = vunpack.c.h.b16 %v2339
    %v3996 = vunpack.c.l.b16 %v2340
    %v3997 = vunpack.c.h.b16 %v2340
    %v3998 = vunpack.c.l.b16 %v2341
    %v3999 = vunpack.c.h.b16 %v2341
    %v4000 = vunpack.c.l.b16 %v2342
    %v4001 = vunpack.c.h.b16 %v2342
    %v4002 = vunpack.c.l.b16 %v2343
    %v4003 = vunpack.c.h.b16 %v2343
    %v4004 = vunpack.c.l.b16 %v2344
    %v4005 = vunpack.c.h.b16 %v2344
    %v4006 = vunpack.c.l.b16 %v2345
    %v4007 = vunpack.c.h.b16 %v2345
    %v4008 = vunpack.c.l.b16 %v2346
    %v4009 = vunpack.c.h.b16 %v2346
    %v4010 = vunpack.c.l.b16 %v2347
    %v4011 = vunpack.c.h.b16 %v2347
    %v4012 = vunpack.c.l.b16 %v2348
    %v4013 = vunpack.c.h.b16 %v2348
    %v4014 = vunpack.c.l.b16 %v2349
    %v4015 = vunpack.c.h.b16 %v2349
    %v4016 = vunpack.c.l.b16 %v2350
    %v4017 = vunpack.c.h.b16 %v2350
    %v4018 = vunpack.c.l.b16 %v2351
    %v4019 = vunpack.c.h.b16 %v2351
    %v4020 = vunpack.c.l.b16 %v2352
    %v4021 = vunpack.c.h.b16 %v2352
    %v4022 = vunpack.c.l.b16 %v2353
    %v4023 = vunpack.c.h.b16 %v2353
    %v4024 = vunpack.c.l.b16 %v2354
    %v4025 = vunpack.c.h.b16 %v2354
    %v4026 = vunpack.c.l.b16 %v2355
    %v4027 = vunpack.c.h.b16 %v2355
    %v4028 = vunpack.c.l.b16 %v2356
    %v4029 = vunpack.c.h.b16 %v2356
    %v4030 = vunpack.c.l.b16 %v2357
    %v4031 = vunpack.c.h.b16 %v2357
    %v4032 = vunpack.c.l.b16 %v2358
    %v4033 = vunpack.c.h.b16 %v2358
    %v4034 = vunpack.c.l.b16 %v2359
    %v4035 = vunpack.c.h.b16 %v2359
    %v4036 = vunpack.c.l.b16 %v2360
    %v4037 = vunpack.c.h.b16 %v2360
    %v4038 = vunpack.c.l.b16 %v2361
    %v4039 = vunpack.c.h.b16 %v2361
    %v4040 = vunpack.c.l.b16 %v2362
    %v4041 = vunpack.c.h.b16 %v2362
    %v4042 = vunpack.c.l.b16 %v2363
    %v4043 = vunpack.c.h.b16 %v2363
    %v4044 = vunpack.c.l.b16 %v2364
    %v4045 = vunpack.c.h.b16 %v2364
    %v4046 = vunpack.c.l.b16 %v2365
    %v4047 = vunpack.c.h.b16 %v2365
    %v4048 = vunpack.c.l.b16 %v2366
    %v4049 = vunpack.c.h.b16 %v2366
    %v4050 = vunpack.c.l.b16 %v2367
    %v4051 = vunpack.c.h.b16 %v2367
    %v4052 = vunpack.c.l.b16 %v2368
    %v4053 = vunpack.c.h.b16 %v2368
    %v4054 = vunpack.c.l.b16 %v2369
    %v4055 = vunpack.c.h.b16 %v2369
    %v4056 = vunpack.c.l.b16 %v2370
    %v4057 = vunpack.c.h.b16 %v2370
    %v4058 = vunpack.c.l.b16 %v2371
    %v4059 = vunpack.c.h.b16 %v2371
    %v4060 = vunpack.c.l.b16 %v2372
    %v4061 = vunpack.c.h.b16 %v2372
    %v4062 = vunpack.c.l.b16 %v2373
    %v4063 = vunpack.c.h.b16 %v2373
    %v4064 = vunpack.c.l.b16 %v2374
    %v4065 = vunpack.c.h.b16 %v2374
    %v4066 = vunpack.c.l.b16 %v2375
    %v4067 = vunpack.c.h.b16 %v2375
    %v4068 = vunpack.c.l.b16 %v2376
    %v4069 = vunpack.c.h.b16 %v2376
    %v4070 = vunpack.c.l.b16 %v2377
    %v4071 = vunpack.c.h.b16 %v2377
    %v4072 = vunpack.c.l.b16 %v2378
    %v4073 = vunpack.c.h.b16 %v2378
    %v4074 = vunpack.c.l.b16 %v2379
    %v4075 = vunpack.c.h.b16 %v2379
    %v4076 = vunpack.c.l.b16 %v2380
    %v4077 = vunpack.c.h.b16 %v2380
    %v4078 = vunpack.c.l.b16 %v2381
    %v4079 = vunpack.c.h.b16 %v2381
    %v4080 = vunpack.c.l.b16 %v2382
    %v4081 = vunpack.c.h.b16 %v2382
    %v4082 = vunpack.c.l.b16 %v2383
    %v4083 = vunpack.c.h.b16 %v2383
    %v4084 = vunpack.c.l.b16 %v2384
    %v4085 = vunpack.c.h.b16 %v2384
    %v4086 = vunpack.c.l.b16 %v2385
    %v4087 = vunpack.c.h.b16 %v2385
    %v4088 = vunpack.c.l.b16 %v2386
    %v4089 = vunpack.c.h.b16 %v2386
    %v4090 = vunpack.c.l.b16 %v2387
    %v4091 = vunpack.c.h.b16 %v2387
    %v4092 = vunpack.c.l.b16 %v2388
    %v4093 = vunpack.c.h.b16 %v2388
    %v4094 = vunpack.c.l.b16 %v2389
    %v4095 = vunpack.c.h.b16 %v2389
    %v4096 = vunpack.c.l.b16 %v2390
    %v4097 = vunpack.c.h.b16 %v2390
    %v4098 = vunpack.c.l.b16 %v2391
    %v4099 = vunpack.c.h.b16 %v2391
    %v4100 = vunpack.c.l.b16 %v2392
    %v4101 = vunpack.c.h.b16 %v2392
    %v4102 = vunpack.c.l.b16 %v2393
    %v4103 = vunpack.c.h.b16 %v2393
    %v4104 = vunpack.c.l.b16 %v2394
    %v4105 = vunpack.c.h.b16 %v2394
    %v4106 = vunpack.c.l.b16 %v2395
    %v4107 = vunpack.c.h.b16 %v2395
    %v4108 = vunpack.c.l.b16 %v2396
    %v4109 = vunpack.c.h.b16 %v2396
    %v4110 = vunpack.c.l.b16 %v2397
    %v4111 = vunpack.c.h.b16 %v2397
    %v4112 = vunpack.c.l.b16 %v2398
    %v4113 = vunpack.c.h.b16 %v2398
    %v4114 = vunpack.c.l.b16 %v2399
    %v4115 = vunpack.c.h.b16 %v2399
    %v4116 = vunpack.c.l.b16 %v2400
    %v4117 = vunpack.c.h.b16 %v2400
    %v4118 = vunpack.c.l.b16 %v2401
    %v4119 = vunpack.c.h.b16 %v2401
    %v4120 = vunpack.c.l.b16 %v2402
    %v4121 = vunpack.c.h.b16 %v2402
    %v4122 = vunpack.c.l.b16 %v2403
    %v4123 = vunpack.c.h.b16 %v2403
    %v4124 = vunpack.c.l.b16 %v2404
    %v4125 = vunpack.c.h.b16 %v2404
    %v4126 = vunpack.c.l.b16 %v2405
    %v4127 = vunpack.c.h.b16 %v2405
    %v4128 = vunpack.c.l.b16 %v2406
    %v4129 = vunpack.c.h.b16 %v2406
    %v4130 = vunpack.c.l.b16 %v2407
    %v4131 = vunpack.c.h.b16 %v2407
    %v4132 = vunpack.c.l.b16 %v2408
    %v4133 = vunpack.c.h.b16 %v2408
    %v4134 = vunpack.c.l.b16 %v2409
    %v4135 = vunpack.c.h.b16 %v2409
    %v4136 = vunpack.c.l.b16 %v2410
    %v4137 = vunpack.c.h.b16 %v2410
    %v4138 = vunpack.c.l.b16 %v2411
    %v4139 = vunpack.c.h.b16 %v2411
    %v4140 = vunpack.c.l.b16 %v2412
    %v4141 = vunpack.c.h.b16 %v2412
    %v4142 = vunpack.c.l.b16 %v2413
    %v4143 = vunpack.c.h.b16 %v2413
    %v4144 = vunpack.c.l.b16 %v2414
    %v4145 = vunpack.c.h.b16 %v2414
    %v4146 = vunpack.c.l.b16 %v2415
    %v4147 = vunpack.c.h.b16 %v2415
    %v4148 = vunpack.c.l.b16 %v2416
    %v4149 = vunpack.c.h.b16 %v2416
    %v4150 = vunpack.c.l.b16 %v2417
    %v4151 = vunpack.c.h.b16 %v2417
    %v4152 = vunpack.c.l.b16 %v2418
    %v4153 = vunpack.c.h.b16 %v2418
    %v4154 = vunpack.c.l.b16 %v2419
    %v4155 = vunpack.c.h.b16 %v2419
    %v4156 = vunpack.c.l.b16 %v2420
    %v4157 = vunpack.c.h.b16 %v2420
    %v4158 = vunpack.c.l.b16 %v2421
    %v4159 = vunpack.c.h.b16 %v2421
    %v4160 = vunpack.c.l.b16 %v2422
    %v4161 = vunpack.c.h.b16 %v2422
    %v4162 = vunpack.c.l.b16 %v2423
    %v4163 = vunpack.c.h.b16 %v2423
    %v4164 = vunpack.c.l.b16 %v2424
    %v4165 = vunpack.c.h.b16 %v2424
    %v4166 = vunpack.c.l.b16 %v2425
    %v4167 = vunpack.c.h.b16 %v2425
    %v4168 = vunpack.c.l.b16 %v2426
    %v4169 = vunpack.c.h.b16 %v2426
    %v4170 = vunpack.c.l.b16 %v2427
    %v4171 = vunpack.c.h.b16 %v2427
    %v4172 = vunpack.c.l.b16 %v2428
    %v4173 = vunpack.c.h.b16 %v2428
    %v4174 = vunpack.c.l.b16 %v2429
    %v4175 = vunpack.c.h.b16 %v2429
    %v4176 = vunpack.c.l.b16 %v2430
    %v4177 = vunpack.c.h.b16 %v2430
    %v4178 = vunpack.c.l.b16 %v2431
    %v4179 = vunpack.c.h.b16 %v2431
    %v4180 = vunpack.c.l.b16 %v2432
    %v4181 = vunpack.c.h.b16 %v2432
    %v4182 = vunpack.c.l.b16 %v2433
    %v4183 = vunpack.c.h.b16 %v2433
    %v4184 = vunpack.c.l.b16 %v2434
    %v4185 = vunpack.c.h.b16 %v2434
    %v4186 = vunpack.c.l.b16 %v2435
    %v4187 = vunpack.c.h.b16 %v2435
    %v4188 = vunpack.c.l.b16 %v2436
    %v4189 = vunpack.c.h.b16 %v2436
    %v4190 = vunpack.c.l.b16 %v2437
    %v4191 = vunpack.c.h.b16 %v2437
    %v4192 = vunpack.c.l.b16 %v2438
    %v4193 = vunpack.c.h.b16 %v2438
    %v4194 = vunpack.c.l.b16 %v2439
    %v4195 = vunpack.c.h.b16 %v2439
    %v4196 = vunpack.c.l.b16 %v2440
    %v4197 = vunpack.c.h.b16 %v2440
    %v4198 = vunpack.c.l.b16 %v2441
    %v4199 = vunpack.c.h.b16 %v2441
    %v4200 = vunpack.c.l.b16 %v2442
    %v4201 = vunpack.c.h.b16 %v2442
    %v4202 = vunpack.c.l.b16 %v2443
    %v4203 = vunpack.c.h.b16 %v2443
    %v4204 = vunpack.c.l.b16 %v2444
    %v4205 = vunpack.c.h.b16 %v2444
    %v4206 = vunpack.c.l.b16 %v2445
    %v4207 = vunpack.c.h.b16 %v2445
    %v4208 = vunpack.c.l.b16 %v2446
    %v4209 = vunpack.c.h.b16 %v2446
    %v4210 = vunpack.c.l.b16 %v2447
    %v4211 = vunpack.c.h.b16 %v2447
    %v4212 = vunpack.c.l.b16 %v2448
    %v4213 = vunpack.c.h.b16 %v2448
    %v4214 = vunpack.c.l.b16 %v2449
    %v4215 = vunpack.c.h.b16 %v2449
    %v4216 = vunpack.c.l.b16 %v2450
    %v4217 = vunpack.c.h.b16 %v2450
    %v4218 = vunpack.c.l.b16 %v2451
    %v4219 = vunpack.c.h.b16 %v2451
    %v4220 = vunpack.c.l.b16 %v2452
    %v4221 = vunpack.c.h.b16 %v2452
    %v4222 = vunpack.c.l.b16 %v2453
    %v4223 = vunpack.c.h.b16 %v2453
    %v4224 = vunpack.c.l.b16 %v2454
    %v4225 = vunpack.c.h.b16 %v2454
    %v4226 = vunpack.c.l.b16 %v2455
    %v4227 = vunpack.c.h.b16 %v2455
    %v4228 = vunpack.c.l.b16 %v2456
    %v4229 = vunpack.c.h.b16 %v2456
    %v4230 = vunpack.c.l.b16 %v2457
    %v4231 = vunpack.c.h.b16 %v2457
    %v4232 = vunpack.c.l.b16 %v2458
    %v4233 = vunpack.c.h.b16 %v2458
    %v4234 = vunpack.c.l.b16 %v2459
    %v4235 = vunpack.c.h.b16 %v2459
    %v4236 = vunpack.c.l.b16 %v2460
    %v4237 = vunpack.c.h.b16 %v2460
    %v4238 = vunpack.c.l.b16 %v2461
    %v4239 = vunpack.c.h.b16 %v2461
    %v4240 = vunpack.c.l.b16 %v2462
    %v4241 = vunpack.c.h.b16 %v2462
    %v4242 = vunpack.c.l.b16 %v2463
    %v4243 = vunpack.c.h.b16 %v2463
    %v4244 = vunpack.c.l.b16 %v2464
    %v4245 = vunpack.c.h.b16 %v2464
    %v4246 = vunpack.c.l.b16 %v2465
    %v4247 = vunpack.c.h.b16 %v2465
    %v4248 = vunpack.c.l.b16 %v2466
    %v4249 = vunpack.c.h.b16 %v2466
    %v4250 = vunpack.c.l.b16 %v2467
    %v4251 = vunpack.c.h.b16 %v2467
    %v4252 = vunpack.c.l.b16 %v2468
    %v4253 = vunpack.c.h.b16 %v2468
    %v4254 = vunpack.c.l.b16 %v2469
    %v4255 = vunpack.c.h.b16 %v2469
    %v4256 = vunpack.c.l.b16 %v2470
    %v4257 = vunpack.c.h.b16 %v2470
    %v4258 = vunpack.c.l.b16 %v2471
    %v4259 = vunpack.c.h.b16 %v2471
    %v4260 = vunpack.c.l.b16 %v2472
    %v4261 = vunpack.c.h.b16 %v2472
    %v4262 = vunpack.c.l.b16 %v2473
    %v4263 = vunpack.c.h.b16 %v2473
    %v4264 = vunpack.c.l.b16 %v2474
    %v4265 = vunpack.c.h.b16 %v2474
    %v4266 = vunpack.c.l.b16 %v2475
    %v4267 = vunpack.c.h.b16 %v2475
    %v4268 = vunpack.c.l.b16 %v2476
    %v4269 = vunpack.c.h.b16 %v2476
    %v4270 = vunpack.c.l.b16 %v2477
    %v4271 = vunpack.c.h.b16 %v2477
    %v4272 = vunpack.c.l.b16 %v2478
    %v4273 = vunpack.c.h.b16 %v2478
    %v4274 = vunpack.c.l.b16 %v2479
    %v4275 = vunpack.c.h.b16 %v2479
    %v4276 = vunpack.c.l.b16 %v2480
    %v4277 = vunpack.c.h.b16 %v2480
    %v4278 = vunpack.c.l.b16 %v2481
    %v4279 = vunpack.c.h.b16 %v2481
    %v4280 = vunpack.c.l.b16 %v2482
    %v4281 = vunpack.c.h.b16 %v2482
    %v4282 = vunpack.c.l.b16 %v2483
    %v4283 = vunpack.c.h.b16 %v2483
    %v4284 = vunpack.c.l.b16 %v2484
    %v4285 = vunpack.c.h.b16 %v2484
    %v4286 = vunpack.c.l.b16 %v2485
    %v4287 = vunpack.c.h.b16 %v2485
    %v4288 = vunpack.c.l.b16 %v2486
    %v4289 = vunpack.c.h.b16 %v2486
    %v4290 = vunpack.c.l.b16 %v2487
    %v4291 = vunpack.c.h.b16 %v2487
    %v4292 = vunpack.c.l.b16 %v2488
    %v4293 = vunpack.c.h.b16 %v2488
    %v4294 = vunpack.c.l.b16 %v2489
    %v4295 = vunpack.c.h.b16 %v2489
    %v4296 = vunpack.c.l.b16 %v2490
    %v4297 = vunpack.c.h.b16 %v2490
    %v4298 = vunpack.c.l.b16 %v2491
    %v4299 = vunpack.c.h.b16 %v2491
    %v4300 = vunpack.c.l.b16 %v2492
    %v4301 = vunpack.c.h.b16 %v2492
    %v4302 = vunpack.c.l.b16 %v2493
    %v4303 = vunpack.c.h.b16 %v2493
    %v4304 = vunpack.c.l.b16 %v2494
    %v4305 = vunpack.c.h.b16 %v2494
    %v4306 = vunpack.c.l.b16 %v2495
    %v4307 = vunpack.c.h.b16 %v2495
    %v4308 = vunpack.c.l.b16 %v2496
    %v4309 = vunpack.c.h.b16 %v2496
    %v4310 = vunpack.c.l.b16 %v2497
    %v4311 = vunpack.c.h.b16 %v2497
    %v4312 = vunpack.c.l.b16 %v2498
    %v4313 = vunpack.c.h.b16 %v2498
    %v4314 = vunpack.c.l.b16 %v2499
    %v4315 = vunpack.c.h.b16 %v2499
    %v4316 = vunpack.c.l.b16 %v2500
    %v4317 = vunpack.c.h.b16 %v2500
    %v4318 = vunpack.c.l.b16 %v2501
    %v4319 = vunpack.c.h.b16 %v2501
    %v4320 = vunpack.c.l.b16 %v2502
    %v4321 = vunpack.c.h.b16 %v2502
    %v4322 = vunpack.c.l.b16 %v2503
    %v4323 = vunpack.c.h.b16 %v2503
    %v4324 = vunpack.c.l.b16 %v2504
    %v4325 = vunpack.c.h.b16 %v2504
    %v4326 = vunpack.c.l.b16 %v2505
    %v4327 = vunpack.c.h.b16 %v2505
    %v4328 = vunpack.c.l.b16 %v2506
    %v4329 = vunpack.c.h.b16 %v2506
    %v4330 = vunpack.c.l.b16 %v2507
    %v4331 = vunpack.c.h.b16 %v2507
    %v4332 = vunpack.c.l.b16 %v2508
    %v4333 = vunpack.c.h.b16 %v2508
    %v4334 = vunpack.c.l.b16 %v2509
    %v4335 = vunpack.c.h.b16 %v2509
    %v4336 = vunpack.c.l.b16 %v2510
    %v4337 = vunpack.c.h.b16 %v2510
    %v4338 = vunpack.c.l.b16 %v2511
    %v4339 = vunpack.c.h.b16 %v2511
    %v4340 = vunpack.c.l.b16 %v2512
    %v4341 = vunpack.c.h.b16 %v2512
    %v4342 = vunpack.c.l.b16 %v2513
    %v4343 = vunpack.c.h.b16 %v2513
    %v4344 = vunpack.c.l.b16 %v2514
    %v4345 = vunpack.c.h.b16 %v2514
    %v4346 = vunpack.c.l.b16 %v2515
    %v4347 = vunpack.c.h.b16 %v2515
    %v4348 = vunpack.c.l.b16 %v2516
    %v4349 = vunpack.c.h.b16 %v2516
    %v4350 = vunpack.c.l.b16 %v2517
    %v4351 = vunpack.c.h.b16 %v2517
    %v4352 = vunpack.c.l.b16 %v2518
    %v4353 = vunpack.c.h.b16 %v2518
    %v4354 = vunpack.c.l.b16 %v2519
    %v4355 = vunpack.c.h.b16 %v2519
    %v4356 = vunpack.c.l.b16 %v2520
    %v4357 = vunpack.c.h.b16 %v2520
    %v4358 = vunpack.c.l.b16 %v2521
    %v4359 = vunpack.c.h.b16 %v2521
    %v4360 = vunpack.c.l.b16 %v2522
    %v4361 = vunpack.c.h.b16 %v2522
    %v4362 = vunpack.c.l.b16 %v2523
    %v4363 = vunpack.c.h.b16 %v2523
    %v4364 = vunpack.c.l.b16 %v2524
    %v4365 = vunpack.c.h.b16 %v2524
    %v4366 = vunpack.c.l.b16 %v2525
    %v4367 = vunpack.c.h.b16 %v2525
    %v4368 = vunpack.c.l.b16 %v2526
    %v4369 = vunpack.c.h.b16 %v2526
    %v4370 = vunpack.c.l.b16 %v2527
    %v4371 = vunpack.c.h.b16 %v2527
    %v4372 = vunpack.c.l.b16 %v2528
    %v4373 = vunpack.c.h.b16 %v2528
    %v4374 = vunpack.c.l.b16 %v2529
    %v4375 = vunpack.c.h.b16 %v2529
    %v4376 = vunpack.c.l.b16 %v2530
    %v4377 = vunpack.c.h.b16 %v2530
    %v4378 = vunpack.c.l.b16 %v2531
    %v4379 = vunpack.c.h.b16 %v2531
    %v4380 = vunpack.c.l.b16 %v2532
    %v4381 = vunpack.c.h.b16 %v2532
    %v4382 = vunpack.c.l.b16 %v2533
    %v4383 = vunpack.c.h.b16 %v2533
    %v4384 = vunpack.c.l.b16 %v2534
    %v4385 = vunpack.c.h.b16 %v2534
    %v4386 = vunpack.c.l.b16 %v2535
    %v4387 = vunpack.c.h.b16 %v2535
    %v4388 = vunpack.c.l.b16 %v2536
    %v4389 = vunpack.c.h.b16 %v2536
    %v4390 = vunpack.c.l.b16 %v2537
    %v4391 = vunpack.c.h.b16 %v2537
    %v4392 = vunpack.c.l.b16 %v2538
    %v4393 = vunpack.c.h.b16 %v2538
    %v4394 = vunpack.c.l.b16 %v2539
    %v4395 = vunpack.c.h.b16 %v2539
    %v4396 = vunpack.c.l.b16 %v2540
    %v4397 = vunpack.c.h.b16 %v2540
    %v4398 = vunpack.c.l.b16 %v2541
    %v4399 = vunpack.c.h.b16 %v2541
    %v4400 = vunpack.c.l.b16 %v2542
    %v4401 = vunpack.c.h.b16 %v2542
    %v4402 = vunpack.c.l.b16 %v2543
    %v4403 = vunpack.c.h.b16 %v2543
    %v4404 = vunpack.c.l.b16 %v2544
    %v4405 = vunpack.c.h.b16 %v2544
    %v4406 = vunpack.c.l.b16 %v2545
    %v4407 = vunpack.c.h.b16 %v2545
    %v4408 = vunpack.c.l.b16 %v2546
    %v4409 = vunpack.c.h.b16 %v2546
    %v4410 = vunpack.c.l.b16 %v2547
    %v4411 = vunpack.c.h.b16 %v2547
    %v4412 = vunpack.c.l.b16 %v2548
    %v4413 = vunpack.c.h.b16 %v2548
    %v4414 = vunpack.c.l.b16 %v2549
    %v4415 = vunpack.c.h.b16 %v2549
    %v4416 = vunpack.c.l.b16 %v2550
    %v4417 = vunpack.c.h.b16 %v2550
    %v4418 = vunpack.c.l.b16 %v2551
    %v4419 = vunpack.c.h.b16 %v2551
    %v4420 = vunpack.c.l.b16 %v2552
    %v4421 = vunpack.c.h.b16 %v2552
    %v4422 = vunpack.c.l.b16 %v2553
    %v4423 = vunpack.c.h.b16 %v2553
    %v4424 = vunpack.c.l.b16 %v2554
    %v4425 = vunpack.c.h.b16 %v2554
    %v4426 = vunpack.c.l.b16 %v2555
    %v4427 = vunpack.c.h.b16 %v2555
    %v4428 = vunpack.c.l.b16 %v2556
    %v4429 = vunpack.c.h.b16 %v2556
    %v4430 = vunpack.c.l.b16 %v2557
    %v4431 = vunpack.c.h.b16 %v2557
    %v4432 = vunpack.c.l.b16 %v2558
    %v4433 = vunpack.c.h.b16 %v2558
    %v4434 = vunpack.c.l.b16 %v2559
    %v4435 = vunpack.c.h.b16 %v2559
    %v4436 = vunpack.c.l.b16 %v2560
    %v4437 = vunpack.c.h.b16 %v2560
    %v4438 = vunpack.c.l.b16 %v2561
    %v4439 = vunpack.c.h.b16 %v2561
    %v4440 = vunpack.c.l.b16 %v2562
    %v4441 = vunpack.c.h.b16 %v2562
    %v4442 = vunpack.c.l.b16 %v2563
    %v4443 = vunpack.c.h.b16 %v2563
    %v4444 = vunpack.c.l.b16 %v2564
    %v4445 = vunpack.c.h.b16 %v2564
    %v4446 = vunpack.c.l.b16 %v2565
    %v4447 = vunpack.c.h.b16 %v2565
    %v4448 = vunpack.c.l.b16 %v2566
    %v4449 = vunpack.c.h.b16 %v2566
    %v4450 = vunpack.c.l.b16 %v2567
    %v4451 = vunpack.c.h.b16 %v2567
    %v4452 = vunpack.c.l.b16 %v2568
    %v4453 = vunpack.c.h.b16 %v2568
    %v4454 = vunpack.c.l.b16 %v2569
    %v4455 = vunpack.c.h.b16 %v2569
    %v4456 = vunpack.c.l.b16 %v2570
    %v4457 = vunpack.c.h.b16 %v2570
    %v4458 = vunpack.c.l.b16 %v2571
    %v4459 = vunpack.c.h.b16 %v2571
    %v4460 = vunpack.c.l.b16 %v2572
    %v4461 = vunpack.c.h.b16 %v2572
    %v4462 = vunpack.c.l.b16 %v2573
    %v4463 = vunpack.c.h.b16 %v2573
    %v4464 = vunpack.c.l.b16 %v2574
    %v4465 = vunpack.c.h.b16 %v2574
    %v4466 = vunpack.c.l.b16 %v2575
    %v4467 = vunpack.c.h.b16 %v2575
    %v4468 = vunpack.c.l.b16 %v2576
    %v4469 = vunpack.c.h.b16 %v2576
    %v4470 = vunpack.c.l.b16 %v2577
    %v4471 = vunpack.c.h.b16 %v2577
    %v4472 = vunpack.c.l.b16 %v2578
    %v4473 = vunpack.c.h.b16 %v2578
    %v4474 = vunpack.c.l.b16 %v2579
    %v4475 = vunpack.c.h.b16 %v2579
    %v4476 = vunpack.c.l.b16 %v2580
    %v4477 = vunpack.c.h.b16 %v2580
    %v4478 = vunpack.c.l.b16 %v2581
    %v4479 = vunpack.c.h.b16 %v2581
    %v4480 = vunpack.c.l.b16 %v2582
    %v4481 = vunpack.c.h.b16 %v2582
    %v4482 = vunpack.c.l.b16 %v2583
    %v4483 = vunpack.c.h.b16 %v2583
    %v4484 = vunpack.c.l.b16 %v2584
    %v4485 = vunpack.c.h.b16 %v2584
    %v4486 = vunpack.c.l.b16 %v2585
    %v4487 = vunpack.c.h.b16 %v2585
    %v4488 = vunpack.c.l.b16 %v2586
    %v4489 = vunpack.c.h.b16 %v2586
    %v4490 = vunpack.c.l.b16 %v2587
    %v4491 = vunpack.c.h.b16 %v2587
    %v4492 = vunpack.c.l.b16 %v2588
    %v4493 = vunpack.c.h.b16 %v2588
    %v4494 = vunpack.c.l.b16 %v2589
    %v4495 = vunpack.c.h.b16 %v2589
    %v4496 = vunpack.c.l.b16 %v2590
    %v4497 = vunpack.c.h.b16 %v2590
    %v4498 = vunpack.c.l.b16 %v2591
    %v4499 = vunpack.c.h.b16 %v2591
    %v4500 = vunpack.c.l.b16 %v2592
    %v4501 = vunpack.c.h.b16 %v2592
    %v4502 = vunpack.c.l.b16 %v2593
    %v4503 = vunpack.c.h.b16 %v2593
    %v4504 = vunpack.c.l.b16 %v2594
    %v4505 = vunpack.c.h.b16 %v2594
    %v4506 = vunpack.c.l.b16 %v2595
    %v4507 = vunpack.c.h.b16 %v2595
    %v4508 = vunpack.c.l.b16 %v2596
    %v4509 = vunpack.c.h.b16 %v2596
    %v4510 = vunpack.c.l.b16 %v2597
    %v4511 = vunpack.c.h.b16 %v2597
    %v4512 = vunpack.c.l.b16 %v2598
    %v4513 = vunpack.c.h.b16 %v2598
    %v4514 = vunpack.c.l.b16 %v2599
    %v4515 = vunpack.c.h.b16 %v2599
    %v4516 = vunpack.c.l.b16 %v2600
    %v4517 = vunpack.c.h.b16 %v2600
    %v4518 = vunpack.c.l.b16 %v2601
    %v4519 = vunpack.c.h.b16 %v2601
    %v4520 = vunpack.c.l.b16 %v2602
    %v4521 = vunpack.c.h.b16 %v2602
    %v4522 = vunpack.c.l.b16 %v2603
    %v4523 = vunpack.c.h.b16 %v2603
    %v4524 = vunpack.c.l.b16 %v2604
    %v4525 = vunpack.c.h.b16 %v2604
    %v4526 = vunpack.c.l.b16 %v2605
    %v4527 = vunpack.c.h.b16 %v2605
    %v4528 = vunpack.c.l.b16 %v2606
    %v4529 = vunpack.c.h.b16 %v2606
    %v4530 = vunpack.c.l.b16 %v2607
    %v4531 = vunpack.c.h.b16 %v2607
    %v4532 = vunpack.c.l.b16 %v2608
    %v4533 = vunpack.c.h.b16 %v2608
    %v4534 = vunpack.c.l.b16 %v2609
    %v4535 = vunpack.c.h.b16 %v2609
    %v4536 = vunpack.c.l.b16 %v2610
    %v4537 = vunpack.c.h.b16 %v2610
    %v4538 = vunpack.c.l.b16 %v2611
    %v4539 = vunpack.c.h.b16 %v2611
    %v4540 = vunpack.c.l.b16 %v2612
    %v4541 = vunpack.c.h.b16 %v2612
    %v4542 = vunpack.c.l.b16 %v2613
    %v4543 = vunpack.c.h.b16 %v2613
    %v4544 = vunpack.c.l.b16 %v2614
    %v4545 = vunpack.c.h.b16 %v2614
    %v4546 = vunpack.c.l.b16 %v2615
    %v4547 = vunpack.c.h.b16 %v2615
    %v4548 = vunpack.c.l.b16 %v2616
    %v4549 = vunpack.c.h.b16 %v2616
    %v4550 = vunpack.c.l.b16 %v2617
    %v4551 = vunpack.c.h.b16 %v2617
    %v4552 = vunpack.c.l.b16 %v2618
    %v4553 = vunpack.c.h.b16 %v2618
    %v4554 = vunpack.c.l.b16 %v2619
    %v4555 = vunpack.c.h.b16 %v2619
    %v4556 = vunpack.c.l.b16 %v2620
    %v4557 = vunpack.c.h.b16 %v2620
    %v4558 = vunpack.c.l.b16 %v2621
    %v4559 = vunpack.c.h.b16 %v2621
    %v4560 = vunpack.c.l.b16 %v2622
    %v4561 = vunpack.c.h.b16 %v2622
    %v4562 = vunpack.c.l.b16 %v2623
    %v4563 = vunpack.c.h.b16 %v2623
    %v4564 = vunpack.c.l.b16 %v2624
    %v4565 = vunpack.c.h.b16 %v2624
    %v4566 = vunpack.c.l.b16 %v2625
    %v4567 = vunpack.c.h.b16 %v2625
    %v4568 = vunpack.c.l.b16 %v2626
    %v4569 = vunpack.c.h.b16 %v2626
    %v4570 = vunpack.c.l.b16 %v2627
    %v4571 = vunpack.c.h.b16 %v2627
    %v4572 = vunpack.c.l.b16 %v2628
    %v4573 = vunpack.c.h.b16 %v2628
    %v4574 = vunpack.c.l.b16 %v2629
    %v4575 = vunpack.c.h.b16 %v2629
    %v4576 = vunpack.c.l.b16 %v2630
    %v4577 = vunpack.c.h.b16 %v2630
    %v4578 = vunpack.c.l.b16 %v2631
    %v4579 = vunpack.c.h.b16 %v2631
    %v4580 = vunpack.c.l.b16 %v2632
    %v4581 = vunpack.c.h.b16 %v2632
    %v4582 = vunpack.c.l.b16 %v2633
    %v4583 = vunpack.c.h.b16 %v2633
    %v4584 = vunpack.c.l.b16 %v2634
    %v4585 = vunpack.c.h.b16 %v2634
    %v4586 = vunpack.c.l.b16 %v2635
    %v4587 = vunpack.c.h.b16 %v2635
    %v4588 = vunpack.c.l.b16 %v2636
    %v4589 = vunpack.c.h.b16 %v2636
    %v4590 = vunpack.c.l.b16 %v2637
    %v4591 = vunpack.c.h.b16 %v2637
    %v4592 = vunpack.c.l.b16 %v2638
    %v4593 = vunpack.c.h.b16 %v2638
    %v4594 = vunpack.c.l.b16 %v2639
    %v4595 = vunpack.c.h.b16 %v2639
    %v4596 = vunpack.c.l.b16 %v2640
    %v4597 = vunpack.c.h.b16 %v2640
    %v4598 = vunpack.c.l.b16 %v2641
    %v4599 = vunpack.c.h.b16 %v2641
    %v4600 = vunpack.c.l.b16 %v2642
    %v4601 = vunpack.c.h.b16 %v2642
    %v4602 = vunpack.c.l.b16 %v2643
    %v4603 = vunpack.c.h.b16 %v2643
    %v4604 = vunpack.c.l.b16 %v2644
    %v4605 = vunpack.c.h.b16 %v2644
    %v4606 = vunpack.c.l.b16 %v2645
    %v4607 = vunpack.c.h.b16 %v2645
    %v4608 = vunpack.c.l.b16 %v2646
    %v4609 = vunpack.c.h.b16 %v2646
    %v4610 = vunpack.c.l.b16 %v2647
    %v4611 = vunpack.c.h.b16 %v2647
    %v4612 = vunpack.c.l.b16 %v2648
    %v4613 = vunpack.c.h.b16 %v2648
    %v4614 = vunpack.c.l.b16 %v2649
    %v4615 = vunpack.c.h.b16 %v2649
    %v4616 = vunpack.c.l.b16 %v2650
    %v4617 = vunpack.c.h.b16 %v2650
    %v4618 = vunpack.c.l.b16 %v2651
    %v4619 = vunpack.c.h.b16 %v2651
    %v4620 = vunpack.c.l.b16 %v2652
    %v4621 = vunpack.c.h.b16 %v2652
    %v4622 = vunpack.c.l.b16 %v2653
    %v4623 = vunpack.c.h.b16 %v2653
    %v4624 = vunpack.c.l.b16 %v2654
    %v4625 = vunpack.c.h.b16 %v2654
    %v4626 = vunpack.c.l.b16 %v2655
    %v4627 = vunpack.c.h.b16 %v2655
    %v4628 = vunpack.c.l.b16 %v2656
    %v4629 = vunpack.c.h.b16 %v2656
    %v4630 = vunpack.c.l.b16 %v2657
    %v4631 = vunpack.c.h.b16 %v2657
    %v4632 = vunpack.c.l.b16 %v2658
    %v4633 = vunpack.c.h.b16 %v2658
    %v4634 = vunpack.c.l.b16 %v2659
    %v4635 = vunpack.c.h.b16 %v2659
    %v4636 = vunpack.c.l.b16 %v2660
    %v4637 = vunpack.c.h.b16 %v2660
    %v4638 = vunpack.c.l.b16 %v2661
    %v4639 = vunpack.c.h.b16 %v2661
    %v4640 = vunpack.c.l.b16 %v2662
    %v4641 = vunpack.c.h.b16 %v2662
    %v4642 = vunpack.c.l.b16 %v2663
    %v4643 = vunpack.c.h.b16 %v2663
    %v4644 = vunpack.c.l.b16 %v2664
    %v4645 = vunpack.c.h.b16 %v2664
    %v4646 = vunpack.c.l.b16 %v2665
    %v4647 = vunpack.c.h.b16 %v2665
    %v4648 = vunpack.c.l.b16 %v2666
    %v4649 = vunpack.c.h.b16 %v2666
    %v4650 = vunpack.c.l.b16 %v2667
    %v4651 = vunpack.c.h.b16 %v2667
    %v4652 = vunpack.c.l.b16 %v2668
    %v4653 = vunpack.c.h.b16 %v2668
    %v4654 = vunpack.c.l.b16 %v2669
    %v4655 = vunpack.c.h.b16 %v2669
    %v4656 = vunpack.c.l.b16 %v2670
    %v4657 = vunpack.c.h.b16 %v2670
    %v4658 = vunpack.c.l.b16 %v2671
    %v4659 = vunpack.c.h.b16 %v2671
    %v4660 = vunpack.c.l.b16 %v2672
    %v4661 = vunpack.c.h.b16 %v2672
    %v4662 = vunpack.c.l.b16 %v2673
    %v4663 = vunpack.c.h.b16 %v2673
    %v4664 = vunpack.c.l.b16 %v2674
    %v4665 = vunpack.c.h.b16 %v2674
    %v4666 = vunpack.c.l.b16 %v2675
    %v4667 = vunpack.c.h.b16 %v2675
    %v4668 = vunpack.c.l.b16 %v2676
    %v4669 = vunpack.c.h.b16 %v2676
    %v4670 = vunpack.c.l.b16 %v2677
    %v4671 = vunpack.c.h.b16 %v2677
    %v4672 = vunpack.c.l.b16 %v2678
    %v4673 = vunpack.c.h.b16 %v2678
    %v4674 = vunpack.c.l.b16 %v2679
    %v4675 = vunpack.c.h.b16 %v2679
    %v4676 = vunpack.c.l.b16 %v2680
    %v4677 = vunpack.c.h.b16 %v2680
    %v4678 = vunpack.c.l.b16 %v2681
    %v4679 = vunpack.c.h.b16 %v2681
    %v4680 = vunpack.c.l.b16 %v2682
    %v4681 = vunpack.c.h.b16 %v2682
    %v4682 = vunpack.c.l.b16 %v2683
    %v4683 = vunpack.c.h.b16 %v2683
    %v4684 = vunpack.c.l.b16 %v2684
    %v4685 = vunpack.c.h.b16 %v2684
    %v4686 = vunpack.c.l.b16 %v2685
    %v4687 = vunpack.c.h.b16 %v2685
    %v4688 = vunpack.c.l.b16 %v2686
    %v4689 = vunpack.c.h.b16 %v2686
    %v4690 = vunpack.c.l.b16 %v2687
    %v4691 = vunpack.c.h.b16 %v2687
    %v4692 = vunpack.c.l.b16 %v2688
    %v4693 = vunpack.c.h.b16 %v2688
    %v4694 = vunpack.c.l.b16 %v2689
    %v4695 = vunpack.c.h.b16 %v2689
    %v4696 = vunpack.c.l.b16 %v2690
    %v4697 = vunpack.c.h.b16 %v2690
    %v4698 = vunpack.c.l.b16 %v2691
    %v4699 = vunpack.c.h.b16 %v2691
    %v4700 = vunpack.c.l.b16 %v2692
    %v4701 = vunpack.c.h.b16 %v2692
    %v4702 = vunpack.c.l.b16 %v2693
    %v4703 = vunpack.c.h.b16 %v2693
    %v4704 = vunpack.c.l.b16 %v2694
    %v4705 = vunpack.c.h.b16 %v2694
    %v4706 = vunpack.c.l.b16 %v2695
    %v4707 = vunpack.c.h.b16 %v2695
    %v4708 = vunpack.c.l.b16 %v2696
    %v4709 = vunpack.c.h.b16 %v2696
    %v4710 = vunpack.c.l.b16 %v2697
    %v4711 = vunpack.c.h.b16 %v2697
    %v4712 = vunpack.c.l.b16 %v2698
    %v4713 = vunpack.c.h.b16 %v2698
    %v4714 = vunpack.c.l.b16 %v2699
    %v4715 = vunpack.c.h.b16 %v2699
    %v4716 = vunpack.c.l.b16 %v2700
    %v4717 = vunpack.c.h.b16 %v2700
    %v4718 = vunpack.c.l.b16 %v2701
    %v4719 = vunpack.c.h.b16 %v2701
    %v4720 = vunpack.c.l.b16 %v2702
    %v4721 = vunpack.c.h.b16 %v2702
    %v4722 = vunpack.c.l.b16 %v2703
    %v4723 = vunpack.c.h.b16 %v2703
    %v4724 = vunpack.c.l.b16 %v2704
    %v4725 = vunpack.c.h.b16 %v2704
    %v4726 = vunpack.c.l.b16 %v2705
    %v4727 = vunpack.c.h.b16 %v2705
    %v4728 = vunpack.c.l.b16 %v2706
    %v4729 = vunpack.c.h.b16 %v2706
    %v4730 = vunpack.c.l.b16 %v2707
    %v4731 = vunpack.c.h.b16 %v2707
    %v4732 = vunpack.c.l.b16 %v2708
    %v4733 = vunpack.c.h.b16 %v2708
    %v4734 = vunpack.c.l.b16 %v2709
    %v4735 = vunpack.c.h.b16 %v2709
    %v4736 = vunpack.c.l.b16 %v2710
    %v4737 = vunpack.c.h.b16 %v2710
    %v4738 = vunpack.c.l.b16 %v2711
    %v4739 = vunpack.c.h.b16 %v2711
    %v4740 = vunpack.c.l.b16 %v2712
    %v4741 = vunpack.c.h.b16 %v2712
    %v4742 = vunpack.c.l.b16 %v2713
    %v4743 = vunpack.c.h.b16 %v2713
    %v4744 = vunpack.c.l.b16 %v2714
    %v4745 = vunpack.c.h.b16 %v2714
    %v4746 = vunpack.c.l.b16 %v2715
    %v4747 = vunpack.c.h.b16 %v2715
    %v4748 = vunpack.c.l.b16 %v2716
    %v4749 = vunpack.c.h.b16 %v2716
    %v4750 = vunpack.c.l.b16 %v2717
    %v4751 = vunpack.c.h.b16 %v2717
    %v4752 = vunpack.c.l.b16 %v2718
    %v4753 = vunpack.c.h.b16 %v2718
    %v4754 = vunpack.c.l.b16 %v2719
    %v4755 = vunpack.c.h.b16 %v2719
    %v4756 = vunpack.c.l.b16 %v2720
    %v4757 = vunpack.c.h.b16 %v2720
    %v4758 = vunpack.c.l.b16 %v2721
    %v4759 = vunpack.c.h.b16 %v2721
    %v4760 = vunpack.c.l.b16 %v2722
    %v4761 = vunpack.c.h.b16 %v2722
    %v4762 = vunpack.c.l.b16 %v2723
    %v4763 = vunpack.c.h.b16 %v2723
    %v4764 = vunpack.c.l.b16 %v2724
    %v4765 = vunpack.c.h.b16 %v2724
    %v4766 = vunpack.c.l.b16 %v2725
    %v4767 = vunpack.c.h.b16 %v2725
    %v4768 = vunpack.c.l.b16 %v2726
    %v4769 = vunpack.c.h.b16 %v2726
    %v4770 = vunpack.c.l.b16 %v2727
    %v4771 = vunpack.c.h.b16 %v2727
    %v4772 = vunpack.c.l.b16 %v2728
    %v4773 = vunpack.c.h.b16 %v2728
    %v4774 = vunpack.c.l.b16 %v2729
    %v4775 = vunpack.c.h.b16 %v2729
    %v4776 = vunpack.c.l.b16 %v2730
    %v4777 = vunpack.c.h.b16 %v2730
    %v4778 = vunpack.c.l.b16 %v2731
    %v4779 = vunpack.c.h.b16 %v2731
    %v4780 = vunpack.c.l.b16 %v2732
    %v4781 = vunpack.c.h.b16 %v2732
    %v4782 = vunpack.c.l.b16 %v2733
    %v4783 = vunpack.c.h.b16 %v2733
    %v4784 = vunpack.c.l.b16 %v2734
    %v4785 = vunpack.c.h.b16 %v2734
    %v4786 = vunpack.c.l.b16 %v2735
    %v4787 = vunpack.c.h.b16 %v2735
    %v4788 = vunpack.c.l.b16 %v2736
    %v4789 = vunpack.c.h.b16 %v2736
    %v4790 = vunpack.c.l.b16 %v2737
    %v4791 = vunpack.c.h.b16 %v2737
    %v4792 = vunpack.c.l.b16 %v2738
    %v4793 = vunpack.c.h.b16 %v2738
    %v4794 = vunpack.c.l.b16 %v2739
    %v4795 = vunpack.c.h.b16 %v2739
    %v4796 = vunpack.c.l.b16 %v2740
    %v4797 = vunpack.c.h.b16 %v2740
    %v4798 = vunpack.c.l.b16 %v2741
    %v4799 = vunpack.c.h.b16 %v2741
    %v4800 = vunpack.c.l.b16 %v2742
    %v4801 = vunpack.c.h.b16 %v2742
    %v4802 = vunpack.c.l.b16 %v2743
    %v4803 = vunpack.c.h.b16 %v2743
    %v4804 = vunpack.c.l.b16 %v2744
    %v4805 = vunpack.c.h.b16 %v2744
    %v4806 = vunpack.c.l.b16 %v2745
    %v4807 = vunpack.c.h.b16 %v2745
    %v4808 = vunpack.c.l.b16 %v2746
    %v4809 = vunpack.c.h.b16 %v2746
    %v4810 = vunpack.c.l.b16 %v2747
    %v4811 = vunpack.c.h.b16 %v2747
    %v4812 = vunpack.c.l.b16 %v2748
    %v4813 = vunpack.c.h.b16 %v2748
    %v4814 = vunpack.c.l.b16 %v2749
    %v4815 = vunpack.c.h.b16 %v2749
    %v4816 = vunpack.c.l.b16 %v2750
    %v4817 = vunpack.c.h.b16 %v2750
    %v4818 = vunpack.c.l.b16 %v2751
    %v4819 = vunpack.c.h.b16 %v2751
    %v4820 = vunpack.c.l.b16 %v2752
    %v4821 = vunpack.c.h.b16 %v2752
    %v4822 = vunpack.c.l.b16 %v2753
    %v4823 = vunpack.c.h.b16 %v2753
    %v4824 = vunpack.c.l.b16 %v2754
    %v4825 = vunpack.c.h.b16 %v2754
    %v4826 = vunpack.c.l.b16 %v2755
    %v4827 = vunpack.c.h.b16 %v2755
    %v4828 = vunpack.c.l.b16 %v2756
    %v4829 = vunpack.c.h.b16 %v2756
    %v4830 = vunpack.c.l.b16 %v2757
    %v4831 = vunpack.c.h.b16 %v2757
    %v4832 = vunpack.c.l.b16 %v2758
    %v4833 = vunpack.c.h.b16 %v2758
    %v4834 = vunpack.c.l.b16 %v2759
    %v4835 = vunpack.c.h.b16 %v2759
    %v4836 = vunpack.c.l.b16 %v2760
    %v4837 = vunpack.c.h.b16 %v2760
    %v4838 = vunpack.c.l.b16 %v2761
    %v4839 = vunpack.c.h.b16 %v2761
    %v4840 = vunpack.c.l.b16 %v2762
    %v4841 = vunpack.c.h.b16 %v2762
    %v4842 = vunpack.c.l.b16 %v2763
    %v4843 = vunpack.c.h.b16 %v2763
    %v4844 = vunpack.c.l.b16 %v2764
    %v4845 = vunpack.c.h.b16 %v2764
    %v4846 = vunpack.c.l.b16 %v2765
    %v4847 = vunpack.c.h.b16 %v2765
    %v4848 = vunpack.c.l.b16 %v2766
    %v4849 = vunpack.c.h.b16 %v2766
    %v4850 = vunpack.c.l.b16 %v2767
    %v4851 = vunpack.c.h.b16 %v2767
    %v4852 = vunpack.c.l.b16 %v2768
    %v4853 = vunpack.c.h.b16 %v2768
    %v4854 = vunpack.c.l.b16 %v2769
    %v4855 = vunpack.c.h.b16 %v2769
    %v4856 = vunpack.c.l.b16 %v2770
    %v4857 = vunpack.c.h.b16 %v2770
    %v4858 = vunpack.c.l.b16 %v2771
    %v4859 = vunpack.c.h.b16 %v2771
    %v4860 = vunpack.c.l.b16 %v2772
    %v4861 = vunpack.c.h.b16 %v2772
    %v4862 = vunpack.c.l.b16 %v2773
    %v4863 = vunpack.c.h.b16 %v2773
    %v4864 = vunpack.c.l.b16 %v2774
    %v4865 = vunpack.c.h.b16 %v2774
    %v4866 = vunpack.c.l.b16 %v2775
    %v4867 = vunpack.c.h.b16 %v2775
    %v4868 = vunpack.c.l.b16 %v2776
    %v4869 = vunpack.c.h.b16 %v2776
    %v4870 = vunpack.c.l.b16 %v2777
    %v4871 = vunpack.c.h.b16 %v2777
    %v4872 = vunpack.c.l.b16 %v2778
    %v4873 = vunpack.c.h.b16 %v2778
    %v4874 = vunpack.c.l.b16 %v2779
    %v4875 = vunpack.c.h.b16 %v2779
    %v4876 = vunpack.c.l.b16 %v2780
    %v4877 = vunpack.c.h.b16 %v2780
    %v4878 = vunpack.c.l.b16 %v2781
    %v4879 = vunpack.c.h.b16 %v2781
    %v4880 = vunpack.c.l.b16 %v2782
    %v4881 = vunpack.c.h.b16 %v2782
    %v4882 = vunpack.c.l.b16 %v2783
    %v4883 = vunpack.c.h.b16 %v2783
    %v4884 = vunpack.c.l.b16 %v2784
    %v4885 = vunpack.c.h.b16 %v2784
    %v4886 = vunpack.c.l.b16 %v2785
    %v4887 = vunpack.c.h.b16 %v2785
    %v4888 = vunpack.c.l.b16 %v2786
    %v4889 = vunpack.c.h.b16 %v2786
    %v4890 = vunpack.c.l.b16 %v2787
    %v4891 = vunpack.c.h.b16 %v2787
    %v4892 = vunpack.c.l.b16 %v2788
    %v4893 = vunpack.c.h.b16 %v2788
    %v4894 = vunpack.c.l.b16 %v2789
    %v4895 = vunpack.c.h.b16 %v2789
    %v4896 = vunpack.c.l.b16 %v2790
    %v4897 = vunpack.c.h.b16 %v2790
    %v4898 = vunpack.c.l.b16 %v2791
    %v4899 = vunpack.c.h.b16 %v2791
    %v4900 = vunpack.c.l.b16 %v2792
    %v4901 = vunpack.c.h.b16 %v2792
    %v4902 = vunpack.c.l.b16 %v2793
    %v4903 = vunpack.c.h.b16 %v2793
    %v4904 = vunpack.c.l.b16 %v2794
    %v4905 = vunpack.c.h.b16 %v2794
    %v4906 = vunpack.c.l.b16 %v2795
    %v4907 = vunpack.c.h.b16 %v2795
    %v4908 = vunpack.c.l.b16 %v2796
    %v4909 = vunpack.c.h.b16 %v2796
    %v4910 = vunpack.c.l.b16 %v2797
    %v4911 = vunpack.c.h.b16 %v2797
    %v4912 = vunpack.c.l.b16 %v2798
    %v4913 = vunpack.c.h.b16 %v2798
    %v4914 = vunpack.c.l.b16 %v2799
    %v4915 = vunpack.c.h.b16 %v2799
    %v4916 = vunpack.c.l.b16 %v2800
    %v4917 = vunpack.c.h.b16 %v2800
    %v4918 = vunpack.c.l.b16 %v2801
    %v4919 = vunpack.c.h.b16 %v2801
    %v4920 = vunpack.c.l.b16 %v2802
    %v4921 = vunpack.c.h.b16 %v2802
    %v4922 = vunpack.c.l.b16 %v2803
    %v4923 = vunpack.c.h.b16 %v2803
    %v4924 = vunpack.c.l.b16 %v2804
    %v4925 = vunpack.c.h.b16 %v2804
    %v4926 = vunpack.c.l.b16 %v2805
    %v4927 = vunpack.c.h.b16 %v2805
    %v4928 = vunpack.c.l.b16 %v2806
    %v4929 = vunpack.c.h.b16 %v2806
    %v4930 = vunpack.c.l.b16 %v2807
    %v4931 = vunpack.c.h.b16 %v2807
    %v4932 = vunpack.c.l.b16 %v2808
    %v4933 = vunpack.c.h.b16 %v2808
    %v4934 = vunpack.c.l.b16 %v2809
    %v4935 = vunpack.c.h.b16 %v2809
    %v4936 = vunpack.c.l.b16 %v2810
    %v4937 = vunpack.c.h.b16 %v2810
    %v4938 = vunpack.c.l.b16 %v2811
    %v4939 = vunpack.c.h.b16 %v2811
    %v4940 = vunpack.c.l.b16 %v2812
    %v4941 = vunpack.c.h.b16 %v2812
    %v4942 = vunpack.c.l.b16 %v2813
    %v4943 = vunpack.c.h.b16 %v2813
    %v4944 = vunpack.c.l.b16 %v2814
    %v4945 = vunpack.c.h.b16 %v2814
    %v4946 = vunpack.c.l.b16 %v2815
    %v4947 = vunpack.c.h.b16 %v2815
    %v4948 = vunpack.c.l.b16 %v2816
    %v4949 = vunpack.c.h.b16 %v2816
    %v4950 = vunpack.c.l.b16 %v2817
    %v4951 = vunpack.c.h.b16 %v2817
    %v4952 = vunpack.c.l.b16 %v2818
    %v4953 = vunpack.c.h.b16 %v2818
    %v4954 = vunpack.c.l.b16 %v2819
    %v4955 = vunpack.c.h.b16 %v2819
    %v4956 = vunpack.c.l.b16 %v2820
    %v4957 = vunpack.c.h.b16 %v2820
    %v4958 = vunpack.c.l.b16 %v2821
    %v4959 = vunpack.c.h.b16 %v2821
    %v4960 = vunpack.c.l.b16 %v2822
    %v4961 = vunpack.c.h.b16 %v2822
    %v4962 = vunpack.c.l.b16 %v2823
    %v4963 = vunpack.c.h.b16 %v2823
    %v4964 = vunpack.c.l.b16 %v2824
    %v4965 = vunpack.c.h.b16 %v2824
    %v4966 = vunpack.c.l.b16 %v2825
    %v4967 = vunpack.c.h.b16 %v2825
    %v4968 = vunpack.c.l.b16 %v2826
    %v4969 = vunpack.c.h.b16 %v2826
    %v4970 = vunpack.c.l.b16 %v2827
    %v4971 = vunpack.c.h.b16 %v2827
    %v4972 = vunpack.c.l.b16 %v2828
    %v4973 = vunpack.c.h.b16 %v2828
    %v4974 = vunpack.c.l.b16 %v2829
    %v4975 = vunpack.c.h.b16 %v2829
    %v4976 = vunpack.c.l.b16 %v2830
    %v4977 = vunpack.c.h.b16 %v2830
    %v4978 = vunpack.c.l.b16 %v2831
    %v4979 = vunpack.c.h.b16 %v2831
    %v4980 = vunpack.c.l.b16 %v2832
    %v4981 = vunpack.c.h.b16 %v2832
    %v4982 = vunpack.c.l.b16 %v2833
    %v4983 = vunpack.c.h.b16 %v2833
    %v4984 = vunpack.c.l.b16 %v2834
    %v4985 = vunpack.c.h.b16 %v2834
    %v4986 = vunpack.c.l.b16 %v2835
    %v4987 = vunpack.c.h.b16 %v2835
    %v4988 = vunpack.c.l.b16 %v2836
    %v4989 = vunpack.c.h.b16 %v2836
    %v4990 = vunpack.c.l.b16 %v2837
    %v4991 = vunpack.c.h.b16 %v2837
    %v4992 = vunpack.c.l.b16 %v2838
    %v4993 = vunpack.c.h.b16 %v2838
    %v4994 = vunpack.c.l.b16 %v2839
    %v4995 = vunpack.c.h.b16 %v2839
    %v4996 = vunpack.c.l.b16 %v2840
    %v4997 = vunpack.c.h.b16 %v2840
    %v4998 = vunpack.c.l.b16 %v2841
    %v4999 = vunpack.c.h.b16 %v2841
    %v5000 = vunpack.c.l.b16 %v2842
    %v5001 = vunpack.c.h.b16 %v2842
    %v5002 = vunpack.c.l.b16 %v2843
    %v5003 = vunpack.c.h.b16 %v2843
    %v5004 = vunpack.c.l.b16 %v2844
    %v5005 = vunpack.c.h.b16 %v2844
    %v5006 = vunpack.c.l.b16 %v2845
    %v5007 = vunpack.c.h.b16 %v2845
    %v5008 = vunpack.c.l.b16 %v2846
    %v5009 = vunpack.c.h.b16 %v2846
    %v5010 = vunpack.c.l.b16 %v2847
    %v5011 = vunpack.c.h.b16 %v2847
    %v5012 = vunpack.c.l.b16 %v2848
    %v5013 = vunpack.c.h.b16 %v2848
    %v5014 = vunpack.c.l.b16 %v2849
    %v5015 = vunpack.c.h.b16 %v2849
    %v5016 = vunpack.c.l.b16 %v2850
    %v5017 = vunpack.c.h.b16 %v2850
    %v5018 = vunpack.c.l.b16 %v2851
    %v5019 = vunpack.c.h.b16 %v2851
    %v5020 = vunpack.c.l.b16 %v2852
    %v5021 = vunpack.c.h.b16 %v2852
    %v5022 = vunpack.c.l.b16 %v2853
    %v5023 = vunpack.c.h.b16 %v2853
    %v5024 = vunpack.c.l.b16 %v2854
    %v5025 = vunpack.c.h.b16 %v2854
    %v5026 = vunpack.c.l.b16 %v2855
    %v5027 = vunpack.c.h.b16 %v2855
    %v5028 = vunpack.c.l.b16 %v2856
    %v5029 = vunpack.c.h.b16 %v2856
    %v5030 = vunpack.c.l.b16 %v2857
    %v5031 = vunpack.c.h.b16 %v2857
    %v5032 = vunpack.c.l.b16 %v2858
    %v5033 = vunpack.c.h.b16 %v2858
    %v5034 = vunpack.c.l.b16 %v2859
    %v5035 = vunpack.c.h.b16 %v2859
    %v5036 = vunpack.c.l.b16 %v2860
    %v5037 = vunpack.c.h.b16 %v2860
    %v5038 = vunpack.c.l.b16 %v2861
    %v5039 = vunpack.c.h.b16 %v2861
    %v5040 = vunpack.c.l.b16 %v2862
    %v5041 = vunpack.c.h.b16 %v2862
    %v5042 = vunpack.c.l.b16 %v2863
    %v5043 = vunpack.c.h.b16 %v2863
    %v5044 = vunpack.c.l.b16 %v2864
    %v5045 = vunpack.c.h.b16 %v2864
    %v5046 = vunpack.c.l.b16 %v2865
    %v5047 = vunpack.c.h.b16 %v2865
    %v5048 = vunpack.c.l.b16 %v2866
    %v5049 = vunpack.c.h.b16 %v2866
    %v5050 = vunpack.c.l.b16 %v2867
    %v5051 = vunpack.c.h.b16 %v2867
    %v5052 = vunpack.c.l.b16 %v2868
    %v5053 = vunpack.c.h.b16 %v2868
    %v5054 = vunpack.c.l.b16 %v2869
    %v5055 = vunpack.c.h.b16 %v2869
    %v5056 = vunpack.c.l.b16 %v2870
    %v5057 = vunpack.c.h.b16 %v2870
    %v5058 = vunpack.c.l.b16 %v2871
    %v5059 = vunpack.c.h.b16 %v2871
    %v5060 = vunpack.c.l.b16 %v2872
    %v5061 = vunpack.c.h.b16 %v2872
    %v5062 = vunpack.c.l.b16 %v2873
    %v5063 = vunpack.c.h.b16 %v2873
    %v5064 = vunpack.c.l.b16 %v2874
    %v5065 = vunpack.c.h.b16 %v2874
    %v5066 = vunpack.c.l.b16 %v2875
    %v5067 = vunpack.c.h.b16 %v2875
    %v5068 = vunpack.c.l.b16 %v2876
    %v5069 = vunpack.c.h.b16 %v2876
    %v5070 = vunpack.c.l.b16 %v2877
    %v5071 = vunpack.c.h.b16 %v2877
    %v5072 = vunpack.c.l.b16 %v2878
    %v5073 = vunpack.c.h.b16 %v2878
    %v5074 = vunpack.c.l.b16 %v2879
    %v5075 = vunpack.c.h.b16 %v2879
    %v5076 = vunpack.c.l.b16 %v2880
    %v5077 = vunpack.c.h.b16 %v2880
    %v5078 = vunpack.c.l.b16 %v2881
    %v5079 = vunpack.c.h.b16 %v2881
    %v5080 = vunpack.c.l.b16 %v2882
    %v5081 = vunpack.c.h.b16 %v2882
    %v5082 = vunpack.c.l.b16 %v2883
    %v5083 = vunpack.c.h.b16 %v2883
    %v5084 = vunpack.c.l.b16 %v2884
    %v5085 = vunpack.c.h.b16 %v2884
    %v5086 = vunpack.c.l.b16 %v2885
    %v5087 = vunpack.c.h.b16 %v2885
    %v5088 = vunpack.c.l.b16 %v2886
    %v5089 = vunpack.c.h.b16 %v2886
    %v5090 = vunpack.c.l.b16 %v2887
    %v5091 = vunpack.c.h.b16 %v2887
    %v5092 = vunpack.c.l.b16 %v2888
    %v5093 = vunpack.c.h.b16 %v2888
    %v5094 = vunpack.c.l.b16 %v2889
    %v5095 = vunpack.c.h.b16 %v2889
    %v5096 = vunpack.c.l.b16 %v2890
    %v5097 = vunpack.c.h.b16 %v2890
    %v5098 = vunpack.c.l.b16 %v2891
    %v5099 = vunpack.c.h.b16 %v2891
    %v5100 = vunpack.c.l.b16 %v2892
    %v5101 = vunpack.c.h.b16 %v2892
    %v5102 = vunpack.c.l.b16 %v2893
    %v5103 = vunpack.c.h.b16 %v2893
    %v5104 = vunpack.c.l.b16 %v2894
    %v5105 = vunpack.c.h.b16 %v2894
    %v5106 = vunpack.c.l.b16 %v2895
    %v5107 = vunpack.c.h.b16 %v2895
    %v5108 = vunpack.c.l.b16 %v2896
    %v5109 = vunpack.c.h.b16 %v2896
    %v5110 = vunpack.c.l.b16 %v2897
    %v5111 = vunpack.c.h.b16 %v2897
    %v5112 = vunpack.c.l.b16 %v2898
    %v5113 = vunpack.c.h.b16 %v2898
    %v5114 = vunpack.c.l.b16 %v2899
    %v5115 = vunpack.c.h.b16 %v2899
    %v5116 = vunpack.c.l.b16 %v2900
    %v5117 = vunpack.c.h.b16 %v2900
    %v5118 = vunpack.c.l.b16 %v2901
    %v5119 = vunpack.c.h.b16 %v2901
    %v5120 = vunpack.c.l.b16 %v2902
    %v5121 = vunpack.c.h.b16 %v2902
    %v5122 = vunpack.c.l.b16 %v2903
    %v5123 = vunpack.c.h.b16 %v2903
    %v5124 = vunpack.c.l.b16 %v2904
    %v5125 = vunpack.c.h.b16 %v2904
    %v5126 = vunpack.c.l.b16 %v2905
    %v5127 = vunpack.c.h.b16 %v2905
    %v5128 = vunpack.c.l.b16 %v2906
    %v5129 = vunpack.c.h.b16 %v2906
    %v5130 = vunpack.c.l.b16 %v2907
    %v5131 = vunpack.c.h.b16 %v2907
    %v5132 = vunpack.c.l.b16 %v2908
    %v5133 = vunpack.c.h.b16 %v2908
    %v5134 = vunpack.c.l.b16 %v2909
    %v5135 = vunpack.c.h.b16 %v2909
    %v5136 = vunpack.c.l.b16 %v2910
    %v5137 = vunpack.c.h.b16 %v2910
    %v5138 = vunpack.c.l.b16 %v2911
    %v5139 = vunpack.c.h.b16 %v2911
    %v5140 = vunpack.c.l.b16 %v2912
    %v5141 = vunpack.c.h.b16 %v2912
    %v5142 = vunpack.c.l.b16 %v2913
    %v5143 = vunpack.c.h.b16 %v2913
    %v5144 = vunpack.c.l.b16 %v2914
    %v5145 = vunpack.c.h.b16 %v2914
    %v5146 = vunpack.c.l.b16 %v2915
    %v5147 = vunpack.c.h.b16 %v2915
    %v5148 = vunpack.c.l.b16 %v2916
    %v5149 = vunpack.c.h.b16 %v2916
    %v5150 = vunpack.c.l.b16 %v2917
    %v5151 = vunpack.c.h.b16 %v2917
    %v5152 = vunpack.c.l.b16 %v2918
    %v5153 = vunpack.c.h.b16 %v2918
    %v5154 = vunpack.c.l.b16 %v2919
    %v5155 = vunpack.c.h.b16 %v2919
    %v5156 = vunpack.c.l.b16 %v2920
    %v5157 = vunpack.c.h.b16 %v2920
    %v5158 = vunpack.c.l.b16 %v2921
    %v5159 = vunpack.c.h.b16 %v2921
    %v5160 = vunpack.c.l.b16 %v2922
    %v5161 = vunpack.c.h.b16 %v2922
    %v5162 = vunpack.c.l.b16 %v2923
    %v5163 = vunpack.c.h.b16 %v2923
    %v5164 = vunpack.c.l.b16 %v2924
    %v5165 = vunpack.c.h.b16 %v2924
    %v5166 = vunpack.c.l.b16 %v2925
    %v5167 = vunpack.c.h.b16 %v2925
    %v5168 = vunpack.c.l.b16 %v2926
    %v5169 = vunpack.c.h.b16 %v2926
    %v5170 = vunpack.c.l.b16 %v2927
    %v5171 = vunpack.c.h.b16 %v2927
    %v5172 = vunpack.c.l.b16 %v2928
    %v5173 = vunpack.c.h.b16 %v2928
    %v5174 = vunpack.c.l.b16 %v2929
    %v5175 = vunpack.c.h.b16 %v2929
    %v5176 = vunpack.c.l.b16 %v2930
    %v5177 = vunpack.c.h.b16 %v2930
    %v5178 = vunpack.c.l.b16 %v2931
    %v5179 = vunpack.c.h.b16 %v2931
    %v5180 = vunpack.c.l.b16 %v2932
    %v5181 = vunpack.c.h.b16 %v2932
    %v5182 = vunpack.c.l.b16 %v2933
    %v5183 = vunpack.c.h.b16 %v2933
    %v5184 = vunpack.c.l.b16 %v2934
    %v5185 = vunpack.c.h.b16 %v2934
    %v5186 = vunpack.c.l.b16 %v2935
    %v5187 = vunpack.c.h.b16 %v2935
    %v5188 = vunpack.c.l.b16 %v2936
    %v5189 = vunpack.c.h.b16 %v2936
    %v5190 = vunpack.c.l.b16 %v2937
    %v5191 = vunpack.c.h.b16 %v2937
    %v5192 = vunpack.c.l.b16 %v2938
    %v5193 = vunpack.c.h.b16 %v2938
    %v5194 = vunpack.c.l.b16 %v2939
    %v5195 = vunpack.c.h.b16 %v2939
    %v5196 = vunpack.c.l.b16 %v2940
    %v5197 = vunpack.c.h.b16 %v2940
    %v5198 = vunpack.c.l.b16 %v2941
    %v5199 = vunpack.c.h.b16 %v2941
    %v5200 = vunpack.c.l.b16 %v2942
    %v5201 = vunpack.c.h.b16 %v2942
    %v5202 = vunpack.c.l.b16 %v2943
    %v5203 = vunpack.c.h.b16 %v2943
    %v5204 = vunpack.c.l.b16 %v2944
    %v5205 = vunpack.c.h.b16 %v2944
    %v5206 = vunpack.c.l.b16 %v2945
    %v5207 = vunpack.c.h.b16 %v2945
    %v5208 = vunpack.c.l.b16 %v2946
    %v5209 = vunpack.c.h.b16 %v2946
    %v5210 = vunpack.c.l.b16 %v2947
    %v5211 = vunpack.c.h.b16 %v2947
    %v5212 = vunpack.c.l.b16 %v2948
    %v5213 = vunpack.c.h.b16 %v2948
    %v5214 = vunpack.c.l.b16 %v2949
    %v5215 = vunpack.c.h.b16 %v2949
    %v5216 = vunpack.c.l.b16 %v2950
    %v5217 = vunpack.c.h.b16 %v2950
    %v5218 = vunpack.c.l.b16 %v2951
    %v5219 = vunpack.c.h.b16 %v2951
    %v5220 = vunpack.c.l.b16 %v2952
    %v5221 = vunpack.c.h.b16 %v2952
    %v5222 = vunpack.c.l.b16 %v2953
    %v5223 = vunpack.c.h.b16 %v2953
    %v5224 = vunpack.c.l.b16 %v2954
    %v5225 = vunpack.c.h.b16 %v2954
    %v5226 = vunpack.c.l.b16 %v2955
    %v5227 = vunpack.c.h.b16 %v2955
    %v5228 = vunpack.c.l.b16 %v2956
    %v5229 = vunpack.c.h.b16 %v2956
    %v5230 = vunpack.c.l.b16 %v2957
    %v5231 = vunpack.c.h.b16 %v2957
    %v5232 = vunpack.c.l.b16 %v2958
    %v5233 = vunpack.c.h.b16 %v2958
    %v5234 = vunpack.c.l.b16 %v2959
    %v5235 = vunpack.c.h.b16 %v2959
    %v5236 = vunpack.c.l.b16 %v2960
    %v5237 = vunpack.c.h.b16 %v2960
    %v5238 = vunpack.c.l.b16 %v2961
    %v5239 = vunpack.c.h.b16 %v2961
    %v5240 = vunpack.c.l.b16 %v2962
    %v5241 = vunpack.c.h.b16 %v2962
    %v5242 = vunpack.c.l.b16 %v2963
    %v5243 = vunpack.c.h.b16 %v2963
    %v5244 = vunpack.c.l.b16 %v2964
    %v5245 = vunpack.c.h.b16 %v2964
    %v5246 = vunpack.c.l.b16 %v2965
    %v5247 = vunpack.c.h.b16 %v2965
    %v5248 = vunpack.c.l.b16 %v2966
    %v5249 = vunpack.c.h.b16 %v2966
    %v5250 = vunpack.c.l.b16 %v2967
    %v5251 = vunpack.c.h.b16 %v2967
    %v5252 = vunpack.c.l.b16 %v2968
    %v5253 = vunpack.c.h.b16 %v2968
    %v5254 = vunpack.c.l.b16 %v2969
    %v5255 = vunpack.c.h.b16 %v2969
    %v5256 = vunpack.c.l.b16 %v2970
    %v5257 = vunpack.c.h.b16 %v2970
    %v5258 = vunpack.c.l.b16 %v2971
    %v5259 = vunpack.c.h.b16 %v2971
    %v5260 = vunpack.c.l.b16 %v2972
    %v5261 = vunpack.c.h.b16 %v2972
    %v5262 = vunpack.c.l.b16 %v2973
    %v5263 = vunpack.c.h.b16 %v2973
    %v5264 = vunpack.c.l.b16 %v2974
    %v5265 = vunpack.c.h.b16 %v2974
    %v5266 = vunpack.c.l.b16 %v2975
    %v5267 = vunpack.c.h.b16 %v2975
    %v5268 = vunpack.c.l.b16 %v2976
    %v5269 = vunpack.c.h.b16 %v2976
    %v5270 = vunpack.c.l.b16 %v2977
    %v5271 = vunpack.c.h.b16 %v2977
    %v5272 = vunpack.c.l.b16 %v2978
    %v5273 = vunpack.c.h.b16 %v2978
    %v5274 = vunpack.c.l.b16 %v2979
    %v5275 = vunpack.c.h.b16 %v2979
    %v5276 = vunpack.c.l.b16 %v2980
    %v5277 = vunpack.c.h.b16 %v2980
    %v5278 = vunpack.c.l.b16 %v2981
    %v5279 = vunpack.c.h.b16 %v2981
    %v5280 = vunpack.c.l.b16 %v2982
    %v5281 = vunpack.c.h.b16 %v2982
    %v5282 = vunpack.c.l.b16 %v2983
    %v5283 = vunpack.c.h.b16 %v2983
    %v5284 = vunpack.c.l.b16 %v2984
    %v5285 = vunpack.c.h.b16 %v2984
    %v5286 = vunpack.c.l.b16 %v2985
    %v5287 = vunpack.c.h.b16 %v2985
    %v5288 = vunpack.c.l.b16 %v2986
    %v5289 = vunpack.c.h.b16 %v2986
    %v5290 = vunpack.c.l.b16 %v2987
    %v5291 = vunpack.c.h.b16 %v2987
    %v5292 = vunpack.c.l.b16 %v2988
    %v5293 = vunpack.c.h.b16 %v2988
    %v5294 = vunpack.c.l.b16 %v2989
    %v5295 = vunpack.c.h.b16 %v2989
    %v5296 = vunpack.c.l.b16 %v2990
    %v5297 = vunpack.c.h.b16 %v2990
    %v5298 = vunpack.c.l.b16 %v2991
    %v5299 = vunpack.c.h.b16 %v2991
    %v5300 = vunpack.c.l.b16 %v2992
    %v5301 = vunpack.c.h.b16 %v2992
    %v5302 = vunpack.c.l.b16 %v2993
    %v5303 = vunpack.c.h.b16 %v2993
    %v5304 = vunpack.c.l.b16 %v2994
    %v5305 = vunpack.c.h.b16 %v2994
    %v5306 = vunpack.c.l.b16 %v2995
    %v5307 = vunpack.c.h.b16 %v2995
    %v5308 = vunpack.c.l.b16 %v2996
    %v5309 = vunpack.c.h.b16 %v2996
    %v5310 = vunpack.c.l.b16 %v2997
    %v5311 = vunpack.c.h.b16 %v2997
    %v5312 = vunpack.c.l.b16 %v2998
    %v5313 = vunpack.c.h.b16 %v2998
    %v5314 = vunpack.c.l.b16 %v2999
    %v5315 = vunpack.c.h.b16 %v2999
    %v5316 = vunpack.c.l.b16 %v3000
    %v5317 = vunpack.c.h.b16 %v3000
    %v5318 = vunpack.c.l.b16 %v3001
    %v5319 = vunpack.c.h.b16 %v3001
    %v5320 = vunpack.c.l.b16 %v3002
    %v5321 = vunpack.c.h.b16 %v3002
    %v5322 = vunpack.c.l.b16 %v3003
    %v5323 = vunpack.c.h.b16 %v3003
    %v5324 = vunpack.c.l.b16 %v3004
    %v5325 = vunpack.c.h.b16 %v3004
    %v5326 = vunpack.c.l.b16 %v3005
    %v5327 = vunpack.c.h.b16 %v3005
    %v5328 = vunpack.c.l.b16 %v3006
    %v5329 = vunpack.c.h.b16 %v3006
    %v5330 = vunpack.c.l.b16 %v3007
    %v5331 = vunpack.c.h.b16 %v3007
    %v5332 = vunpack.c.l.b16 %v3008
    %v5333 = vunpack.c.h.b16 %v3008
    %v5334 = vunpack.c.l.b16 %v3009
    %v5335 = vunpack.c.h.b16 %v3009
    %v5336 = vunpack.c.l.b16 %v3010
    %v5337 = vunpack.c.h.b16 %v3010
    %v5338 = vunpack.c.l.b16 %v3011
    %v5339 = vunpack.c.h.b16 %v3011
    %v5340 = vunpack.c.l.b16 %v3012
    %v5341 = vunpack.c.h.b16 %v3012
    %v5342 = vunpack.c.l.b16 %v3013
    %v5343 = vunpack.c.h.b16 %v3013
    %v5344 = vunpack.c.l.b16 %v3014
    %v5345 = vunpack.c.h.b16 %v3014
    %v5346 = vunpack.c.l.b16 %v3015
    %v5347 = vunpack.c.h.b16 %v3015
    %v5348 = vunpack.c.l.b16 %v3016
    %v5349 = vunpack.c.h.b16 %v3016
    %v5350 = vunpack.c.l.b16 %v3017
    %v5351 = vunpack.c.h.b16 %v3017
    %v5352 = vunpack.c.l.b16 %v3018
    %v5353 = vunpack.c.h.b16 %v3018
    %v5354 = vunpack.c.l.b16 %v3019
    %v5355 = vunpack.c.h.b16 %v3019
    %v5356 = vunpack.c.l.b16 %v3020
    %v5357 = vunpack.c.h.b16 %v3020
    %v5358 = vunpack.c.l.b16 %v3021
    %v5359 = vunpack.c.h.b16 %v3021
    %v5360 = vunpack.c.l.b16 %v3022
    %v5361 = vunpack.c.h.b16 %v3022
    %v5362 = vunpack.c.l.b16 %v3023
    %v5363 = vunpack.c.h.b16 %v3023
    %v5364 = vunpack.c.l.b16 %v3024
    %v5365 = vunpack.c.h.b16 %v3024
    %v5366 = vunpack.c.l.b16 %v3025
    %v5367 = vunpack.c.h.b16 %v3025
    %v5368 = vunpack.c.l.b16 %v3026
    %v5369 = vunpack.c.h.b16 %v3026
    %v5370 = vunpack.c.l.b16 %v3027
    %v5371 = vunpack.c.h.b16 %v3027
    %v5372 = vunpack.c.l.b16 %v3028
    %v5373 = vunpack.c.h.b16 %v3028
    %v5374 = vunpack.c.l.b16 %v3029
    %v5375 = vunpack.c.h.b16 %v3029
    %v5376 = vunpack.c.l.b16 %v3030
    %v5377 = vunpack.c.h.b16 %v3030
    %v5378 = vunpack.c.l.b16 %v3031
    %v5379 = vunpack.c.h.b16 %v3031
    %v5380 = vunpack.c.l.b16 %v3032
    %v5381 = vunpack.c.h.b16 %v3032
    %v5382 = vunpack.c.l.b16 %v3033
    %v5383 = vunpack.c.h.b16 %v3033
    %v5384 = vunpack.c.l.b16 %v3034
    %v5385 = vunpack.c.h.b16 %v3034
    %v5386 = vunpack.c.l.b16 %v3035
    %v5387 = vunpack.c.h.b16 %v3035
    %v5388 = vunpack.c.l.b16 %v3036
    %v5389 = vunpack.c.h.b16 %v3036
    %v5390 = vunpack.c.l.b16 %v3037
    %v5391 = vunpack.c.h.b16 %v3037
    %v5392 = vunpack.c.l.b16 %v3038
    %v5393 = vunpack.c.h.b16 %v3038
    %v5394 = vunpack.c.l.b16 %v3039
    %v5395 = vunpack.c.h.b16 %v3039
    %v5396 = vunpack.c.l.b16 %v3040
    %v5397 = vunpack.c.h.b16 %v3040
    %v5398 = vunpack.c.l.b16 %v3041
    %v5399 = vunpack.c.h.b16 %v3041
    %v5400 = vunpack.c.l.b16 %v3042
    %v5401 = vunpack.c.h.b16 %v3042
    %v5402 = vunpack.c.l.b16 %v3043
    %v5403 = vunpack.c.h.b16 %v3043
    %v5404 = vunpack.c.l.b16 %v3044
    %v5405 = vunpack.c.h.b16 %v3044
    %v5406 = vunpack.c.l.b16 %v3045
    %v5407 = vunpack.c.h.b16 %v3045
    %v5408 = vunpack.c.l.b16 %v3046
    %v5409 = vunpack.c.h.b16 %v3046
    %v5410 = vunpack.c.l.b16 %v3047
    %v5411 = vunpack.c.h.b16 %v3047
    %v5412 = vunpack.c.l.b16 %v3048
    %v5413 = vunpack.c.h.b16 %v3048
    %v5414 = vunpack.c.l.b16 %v3049
    %v5415 = vunpack.c.h.b16 %v3049
    %v5416 = vunpack.c.l.b16 %v3050
    %v5417 = vunpack.c.h.b16 %v3050
    %v5418 = vunpack.c.l.b16 %v3051
    %v5419 = vunpack.c.h.b16 %v3051
    %v5420 = vunpack.c.l.b16 %v3052
    %v5421 = vunpack.c.h.b16 %v3052
    %v5422 = vunpack.c.l.b16 %v3053
    %v5423 = vunpack.c.h.b16 %v3053
    %v5424 = vunpack.c.l.b16 %v3054
    %v5425 = vunpack.c.h.b16 %v3054
    %v5426 = vunpack.c.l.b16 %v3055
    %v5427 = vunpack.c.h.b16 %v3055
    %v5428 = vunpack.c.l.b16 %v3056
    %v5429 = vunpack.c.h.b16 %v3056
    %v5430 = vunpack.c.l.b16 %v3057
    %v5431 = vunpack.c.h.b16 %v3057
    %v5432 = vunpack.c.l.b16 %v3058
    %v5433 = vunpack.c.h.b16 %v3058
    %v5434 = vunpack.c.l.b16 %v3059
    %v5435 = vunpack.c.h.b16 %v3059
    %v5436 = vunpack.c.l.b16 %v3060
    %v5437 = vunpack.c.h.b16 %v3060
    %v5438 = vunpack.c.l.b16 %v3061
    %v5439 = vunpack.c.h.b16 %v3061
    %v5440 = vunpack.c.l.b16 %v3062
    %v5441 = vunpack.c.h.b16 %v3062
    %v5442 = vunpack.c.l.b16 %v3063
    %v5443 = vunpack.c.h.b16 %v3063
    %v5444 = vunpack.c.l.b16 %v3064
    %v5445 = vunpack.c.h.b16 %v3064
    %v5446 = vunpack.c.l.b16 %v3065
    %v5447 = vunpack.c.h.b16 %v3065
    %v5448 = vunpack.c.l.b16 %v3066
    %v5449 = vunpack.c.h.b16 %v3066
    %v5450 = vunpack.c.l.b16 %v3067
    %v5451 = vunpack.c.h.b16 %v3067
    %v5452 = vunpack.c.l.b16 %v3068
    %v5453 = vunpack.c.h.b16 %v3068
    %v5454 = vunpack.c.l.b16 %v3069
    %v5455 = vunpack.c.h.b16 %v3069
    %v5456 = vunpack.c.l.b16 %v3070
    %v5457 = vunpack.c.h.b16 %v3070
    %v5458 = vunpack.c.l.b16 %v3071
    %v5459 = vunpack.c.h.b16 %v3071
    %v5460 = vpack.c.b16 %v3940, %v3924
    %v5461 = vpack.c.b16 %v3941, %v3925
    %v5462 = vpack.c.b16 %v3942, %v3926
    %v5463 = vpack.c.b16 %v3943, %v3927
    %v5464 = vpack.c.b16 %v3944, %v3928
    %v5465 = vpack.c.b16 %v3945, %v3929
    %v5466 = vpack.c.b16 %v3946, %v3930
    %v5467 = vpack.c.b16 %v3947, %v3931
    %v5468 = vpack.c.b16 %v3948, %v3932
    %v5469 = vpack.c.b16 %v3949, %v3933
    %v5470 = vpack.c.b16 %v3950, %v3934
    %v5471 = vpack.c.b16 %v3951, %v3935
    %v5472 = vpack.c.b16 %v3952, %v3936
    %v5473 = vpack.c.b16 %v3953, %v3937
    %v5474 = vpack.c.b16 %v3954, %v3938
    %v5475 = vpack.c.b16 %v3955, %v3939
    %v5476 = vpack.c.b16 %v3972, %v3956
    %v5477 = vpack.c.b16 %v3973, %v3957
    %v5478 = vpack.c.b16 %v3974, %v3958
    %v5479 = vpack.c.b16 %v3975, %v3959
    %v5480 = vpack.c.b16 %v3976, %v3960
    %v5481 = vpack.c.b16 %v3977, %v3961
    %v5482 = vpack.c.b16 %v3978, %v3962
    %v5483 = vpack.c.b16 %v3979, %v3963
    %v5484 = vpack.c.b16 %v3980, %v3964
    %v5485 = vpack.c.b16 %v3981, %v3965
    %v5486 = vpack.c.b16 %v3982, %v3966
    %v5487 = vpack.c.b16 %v3983, %v3967
    %v5488 = vpack.c.b16 %v3984, %v3968
    %v5489 = vpack.c.b16 %v3985, %v3969
    %v5490 = vpack.c.b16 %v3986, %v3970
    %v5491 = vpack.c.b16 %v3987, %v3971
    %v5492 = vpack.c.b16 %v4004, %v3988
    %v5493 = vpack.c.b16 %v4005, %v3989
    %v5494 = vpack.c.b16 %v4006, %v3990
    %v5495 = vpack.c.b16 %v4007, %v3991
    %v5496 = vpack.c.b16 %v4008, %v3992
    %v5497 = vpack.c.b16 %v4009, %v3993
    %v5498 = vpack.c.b16 %v4010, %v3994
    %v5499 = vpack.c.b16 %v4011, %v3995
    %v5500 = vpack.c.b16 %v4012, %v3996
    %v5501 = vpack.c.b16 %v4013, %v3997
    %v5502 = vpack.c.b16 %v4014, %v3998
    %v5503 = vpack.c.b16 %v4015, %v3999
    %v5504 = vpack.c.b16 %v4016, %v4000
    %v5505 = vpack.c.b16 %v4017, %v4001
    %v5506 = vpack.c.b16 %v4018, %v4002
    %v5507 = vpack.c.b16 %v4019, %v4003
    %v5508 = vpack.c.b16 %v4036, %v4020
    %v5509 = vpack.c.b16 %v4037, %v4021
    %v5510 = vpack.c.b16 %v4038, %v4022
    %v5511 = vpack.c.b16 %v4039, %v4023
    %v5512 = vpack.c.b16 %v4040, %v4024
    %v5513 = vpack.c.b16 %v4041, %v4025
    %v5514 = vpack.c.b16 %v4042, %v4026
    %v5515 = vpack.c.b16 %v4043, %v4027
    %v5516 = vpack.c.b16 %v4044, %v4028
    %v5517 = vpack.c.b16 %v4045, %v4029
    %v5518 = vpack.c.b16 %v4046, %v4030
    %v5519 = vpack.c.b16 %v4047, %v4031
    %v5520 = vpack.c.b16 %v4048, %v4032
    %v5521 = vpack.c.b16 %v4049, %v4033
    %v5522 = vpack.c.b16 %v4050, %v4034
    %v5523 = vpack.c.b16 %v4051, %v4035
    %v5524 = vpack.c.b16 %v4068, %v4052
    %v5525 = vpack.c.b16 %v4069, %v4053
    %v5526 = vpack.c.b16 %v4070, %v4054
    %v5527 = vpack.c.b16 %v4071, %v4055
    %v5528 = vpack.c.b16 %v4072, %v4056
    %v5529 = vpack.c.b16 %v4073, %v4057
    %v5530 = vpack.c.b16 %v4074, %v4058
    %v5531 = vpack.c.b16 %v4075, %v4059
    %v5532 = vpack.c.b16 %v4076, %v4060
    %v5533 = vpack.c.b16 %v4077, %v4061
    %v5534 = vpack.c.b16 %v4078, %v4062
    %v5535 = vpack.c.b16 %v4079, %v4063
    %v5536 = vpack.c.b16 %v4080, %v4064
    %v5537 = vpack.c.b16 %v4081, %v4065
    %v5538 = vpack.c.b16 %v4082, %v4066
    %v5539 = vpack.c.b16 %v4083, %v4067
    %v5540 = vpack.c.b16 %v4100, %v4084
    %v5541 = vpack.c.b16 %v4101, %v4085
    %v5542 = vpack.c.b16 %v4102, %v4086
    %v5543 = vpack.c.b16 %v4103, %v4087
    %v5544 = vpack.c.b16 %v4104, %v4088
    %v5545 = vpack.c.b16 %v4105, %v4089
    %v5546 = vpack.c.b16 %v4106, %v4090
    %v5547 = vpack.c.b16 %v4107, %v4091
    %v5548 = vpack.c.b16 %v4108, %v4092
    %v5549 = vpack.c.b16 %v4109, %v4093
    %v5550 = vpack.c.b16 %v4110, %v4094
    %v5551 = vpack.c.b16 %v4111, %v4095
    %v5552 = vpack.c.b16 %v4112, %v4096
    %v5553 = vpack.c.b16 %v4113, %v4097
    %v5554 = vpack.c.b16 %v4114, %v4098
    %v5555 = vpack.c.b16 %v4115, %v4099
    %v5556 = vpack.c.b16 %v4132, %v4116
    %v5557 = vpack.c.b16 %v4133, %v4117
    %v5558 = vpack.c.b16 %v4134, %v4118
    %v5559 = vpack.c.b16 %v4135, %v4119
    %v5560 = vpack.c.b16 %v4136, %v4120
    %v5561 = vpack.c.b16 %v4137, %v4121
    %v5562 = vpack.c.b16 %v4138, %v4122
    %v5563 = vpack.c.b16 %v4139, %v4123
    %v5564 = vpack.c.b16 %v4140, %v4124
    %v5565 = vpack.c.b16 %v4141, %v4125
    %v5566 = vpack.c.b16 %v4142, %v4126
    %v5567 = vpack.c.b16 %v4143, %v4127
    %v5568 = vpack.c.b16 %v4144, %v4128
    %v5569 = vpack.c.b16 %v4145, %v4129
    %v5570 = vpack.c.b16 %v4146, %v4130
    %v5571 = vpack.c.b16 %v4147, %v4131
    %v5572 = vpack.c.b16 %v4164, %v4148
    %v5573 = vpack.c.b16 %v4165, %v4149
    %v5574 = vpack.c.b16 %v4166, %v4150
    %v5575 = vpack.c.b16 %v4167, %v4151
    %v5576 = vpack.c.b16 %v4168, %v4152
    %v5577 = vpack.c.b16 %v4169, %v4153
    %v5578 = vpack.c.b16 %v4170, %v4154
    %v5579 = vpack.c.b16 %v4171, %v4155
    %v5580 = vpack.c.b16 %v4172, %v4156
    %v5581 = vpack.c.b16 %v4173, %v4157
    %v5582 = vpack.c.b16 %v4174, %v4158
    %v5583 = vpack.c.b16 %v4175, %v4159
    %v5584 = vpack.c.b16 %v4176, %v4160
    %v5585 = vpack.c.b16 %v4177, %v4161
    %v5586 = vpack.c.b16 %v4178, %v4162
    %v5587 = vpack.c.b16 %v4179, %v4163
    %v5588 = vpack.c.b16 %v4196, %v4180
    %v5589 = vpack.c.b16 %v4197, %v4181
    %v5590 = vpack.c.b16 %v4198, %v4182
    %v5591 = vpack.c.b16 %v4199, %v4183
    %v5592 = vpack.c.b16 %v4200, %v4184
    %v5593 = vpack.c.b16 %v4201, %v4185
    %v5594 = vpack.c.b16 %v4202, %v4186
    %v5595 = vpack.c.b16 %v4203, %v4187
    %v5596 = vpack.c.b16 %v4204, %v4188
    %v5597 = vpack.c.b16 %v4205, %v4189
    %v5598 = vpack.c.b16 %v4206, %v4190
    %v5599 = vpack.c.b16 %v4207, %v4191
    %v5600 = vpack.c.b16 %v4208, %v4192
    %v5601 = vpack.c.b16 %v4209, %v4193
    %v5602 = vpack.c.b16 %v4210, %v4194
    %v5603 = vpack.c.b16 %v4211, %v4195
    %v5604 = vpack.c.b16 %v4228, %v4212
    %v5605 = vpack.c.b16 %v4229, %v4213
    %v5606 = vpack.c.b16 %v4230, %v4214
    %v5607 = vpack.c.b16 %v4231, %v4215
    %v5608 = vpack.c.b16 %v4232, %v4216
    %v5609 = vpack.c.b16 %v4233, %v4217
    %v5610 = vpack.c.b16 %v4234, %v4218
    %v5611 = vpack.c.b16 %v4235, %v4219
    %v5612 = vpack.c.b16 %v4236, %v4220
    %v5613 = vpack.c.b16 %v4237, %v4221
    %v5614 = vpack.c.b16 %v4238, %v4222
    %v5615 = vpack.c.b16 %v4239, %v4223
    %v5616 = vpack.c.b16 %v4240, %v4224
    %v5617 = vpack.c.b16 %v4241, %v4225
    %v5618 = vpack.c.b16 %v4242, %v4226
    %v5619 = vpack.c.b16 %v4243, %v4227
    %v5620 = vpack.c.b16 %v4260, %v4244
    %v5621 = vpack.c.b16 %v4261, %v4245
    %v5622 = vpack.c.b16 %v4262, %v4246
    %v5623 = vpack.c.b16 %v4263, %v4247
    %v5624 = vpack.c.b16 %v4264, %v4248
    %v5625 = vpack.c.b16 %v4265, %v4249
    %v5626 = vpack.c.b16 %v4266, %v4250
    %v5627 = vpack.c.b16 %v4267, %v4251
    %v5628 = vpack.c.b16 %v4268, %v4252
    %v5629 = vpack.c.b16 %v4269, %v4253
    %v5630 = vpack.c.b16 %v4270, %v4254
    %v5631 = vpack.c.b16 %v4271, %v4255
    %v5632 = vpack.c.b16 %v4272, %v4256
    %v5633 = vpack.c.b16 %v4273, %v4257
    %v5634 = vpack.c.b16 %v4274, %v4258
    %v5635 = vpack.c.b16 %v4275, %v4259
    %v5636 = vpack.c.b16 %v4292, %v4276
    %v5637 = vpack.c.b16 %v4293, %v4277
    %v5638 = vpack.c.b16 %v4294, %v4278
    %v5639 = vpack.c.b16 %v4295, %v4279
    %v5640 = vpack.c.b16 %v4296, %v4280
    %v5641 = vpack.c.b16 %v4297, %v4281
    %v5642 = vpack.c.b16 %v4298, %v4282
    %v5643 = vpack.c.b16 %v4299, %v4283
    %v5644 = vpack.c.b16 %v4300, %v4284
    %v5645 = vpack.c.b16 %v4301, %v4285
    %v5646 = vpack.c.b16 %v4302, %v4286
    %v5647 = vpack.c.b16 %v4303, %v4287
    %v5648 = vpack.c.b16 %v4304, %v4288
    %v5649 = vpack.c.b16 %v4305, %v4289
    %v5650 = vpack.c.b16 %v4306, %v4290
    %v5651 = vpack.c.b16 %v4307, %v4291
    %v5652 = vpack.c.b16 %v4324, %v4308
    %v5653 = vpack.c.b16 %v4325, %v4309
    %v5654 = vpack.c.b16 %v4326, %v4310
    %v5655 = vpack.c.b16 %v4327, %v4311
    %v5656 = vpack.c.b16 %v4328, %v4312
    %v5657 = vpack.c.b16 %v4329, %v4313
    %v5658 = vpack.c.b16 %v4330, %v4314
    %v5659 = vpack.c.b16 %v4331, %v4315
    %v5660 = vpack.c.b16 %v4332, %v4316
    %v5661 = vpack.c.b16 %v4333, %v4317
    %v5662 = vpack.c.b16 %v4334, %v4318
    %v5663 = vpack.c.b16 %v4335, %v4319
    %v5664 = vpack.c.b16 %v4336, %v4320
    %v5665 = vpack.c.b16 %v4337, %v4321
    %v5666 = vpack.c.b16 %v4338, %v4322
    %v5667 = vpack.c.b16 %v4339, %v4323
    %v5668 = vpack.c.b16 %v4356, %v4340
    %v5669 = vpack.c.b16 %v4357, %v4341
    %v5670 = vpack.c.b16 %v4358, %v4342
    %v5671 = vpack.c.b16 %v4359, %v4343
    %v5672 = vpack.c.b16 %v4360, %v4344
    %v5673 = vpack.c.b16 %v4361, %v4345
    %v5674 = vpack.c.b16 %v4362, %v4346
    %v5675 = vpack.c.b16 %v4363, %v4347
    %v5676 = vpack.c.b16 %v4364, %v4348
    %v5677 = vpack.c.b16 %v4365, %v4349
    %v5678 = vpack.c.b16 %v4366, %v4350
    %v5679 = vpack.c.b16 %v4367, %v4351
    %v5680 = vpack.c.b16 %v4368, %v4352
    %v5681 = vpack.c.b16 %v4369, %v4353
    %v5682 = vpack.c.b16 %v4370, %v4354
    %v5683 = vpack.c.b16 %v4371, %v4355
    %v5684 = vpack.c.b16 %v4388, %v4372
    %v5685 = vpack.c.b16 %v4389, %v4373
    %v5686 = vpack.c.b16 %v4390, %v4374
    %v5687 = vpack.c.b16 %v4391, %v4375
    %v5688 = vpack.c.b16 %v4392, %v4376
    %v5689 = vpack.c.b16 %v4393, %v4377
    %v5690 = vpack.c.b16 %v4394, %v4378
    %v5691 = vpack.c.b16 %v4395, %v4379
    %v5692 = vpack.c.b16 %v4396, %v4380
    %v5693 = vpack.c.b16 %v4397, %v4381
    %v5694 = vpack.c.b16 %v4398, %v4382
    %v5695 = vpack.c.b16 %v4399, %v4383
    %v5696 = vpack.c.b16 %v4400, %v4384
    %v5697 = vpack.c.b16 %v4401, %v4385
    %v5698 = vpack.c.b16 %v4402, %v4386
    %v5699 = vpack.c.b16 %v4403, %v4387
    %v5700 = vpack.c.b16 %v4420, %v4404
    %v5701 = vpack.c.b16 %v4421, %v4405
    %v5702 = vpack.c.b16 %v4422, %v4406
    %v5703 = vpack.c.b16 %v4423, %v4407
    %v5704 = vpack.c.b16 %v4424, %v4408
    %v5705 = vpack.c.b16 %v4425, %v4409
    %v5706 = vpack.c.b16 %v4426, %v4410
    %v5707 = vpack.c.b16 %v4427, %v4411
    %v5708 = vpack.c.b16 %v4428, %v4412
    %v5709 = vpack.c.b16 %v4429, %v4413
    %v5710 = vpack.c.b16 %v4430, %v4414
    %v5711 = vpack.c.b16 %v4431, %v4415
    %v5712 = vpack.c.b16 %v4432, %v4416
    %v5713 = vpack.c.b16 %v4433, %v4417
    %v5714 = vpack.c.b16 %v4434, %v4418
    %v5715 = vpack.c.b16 %v4435, %v4419
    %v5716 = vpack.c.b16 %v4452, %v4436
    %v5717 = vpack.c.b16 %v4453, %v4437
    %v5718 = vpack.c.b16 %v4454, %v4438
    %v5719 = vpack.c.b16 %v4455, %v4439
    %v5720 = vpack.c.b16 %v4456, %v4440
    %v5721 = vpack.c.b16 %v4457, %v4441
    %v5722 = vpack.c.b16 %v4458, %v4442
    %v5723 = vpack.c.b16 %v4459, %v4443
    %v5724 = vpack.c.b16 %v4460, %v4444
    %v5725 = vpack.c.b16 %v4461, %v4445
    %v5726 = vpack.c.b16 %v4462, %v4446
    %v5727 = vpack.c.b16 %v4463, %v4447
    %v5728 = vpack.c.b16 %v4464, %v4448
    %v5729 = vpack.c.b16 %v4465, %v4449
    %v5730 = vpack.c.b16 %v4466, %v4450
    %v5731 = vpack.c.b16 %v4467, %v4451
    %v5732 = vpack.c.b16 %v4484, %v4468
    %v5733 = vpack.c.b16 %v4485, %v4469
    %v5734 = vpack.c.b16 %v4486, %v4470
    %v5735 = vpack.c.b16 %v4487, %v4471
    %v5736 = vpack.c.b16 %v4488, %v4472
    %v5737 = vpack.c.b16 %v4489, %v4473
    %v5738 = vpack.c.b16 %v4490, %v4474
    %v5739 = vpack.c.b16 %v4491, %v4475
    %v5740 = vpack.c.b16 %v4492, %v4476
    %v5741 = vpack.c.b16 %v4493, %v4477
    %v5742 = vpack.c.b16 %v4494, %v4478
    %v5743 = vpack.c.b16 %v4495, %v4479
    %v5744 = vpack.c.b16 %v4496, %v4480
    %v5745 = vpack.c.b16 %v4497, %v4481
    %v5746 = vpack.c.b16 %v4498, %v4482
    %v5747 = vpack.c.b16 %v4499, %v4483
    %v5748 = vpack.c.b16 %v4516, %v4500
    %v5749 = vpack.c.b16 %v4517, %v4501
    %v5750 = vpack.c.b16 %v4518, %v4502
    %v5751 = vpack.c.b16 %v4519, %v4503
    %v5752 = vpack.c.b16 %v4520, %v4504
    %v5753 = vpack.c.b16 %v4521, %v4505
    %v5754 = vpack.c.b16 %v4522, %v4506
    %v5755 = vpack.c.b16 %v4523, %v4507
    %v5756 = vpack.c.b16 %v4524, %v4508
    %v5757 = vpack.c.b16 %v4525, %v4509
    %v5758 = vpack.c.b16 %v4526, %v4510
    %v5759 = vpack.c.b16 %v4527, %v4511
    %v5760 = vpack.c.b16 %v4528, %v4512
    %v5761 = vpack.c.b16 %v4529, %v4513
    %v5762 = vpack.c.b16 %v4530, %v4514
    %v5763 = vpack.c.b16 %v4531, %v4515
    %v5764 = vpack.c.b16 %v4548, %v4532
    %v5765 = vpack.c.b16 %v4549, %v4533
    %v5766 = vpack.c.b16 %v4550, %v4534
    %v5767 = vpack.c.b16 %v4551, %v4535
    %v5768 = vpack.c.b16 %v4552, %v4536
    %v5769 = vpack.c.b16 %v4553, %v4537
    %v5770 = vpack.c.b16 %v4554, %v4538
    %v5771 = vpack.c.b16 %v4555, %v4539
    %v5772 = vpack.c.b16 %v4556, %v4540
    %v5773 = vpack.c.b16 %v4557, %v4541
    %v5774 = vpack.c.b16 %v4558, %v4542
    %v5775 = vpack.c.b16 %v4559, %v4543
    %v5776 = vpack.c.b16 %v4560, %v4544
    %v5777 = vpack.c.b16 %v4561, %v4545
    %v5778 = vpack.c.b16 %v4562, %v4546
    %v5779 = vpack.c.b16 %v4563, %v4547
    %v5780 = vpack.c.b16 %v4580, %v4564
    %v5781 = vpack.c.b16 %v4581, %v4565
    %v5782 = vpack.c.b16 %v4582, %v4566
    %v5783 = vpack.c.b16 %v4583, %v4567
    %v5784 = vpack.c.b16 %v4584, %v4568
    %v5785 = vpack.c.b16 %v4585, %v4569
    %v5786 = vpack.c.b16 %v4586, %v4570
    %v5787 = vpack.c.b16 %v4587, %v4571
    %v5788 = vpack.c.b16 %v4588, %v4572
    %v5789 = vpack.c.b16 %v4589, %v4573
    %v5790 = vpack.c.b16 %v4590, %v4574
    %v5791 = vpack.c.b16 %v4591, %v4575
    %v5792 = vpack.c.b16 %v4592, %v4576
    %v5793 = vpack.c.b16 %v4593, %v4577
    %v5794 = vpack.c.b16 %v4594, %v4578
    %v5795 = vpack.c.b16 %v4595, %v4579
    %v5796 = vpack.c.b16 %v4612, %v4596
    %v5797 = vpack.c.b16 %v4613, %v4597
    %v5798 = vpack.c.b16 %v4614, %v4598
    %v5799 = vpack.c.b16 %v4615, %v4599
    %v5800 = vpack.c.b16 %v4616, %v4600
    %v5801 = vpack.c.b16 %v4617, %v4601
    %v5802 = vpack.c.b16 %v4618, %v4602
    %v5803 = vpack.c.b16 %v4619, %v4603
    %v5804 = vpack.c.b16 %v4620, %v4604
    %v5805 = vpack.c.b16 %v4621, %v4605
    %v5806 = vpack.c.b16 %v4622, %v4606
    %v5807 = vpack.c.b16 %v4623, %v4607
    %v5808 = vpack.c.b16 %v4624, %v4608
    %v5809 = vpack.c.b16 %v4625, %v4609
    %v5810 = vpack.c.b16 %v4626, %v4610
    %v5811 = vpack.c.b16 %v4627, %v4611
    %v5812 = vpack.c.b16 %v4644, %v4628
    %v5813 = vpack.c.b16 %v4645, %v4629
    %v5814 = vpack.c.b16 %v4646, %v4630
    %v5815 = vpack.c.b16 %v4647, %v4631
    %v5816 = vpack.c.b16 %v4648, %v4632
    %v5817 = vpack.c.b16 %v4649, %v4633
    %v5818 = vpack.c.b16 %v4650, %v4634
    %v5819 = vpack.c.b16 %v4651, %v4635
    %v5820 = vpack.c.b16 %v4652, %v4636
    %v5821 = vpack.c.b16 %v4653, %v4637
    %v5822 = vpack.c.b16 %v4654, %v4638
    %v5823 = vpack.c.b16 %v4655, %v4639
    %v5824 = vpack.c.b16 %v4656, %v4640
    %v5825 = vpack.c.b16 %v4657, %v4641
    %v5826 = vpack.c.b16 %v4658, %v4642
    %v5827 = vpack.c.b16 %v4659, %v4643
    %v5828 = vpack.c.b16 %v4676, %v4660
    %v5829 = vpack.c.b16 %v4677, %v4661
    %v5830 = vpack.c.b16 %v4678, %v4662
    %v5831 = vpack.c.b16 %v4679, %v4663
    %v5832 = vpack.c.b16 %v4680, %v4664
    %v5833 = vpack.c.b16 %v4681, %v4665
    %v5834 = vpack.c.b16 %v4682, %v4666
    %v5835 = vpack.c.b16 %v4683, %v4667
    %v5836 = vpack.c.b16 %v4684, %v4668
    %v5837 = vpack.c.b16 %v4685, %v4669
    %v5838 = vpack.c.b16 %v4686, %v4670
    %v5839 = vpack.c.b16 %v4687, %v4671
    %v5840 = vpack.c.b16 %v4688, %v4672
    %v5841 = vpack.c.b16 %v4689, %v4673
    %v5842 = vpack.c.b16 %v4690, %v4674
    %v5843 = vpack.c.b16 %v4691, %v4675
    %v5844 = vpack.c.b16 %v4708, %v4692
    %v5845 = vpack.c.b16 %v4709, %v4693
    %v5846 = vpack.c.b16 %v4710, %v4694
    %v5847 = vpack.c.b16 %v4711, %v4695
    %v5848 = vpack.c.b16 %v4712, %v4696
    %v5849 = vpack.c.b16 %v4713, %v4697
    %v5850 = vpack.c.b16 %v4714, %v4698
    %v5851 = vpack.c.b16 %v4715, %v4699
    %v5852 = vpack.c.b16 %v4716, %v4700
    %v5853 = vpack.c.b16 %v4717, %v4701
    %v5854 = vpack.c.b16 %v4718, %v4702
    %v5855 = vpack.c.b16 %v4719, %v4703
    %v5856 = vpack.c.b16 %v4720, %v4704
    %v5857 = vpack.c.b16 %v4721, %v4705
    %v5858 = vpack.c.b16 %v4722, %v4706
    %v5859 = vpack.c.b16 %v4723, %v4707
    %v5860 = vpack.c.b16 %v4740, %v4724
    %v5861 = vpack.c.b16 %v4741, %v4725
    %v5862 = vpack.c.b16 %v4742, %v4726
    %v5863 = vpack.c.b16 %v4743, %v4727
    %v5864 = vpack.c.b16 %v4744, %v4728
    %v5865 = vpack.c.b16 %v4745, %v4729
    %v5866 = vpack.c.b16 %v4746, %v4730
    %v5867 = vpack.c.b16 %v4747, %v4731
    %v5868 = vpack.c.b16 %v4748, %v4732
    %v5869 = vpack.c.b16 %v4749, %v4733
    %v5870 = vpack.c.b16 %v4750, %v4734
    %v5871 = vpack.c.b16 %v4751, %v4735
    %v5872 = vpack.c.b16 %v4752, %v4736
    %v5873 = vpack.c.b16 %v4753, %v4737
    %v5874 = vpack.c.b16 %v4754, %v4738
    %v5875 = vpack.c.b16 %v4755, %v4739
    %v5876 = vpack.c.b16 %v4772, %v4756
    %v5877 = vpack.c.b16 %v4773, %v4757
    %v5878 = vpack.c.b16 %v4774, %v4758
    %v5879 = vpack.c.b16 %v4775, %v4759
    %v5880 = vpack.c.b16 %v4776, %v4760
    %v5881 = vpack.c.b16 %v4777, %v4761
    %v5882 = vpack.c.b16 %v4778, %v4762
    %v5883 = vpack.c.b16 %v4779, %v4763
    %v5884 = vpack.c.b16 %v4780, %v4764
    %v5885 = vpack.c.b16 %v4781, %v4765
    %v5886 = vpack.c.b16 %v4782, %v4766
    %v5887 = vpack.c.b16 %v4783, %v4767
    %v5888 = vpack.c.b16 %v4784, %v4768
    %v5889 = vpack.c.b16 %v4785, %v4769
    %v5890 = vpack.c.b16 %v4786, %v4770
    %v5891 = vpack.c.b16 %v4787, %v4771
    %v5892 = vpack.c.b16 %v4804, %v4788
    %v5893 = vpack.c.b16 %v4805, %v4789
    %v5894 = vpack.c.b16 %v4806, %v4790
    %v5895 = vpack.c.b16 %v4807, %v4791
    %v5896 = vpack.c.b16 %v4808, %v4792
    %v5897 = vpack.c.b16 %v4809, %v4793
    %v5898 = vpack.c.b16 %v4810, %v4794
    %v5899 = vpack.c.b16 %v4811, %v4795
    %v5900 = vpack.c.b16 %v4812, %v4796
    %v5901 = vpack.c.b16 %v4813, %v4797
    %v5902 = vpack.c.b16 %v4814, %v4798
    %v5903 = vpack.c.b16 %v4815, %v4799
    %v5904 = vpack.c.b16 %v4816, %v4800
    %v5905 = vpack.c.b16 %v4817, %v4801
    %v5906 = vpack.c.b16 %v4818, %v4802
    %v5907 = vpack.c.b16 %v4819, %v4803
    %v5908 = vpack.c.b16 %v4836, %v4820
    %v5909 = vpack.c.b16 %v4837, %v4821
    %v5910 = vpack.c.b16 %v4838, %v4822
    %v5911 = vpack.c.b16 %v4839, %v4823
    %v5912 = vpack.c.b16 %v4840, %v4824
    %v5913 = vpack.c.b16 %v4841, %v4825
    %v5914 = vpack.c.b16 %v4842, %v4826
    %v5915 = vpack.c.b16 %v4843, %v4827
    %v5916 = vpack.c.b16 %v4844, %v4828
    %v5917 = vpack.c.b16 %v4845, %v4829
    %v5918 = vpack.c.b16 %v4846, %v4830
    %v5919 = vpack.c.b16 %v4847, %v4831
    %v5920 = vpack.c.b16 %v4848, %v4832
    %v5921 = vpack.c.b16 %v4849, %v4833
    %v5922 = vpack.c.b16 %v4850, %v4834
    %v5923 = vpack.c.b16 %v4851, %v4835
    %v5924 = vpack.c.b16 %v4868, %v4852
    %v5925 = vpack.c.b16 %v4869, %v4853
    %v5926 = vpack.c.b16 %v4870, %v4854
    %v5927 = vpack.c.b16 %v4871, %v4855
    %v5928 = vpack.c.b16 %v4872, %v4856
    %v5929 = vpack.c.b16 %v4873, %v4857
    %v5930 = vpack.c.b16 %v4874, %v4858
    %v5931 = vpack.c.b16 %v4875, %v4859
    %v5932 = vpack.c.b16 %v4876, %v4860
    %v5933 = vpack.c.b16 %v4877, %v4861
    %v5934 = vpack.c.b16 %v4878, %v4862
    %v5935 = vpack.c.b16 %v4879, %v4863
    %v5936 = vpack.c.b16 %v4880, %v4864
    %v5937 = vpack.c.b16 %v4881, %v4865
    %v5938 = vpack.c.b16 %v4882, %v4866
    %v5939 = vpack.c.b16 %v4883, %v4867
    %v5940 = vpack.c.b16 %v4900, %v4884
    %v5941 = vpack.c.b16 %v4901, %v4885
    %v5942 = vpack.c.b16 %v4902, %v4886
    %v5943 = vpack.c.b16 %v4903, %v4887
    %v5944 = vpack.c.b16 %v4904, %v4888
    %v5945 = vpack.c.b16 %v4905, %v4889
    %v5946 = vpack.c.b16 %v4906, %v4890
    %v5947 = vpack.c.b16 %v4907, %v4891
    %v5948 = vpack.c.b16 %v4908, %v4892
    %v5949 = vpack.c.b16 %v4909, %v4893
    %v5950 = vpack.c.b16 %v4910, %v4894
    %v5951 = vpack.c.b16 %v4911, %v4895
    %v5952 = vpack.c.b16 %v4912, %v4896
    %v5953 = vpack.c.b16 %v4913, %v4897
    %v5954 = vpack.c.b16 %v4914, %v4898
    %v5955 = vpack.c.b16 %v4915, %v4899
    %v5956 = vpack.c.b16 %v4932, %v4916
    %v5957 = vpack.c.b16 %v4933, %v4917
    %v5958 = vpack.c.b16 %v4934, %v4918
    %v5959 = vpack.c.b16 %v4935, %v4919
    %v5960 = vpack.c.b16 %v4936, %v4920
    %v5961 = vpack.c.b16 %v4937, %v4921
    %v5962 = vpack.c.b16 %v4938, %v4922
    %v5963 = vpack.c.b16 %v4939, %v4923
    %v5964 = vpack.c.b16 %v4940, %v4924
    %v5965 = vpack.c.b16 %v4941, %v4925
    %v5966 = vpack.c.b16 %v4942, %v4926
    %v5967 = vpack.c.b16 %v4943, %v4927
    %v5968 = vpack.c.b16 %v4944, %v4928
    %v5969 = vpack.c.b16 %v4945, %v4929
    %v5970 = vpack.c.b16 %v4946, %v4930
    %v5971 = vpack.c.b16 %v4947, %v4931
    %v5972 = vpack.c.b16 %v4964, %v4948
    %v5973 = vpack.c.b16 %v4965, %v4949
    %v5974 = vpack.c.b16 %v4966, %v4950
    %v5975 = vpack.c.b16 %v4967, %v4951
    %v5976 = vpack.c.b16 %v4968, %v4952
    %v5977 = vpack.c.b16 %v4969, %v4953
    %v5978 = vpack.c.b16 %v4970, %v4954
    %v5979 = vpack.c.b16 %v4971, %v4955
    %v5980 = vpack.c.b16 %v4972, %v4956
    %v5981 = vpack.c.b16 %v4973, %v4957
    %v5982 = vpack.c.b16 %v4974, %v4958
    %v5983 = vpack.c.b16 %v4975, %v4959
    %v5984 = vpack.c.b16 %v4976, %v4960
    %v5985 = vpack.c.b16 %v4977, %v4961
    %v5986 = vpack.c.b16 %v4978, %v4962
    %v5987 = vpack.c.b16 %v4979, %v4963
    %v5988 = vpack.c.b16 %v4996, %v4980
    %v5989 = vpack.c.b16 %v4997, %v4981
    %v5990 = vpack.c.b16 %v4998, %v4982
    %v5991 = vpack.c.b16 %v4999, %v4983
    %v5992 = vpack.c.b16 %v5000, %v4984
    %v5993 = vpack.c.b16 %v5001, %v4985
    %v5994 = vpack.c.b16 %v5002, %v4986
    %v5995 = vpack.c.b16 %v5003, %v4987
    %v5996 = vpack.c.b16 %v5004, %v4988
    %v5997 = vpack.c.b16 %v5005, %v4989
    %v5998 = vpack.c.b16 %v5006, %v4990
    %v5999 = vpack.c.b16 %v5007, %v4991
    %v6000 = vpack.c.b16 %v5008, %v4992
    %v6001 = vpack.c.b16 %v5009, %v4993
    %v6002 = vpack.c.b16 %v5010, %v4994
    %v6003 = vpack.c.b16 %v5011, %v4995
    %v6004 = vpack.c.b16 %v5028, %v5012
    %v6005 = vpack.c.b16 %v5029, %v5013
    %v6006 = vpack.c.b16 %v5030, %v5014
    %v6007 = vpack.c.b16 %v5031, %v5015
    %v6008 = vpack.c.b16 %v5032, %v5016
    %v6009 = vpack.c.b16 %v5033, %v5017
    %v6010 = vpack.c.b16 %v5034, %v5018
    %v6011 = vpack.c.b16 %v5035, %v5019
    %v6012 = vpack.c.b16 %v5036, %v5020
    %v6013 = vpack.c.b16 %v5037, %v5021
    %v6014 = vpack.c.b16 %v5038, %v5022
    %v6015 = vpack.c.b16 %v5039, %v5023
    %v6016 = vpack.c.b16 %v5040, %v5024
    %v6017 = vpack.c.b16 %v5041, %v5025
    %v6018 = vpack.c.b16 %v5042, %v5026
    %v6019 = vpack.c.b16 %v5043, %v5027
    %v6020 = vpack.c.b16 %v5060, %v5044
    %v6021 = vpack.c.b16 %v5061, %v5045
    %v6022 = vpack.c.b16 %v5062, %v5046
    %v6023 = vpack.c.b16 %v5063, %v5047
    %v6024 = vpack.c.b16 %v5064, %v5048
    %v6025 = vpack.c.b16 %v5065, %v5049
    %v6026 = vpack.c.b16 %v5066, %v5050
    %v6027 = vpack.c.b16 %v5067, %v5051
    %v6028 = vpack.c.b16 %v5068, %v5052
    %v6029 = vpack.c.b16 %v5069, %v5053
    %v6030 = vpack.c.b16 %v5070, %v5054
    %v6031 = vpack.c.b16 %v5071, %v5055
    %v6032 = vpack.c.b16 %v5072, %v5056
    %v6033 = vpack.c.b16 %v5073, %v5057
    %v6034 = vpack.c.b16 %v5074, %v5058
    %v6035 = vpack.c.b16 %v5075, %v5059
    %v6036 = vpack.c.b16 %v5092, %v5076
    %v6037 = vpack.c.b16 %v5093, %v5077
    %v6038 = vpack.c.b16 %v5094, %v5078
    %v6039 = vpack.c.b16 %v5095, %v5079
    %v6040 = vpack.c.b16 %v5096, %v5080
    %v6041 = vpack.c.b16 %v5097, %v5081
    %v6042 = vpack.c.b16 %v5098, %v5082
    %v6043 = vpack.c.b16 %v5099, %v5083
    %v6044 = vpack.c.b16 %v5100, %v5084
    %v6045 = vpack.c.b16 %v5101, %v5085
    %v6046 = vpack.c.b16 %v5102, %v5086
    %v6047 = vpack.c.b16 %v5103, %v5087
    %v6048 = vpack.c.b16 %v5104, %v5088
    %v6049 = vpack.c.b16 %v5105, %v5089
    %v6050 = vpack.c.b16 %v5106, %v5090
    %v6051 = vpack.c.b16 %v5107, %v5091
    %v6052 = vpack.c.b16 %v5124, %v5108
    %v6053 = vpack.c.b16 %v5125, %v5109
    %v6054 = vpack.c.b16 %v5126, %v5110
    %v6055 = vpack.c.b16 %v5127, %v5111
    %v6056 = vpack.c.b16 %v5128, %v5112
    %v6057 = vpack.c.b16 %v5129, %v5113
    %v6058 = vpack.c.b16 %v5130, %v5114
    %v6059 = vpack.c.b16 %v5131, %v5115
    %v6060 = vpack.c.b16 %v5132, %v5116
    %v6061 = vpack.c.b16 %v5133, %v5117
    %v6062 = vpack.c.b16 %v5134, %v5118
    %v6063 = vpack.c.b16 %v5135, %v5119
    %v6064 = vpack.c.b16 %v5136, %v5120
    %v6065 = vpack.c.b16 %v5137, %v5121
    %v6066 = vpack.c.b16 %v5138, %v5122
    %v6067 = vpack.c.b16 %v5139, %v5123
    %v6068 = vpack.c.b16 %v5156, %v5140
    %v6069 = vpack.c.b16 %v5157, %v5141
    %v6070 = vpack.c.b16 %v5158, %v5142
    %v6071 = vpack.c.b16 %v5159, %v5143
    %v6072 = vpack.c.b16 %v5160, %v5144
    %v6073 = vpack.c.b16 %v5161, %v5145
    %v6074 = vpack.c.b16 %v5162, %v5146
    %v6075 = vpack.c.b16 %v5163, %v5147
    %v6076 = vpack.c.b16 %v5164, %v5148
    %v6077 = vpack.c.b16 %v5165, %v5149
    %v6078 = vpack.c.b16 %v5166, %v5150
    %v6079 = vpack.c.b16 %v5167, %v5151
    %v6080 = vpack.c.b16 %v5168, %v5152
    %v6081 = vpack.c.b16 %v5169, %v5153
    %v6082 = vpack.c.b16 %v5170, %v5154
    %v6083 = vpack.c.b16 %v5171, %v5155
    %v6084 = vpack.c.b16 %v5188, %v5172
    %v6085 = vpack.c.b16 %v5189, %v5173
    %v6086 = vpack.c.b16 %v5190, %v5174
    %v6087 = vpack.c.b16 %v5191, %v5175
    %v6088 = vpack.c.b16 %v5192, %v5176
    %v6089 = vpack.c.b16 %v5193, %v5177
    %v6090 = vpack.c.b16 %v5194, %v5178
    %v6091 = vpack.c.b16 %v5195, %v5179
    %v6092 = vpack.c.b16 %v5196, %v5180
    %v6093 = vpack.c.b16 %v5197, %v5181
    %v6094 = vpack.c.b16 %v5198, %v5182
    %v6095 = vpack.c.b16 %v5199, %v5183
    %v6096 = vpack.c.b16 %v5200, %v5184
    %v6097 = vpack.c.b16 %v5201, %v5185
    %v6098 = vpack.c.b16 %v5202, %v5186
    %v6099 = vpack.c.b16 %v5203, %v5187
    %v6100 = vpack.c.b16 %v5220, %v5204
    %v6101 = vpack.c.b16 %v5221, %v5205
    %v6102 = vpack.c.b16 %v5222, %v5206
    %v6103 = vpack.c.b16 %v5223, %v5207
    %v6104 = vpack.c.b16 %v5224, %v5208
    %v6105 = vpack.c.b16 %v5225, %v5209
    %v6106 = vpack.c.b16 %v5226, %v5210
    %v6107 = vpack.c.b16 %v5227, %v5211
    %v6108 = vpack.c.b16 %v5228, %v5212
    %v6109 = vpack.c.b16 %v5229, %v5213
    %v6110 = vpack.c.b16 %v5230, %v5214
    %v6111 = vpack.c.b16 %v5231, %v5215
    %v6112 = vpack.c.b16 %v5232, %v5216
    %v6113 = vpack.c.b16 %v5233, %v5217
    %v6114 = vpack.c.b16 %v5234, %v5218
    %v6115 = vpack.c.b16 %v5235, %v5219
    %v6116 = vpack.c.b16 %v5252, %v5236
    %v6117 = vpack.c.b16 %v5253, %v5237
    %v6118 = vpack.c.b16 %v5254, %v5238
    %v6119 = vpack.c.b16 %v5255, %v5239
    %v6120 = vpack.c.b16 %v5256, %v5240
    %v6121 = vpack.c.b16 %v5257, %v5241
    %v6122 = vpack.c.b16 %v5258, %v5242
    %v6123 = vpack.c.b16 %v5259, %v5243
    %v6124 = vpack.c.b16 %v5260, %v5244
    %v6125 = vpack.c.b16 %v5261, %v5245
    %v6126 = vpack.c.b16 %v5262, %v5246
    %v6127 = vpack.c.b16 %v5263, %v5247
    %v6128 = vpack.c.b16 %v5264, %v5248
    %v6129 = vpack.c.b16 %v5265, %v5249
    %v6130 = vpack.c.b16 %v5266, %v5250
    %v6131 = vpack.c.b16 %v5267, %v5251
    %v6132 = vpack.c.b16 %v5284, %v5268
    %v6133 = vpack.c.b16 %v5285, %v5269
    %v6134 = vpack.c.b16 %v5286, %v5270
    %v6135 = vpack.c.b16 %v5287, %v5271
    %v6136 = vpack.c.b16 %v5288, %v5272
    %v6137 = vpack.c.b16 %v5289, %v5273
    %v6138 = vpack.c.b16 %v5290, %v5274
    %v6139 = vpack.c.b16 %v5291, %v5275
    %v6140 = vpack.c.b16 %v5292, %v5276
    %v6141 = vpack.c.b16 %v5293, %v5277
    %v6142 = vpack.c.b16 %v5294, %v5278
    %v6143 = vpack.c.b16 %v5295, %v5279
    %v6144 = vpack.c.b16 %v5296, %v5280
    %v6145 = vpack.c.b16 %v5297, %v5281
    %v6146 = vpack.c.b16 %v5298, %v5282
    %v6147 = vpack.c.b16 %v5299, %v5283
    %v6148 = vpack.c.b16 %v5316, %v5300
    %v6149 = vpack.c.b16 %v5317, %v5301
    %v6150 = vpack.c.b16 %v5318, %v5302
    %v6151 = vpack.c.b16 %v5319, %v5303
    %v6152 = vpack.c.b16 %v5320, %v5304
    %v6153 = vpack.c.b16 %v5321, %v5305
    %v6154 = vpack.c.b16 %v5322, %v5306
    %v6155 = vpack.c.b16 %v5323, %v5307
    %v6156 = vpack.c.b16 %v5324, %v5308
    %v6157 = vpack.c.b16 %v5325, %v5309
    %v6158 = vpack.c.b16 %v5326, %v5310
    %v6159 = vpack.c.b16 %v5327, %v5311
    %v6160 = vpack.c.b16 %v5328, %v5312
    %v6161 = vpack.c.b16 %v5329, %v5313
    %v6162 = vpack.c.b16 %v5330, %v5314
    %v6163 = vpack.c.b16 %v5331, %v5315
    %v6164 = vpack.c.b16 %v5348, %v5332
    %v6165 = vpack.c.b16 %v5349, %v5333
    %v6166 = vpack.c.b16 %v5350, %v5334
    %v6167 = vpack.c.b16 %v5351, %v5335
    %v6168 = vpack.c.b16 %v5352, %v5336
    %v6169 = vpack.c.b16 %v5353, %v5337
    %v6170 = vpack.c.b16 %v5354, %v5338
    %v6171 = vpack.c.b16 %v5355, %v5339
    %v6172 = vpack.c.b16 %v5356, %v5340
    %v6173 = vpack.c.b16 %v5357, %v5341
    %v6174 = vpack.c.b16 %v5358, %v5342
    %v6175 = vpack.c.b16 %v5359, %v5343
    %v6176 = vpack.c.b16 %v5360, %v5344
    %v6177 = vpack.c.b16 %v5361, %v5345
    %v6178 = vpack.c.b16 %v5362, %v5346
    %v6179 = vpack.c.b16 %v5363, %v5347
    %v6180 = vpack.c.b16 %v5380, %v5364
    %v6181 = vpack.c.b16 %v5381, %v5365
    %v6182 = vpack.c.b16 %v5382, %v5366
    %v6183 = vpack.c.b16 %v5383, %v5367
    %v6184 = vpack.c.b16 %v5384, %v5368
    %v6185 = vpack.c.b16 %v5385, %v5369
    %v6186 = vpack.c.b16 %v5386, %v5370
    %v6187 = vpack.c.b16 %v5387, %v5371
    %v6188 = vpack.c.b16 %v5388, %v5372
    %v6189 = vpack.c.b16 %v5389, %v5373
    %v6190 = vpack.c.b16 %v5390, %v5374
    %v6191 = vpack.c.b16 %v5391, %v5375
    %v6192 = vpack.c.b16 %v5392, %v5376
    %v6193 = vpack.c.b16 %v5393, %v5377
    %v6194 = vpack.c.b16 %v5394, %v5378
    %v6195 = vpack.c.b16 %v5395, %v5379
    %v6196 = vpack.c.b16 %v5412, %v5396
    %v6197 = vpack.c.b16 %v5413, %v5397
    %v6198 = vpack.c.b16 %v5414, %v5398
    %v6199 = vpack.c.b16 %v5415, %v5399
    %v6200 = vpack.c.b16 %v5416, %v5400
    %v6201 = vpack.c.b16 %v5417, %v5401
    %v6202 = vpack.c.b16 %v5418, %v5402
    %v6203 = vpack.c.b16 %v5419, %v5403
    %v6204 = vpack.c.b16 %v5420, %v5404
    %v6205 = vpack.c.b16 %v5421, %v5405
    %v6206 = vpack.c.b16 %v5422, %v5406
    %v6207 = vpack.c.b16 %v5423, %v5407
    %v6208 = vpack.c.b16 %v5424, %v5408
    %v6209 = vpack.c.b16 %v5425, %v5409
    %v6210 = vpack.c.b16 %v5426, %v5410
    %v6211 = vpack.c.b16 %v5427, %v5411
    %v6212 = vpack.c.b16 %v5444, %v5428
    %v6213 = vpack.c.b16 %v5445, %v5429
    %v6214 = vpack.c.b16 %v5446, %v5430
    %v6215 = vpack.c.b16 %v5447, %v5431
    %v6216 = vpack.c.b16 %v5448, %v5432
    %v6217 = vpack.c.b16 %v5449, %v5433
    %v6218 = vpack.c.b16 %v5450, %v5434
    %v6219 = vpack.c.b16 %v5451, %v5435
    %v6220 = vpack.c.b16 %v5452, %v5436
    %v6221 = vpack.c.b16 %v5453, %v5437
    %v6222 = vpack.c.b16 %v5454, %v5438
    %v6223 = vpack.c.b16 %v5455, %v5439
    %v6224 = vpack.c.b16 %v5456, %v5440
    %v6225 = vpack.c.b16 %v5457, %v5441
    %v6226 = vpack.c.b16 %v5458, %v5442
    %v6227 = vpack.c.b16 %v5459, %v5443
    %6996 = vmatprep.subr.bf16.mxu0 %v5461
    %6997 = vmatpush1.bf16.msra.mxu0 %v5460
    %6998 = vmatprep.subr.bf16.mxu0 %v5477
    %6999 = vmatpush1.bf16.msra.mxu0 %v5476
    %7000 = vmatprep.subr.bf16.mxu0 %v5493
    %7001 = vmatpush1.bf16.msra.mxu0 %v5492
    %7002 = vmatprep.subr.bf16.mxu0 %v5509
    %7003 = vmatpush1.bf16.msra.mxu0 %v5508
    %7004 = vmatprep.subr.bf16.mxu0 %v5525
    %7005 = vmatpush1.bf16.msra.mxu0 %v5524
    %7006 = vmatprep.subr.bf16.mxu0 %v5541
    %7007 = vmatpush1.bf16.msra.mxu0 %v5540
    %7008 = vmatprep.subr.bf16.mxu0 %v5557
    %7009 = vmatpush1.bf16.msra.mxu0 %v5556
    %7010 = vmatprep.subr.bf16.mxu0 %v5573
    %7011 = vmatpush1.bf16.msra.mxu0 %v5572
    %7012 = vmatprep.subr.bf16.mxu0 %v5589
    %7013 = vmatpush1.bf16.msra.mxu0 %v5588
    %7014 = vmatprep.subr.bf16.mxu0 %v5605
    %7015 = vmatpush1.bf16.msra.mxu0 %v5604
    %7016 = vmatprep.subr.bf16.mxu0 %v5621
    %7017 = vmatpush1.bf16.msra.mxu0 %v5620
    %7018 = vmatprep.subr.bf16.mxu0 %v5637
    %7019 = vmatpush1.bf16.msra.mxu0 %v5636
    %7020 = vmatprep.subr.bf16.mxu0 %v5653
    %7021 = vmatpush1.bf16.msra.mxu0 %v5652
    %7022 = vmatprep.subr.bf16.mxu0 %v5669
    %7023 = vmatpush1.bf16.msra.mxu0 %v5668
    %7024 = vmatprep.subr.bf16.mxu0 %v5685
    %7025 = vmatpush1.bf16.msra.mxu0 %v5684
    %7026 = vmatprep.subr.bf16.mxu0 %v5701
    %7027 = vmatpush1.bf16.msra.mxu0 %v5700
    %7028 = vmatprep.mubr.bf16.mxu0 %v2299
    %7029 = vmatmul.mubr.bf16.gmra.mrb[0].mxu0 %v2298
    %v7030 = vpop.f32.mrb[0].mxu0
    %v7031 = vadd.f32 %v3079, %v7030
    %v7032 = vpop.f32.mrb[0].mxu0
    %v7033 = vadd.f32 %v3083, %v7032
    %v7034 = vpop.f32.mrb[0].mxu0
    %v7035 = vadd.f32 %v3079, %v7034
    %v7036 = vpop.f32.mrb[0].mxu0
    %v7037 = vadd.f32 %v3083, %v7036
    %7038 = vdwg.mxu0
    %7039 = vmatprep.subr.bf16.mxu0 %v5717
    %7040 = vmatpush1.bf16.msra.mxu0 %v5716
    %7041 = vmatprep.subr.bf16.mxu0 %v5733
    %7042 = vmatpush1.bf16.msra.mxu0 %v5732
    %7043 = vmatprep.subr.bf16.mxu0 %v5749
    %7044 = vmatpush1.bf16.msra.mxu0 %v5748
    %7045 = vmatprep.subr.bf16.mxu0 %v5765
    %7046 = vmatpush1.bf16.msra.mxu0 %v5764
    %7047 = vmatprep.subr.bf16.mxu0 %v5781
    %7048 = vmatpush1.bf16.msra.mxu0 %v5780
    %7049 = vmatprep.subr.bf16.mxu0 %v5797
    %7050 = vmatpush1.bf16.msra.mxu0 %v5796
    %7051 = vmatprep.subr.bf16.mxu0 %v5813
    %7052 = vmatpush1.bf16.msra.mxu0 %v5812
    %7053 = vmatprep.subr.bf16.mxu0 %v5829
    %7054 = vmatpush1.bf16.msra.mxu0 %v5828
    %7055 = vmatprep.subr.bf16.mxu0 %v5845
    %7056 = vmatpush1.bf16.msra.mxu0 %v5844
    %7057 = vmatprep.subr.bf16.mxu0 %v5861
    %7058 = vmatpush1.bf16.msra.mxu0 %v5860
    %7059 = vmatprep.subr.bf16.mxu0 %v5877
    %7060 = vmatpush1.bf16.msra.mxu0 %v5876
    %7061 = vmatprep.subr.bf16.mxu0 %v5893
    %7062 = vmatpush1.bf16.msra.mxu0 %v5892
    %7063 = vmatprep.subr.bf16.mxu0 %v5909
    %7064 = vmatpush1.bf16.msra.mxu0 %v5908
    %7065 = vmatprep.subr.bf16.mxu0 %v5925
    %7066 = vmatpush1.bf16.msra.mxu0 %v5924
    %7067 = vmatprep.subr.bf16.mxu0 %v5941
    %7068 = vmatpush1.bf16.msra.mxu0 %v5940
    %7069 = vmatprep.subr.bf16.mxu0 %v5957
    %7070 = vmatpush1.bf16.msra.mxu0 %v5956
    %7071 = vmatprep.mubr.bf16.mxu0 %v2301
    %7072 = vmatmul.mubr.bf16.gmra.mrb[0].mxu0 %v2300
    %v7073 = vpop.f32.mrb[0].mxu0
    %v7074 = vadd.f32 %v7031, %v7073
    %v7075 = vpop.f32.mrb[0].mxu0
    %v7076 = vadd.f32 %v7033, %v7075
    %v7077 = vpop.f32.mrb[0].mxu0
    %v7078 = vadd.f32 %v7035, %v7077
    %v7079 = vpop.f32.mrb[0].mxu0
    %v7080 = vadd.f32 %v7037, %v7079
    %7081 = vdwg.mxu0
    %7082 = vmatprep.subr.bf16.mxu0 %v5973
    %7083 = vmatpush1.bf16.msra.mxu0 %v5972
    %7084 = vmatprep.subr.bf16.mxu0 %v5989
    %7085 = vmatpush1.bf16.msra.mxu0 %v5988
    %7086 = vmatprep.subr.bf16.mxu0 %v6005
    %7087 = vmatpush1.bf16.msra.mxu0 %v6004
    %7088 = vmatprep.subr.bf16.mxu0 %v6021
    %7089 = vmatpush1.bf16.msra.mxu0 %v6020
    %7090 = vmatprep.subr.bf16.mxu0 %v6037
    %7091 = vmatpush1.bf16.msra.mxu0 %v6036
    %7092 = vmatprep.subr.bf16.mxu0 %v6053
    %7093 = vmatpush1.bf16.msra.mxu0 %v6052
    %7094 = vmatprep.subr.bf16.mxu0 %v6069
    %7095 = vmatpush1.bf16.msra.mxu0 %v6068
    %7096 = vmatprep.subr.bf16.mxu0 %v6085
    %7097 = vmatpush1.bf16.msra.mxu0 %v6084
    %7098 = vmatprep.subr.bf16.mxu0 %v6101
    %7099 = vmatpush1.bf16.msra.mxu0 %v6100
    %7100 = vmatprep.subr.bf16.mxu0 %v6117
    %7101 = vmatpush1.bf16.msra.mxu0 %v6116
    %7102 = vmatprep.subr.bf16.mxu0 %v6133
    %7103 = vmatpush1.bf16.msra.mxu0 %v6132
    %7104 = vmatprep.subr.bf16.mxu0 %v6149
    %7105 = vmatpush1.bf16.msra.mxu0 %v6148
    %7106 = vmatprep.subr.bf16.mxu0 %v6165
    %7107 = vmatpush1.bf16.msra.mxu0 %v6164
    %7108 = vmatprep.subr.bf16.mxu0 %v6181
    %7109 = vmatpush1.bf16.msra.mxu0 %v6180
    %7110 = vmatprep.subr.bf16.mxu0 %v6197
    %7111 = vmatpush1.bf16.msra.mxu0 %v6196
    %7112 = vmatprep.subr.bf16.mxu0 %v6213
    %7113 = vmatpush1.bf16.msra.mxu0 %v6212
    %7114 = vmatprep.mubr.bf16.mxu0 %v2303
    %7115 = vmatmul.mubr.bf16.gmra.mrb[0].mxu0 %v2302
    %v7116 = vpop.f32.mrb[0].mxu0
    %v7117 = vadd.f32 %v7074, %v7116
    %v7118 = vpop.f32.mrb[0].mxu0
    %v7119 = vadd.f32 %v7076, %v7118
    %v7120 = vpop.f32.mrb[0].mxu0
    %v7121 = vadd.f32 %v7078, %v7120
    %v7122 = vpop.f32.mrb[0].mxu0
    %v7123 = vadd.f32 %v7080, %v7122
    %7124 = vdwg.mxu0
    %7125 = vmatprep.subr.bf16.mxu0 %v5463
    %7126 = vmatpush1.bf16.msra.mxu0 %v5462
    %7127 = vmatprep.subr.bf16.mxu0 %v5479
    %7128 = vmatpush1.bf16.msra.mxu0 %v5478
    %7129 = vmatprep.subr.bf16.mxu0 %v5495
    %7130 = vmatpush1.bf16.msra.mxu0 %v5494
    %7131 = vmatprep.subr.bf16.mxu0 %v5511
    %7132 = vmatpush1.bf16.msra.mxu0 %v5510
    %7133 = vmatprep.subr.bf16.mxu0 %v5527
    %7134 = vmatpush1.bf16.msra.mxu0 %v5526
    %7135 = vmatprep.subr.bf16.mxu0 %v5543
    %7136 = vmatpush1.bf16.msra.mxu0 %v5542
    %7137 = vmatprep.subr.bf16.mxu0 %v5559
    %7138 = vmatpush1.bf16.msra.mxu0 %v5558
    %7139 = vmatprep.subr.bf16.mxu0 %v5575
    %7140 = vmatpush1.bf16.msra.mxu0 %v5574
    %7141 = vmatprep.subr.bf16.mxu0 %v5591
    %7142 = vmatpush1.bf16.msra.mxu0 %v5590
    %7143 = vmatprep.subr.bf16.mxu0 %v5607
    %7144 = vmatpush1.bf16.msra.mxu0 %v5606
    %7145 = vmatprep.subr.bf16.mxu0 %v5623
    %7146 = vmatpush1.bf16.msra.mxu0 %v5622
    %7147 = vmatprep.subr.bf16.mxu0 %v5639
    %7148 = vmatpush1.bf16.msra.mxu0 %v5638
    %7149 = vmatprep.subr.bf16.mxu0 %v5655
    %7150 = vmatpush1.bf16.msra.mxu0 %v5654
    %7151 = vmatprep.subr.bf16.mxu0 %v5671
    %7152 = vmatpush1.bf16.msra.mxu0 %v5670
    %7153 = vmatprep.subr.bf16.mxu0 %v5687
    %7154 = vmatpush1.bf16.msra.mxu0 %v5686
    %7155 = vmatprep.subr.bf16.mxu0 %v5703
    %7156 = vmatpush1.bf16.msra.mxu0 %v5702
    %7157 = vmatprep.mubr.bf16.mxu0 %v2299
    %7158 = vmatmul.mubr.bf16.gmra.mrb[0].mxu0 %v2298
    %v7159 = vpop.f32.mrb[0].mxu0
    %v7160 = vadd.f32 %v3087, %v7159
    %v7161 = vpop.f32.mrb[0].mxu0
    %v7162 = vadd.f32 %v3091, %v7161
    %v7163 = vpop.f32.mrb[0].mxu0
    %v7164 = vadd.f32 %v3087, %v7163
    %v7165 = vpop.f32.mrb[0].mxu0
    %v7166 = vadd.f32 %v3091, %v7165
    %7167 = vdwg.mxu0
    %7168 = vmatprep.subr.bf16.mxu0 %v5719
    %7169 = vmatpush1.bf16.msra.mxu0 %v5718
    %7170 = vmatprep.subr.bf16.mxu0 %v5735
    %7171 = vmatpush1.bf16.msra.mxu0 %v5734
    %7172 = vmatprep.subr.bf16.mxu0 %v5751
    %7173 = vmatpush1.bf16.msra.mxu0 %v5750
    %7174 = vmatprep.subr.bf16.mxu0 %v5767
    %7175 = vmatpush1.bf16.msra.mxu0 %v5766
    %7176 = vmatprep.subr.bf16.mxu0 %v5783
    %7177 = vmatpush1.bf16.msra.mxu0 %v5782
    %7178 = vmatprep.subr.bf16.mxu0 %v5799
    %7179 = vmatpush1.bf16.msra.mxu0 %v5798
    %7180 = vmatprep.subr.bf16.mxu0 %v5815
    %7181 = vmatpush1.bf16.msra.mxu0 %v5814
    %7182 = vmatprep.subr.bf16.mxu0 %v5831
    %7183 = vmatpush1.bf16.msra.mxu0 %v5830
    %7184 = vmatprep.subr.bf16.mxu0 %v5847
    %7185 = vmatpush1.bf16.msra.mxu0 %v5846
    %7186 = vmatprep.subr.bf16.mxu0 %v5863
    %7187 = vmatpush1.bf16.msra.mxu0 %v5862
    %7188 = vmatprep.subr.bf16.mxu0 %v5879
    %7189 = vmatpush1.bf16.msra.mxu0 %v5878
    %7190 = vmatprep.subr.bf16.mxu0 %v5895
    %7191 = vmatpush1.bf16.msra.mxu0 %v5894
    %7192 = vmatprep.subr.bf16.mxu0 %v5911
    %7193 = vmatpush1.bf16.msra.mxu0 %v5910
    %7194 = vmatprep.subr.bf16.mxu0 %v5927
    %7195 = vmatpush1.bf16.msra.mxu0 %v5926
    %7196 = vmatprep.subr.bf16.mxu0 %v5943
    %7197 = vmatpush1.bf16.msra.mxu0 %v5942
    %7198 = vmatprep.subr.bf16.mxu0 %v5959
    %7199 = vmatpush1.bf16.msra.mxu0 %v5958
    %7200 = vmatprep.mubr.bf16.mxu0 %v2301
    %7201 = vmatmul.mubr.bf16.gmra.mrb[0].mxu0 %v2300
    %v7202 = vpop.f32.mrb[0].mxu0
    %v7203 = vadd.f32 %v7160, %v7202
    %v7204 = vpop.f32.mrb[0].mxu0
    %v7205 = vadd.f32 %v7162, %v7204
    %v7206 = vpop.f32.mrb[0].mxu0
    %v7207 = vadd.f32 %v7164, %v7206
    %v7208 = vpop.f32.mrb[0].mxu0
    %v7209 = vadd.f32 %v7166, %v7208
    %7210 = vdwg.mxu0
    %7211 = vmatprep.subr.bf16.mxu0 %v5975
    %7212 = vmatpush1.bf16.msra.mxu0 %v5974
    %7213 = vmatprep.subr.bf16.mxu0 %v5991
    %7214 = vmatpush1.bf16.msra.mxu0 %v5990
    %7215 = vmatprep.subr.bf16.mxu0 %v6007
    %7216 = vmatpush1.bf16.msra.mxu0 %v6006
    %7217 = vmatprep.subr.bf16.mxu0 %v6023
    %7218 = vmatpush1.bf16.msra.mxu0 %v6022
    %7219 = vmatprep.subr.bf16.mxu0 %v6039
    %7220 = vmatpush1.bf16.msra.mxu0 %v6038
    %7221 = vmatprep.subr.bf16.mxu0 %v6055
    %7222 = vmatpush1.bf16.msra.mxu0 %v6054
    %7223 = vmatprep.subr.bf16.mxu0 %v6071
    %7224 = vmatpush1.bf16.msra.mxu0 %v6070
    %7225 = vmatprep.subr.bf16.mxu0 %v6087
    %7226 = vmatpush1.bf16.msra.mxu0 %v6086
    %7227 = vmatprep.subr.bf16.mxu0 %v6103
    %7228 = vmatpush1.bf16.msra.mxu0 %v6102
    %7229 = vmatprep.subr.bf16.mxu0 %v6119
    %7230 = vmatpush1.bf16.msra.mxu0 %v6118
    %7231 = vmatprep.subr.bf16.mxu0 %v6135
    %7232 = vmatpush1.bf16.msra.mxu0 %v6134
    %7233 = vmatprep.subr.bf16.mxu0 %v6151
    %7234 = vmatpush1.bf16.msra.mxu0 %v6150
    %7235 = vmatprep.subr.bf16.mxu0 %v6167
    %7236 = vmatpush1.bf16.msra.mxu0 %v6166
    %7237 = vmatprep.subr.bf16.mxu0 %v6183
    %7238 = vmatpush1.bf16.msra.mxu0 %v6182
    %7239 = vmatprep.subr.bf16.mxu0 %v6199
    %7240 = vmatpush1.bf16.msra.mxu0 %v6198
    %7241 = vmatprep.subr.bf16.mxu0 %v6215
    %7242 = vmatpush1.bf16.msra.mxu0 %v6214
    %7243 = vmatprep.mubr.bf16.mxu0 %v2303
    %7244 = vmatmul.mubr.bf16.gmra.mrb[0].mxu0 %v2302
    %v7245 = vpop.f32.mrb[0].mxu0
    %v7246 = vadd.f32 %v7203, %v7245
    %v7247 = vpop.f32.mrb[0].mxu0
    %v7248 = vadd.f32 %v7205, %v7247
    %v7249 = vpop.f32.mrb[0].mxu0
    %v7250 = vadd.f32 %v7207, %v7249
    %v7251 = vpop.f32.mrb[0].mxu0
    %v7252 = vadd.f32 %v7209, %v7251
    %7253 = vdwg.mxu0
    %7254 = vmatprep.subr.bf16.mxu0 %v5465
    %7255 = vmatpush1.bf16.msra.mxu0 %v5464
    %7256 = vmatprep.subr.bf16.mxu0 %v5481
    %7257 = vmatpush1.bf16.msra.mxu0 %v5480
    %7258 = vmatprep.subr.bf16.mxu0 %v5497
    %7259 = vmatpush1.bf16.msra.mxu0 %v5496
    %7260 = vmatprep.subr.bf16.mxu0 %v5513
    %7261 = vmatpush1.bf16.msra.mxu0 %v5512
    %7262 = vmatprep.subr.bf16.mxu0 %v5529
    %7263 = vmatpush1.bf16.msra.mxu0 %v5528
    %7264 = vmatprep.subr.bf16.mxu0 %v5545
    %7265 = vmatpush1.bf16.msra.mxu0 %v5544
    %7266 = vmatprep.subr.bf16.mxu0 %v5561
    %7267 = vmatpush1.bf16.msra.mxu0 %v5560
    %7268 = vmatprep.subr.bf16.mxu0 %v5577
    %7269 = vmatpush1.bf16.msra.mxu0 %v5576
    %7270 = vmatprep.subr.bf16.mxu0 %v5593
    %7271 = vmatpush1.bf16.msra.mxu0 %v5592
    %7272 = vmatprep.subr.bf16.mxu0 %v5609
    %7273 = vmatpush1.bf16.msra.mxu0 %v5608
    %7274 = vmatprep.subr.bf16.mxu0 %v5625
    %7275 = vmatpush1.bf16.msra.mxu0 %v5624
    %7276 = vmatprep.subr.bf16.mxu0 %v5641
    %7277 = vmatpush1.bf16.msra.mxu0 %v5640
    %7278 = vmatprep.subr.bf16.mxu0 %v5657
    %7279 = vmatpush1.bf16.msra.mxu0 %v5656
    %7280 = vmatprep.subr.bf16.mxu0 %v5673
    %7281 = vmatpush1.bf16.msra.mxu0 %v5672
    %7282 = vmatprep.subr.bf16.mxu0 %v5689
    %7283 = vmatpush1.bf16.msra.mxu0 %v5688
    %7284 = vmatprep.subr.bf16.mxu0 %v5705
    %7285 = vmatpush1.bf16.msra.mxu0 %v5704
    %7286 = vmatprep.mubr.bf16.mxu0 %v2299
    %7287 = vmatmul.mubr.bf16.gmra.mrb[0].mxu0 %v2298
    %v7288 = vpop.f32.mrb[0].mxu0
    %v7289 = vadd.f32 %v3095, %v7288
    %v7290 = vpop.f32.mrb[0].mxu0
    %v7291 = vadd.f32 %v3099, %v7290
    %v7292 = vpop.f32.mrb[0].mxu0
    %v7293 = vadd.f32 %v3095, %v7292
    %v7294 = vpop.f32.mrb[0].mxu0
    %v7295 = vadd.f32 %v3099, %v7294
    %7296 = vdwg.mxu0
    %7297 = vmatprep.subr.bf16.mxu0 %v5721
    %7298 = vmatpush1.bf16.msra.mxu0 %v5720
    %7299 = vmatprep.subr.bf16.mxu0 %v5737
    %7300 = vmatpush1.bf16.msra.mxu0 %v5736
    %7301 = vmatprep.subr.bf16.mxu0 %v5753
    %7302 = vmatpush1.bf16.msra.mxu0 %v5752
    %7303 = vmatprep.subr.bf16.mxu0 %v5769
    %7304 = vmatpush1.bf16.msra.mxu0 %v5768
    %7305 = vmatprep.subr.bf16.mxu0 %v5785
    %7306 = vmatpush1.bf16.msra.mxu0 %v5784
    %7307 = vmatprep.subr.bf16.mxu0 %v5801
    %7308 = vmatpush1.bf16.msra.mxu0 %v5800
    %7309 = vmatprep.subr.bf16.mxu0 %v5817
    %7310 = vmatpush1.bf16.msra.mxu0 %v5816
    %7311 = vmatprep.subr.bf16.mxu0 %v5833
    %7312 = vmatpush1.bf16.msra.mxu0 %v5832
    %7313 = vmatprep.subr.bf16.mxu0 %v5849
    %7314 = vmatpush1.bf16.msra.mxu0 %v5848
    %7315 = vmatprep.subr.bf16.mxu0 %v5865
    %7316 = vmatpush1.bf16.msra.mxu0 %v5864
    %7317 = vmatprep.subr.bf16.mxu0 %v5881
    %7318 = vmatpush1.bf16.msra.mxu0 %v5880
    %7319 = vmatprep.subr.bf16.mxu0 %v5897
    %7320 = vmatpush1.bf16.msra.mxu0 %v5896
    %7321 = vmatprep.subr.bf16.mxu0 %v5913
    %7322 = vmatpush1.bf16.msra.mxu0 %v5912
    %7323 = vmatprep.subr.bf16.mxu0 %v5929
    %7324 = vmatpush1.bf16.msra.mxu0 %v5928
    %7325 = vmatprep.subr.bf16.mxu0 %v5945
    %7326 = vmatpush1.bf16.msra.mxu0 %v5944
    %7327 = vmatprep.subr.bf16.mxu0 %v5961
    %7328 = vmatpush1.bf16.msra.mxu0 %v5960
    %7329 = vmatprep.mubr.bf16.mxu0 %v2301
    %7330 = vmatmul.mubr.bf16.gmra.mrb[0].mxu0 %v2300
    %v7331 = vpop.f32.mrb[0].mxu0
    %v7332 = vadd.f32 %v7289, %v7331
    %v7333 = vpop.f32.mrb[0].mxu0
    %v7334 = vadd.f32 %v7291, %v7333
    %v7335 = vpop.f32.mrb[0].mxu0
    %v7336 = vadd.f32 %v7293, %v7335
    %v7337 = vpop.f32.mrb[0].mxu0
    %v7338 = vadd.f32 %v7295, %v7337
    %7339 = vdwg.mxu0
    %7340 = vmatprep.subr.bf16.mxu0 %v5977
    %7341 = vmatpush1.bf16.msra.mxu0 %v5976
    %7342 = vmatprep.subr.bf16.mxu0 %v5993
    %7343 = vmatpush1.bf16.msra.mxu0 %v5992
    %7344 = vmatprep.subr.bf16.mxu0 %v6009
    %7345 = vmatpush1.bf16.msra.mxu0 %v6008
    %7346 = vmatprep.subr.bf16.mxu0 %v6025
    %7347 = vmatpush1.bf16.msra.mxu0 %v6024
    %7348 = vmatprep.subr.bf16.mxu0 %v6041
    %7349 = vmatpush1.bf16.msra.mxu0 %v6040
    %7350 = vmatprep.subr.bf16.mxu0 %v6057
    %7351 = vmatpush1.bf16.msra.mxu0 %v6056
    %7352 = vmatprep.subr.bf16.mxu0 %v6073
    %7353 = vmatpush1.bf16.msra.mxu0 %v6072
    %7354 = vmatprep.subr.bf16.mxu0 %v6089
    %7355 = vmatpush1.bf16.msra.mxu0 %v6088
    %7356 = vmatprep.subr.bf16.mxu0 %v6105
    %7357 = vmatpush1.bf16.msra.mxu0 %v6104
    %7358 = vmatprep.subr.bf16.mxu0 %v6121
    %7359 = vmatpush1.bf16.msra.mxu0 %v6120
    %7360 = vmatprep.subr.bf16.mxu0 %v6137
    %7361 = vmatpush1.bf16.msra.mxu0 %v6136
    %7362 = vmatprep.subr.bf16.mxu0 %v6153
    %7363 = vmatpush1.bf16.msra.mxu0 %v6152
    %7364 = vmatprep.subr.bf16.mxu0 %v6169
    %7365 = vmatpush1.bf16.msra.mxu0 %v6168
    %7366 = vmatprep.subr.bf16.mxu0 %v6185
    %7367 = vmatpush1.bf16.msra.mxu0 %v6184
    %7368 = vmatprep.subr.bf16.mxu0 %v6201
    %7369 = vmatpush1.bf16.msra.mxu0 %v6200
    %7370 = vmatprep.subr.bf16.mxu0 %v6217
    %7371 = vmatpush1.bf16.msra.mxu0 %v6216
    %7372 = vmatprep.mubr.bf16.mxu0 %v2303
    %7373 = vmatmul.mubr.bf16.gmra.mrb[0].mxu0 %v2302
    %v7374 = vpop.f32.mrb[0].mxu0
    %v7375 = vadd.f32 %v7332, %v7374
    %v7376 = vpop.f32.mrb[0].mxu0
    %v7377 = vadd.f32 %v7334, %v7376
    %v7378 = vpop.f32.mrb[0].mxu0
    %v7379 = vadd.f32 %v7336, %v7378
    %v7380 = vpop.f32.mrb[0].mxu0
    %v7381 = vadd.f32 %v7338, %v7380
    %7382 = vdwg.mxu0
    %7383 = vmatprep.subr.bf16.mxu0 %v5467
    %7384 = vmatpush1.bf16.msra.mxu0 %v5466
    %7385 = vmatprep.subr.bf16.mxu0 %v5483
    %7386 = vmatpush1.bf16.msra.mxu0 %v5482
    %7387 = vmatprep.subr.bf16.mxu0 %v5499
    %7388 = vmatpush1.bf16.msra.mxu0 %v5498
    %7389 = vmatprep.subr.bf16.mxu0 %v5515
    %7390 = vmatpush1.bf16.msra.mxu0 %v5514
    %7391 = vmatprep.subr.bf16.mxu0 %v5531
    %7392 = vmatpush1.bf16.msra.mxu0 %v5530
    %7393 = vmatprep.subr.bf16.mxu0 %v5547
    %7394 = vmatpush1.bf16.msra.mxu0 %v5546
    %7395 = vmatprep.subr.bf16.mxu0 %v5563
    %7396 = vmatpush1.bf16.msra.mxu0 %v5562
    %7397 = vmatprep.subr.bf16.mxu0 %v5579
    %7398 = vmatpush1.bf16.msra.mxu0 %v5578
    %7399 = vmatprep.subr.bf16.mxu0 %v5595
    %7400 = vmatpush1.bf16.msra.mxu0 %v5594
    %7401 = vmatprep.subr.bf16.mxu0 %v5611
    %7402 = vmatpush1.bf16.msra.mxu0 %v5610
    %7403 = vmatprep.subr.bf16.mxu0 %v5627
    %7404 = vmatpush1.bf16.msra.mxu0 %v5626
    %7405 = vmatprep.subr.bf16.mxu0 %v5643
    %7406 = vmatpush1.bf16.msra.mxu0 %v5642
    %7407 = vmatprep.subr.bf16.mxu0 %v5659
    %7408 = vmatpush1.bf16.msra.mxu0 %v5658
    %7409 = vmatprep.subr.bf16.mxu0 %v5675
    %7410 = vmatpush1.bf16.msra.mxu0 %v5674
    %7411 = vmatprep.subr.bf16.mxu0 %v5691
    %7412 = vmatpush1.bf16.msra.mxu0 %v5690
    %7413 = vmatprep.subr.bf16.mxu0 %v5707
    %7414 = vmatpush1.bf16.msra.mxu0 %v5706
    %7415 = vmatprep.mubr.bf16.mxu0 %v2299
    %7416 = vmatmul.mubr.bf16.gmra.mrb[0].mxu0 %v2298
    %v7417 = vpop.f32.mrb[0].mxu0
    %v7418 = vadd.f32 %v3103, %v7417
    %v7419 = vpop.f32.mrb[0].mxu0
    %v7420 = vadd.f32 %v3107, %v7419
    %v7421 = vpop.f32.mrb[0].mxu0
    %v7422 = vadd.f32 %v3103, %v7421
    %v7423 = vpop.f32.mrb[0].mxu0
    %v7424 = vadd.f32 %v3107, %v7423
    %7425 = vdwg.mxu0
    %7426 = vmatprep.subr.bf16.mxu0 %v5723
    %7427 = vmatpush1.bf16.msra.mxu0 %v5722
    %7428 = vmatprep.subr.bf16.mxu0 %v5739
    %7429 = vmatpush1.bf16.msra.mxu0 %v5738
    %7430 = vmatprep.subr.bf16.mxu0 %v5755
    %7431 = vmatpush1.bf16.msra.mxu0 %v5754
    %7432 = vmatprep.subr.bf16.mxu0 %v5771
    %7433 = vmatpush1.bf16.msra.mxu0 %v5770
    %7434 = vmatprep.subr.bf16.mxu0 %v5787
    %7435 = vmatpush1.bf16.msra.mxu0 %v5786
    %7436 = vmatprep.subr.bf16.mxu0 %v5803
    %7437 = vmatpush1.bf16.msra.mxu0 %v5802
    %7438 = vmatprep.subr.bf16.mxu0 %v5819
    %7439 = vmatpush1.bf16.msra.mxu0 %v5818
    %7440 = vmatprep.subr.bf16.mxu0 %v5835
    %7441 = vmatpush1.bf16.msra.mxu0 %v5834
    %7442 = vmatprep.subr.bf16.mxu0 %v5851
    %7443 = vmatpush1.bf16.msra.mxu0 %v5850
    %7444 = vmatprep.subr.bf16.mxu0 %v5867
    %7445 = vmatpush1.bf16.msra.mxu0 %v5866
    %7446 = vmatprep.subr.bf16.mxu0 %v5883
    %7447 = vmatpush1.bf16.msra.mxu0 %v5882
    %7448 = vmatprep.subr.bf16.mxu0 %v5899
    %7449 = vmatpush1.bf16.msra.mxu0 %v5898
    %7450 = vmatprep.subr.bf16.mxu0 %v5915
    %7451 = vmatpush1.bf16.msra.mxu0 %v5914
    %7452 = vmatprep.subr.bf16.mxu0 %v5931
    %7453 = vmatpush1.bf16.msra.mxu0 %v5930
    %7454 = vmatprep.subr.bf16.mxu0 %v5947
    %7455 = vmatpush1.bf16.msra.mxu0 %v5946
    %7456 = vmatprep.subr.bf16.mxu0 %v5963
    %7457 = vmatpush1.bf16.msra.mxu0 %v5962
    %7458 = vmatprep.mubr.bf16.mxu0 %v2301
    %7459 = vmatmul.mubr.bf16.gmra.mrb[0].mxu0 %v2300
    %v7460 = vpop.f32.mrb[0].mxu0
    %v7461 = vadd.f32 %v7418, %v7460
    %v7462 = vpop.f32.mrb[0].mxu0
    %v7463 = vadd.f32 %v7420, %v7462
    %v7464 = vpop.f32.mrb[0].mxu0
    %v7465 = vadd.f32 %v7422, %v7464
    %v7466 = vpop.f32.mrb[0].mxu0
    %v7467 = vadd.f32 %v7424, %v7466
    %7468 = vdwg.mxu0
    %7469 = vmatprep.subr.bf16.mxu0 %v5979
    %7470 = vmatpush1.bf16.msra.mxu0 %v5978
    %7471 = vmatprep.subr.bf16.mxu0 %v5995
    %7472 = vmatpush1.bf16.msra.mxu0 %v5994
    %7473 = vmatprep.subr.bf16.mxu0 %v6011
    %7474 = vmatpush1.bf16.msra.mxu0 %v6010
    %7475 = vmatprep.subr.bf16.mxu0 %v6027
    %7476 = vmatpush1.bf16.msra.mxu0 %v6026
    %7477 = vmatprep.subr.bf16.mxu0 %v6043
    %7478 = vmatpush1.bf16.msra.mxu0 %v6042
    %7479 = vmatprep.subr.bf16.mxu0 %v6059
    %7480 = vmatpush1.bf16.msra.mxu0 %v6058
    %7481 = vmatprep.subr.bf16.mxu0 %v6075
    %7482 = vmatpush1.bf16.msra.mxu0 %v6074
    %7483 = vmatprep.subr.bf16.mxu0 %v6091
    %7484 = vmatpush1.bf16.msra.mxu0 %v6090
    %7485 = vmatprep.subr.bf16.mxu0 %v6107
    %7486 = vmatpush1.bf16.msra.mxu0 %v6106
    %7487 = vmatprep.subr.bf16.mxu0 %v6123
    %7488 = vmatpush1.bf16.msra.mxu0 %v6122
    %7489 = vmatprep.subr.bf16.mxu0 %v6139
    %7490 = vmatpush1.bf16.msra.mxu0 %v6138
    %7491 = vmatprep.subr.bf16.mxu0 %v6155
    %7492 = vmatpush1.bf16.msra.mxu0 %v6154
    %7493 = vmatprep.subr.bf16.mxu0 %v6171
    %7494 = vmatpush1.bf16.msra.mxu0 %v6170
    %7495 = vmatprep.subr.bf16.mxu0 %v6187
    %7496 = vmatpush1.bf16.msra.mxu0 %v6186
    %7497 = vmatprep.subr.bf16.mxu0 %v6203
    %7498 = vmatpush1.bf16.msra.mxu0 %v6202
    %7499 = vmatprep.subr.bf16.mxu0 %v6219
    %7500 = vmatpush1.bf16.msra.mxu0 %v6218
    %7501 = vmatprep.mubr.bf16.mxu0 %v2303
    %7502 = vmatmul.mubr.bf16.gmra.mrb[0].mxu0 %v2302
    %v7503 = vpop.f32.mrb[0].mxu0
    %v7504 = vadd.f32 %v7461, %v7503
    %v7505 = vpop.f32.mrb[0].mxu0
    %v7506 = vadd.f32 %v7463, %v7505
    %v7507 = vpop.f32.mrb[0].mxu0
    %v7508 = vadd.f32 %v7465, %v7507
    %v7509 = vpop.f32.mrb[0].mxu0
    %v7510 = vadd.f32 %v7467, %v7509
    %7511 = vdwg.mxu0
    %7512 = vmatprep.subr.bf16.mxu0 %v5469
    %7513 = vmatpush1.bf16.msra.mxu0 %v5468
    %7514 = vmatprep.subr.bf16.mxu0 %v5485
    %7515 = vmatpush1.bf16.msra.mxu0 %v5484
    %7516 = vmatprep.subr.bf16.mxu0 %v5501
    %7517 = vmatpush1.bf16.msra.mxu0 %v5500
    %7518 = vmatprep.subr.bf16.mxu0 %v5517
    %7519 = vmatpush1.bf16.msra.mxu0 %v5516
    %7520 = vmatprep.subr.bf16.mxu0 %v5533
    %7521 = vmatpush1.bf16.msra.mxu0 %v5532
    %7522 = vmatprep.subr.bf16.mxu0 %v5549
    %7523 = vmatpush1.bf16.msra.mxu0 %v5548
    %7524 = vmatprep.subr.bf16.mxu0 %v5565
    %7525 = vmatpush1.bf16.msra.mxu0 %v5564
    %7526 = vmatprep.subr.bf16.mxu0 %v5581
    %7527 = vmatpush1.bf16.msra.mxu0 %v5580
    %7528 = vmatprep.subr.bf16.mxu0 %v5597
    %7529 = vmatpush1.bf16.msra.mxu0 %v5596
    %7530 = vmatprep.subr.bf16.mxu0 %v5613
    %7531 = vmatpush1.bf16.msra.mxu0 %v5612
    %7532 = vmatprep.subr.bf16.mxu0 %v5629
    %7533 = vmatpush1.bf16.msra.mxu0 %v5628
    %7534 = vmatprep.subr.bf16.mxu0 %v5645
    %7535 = vmatpush1.bf16.msra.mxu0 %v5644
    %7536 = vmatprep.subr.bf16.mxu0 %v5661
    %7537 = vmatpush1.bf16.msra.mxu0 %v5660
    %7538 = vmatprep.subr.bf16.mxu0 %v5677
    %7539 = vmatpush1.bf16.msra.mxu0 %v5676
    %7540 = vmatprep.subr.bf16.mxu0 %v5693
    %7541 = vmatpush1.bf16.msra.mxu0 %v5692
    %7542 = vmatprep.subr.bf16.mxu0 %v5709
    %7543 = vmatpush1.bf16.msra.mxu0 %v5708
    %7544 = vmatprep.mubr.bf16.mxu0 %v2299
    %7545 = vmatmul.mubr.bf16.gmra.mrb[0].mxu0 %v2298
    %v7546 = vpop.f32.mrb[0].mxu0
    %v7547 = vadd.f32 %v3111, %v7546
    %v7548 = vpop.f32.mrb[0].mxu0
    %v7549 = vadd.f32 %v3115, %v7548
    %v7550 = vpop.f32.mrb[0].mxu0
    %v7551 = vadd.f32 %v3111, %v7550
    %v7552 = vpop.f32.mrb[0].mxu0
    %v7553 = vadd.f32 %v3115, %v7552
    %7554 = vdwg.mxu0
    %7555 = vmatprep.subr.bf16.mxu0 %v5725
    %7556 = vmatpush1.bf16.msra.mxu0 %v5724
    %7557 = vmatprep.subr.bf16.mxu0 %v5741
    %7558 = vmatpush1.bf16.msra.mxu0 %v5740
    %7559 = vmatprep.subr.bf16.mxu0 %v5757
    %7560 = vmatpush1.bf16.msra.mxu0 %v5756
    %7561 = vmatprep.subr.bf16.mxu0 %v5773
    %7562 = vmatpush1.bf16.msra.mxu0 %v5772
    %7563 = vmatprep.subr.bf16.mxu0 %v5789
    %7564 = vmatpush1.bf16.msra.mxu0 %v5788
    %7565 = vmatprep.subr.bf16.mxu0 %v5805
    %7566 = vmatpush1.bf16.msra.mxu0 %v5804
    %7567 = vmatprep.subr.bf16.mxu0 %v5821
    %7568 = vmatpush1.bf16.msra.mxu0 %v5820
    %7569 = vmatprep.subr.bf16.mxu0 %v5837
    %7570 = vmatpush1.bf16.msra.mxu0 %v5836
    %7571 = vmatprep.subr.bf16.mxu0 %v5853
    %7572 = vmatpush1.bf16.msra.mxu0 %v5852
    %7573 = vmatprep.subr.bf16.mxu0 %v5869
    %7574 = vmatpush1.bf16.msra.mxu0 %v5868
    %7575 = vmatprep.subr.bf16.mxu0 %v5885
    %7576 = vmatpush1.bf16.msra.mxu0 %v5884
    %7577 = vmatprep.subr.bf16.mxu0 %v5901
    %7578 = vmatpush1.bf16.msra.mxu0 %v5900
    %7579 = vmatprep.subr.bf16.mxu0 %v5917
    %7580 = vmatpush1.bf16.msra.mxu0 %v5916
    %7581 = vmatprep.subr.bf16.mxu0 %v5933
    %7582 = vmatpush1.bf16.msra.mxu0 %v5932
    %7583 = vmatprep.subr.bf16.mxu0 %v5949
    %7584 = vmatpush1.bf16.msra.mxu0 %v5948
    %7585 = vmatprep.subr.bf16.mxu0 %v5965
    %7586 = vmatpush1.bf16.msra.mxu0 %v5964
    %7587 = vmatprep.mubr.bf16.mxu0 %v2301
    %7588 = vmatmul.mubr.bf16.gmra.mrb[0].mxu0 %v2300
    %v7589 = vpop.f32.mrb[0].mxu0
    %v7590 = vadd.f32 %v7547, %v7589
    %v7591 = vpop.f32.mrb[0].mxu0
    %v7592 = vadd.f32 %v7549, %v7591
    %v7593 = vpop.f32.mrb[0].mxu0
    %v7594 = vadd.f32 %v7551, %v7593
    %v7595 = vpop.f32.mrb[0].mxu0
    %v7596 = vadd.f32 %v7553, %v7595
    %7597 = vdwg.mxu0
    %7598 = vmatprep.subr.bf16.mxu0 %v5981
    %7599 = vmatpush1.bf16.msra.mxu0 %v5980
    %7600 = vmatprep.subr.bf16.mxu0 %v5997
    %7601 = vmatpush1.bf16.msra.mxu0 %v5996
    %7602 = vmatprep.subr.bf16.mxu0 %v6013
    %7603 = vmatpush1.bf16.msra.mxu0 %v6012
    %7604 = vmatprep.subr.bf16.mxu0 %v6029
    %7605 = vmatpush1.bf16.msra.mxu0 %v6028
    %7606 = vmatprep.subr.bf16.mxu0 %v6045
    %7607 = vmatpush1.bf16.msra.mxu0 %v6044
    %7608 = vmatprep.subr.bf16.mxu0 %v6061
    %7609 = vmatpush1.bf16.msra.mxu0 %v6060
    %7610 = vmatprep.subr.bf16.mxu0 %v6077
    %7611 = vmatpush1.bf16.msra.mxu0 %v6076
    %7612 = vmatprep.subr.bf16.mxu0 %v6093
    %7613 = vmatpush1.bf16.msra.mxu0 %v6092
    %7614 = vmatprep.subr.bf16.mxu0 %v6109
    %7615 = vmatpush1.bf16.msra.mxu0 %v6108
    %7616 = vmatprep.subr.bf16.mxu0 %v6125
    %7617 = vmatpush1.bf16.msra.mxu0 %v6124
    %7618 = vmatprep.subr.bf16.mxu0 %v6141
    %7619 = vmatpush1.bf16.msra.mxu0 %v6140
    %7620 = vmatprep.subr.bf16.mxu0 %v6157
    %7621 = vmatpush1.bf16.msra.mxu0 %v6156
    %7622 = vmatprep.subr.bf16.mxu0 %v6173
    %7623 = vmatpush1.bf16.msra.mxu0 %v6172
    %7624 = vmatprep.subr.bf16.mxu0 %v6189
    %7625 = vmatpush1.bf16.msra.mxu0 %v6188
    %7626 = vmatprep.subr.bf16.mxu0 %v6205
    %7627 = vmatpush1.bf16.msra.mxu0 %v6204
    %7628 = vmatprep.subr.bf16.mxu0 %v6221
    %7629 = vmatpush1.bf16.msra.mxu0 %v6220
    %7630 = vmatprep.mubr.bf16.mxu0 %v2303
    %7631 = vmatmul.mubr.bf16.gmra.mrb[0].mxu0 %v2302
    %v7632 = vpop.f32.mrb[0].mxu0
    %v7633 = vadd.f32 %v7590, %v7632
    %v7634 = vpop.f32.mrb[0].mxu0
    %v7635 = vadd.f32 %v7592, %v7634
    %v7636 = vpop.f32.mrb[0].mxu0
    %v7637 = vadd.f32 %v7594, %v7636
    %v7638 = vpop.f32.mrb[0].mxu0
    %v7639 = vadd.f32 %v7596, %v7638
    %7640 = vdwg.mxu0
    %7641 = vmatprep.subr.bf16.mxu0 %v5471
    %7642 = vmatpush1.bf16.msra.mxu0 %v5470
    %7643 = vmatprep.subr.bf16.mxu0 %v5487
    %7644 = vmatpush1.bf16.msra.mxu0 %v5486
    %7645 = vmatprep.subr.bf16.mxu0 %v5503
    %7646 = vmatpush1.bf16.msra.mxu0 %v5502
    %7647 = vmatprep.subr.bf16.mxu0 %v5519
    %7648 = vmatpush1.bf16.msra.mxu0 %v5518
    %7649 = vmatprep.subr.bf16.mxu0 %v5535
    %7650 = vmatpush1.bf16.msra.mxu0 %v5534
    %7651 = vmatprep.subr.bf16.mxu0 %v5551
    %7652 = vmatpush1.bf16.msra.mxu0 %v5550
    %7653 = vmatprep.subr.bf16.mxu0 %v5567
    %7654 = vmatpush1.bf16.msra.mxu0 %v5566
    %7655 = vmatprep.subr.bf16.mxu0 %v5583
    %7656 = vmatpush1.bf16.msra.mxu0 %v5582
    %7657 = vmatprep.subr.bf16.mxu0 %v5599
    %7658 = vmatpush1.bf16.msra.mxu0 %v5598
    %7659 = vmatprep.subr.bf16.mxu0 %v5615
    %7660 = vmatpush1.bf16.msra.mxu0 %v5614
    %7661 = vmatprep.subr.bf16.mxu0 %v5631
    %7662 = vmatpush1.bf16.msra.mxu0 %v5630
    %7663 = vmatprep.subr.bf16.mxu0 %v5647
    %7664 = vmatpush1.bf16.msra.mxu0 %v5646
    %7665 = vmatprep.subr.bf16.mxu0 %v5663
    %7666 = vmatpush1.bf16.msra.mxu0 %v5662
    %7667 = vmatprep.subr.bf16.mxu0 %v5679
    %7668 = vmatpush1.bf16.msra.mxu0 %v5678
    %7669 = vmatprep.subr.bf16.mxu0 %v5695
    %7670 = vmatpush1.bf16.msra.mxu0 %v5694
    %7671 = vmatprep.subr.bf16.mxu0 %v5711
    %7672 = vmatpush1.bf16.msra.mxu0 %v5710
    %7673 = vmatprep.mubr.bf16.mxu0 %v2299
    %7674 = vmatmul.mubr.bf16.gmra.mrb[0].mxu0 %v2298
    %v7675 = vpop.f32.mrb[0].mxu0
    %v7676 = vadd.f32 %v3119, %v7675
    %v7677 = vpop.f32.mrb[0].mxu0
    %v7678 = vadd.f32 %v3123, %v7677
    %v7679 = vpop.f32.mrb[0].mxu0
    %v7680 = vadd.f32 %v3119, %v7679
    %v7681 = vpop.f32.mrb[0].mxu0
    %v7682 = vadd.f32 %v3123, %v7681
    %7683 = vdwg.mxu0
    %7684 = vmatprep.subr.bf16.mxu0 %v5727
    %7685 = vmatpush1.bf16.msra.mxu0 %v5726
    %7686 = vmatprep.subr.bf16.mxu0 %v5743
    %7687 = vmatpush1.bf16.msra.mxu0 %v5742
    %7688 = vmatprep.subr.bf16.mxu0 %v5759
    %7689 = vmatpush1.bf16.msra.mxu0 %v5758
    %7690 = vmatprep.subr.bf16.mxu0 %v5775
    %7691 = vmatpush1.bf16.msra.mxu0 %v5774
    %7692 = vmatprep.subr.bf16.mxu0 %v5791
    %7693 = vmatpush1.bf16.msra.mxu0 %v5790
    %7694 = vmatprep.subr.bf16.mxu0 %v5807
    %7695 = vmatpush1.bf16.msra.mxu0 %v5806
    %7696 = vmatprep.subr.bf16.mxu0 %v5823
    %7697 = vmatpush1.bf16.msra.mxu0 %v5822
    %7698 = vmatprep.subr.bf16.mxu0 %v5839
    %7699 = vmatpush1.bf16.msra.mxu0 %v5838
    %7700 = vmatprep.subr.bf16.mxu0 %v5855
    %7701 = vmatpush1.bf16.msra.mxu0 %v5854
    %7702 = vmatprep.subr.bf16.mxu0 %v5871
    %7703 = vmatpush1.bf16.msra.mxu0 %v5870
    %7704 = vmatprep.subr.bf16.mxu0 %v5887
    %7705 = vmatpush1.bf16.msra.mxu0 %v5886
    %7706 = vmatprep.subr.bf16.mxu0 %v5903
    %7707 = vmatpush1.bf16.msra.mxu0 %v5902
    %7708 = vmatprep.subr.bf16.mxu0 %v5919
    %7709 = vmatpush1.bf16.msra.mxu0 %v5918
    %7710 = vmatprep.subr.bf16.mxu0 %v5935
    %7711 = vmatpush1.bf16.msra.mxu0 %v5934
    %7712 = vmatprep.subr.bf16.mxu0 %v5951
    %7713 = vmatpush1.bf16.msra.mxu0 %v5950
    %7714 = vmatprep.subr.bf16.mxu0 %v5967
    %7715 = vmatpush1.bf16.msra.mxu0 %v5966
    %7716 = vmatprep.mubr.bf16.mxu0 %v2301
    %7717 = vmatmul.mubr.bf16.gmra.mrb[0].mxu0 %v2300
    %v7718 = vpop.f32.mrb[0].mxu0
    %v7719 = vadd.f32 %v7676, %v7718
    %v7720 = vpop.f32.mrb[0].mxu0
    %v7721 = vadd.f32 %v7678, %v7720
    %v7722 = vpop.f32.mrb[0].mxu0
    %v7723 = vadd.f32 %v7680, %v7722
    %v7724 = vpop.f32.mrb[0].mxu0
    %v7725 = vadd.f32 %v7682, %v7724
    %7726 = vdwg.mxu0
    %7727 = vmatprep.subr.bf16.mxu0 %v5983
    %7728 = vmatpush1.bf16.msra.mxu0 %v5982
    %7729 = vmatprep.subr.bf16.mxu0 %v5999
    %7730 = vmatpush1.bf16.msra.mxu0 %v5998
    %7731 = vmatprep.subr.bf16.mxu0 %v6015
    %7732 = vmatpush1.bf16.msra.mxu0 %v6014
    %7733 = vmatprep.subr.bf16.mxu0 %v6031
    %7734 = vmatpush1.bf16.msra.mxu0 %v6030
    %7735 = vmatprep.subr.bf16.mxu0 %v6047
    %7736 = vmatpush1.bf16.msra.mxu0 %v6046
    %7737 = vmatprep.subr.bf16.mxu0 %v6063
    %7738 = vmatpush1.bf16.msra.mxu0 %v6062
    %7739 = vmatprep.subr.bf16.mxu0 %v6079
    %7740 = vmatpush1.bf16.msra.mxu0 %v6078
    %7741 = vmatprep.subr.bf16.mxu0 %v6095
    %7742 = vmatpush1.bf16.msra.mxu0 %v6094
    %7743 = vmatprep.subr.bf16.mxu0 %v6111
    %7744 = vmatpush1.bf16.msra.mxu0 %v6110
    %7745 = vmatprep.subr.bf16.mxu0 %v6127
    %7746 = vmatpush1.bf16.msra.mxu0 %v6126
    %7747 = vmatprep.subr.bf16.mxu0 %v6143
    %7748 = vmatpush1.bf16.msra.mxu0 %v6142
    %7749 = vmatprep.subr.bf16.mxu0 %v6159
    %7750 = vmatpush1.bf16.msra.mxu0 %v6158
    %7751 = vmatprep.subr.bf16.mxu0 %v6175
    %7752 = vmatpush1.bf16.msra.mxu0 %v6174
    %7753 = vmatprep.subr.bf16.mxu0 %v6191
    %7754 = vmatpush1.bf16.msra.mxu0 %v6190
    %7755 = vmatprep.subr.bf16.mxu0 %v6207
    %7756 = vmatpush1.bf16.msra.mxu0 %v6206
    %7757 = vmatprep.subr.bf16.mxu0 %v6223
    %7758 = vmatpush1.bf16.msra.mxu0 %v6222
    %7759 = vmatprep.mubr.bf16.mxu0 %v2303
    %7760 = vmatmul.mubr.bf16.gmra.mrb[0].mxu0 %v2302
    %v7761 = vpop.f32.mrb[0].mxu0
    %v7762 = vadd.f32 %v7719, %v7761
    %v7763 = vpop.f32.mrb[0].mxu0
    %v7764 = vadd.f32 %v7721, %v7763
    %v7765 = vpop.f32.mrb[0].mxu0
    %v7766 = vadd.f32 %v7723, %v7765
    %v7767 = vpop.f32.mrb[0].mxu0
    %v7768 = vadd.f32 %v7725, %v7767
    %7769 = vdwg.mxu0
    %7770 = vmatprep.subr.bf16.mxu0 %v5473
    %7771 = vmatpush1.bf16.msra.mxu0 %v5472
    %7772 = vmatprep.subr.bf16.mxu0 %v5489
    %7773 = vmatpush1.bf16.msra.mxu0 %v5488
    %7774 = vmatprep.subr.bf16.mxu0 %v5505
    %7775 = vmatpush1.bf16.msra.mxu0 %v5504
    %7776 = vmatprep.subr.bf16.mxu0 %v5521
    %7777 = vmatpush1.bf16.msra.mxu0 %v5520
    %7778 = vmatprep.subr.bf16.mxu0 %v5537
    %7779 = vmatpush1.bf16.msra.mxu0 %v5536
    %7780 = vmatprep.subr.bf16.mxu0 %v5553
    %7781 = vmatpush1.bf16.msra.mxu0 %v5552
    %7782 = vmatprep.subr.bf16.mxu0 %v5569
    %7783 = vmatpush1.bf16.msra.mxu0 %v5568
    %7784 = vmatprep.subr.bf16.mxu0 %v5585
    %7785 = vmatpush1.bf16.msra.mxu0 %v5584
    %7786 = vmatprep.subr.bf16.mxu0 %v5601
    %7787 = vmatpush1.bf16.msra.mxu0 %v5600
    %7788 = vmatprep.subr.bf16.mxu0 %v5617
    %7789 = vmatpush1.bf16.msra.mxu0 %v5616
    %7790 = vmatprep.subr.bf16.mxu0 %v5633
    %7791 = vmatpush1.bf16.msra.mxu0 %v5632
    %7792 = vmatprep.subr.bf16.mxu0 %v5649
    %7793 = vmatpush1.bf16.msra.mxu0 %v5648
    %7794 = vmatprep.subr.bf16.mxu0 %v5665
    %7795 = vmatpush1.bf16.msra.mxu0 %v5664
    %7796 = vmatprep.subr.bf16.mxu0 %v5681
    %7797 = vmatpush1.bf16.msra.mxu0 %v5680
    %7798 = vmatprep.subr.bf16.mxu0 %v5697
    %7799 = vmatpush1.bf16.msra.mxu0 %v5696
    %7800 = vmatprep.subr.bf16.mxu0 %v5713
    %7801 = vmatpush1.bf16.msra.mxu0 %v5712
    %7802 = vmatprep.mubr.bf16.mxu0 %v2299
    %7803 = vmatmul.mubr.bf16.gmra.mrb[0].mxu0 %v2298
    %v7804 = vpop.f32.mrb[0].mxu0
    %v7805 = vadd.f32 %v3127, %v7804
    %v7806 = vpop.f32.mrb[0].mxu0
    %v7807 = vadd.f32 %v3131, %v7806
    %v7808 = vpop.f32.mrb[0].mxu0
    %v7809 = vadd.f32 %v3127, %v7808
    %v7810 = vpop.f32.mrb[0].mxu0
    %v7811 = vadd.f32 %v3131, %v7810
    %7812 = vdwg.mxu0
    %7813 = vmatprep.subr.bf16.mxu0 %v5729
    %7814 = vmatpush1.bf16.msra.mxu0 %v5728
    %7815 = vmatprep.subr.bf16.mxu0 %v5745
    %7816 = vmatpush1.bf16.msra.mxu0 %v5744
    %7817 = vmatprep.subr.bf16.mxu0 %v5761
    %7818 = vmatpush1.bf16.msra.mxu0 %v5760
    %7819 = vmatprep.subr.bf16.mxu0 %v5777
    %7820 = vmatpush1.bf16.msra.mxu0 %v5776
    %7821 = vmatprep.subr.bf16.mxu0 %v5793
    %7822 = vmatpush1.bf16.msra.mxu0 %v5792
    %7823 = vmatprep.subr.bf16.mxu0 %v5809
    %7824 = vmatpush1.bf16.msra.mxu0 %v5808
    %7825 = vmatprep.subr.bf16.mxu0 %v5825
    %7826 = vmatpush1.bf16.msra.mxu0 %v5824
    %7827 = vmatprep.subr.bf16.mxu0 %v5841
    %7828 = vmatpush1.bf16.msra.mxu0 %v5840
    %7829 = vmatprep.subr.bf16.mxu0 %v5857
    %7830 = vmatpush1.bf16.msra.mxu0 %v5856
    %7831 = vmatprep.subr.bf16.mxu0 %v5873
    %7832 = vmatpush1.bf16.msra.mxu0 %v5872
    %7833 = vmatprep.subr.bf16.mxu0 %v5889
    %7834 = vmatpush1.bf16.msra.mxu0 %v5888
    %7835 = vmatprep.subr.bf16.mxu0 %v5905
    %7836 = vmatpush1.bf16.msra.mxu0 %v5904
    %7837 = vmatprep.subr.bf16.mxu0 %v5921
    %7838 = vmatpush1.bf16.msra.mxu0 %v5920
    %7839 = vmatprep.subr.bf16.mxu0 %v5937
    %7840 = vmatpush1.bf16.msra.mxu0 %v5936
    %7841 = vmatprep.subr.bf16.mxu0 %v5953
    %7842 = vmatpush1.bf16.msra.mxu0 %v5952
    %7843 = vmatprep.subr.bf16.mxu0 %v5969
    %7844 = vmatpush1.bf16.msra.mxu0 %v5968
    %7845 = vmatprep.mubr.bf16.mxu0 %v2301
    %7846 = vmatmul.mubr.bf16.gmra.mrb[0].mxu0 %v2300
    %v7847 = vpop.f32.mrb[0].mxu0
    %v7848 = vadd.f32 %v7805, %v7847
    %v7849 = vpop.f32.mrb[0].mxu0
    %v7850 = vadd.f32 %v7807, %v7849
    %v7851 = vpop.f32.mrb[0].mxu0
    %v7852 = vadd.f32 %v7809, %v7851
    %v7853 = vpop.f32.mrb[0].mxu0
    %v7854 = vadd.f32 %v7811, %v7853
    %7855 = vdwg.mxu0
    %7856 = vmatprep.subr.bf16.mxu0 %v5985
    %7857 = vmatpush1.bf16.msra.mxu0 %v5984
    %7858 = vmatprep.subr.bf16.mxu0 %v6001
    %7859 = vmatpush1.bf16.msra.mxu0 %v6000
    %7860 = vmatprep.subr.bf16.mxu0 %v6017
    %7861 = vmatpush1.bf16.msra.mxu0 %v6016
    %7862 = vmatprep.subr.bf16.mxu0 %v6033
    %7863 = vmatpush1.bf16.msra.mxu0 %v6032
    %7864 = vmatprep.subr.bf16.mxu0 %v6049
    %7865 = vmatpush1.bf16.msra.mxu0 %v6048
    %7866 = vmatprep.subr.bf16.mxu0 %v6065
    %7867 = vmatpush1.bf16.msra.mxu0 %v6064
    %7868 = vmatprep.subr.bf16.mxu0 %v6081
    %7869 = vmatpush1.bf16.msra.mxu0 %v6080
    %7870 = vmatprep.subr.bf16.mxu0 %v6097
    %7871 = vmatpush1.bf16.msra.mxu0 %v6096
    %7872 = vmatprep.subr.bf16.mxu0 %v6113
    %7873 = vmatpush1.bf16.msra.mxu0 %v6112
    %7874 = vmatprep.subr.bf16.mxu0 %v6129
    %7875 = vmatpush1.bf16.msra.mxu0 %v6128
    %7876 = vmatprep.subr.bf16.mxu0 %v6145
    %7877 = vmatpush1.bf16.msra.mxu0 %v6144
    %7878 = vmatprep.subr.bf16.mxu0 %v6161
    %7879 = vmatpush1.bf16.msra.mxu0 %v6160
    %7880 = vmatprep.subr.bf16.mxu0 %v6177
    %7881 = vmatpush1.bf16.msra.mxu0 %v6176
    %7882 = vmatprep.subr.bf16.mxu0 %v6193
    %7883 = vmatpush1.bf16.msra.mxu0 %v6192
    %7884 = vmatprep.subr.bf16.mxu0 %v6209
    %7885 = vmatpush1.bf16.msra.mxu0 %v6208
    %7886 = vmatprep.subr.bf16.mxu0 %v6225
    %7887 = vmatpush1.bf16.msra.mxu0 %v6224
    %7888 = vmatprep.mubr.bf16.mxu0 %v2303
    %7889 = vmatmul.mubr.bf16.gmra.mrb[0].mxu0 %v2302
    %v7890 = vpop.f32.mrb[0].mxu0
    %v7891 = vadd.f32 %v7848, %v7890
    %v7892 = vpop.f32.mrb[0].mxu0
    %v7893 = vadd.f32 %v7850, %v7892
    %v7894 = vpop.f32.mrb[0].mxu0
    %v7895 = vadd.f32 %v7852, %v7894
    %v7896 = vpop.f32.mrb[0].mxu0
    %v7897 = vadd.f32 %v7854, %v7896
    %7898 = vdwg.mxu0
    %7899 = vmatprep.subr.bf16.mxu0 %v5475
    %7900 = vmatpush1.bf16.msra.mxu0 %v5474
    %7901 = vmatprep.subr.bf16.mxu0 %v5491
    %7902 = vmatpush1.bf16.msra.mxu0 %v5490
    %7903 = vmatprep.subr.bf16.mxu0 %v5507
    %7904 = vmatpush1.bf16.msra.mxu0 %v5506
    %7905 = vmatprep.subr.bf16.mxu0 %v5523
    %7906 = vmatpush1.bf16.msra.mxu0 %v5522
    %7907 = vmatprep.subr.bf16.mxu0 %v5539
    %7908 = vmatpush1.bf16.msra.mxu0 %v5538
    %7909 = vmatprep.subr.bf16.mxu0 %v5555
    %7910 = vmatpush1.bf16.msra.mxu0 %v5554
    %7911 = vmatprep.subr.bf16.mxu0 %v5571
    %7912 = vmatpush1.bf16.msra.mxu0 %v5570
    %7913 = vmatprep.subr.bf16.mxu0 %v5587
    %7914 = vmatpush1.bf16.msra.mxu0 %v5586
    %7915 = vmatprep.subr.bf16.mxu0 %v5603
    %7916 = vmatpush1.bf16.msra.mxu0 %v5602
    %7917 = vmatprep.subr.bf16.mxu0 %v5619
    %7918 = vmatpush1.bf16.msra.mxu0 %v5618
    %7919 = vmatprep.subr.bf16.mxu0 %v5635
    %7920 = vmatpush1.bf16.msra.mxu0 %v5634
    %7921 = vmatprep.subr.bf16.mxu0 %v5651
    %7922 = vmatpush1.bf16.msra.mxu0 %v5650
    %7923 = vmatprep.subr.bf16.mxu0 %v5667
    %7924 = vmatpush1.bf16.msra.mxu0 %v5666
    %7925 = vmatprep.subr.bf16.mxu0 %v5683
    %7926 = vmatpush1.bf16.msra.mxu0 %v5682
    %7927 = vmatprep.subr.bf16.mxu0 %v5699
    %7928 = vmatpush1.bf16.msra.mxu0 %v5698
    %7929 = vmatprep.subr.bf16.mxu0 %v5715
    %7930 = vmatpush1.bf16.msra.mxu0 %v5714
    %7931 = vmatprep.mubr.bf16.mxu0 %v2299
    %7932 = vmatmul.mubr.bf16.gmra.mrb[0].mxu0 %v2298
    %v7933 = vpop.f32.mrb[0].mxu0
    %v7934 = vadd.f32 %v3135, %v7933
    %v7935 = vpop.f32.mrb[0].mxu0
    %v7936 = vadd.f32 %v3139, %v7935
    %v7937 = vpop.f32.mrb[0].mxu0
    %v7938 = vadd.f32 %v3135, %v7937
    %v7939 = vpop.f32.mrb[0].mxu0
    %v7940 = vadd.f32 %v3139, %v7939
    %7941 = vdwg.mxu0
    %7942 = vmatprep.subr.bf16.mxu0 %v5731
    %7943 = vmatpush1.bf16.msra.mxu0 %v5730
    %7944 = vmatprep.subr.bf16.mxu0 %v5747
    %7945 = vmatpush1.bf16.msra.mxu0 %v5746
    %7946 = vmatprep.subr.bf16.mxu0 %v5763
    %7947 = vmatpush1.bf16.msra.mxu0 %v5762
    %7948 = vmatprep.subr.bf16.mxu0 %v5779
    %7949 = vmatpush1.bf16.msra.mxu0 %v5778
    %7950 = vmatprep.subr.bf16.mxu0 %v5795
    %7951 = vmatpush1.bf16.msra.mxu0 %v5794
    %7952 = vmatprep.subr.bf16.mxu0 %v5811
    %7953 = vmatpush1.bf16.msra.mxu0 %v5810
    %7954 = vmatprep.subr.bf16.mxu0 %v5827
    %7955 = vmatpush1.bf16.msra.mxu0 %v5826
    %7956 = vmatprep.subr.bf16.mxu0 %v5843
    %7957 = vmatpush1.bf16.msra.mxu0 %v5842
    %7958 = vmatprep.subr.bf16.mxu0 %v5859
    %7959 = vmatpush1.bf16.msra.mxu0 %v5858
    %7960 = vmatprep.subr.bf16.mxu0 %v5875
    %7961 = vmatpush1.bf16.msra.mxu0 %v5874
    %7962 = vmatprep.subr.bf16.mxu0 %v5891
    %7963 = vmatpush1.bf16.msra.mxu0 %v5890
    %7964 = vmatprep.subr.bf16.mxu0 %v5907
    %7965 = vmatpush1.bf16.msra.mxu0 %v5906
    %7966 = vmatprep.subr.bf16.mxu0 %v5923
    %7967 = vmatpush1.bf16.msra.mxu0 %v5922
    %7968 = vmatprep.subr.bf16.mxu0 %v5939
    %7969 = vmatpush1.bf16.msra.mxu0 %v5938
    %7970 = vmatprep.subr.bf16.mxu0 %v5955
    %7971 = vmatpush1.bf16.msra.mxu0 %v5954
    %7972 = vmatprep.subr.bf16.mxu0 %v5971
    %7973 = vmatpush1.bf16.msra.mxu0 %v5970
    %7974 = vmatprep.mubr.bf16.mxu0 %v2301
    %7975 = vmatmul.mubr.bf16.gmra.mrb[0].mxu0 %v2300
    %v7976 = vpop.f32.mrb[0].mxu0
    %v7977 = vadd.f32 %v7934, %v7976
    %v7978 = vpop.f32.mrb[0].mxu0
    %v7979 = vadd.f32 %v7936, %v7978
    %v7980 = vpop.f32.mrb[0].mxu0
    %v7981 = vadd.f32 %v7938, %v7980
    %v7982 = vpop.f32.mrb[0].mxu0
    %v7983 = vadd.f32 %v7940, %v7982
    %7984 = vdwg.mxu0
    %7985 = vmatprep.subr.bf16.mxu0 %v5987
    %7986 = vmatpush1.bf16.msra.mxu0 %v5986
    %7987 = vmatprep.subr.bf16.mxu0 %v6003
    %7988 = vmatpush1.bf16.msra.mxu0 %v6002
    %7989 = vmatprep.subr.bf16.mxu0 %v6019
    %7990 = vmatpush1.bf16.msra.mxu0 %v6018
    %7991 = vmatprep.subr.bf16.mxu0 %v6035
    %7992 = vmatpush1.bf16.msra.mxu0 %v6034
    %7993 = vmatprep.subr.bf16.mxu0 %v6051
    %7994 = vmatpush1.bf16.msra.mxu0 %v6050
    %7995 = vmatprep.subr.bf16.mxu0 %v6067
    %7996 = vmatpush1.bf16.msra.mxu0 %v6066
    %7997 = vmatprep.subr.bf16.mxu0 %v6083
    %7998 = vmatpush1.bf16.msra.mxu0 %v6082
    %7999 = vmatprep.subr.bf16.mxu0 %v6099
    %8000 = vmatpush1.bf16.msra.mxu0 %v6098
    %8001 = vmatprep.subr.bf16.mxu0 %v6115
    %8002 = vmatpush1.bf16.msra.mxu0 %v6114
    %8003 = vmatprep.subr.bf16.mxu0 %v6131
    %8004 = vmatpush1.bf16.msra.mxu0 %v6130
    %8005 = vmatprep.subr.bf16.mxu0 %v6147
    %8006 = vmatpush1.bf16.msra.mxu0 %v6146
    %8007 = vmatprep.subr.bf16.mxu0 %v6163
    %8008 = vmatpush1.bf16.msra.mxu0 %v6162
    %8009 = vmatprep.subr.bf16.mxu0 %v6179
    %8010 = vmatpush1.bf16.msra.mxu0 %v6178
    %8011 = vmatprep.subr.bf16.mxu0 %v6195
    %8012 = vmatpush1.bf16.msra.mxu0 %v6194
    %8013 = vmatprep.subr.bf16.mxu0 %v6211
    %8014 = vmatpush1.bf16.msra.mxu0 %v6210
    %8015 = vmatprep.subr.bf16.mxu0 %v6227
    %8016 = vmatpush1.bf16.msra.mxu0 %v6226
    %8017 = vmatprep.mubr.bf16.mxu0 %v2303
    %8018 = vmatmul.mubr.bf16.gmra.mrb[0].mxu0 %v2302
    %v8019 = vpop.f32.mrb[0].mxu0
    %v8020 = vadd.f32 %v7977, %v8019
    %v8021 = vpop.f32.mrb[0].mxu0
    %v8022 = vadd.f32 %v7979, %v8021
    %v8023 = vpop.f32.mrb[0].mxu0
    %v8024 = vadd.f32 %v7981, %v8023
    %v8025 = vpop.f32.mrb[0].mxu0
    %v8026 = vadd.f32 %v7983, %v8025
    %8027 = vdwg.mxu0
    %v8028 = vmul.f32 %v7117, 0.5
    %v8029 = vmul.f32 %v7119, 0.5
    %v8030 = vmul.f32 %v7246, 0.5
    %v8031 = vmul.f32 %v7248, 0.5
    %v8032 = vmul.f32 %v7375, 0.5
    %v8033 = vmul.f32 %v7377, 0.5
    %v8034 = vmul.f32 %v7504, 0.5
    %v8035 = vmul.f32 %v7506, 0.5
    %v8036 = vmul.f32 %v7633, 0.5
    %v8037 = vmul.f32 %v7635, 0.5
    %v8038 = vmul.f32 %v7762, 0.5
    %v8039 = vmul.f32 %v7764, 0.5
    %v8040 = vmul.f32 %v7891, 0.5
    %v8041 = vmul.f32 %v7893, 0.5
    %v8042 = vmul.f32 %v8020, 0.5
    %v8043 = vmul.f32 %v8022, 0.5
    %v8044 = vmul.f32 %v7121, 0.5
    %v8045 = vmul.f32 %v7123, 0.5
    %v8046 = vmul.f32 %v7250, 0.5
    %v8047 = vmul.f32 %v7252, 0.5
    %v8048 = vmul.f32 %v7379, 0.5
    %v8049 = vmul.f32 %v7381, 0.5
    %v8050 = vmul.f32 %v7508, 0.5
    %v8051 = vmul.f32 %v7510, 0.5
    %v8052 = vmul.f32 %v7637, 0.5
    %v8053 = vmul.f32 %v7639, 0.5
    %v8054 = vmul.f32 %v7766, 0.5
    %v8055 = vmul.f32 %v7768, 0.5
    %v8056 = vmul.f32 %v7895, 0.5
    %v8057 = vmul.f32 %v7897, 0.5
    %v8058 = vmul.f32 %v8024, 0.5
    %v8059 = vmul.f32 %v8026, 0.5
    %v8060 = vmul.f32 %v7117, 0.044715
    %v8061 = vmul.f32 %v7119, 0.044715
    %v8062 = vmul.f32 %v7246, 0.044715
    %v8063 = vmul.f32 %v7248, 0.044715
    %v8064 = vmul.f32 %v7375, 0.044715
    %v8065 = vmul.f32 %v7377, 0.044715
    %v8066 = vmul.f32 %v7504, 0.044715
    %v8067 = vmul.f32 %v7506, 0.044715
    %v8068 = vmul.f32 %v7633, 0.044715
    %v8069 = vmul.f32 %v7635, 0.044715
    %v8070 = vmul.f32 %v7762, 0.044715
    %v8071 = vmul.f32 %v7764, 0.044715
    %v8072 = vmul.f32 %v7891, 0.044715
    %v8073 = vmul.f32 %v7893, 0.044715
    %v8074 = vmul.f32 %v8020, 0.044715
    %v8075 = vmul.f32 %v8022, 0.044715
    %v8076 = vmul.f32 %v7121, 0.044715
    %v8077 = vmul.f32 %v7123, 0.044715
    %v8078 = vmul.f32 %v7250, 0.044715
    %v8079 = vmul.f32 %v7252, 0.044715
    %v8080 = vmul.f32 %v7379, 0.044715
    %v8081 = vmul.f32 %v7381, 0.044715
    %v8082 = vmul.f32 %v7508, 0.044715
    %v8083 = vmul.f32 %v7510, 0.044715
    %v8084 = vmul.f32 %v7637, 0.044715
    %v8085 = vmul.f32 %v7639, 0.044715
    %v8086 = vmul.f32 %v7766, 0.044715
    %v8087 = vmul.f32 %v7768, 0.044715
    %v8088 = vmul.f32 %v7895, 0.044715
    %v8089 = vmul.f32 %v7897, 0.044715
    %v8090 = vmul.f32 %v8024, 0.044715
    %v8091 = vmul.f32 %v8026, 0.044715
    %v8092 = vmul.f32 %v8060, %v7117
    %v8093 = vmul.f32 %v8061, %v7119
    %v8094 = vmul.f32 %v8062, %v7246
    %v8095 = vmul.f32 %v8063, %v7248
    %v8096 = vmul.f32 %v8064, %v7375
    %v8097 = vmul.f32 %v8065, %v7377
    %v8098 = vmul.f32 %v8066, %v7504
    %v8099 = vmul.f32 %v8067, %v7506
    %v8100 = vmul.f32 %v8068, %v7633
    %v8101 = vmul.f32 %v8069, %v7635
    %v8102 = vmul.f32 %v8070, %v7762
    %v8103 = vmul.f32 %v8071, %v7764
    %v8104 = vmul.f32 %v8072, %v7891
    %v8105 = vmul.f32 %v8073, %v7893
    %v8106 = vmul.f32 %v8074, %v8020
    %v8107 = vmul.f32 %v8075, %v8022
    %v8108 = vmul.f32 %v8076, %v7121
    %v8109 = vmul.f32 %v8077, %v7123
    %v8110 = vmul.f32 %v8078, %v7250
    %v8111 = vmul.f32 %v8079, %v7252
    %v8112 = vmul.f32 %v8080, %v7379
    %v8113 = vmul.f32 %v8081, %v7381
    %v8114 = vmul.f32 %v8082, %v7508
    %v8115 = vmul.f32 %v8083, %v7510
    %v8116 = vmul.f32 %v8084, %v7637
    %v8117 = vmul.f32 %v8085, %v7639
    %v8118 = vmul.f32 %v8086, %v7766
    %v8119 = vmul.f32 %v8087, %v7768
    %v8120 = vmul.f32 %v8088, %v7895
    %v8121 = vmul.f32 %v8089, %v7897
    %v8122 = vmul.f32 %v8090, %v8024
    %v8123 = vmul.f32 %v8091, %v8026
    %v8124 = vmul.f32 %v8092, %v7117
    %v8125 = vmul.f32 %v8093, %v7119
    %v8126 = vmul.f32 %v8094, %v7246
    %v8127 = vmul.f32 %v8095, %v7248
    %v8128 = vmul.f32 %v8096, %v7375
    %v8129 = vmul.f32 %v8097, %v7377
    %v8130 = vmul.f32 %v8098, %v7504
    %v8131 = vmul.f32 %v8099, %v7506
    %v8132 = vmul.f32 %v8100, %v7633
    %v8133 = vmul.f32 %v8101, %v7635
    %v8134 = vmul.f32 %v8102, %v7762
    %v8135 = vmul.f32 %v8103, %v7764
    %v8136 = vmul.f32 %v8104, %v7891
    %v8137 = vmul.f32 %v8105, %v7893
    %v8138 = vmul.f32 %v8106, %v8020
    %v8139 = vmul.f32 %v8107, %v8022
    %v8140 = vmul.f32 %v8108, %v7121
    %v8141 = vmul.f32 %v8109, %v7123
    %v8142 = vmul.f32 %v8110, %v7250
    %v8143 = vmul.f32 %v8111, %v7252
    %v8144 = vmul.f32 %v8112, %v7379
    %v8145 = vmul.f32 %v8113, %v7381
    %v8146 = vmul.f32 %v8114, %v7508
    %v8147 = vmul.f32 %v8115, %v7510
    %v8148 = vmul.f32 %v8116, %v7637
    %v8149 = vmul.f32 %v8117, %v7639
    %v8150 = vmul.f32 %v8118, %v7766
    %v8151 = vmul.f32 %v8119, %v7768
    %v8152 = vmul.f32 %v8120, %v7895
    %v8153 = vmul.f32 %v8121, %v7897
    %v8154 = vmul.f32 %v8122, %v8024
    %v8155 = vmul.f32 %v8123, %v8026
    %v8156 = vadd.f32 %v7117, %v8124
    %v8157 = vadd.f32 %v7119, %v8125
    %v8158 = vadd.f32 %v7246, %v8126
    %v8159 = vadd.f32 %v7248, %v8127
    %v8160 = vadd.f32 %v7375, %v8128
    %v8161 = vadd.f32 %v7377, %v8129
    %v8162 = vadd.f32 %v7504, %v8130
    %v8163 = vadd.f32 %v7506, %v8131
    %v8164 = vadd.f32 %v7633, %v8132
    %v8165 = vadd.f32 %v7635, %v8133
    %v8166 = vadd.f32 %v7762, %v8134
    %v8167 = vadd.f32 %v7764, %v8135
    %v8168 = vadd.f32 %v7891, %v8136
    %v8169 = vadd.f32 %v7893, %v8137
    %v8170 = vadd.f32 %v8020, %v8138
    %v8171 = vadd.f32 %v8022, %v8139
    %v8172 = vadd.f32 %v7121, %v8140
    %v8173 = vadd.f32 %v7123, %v8141
    %v8174 = vadd.f32 %v7250, %v8142
    %v8175 = vadd.f32 %v7252, %v8143
    %v8176 = vadd.f32 %v7379, %v8144
    %v8177 = vadd.f32 %v7381, %v8145
    %v8178 = vadd.f32 %v7508, %v8146
    %v8179 = vadd.f32 %v7510, %v8147
    %v8180 = vadd.f32 %v7637, %v8148
    %v8181 = vadd.f32 %v7639, %v8149
    %v8182 = vadd.f32 %v7766, %v8150
    %v8183 = vadd.f32 %v7768, %v8151
    %v8184 = vadd.f32 %v7895, %v8152
    %v8185 = vadd.f32 %v7897, %v8153
    %v8186 = vadd.f32 %v8024, %v8154
    %v8187 = vadd.f32 %v8026, %v8155
    %v8188 = vmul.f32 %v8156, 0.7978846
    %v8189 = vmul.f32 %v8157, 0.7978846
    %v8190 = vmul.f32 %v8158, 0.7978846
    %v8191 = vmul.f32 %v8159, 0.7978846
    %v8192 = vmul.f32 %v8160, 0.7978846
    %v8193 = vmul.f32 %v8161, 0.7978846
    %v8194 = vmul.f32 %v8162, 0.7978846
    %v8195 = vmul.f32 %v8163, 0.7978846
    %v8196 = vmul.f32 %v8164, 0.7978846
    %v8197 = vmul.f32 %v8165, 0.7978846
    %v8198 = vmul.f32 %v8166, 0.7978846
    %v8199 = vmul.f32 %v8167, 0.7978846
    %v8200 = vmul.f32 %v8168, 0.7978846
    %v8201 = vmul.f32 %v8169, 0.7978846
    %v8202 = vmul.f32 %v8170, 0.7978846
    %v8203 = vmul.f32 %v8171, 0.7978846
    %v8204 = vmul.f32 %v8172, 0.7978846
    %v8205 = vmul.f32 %v8173, 0.7978846
    %v8206 = vmul.f32 %v8174, 0.7978846
    %v8207 = vmul.f32 %v8175, 0.7978846
    %v8208 = vmul.f32 %v8176, 0.7978846
    %v8209 = vmul.f32 %v8177, 0.7978846
    %v8210 = vmul.f32 %v8178, 0.7978846
    %v8211 = vmul.f32 %v8179, 0.7978846
    %v8212 = vmul.f32 %v8180, 0.7978846
    %v8213 = vmul.f32 %v8181, 0.7978846
    %v8214 = vmul.f32 %v8182, 0.7978846
    %v8215 = vmul.f32 %v8183, 0.7978846
    %v8216 = vmul.f32 %v8184, 0.7978846
    %v8217 = vmul.f32 %v8185, 0.7978846
    %v8218 = vmul.f32 %v8186, 0.7978846
    %v8219 = vmul.f32 %v8187, 0.7978846
    %v8220 = vtanh.pop %v8188
    %v8221 = vtanh.pop %v8189
    %v8222 = vtanh.pop %v8190
    %v8223 = vtanh.pop %v8191
    %v8224 = vtanh.pop %v8192
    %v8225 = vtanh.pop %v8193
    %v8226 = vtanh.pop %v8194
    %v8227 = vtanh.pop %v8195
    %v8228 = vtanh.pop %v8196
    %v8229 = vtanh.pop %v8197
    %v8230 = vtanh.pop %v8198
    %v8231 = vtanh.pop %v8199
    %v8232 = vtanh.pop %v8200
    %v8233 = vtanh.pop %v8201
    %v8234 = vtanh.pop %v8202
    %v8235 = vtanh.pop %v8203
    %v8236 = vtanh.pop %v8204
    %v8237 = vtanh.pop %v8205
    %v8238 = vtanh.pop %v8206
    %v8239 = vtanh.pop %v8207
    %v8240 = vtanh.pop %v8208
    %v8241 = vtanh.pop %v8209
    %v8242 = vtanh.pop %v8210
    %v8243 = vtanh.pop %v8211
    %v8244 = vtanh.pop %v8212
    %v8245 = vtanh.pop %v8213
    %v8246 = vtanh.pop %v8214
    %v8247 = vtanh.pop %v8215
    %v8248 = vtanh.pop %v8216
    %v8249 = vtanh.pop %v8217
    %v8250 = vtanh.pop %v8218
    %v8251 = vtanh.pop %v8219
    %v8252 = vadd.f32 %v8220, 1.0
    %v8253 = vadd.f32 %v8221, 1.0
    %v8254 = vadd.f32 %v8222, 1.0
    %v8255 = vadd.f32 %v8223, 1.0
    %v8256 = vadd.f32 %v8224, 1.0
    %v8257 = vadd.f32 %v8225, 1.0
    %v8258 = vadd.f32 %v8226, 1.0
    %v8259 = vadd.f32 %v8227, 1.0
    %v8260 = vadd.f32 %v8228, 1.0
    %v8261 = vadd.f32 %v8229, 1.0
    %v8262 = vadd.f32 %v8230, 1.0
    %v8263 = vadd.f32 %v8231, 1.0
    %v8264 = vadd.f32 %v8232, 1.0
    %v8265 = vadd.f32 %v8233, 1.0
    %v8266 = vadd.f32 %v8234, 1.0
    %v8267 = vadd.f32 %v8235, 1.0
    %v8268 = vadd.f32 %v8236, 1.0
    %v8269 = vadd.f32 %v8237, 1.0
    %v8270 = vadd.f32 %v8238, 1.0
    %v8271 = vadd.f32 %v8239, 1.0
    %v8272 = vadd.f32 %v8240, 1.0
    %v8273 = vadd.f32 %v8241, 1.0
    %v8274 = vadd.f32 %v8242, 1.0
    %v8275 = vadd.f32 %v8243, 1.0
    %v8276 = vadd.f32 %v8244, 1.0
    %v8277 = vadd.f32 %v8245, 1.0
    %v8278 = vadd.f32 %v8246, 1.0
    %v8279 = vadd.f32 %v8247, 1.0
    %v8280 = vadd.f32 %v8248, 1.0
    %v8281 = vadd.f32 %v8249, 1.0
    %v8282 = vadd.f32 %v8250, 1.0
    %v8283 = vadd.f32 %v8251, 1.0
    %v8284 = vmul.f32 %v8028, %v8252
    %v8285 = vmul.f32 %v8029, %v8253
    %v8286 = vmul.f32 %v8030, %v8254
    %v8287 = vmul.f32 %v8031, %v8255
    %v8288 = vmul.f32 %v8032, %v8256
    %v8289 = vmul.f32 %v8033, %v8257
    %v8290 = vmul.f32 %v8034, %v8258
    %v8291 = vmul.f32 %v8035, %v8259
    %v8292 = vmul.f32 %v8036, %v8260
    %v8293 = vmul.f32 %v8037, %v8261
    %v8294 = vmul.f32 %v8038, %v8262
    %v8295 = vmul.f32 %v8039, %v8263
    %v8296 = vmul.f32 %v8040, %v8264
    %v8297 = vmul.f32 %v8041, %v8265
    %v8298 = vmul.f32 %v8042, %v8266
    %v8299 = vmul.f32 %v8043, %v8267
    %v8300 = vmul.f32 %v8044, %v8268
    %v8301 = vmul.f32 %v8045, %v8269
    %v8302 = vmul.f32 %v8046, %v8270
    %v8303 = vmul.f32 %v8047, %v8271
    %v8304 = vmul.f32 %v8048, %v8272
    %v8305 = vmul.f32 %v8049, %v8273
    %v8306 = vmul.f32 %v8050, %v8274
    %v8307 = vmul.f32 %v8051, %v8275
    %v8308 = vmul.f32 %v8052, %v8276
    %v8309 = vmul.f32 %v8053, %v8277
    %v8310 = vmul.f32 %v8054, %v8278
    %v8311 = vmul.f32 %v8055, %v8279
    %v8312 = vmul.f32 %v8056, %v8280
    %v8313 = vmul.f32 %v8057, %v8281
    %v8314 = vmul.f32 %v8058, %v8282
    %v8315 = vmul.f32 %v8059, %v8283
    %v8316 = vpack.c.bf16 %v8300, %v8284
    %v8317 = vpack.c.bf16 %v8301, %v8285
    %v8318 = vpack.c.bf16 %v8302, %v8286
    %v8319 = vpack.c.bf16 %v8303, %v8287
    %v8320 = vpack.c.bf16 %v8304, %v8288
    %v8321 = vpack.c.bf16 %v8305, %v8289
    %v8322 = vpack.c.bf16 %v8306, %v8290
    %v8323 = vpack.c.bf16 %v8307, %v8291
    %v8324 = vpack.c.bf16 %v8308, %v8292
    %v8325 = vpack.c.bf16 %v8309, %v8293
    %v8326 = vpack.c.bf16 %v8310, %v8294
    %v8327 = vpack.c.bf16 %v8311, %v8295
    %v8328 = vpack.c.bf16 %v8312, %v8296
    %v8329 = vpack.c.bf16 %v8313, %v8297
    %v8330 = vpack.c.bf16 %v8314, %v8298
    %v8331 = vpack.c.bf16 %v8315, %v8299
    %v8332 = vld [vmem:[#allocation9] sm:$0xf]
    %v8333 = vld [vmem:[#allocation9 + $0x4] sm:$0xf]
    %v8334 = vld [vmem:[#allocation9 + $0x8] sm:$0xf]
    %v8335 = vld [vmem:[#allocation9 + $0xc] sm:$0xf]
    %v8336 = vld [vmem:[#allocation9 + $0x10] sm:$0xf]
    %v8337 = vld [vmem:[#allocation9 + $0x14] sm:$0xf]
    %v8338 = vld [vmem:[#allocation9 + $0x18] sm:$0xf]
    %v8339 = vld [vmem:[#allocation9 + $0x1c] sm:$0xf]
    %v8340 = vld [vmem:[#allocation9 + $0x20] sm:$0xf]
    %v8341 = vld [vmem:[#allocation9 + $0x24] sm:$0xf]
    %v8342 = vld [vmem:[#allocation9 + $0x28] sm:$0xf]
    %v8343 = vld [vmem:[#allocation9 + $0x2c] sm:$0xf]
    %v8344 = vld [vmem:[#allocation9 + $0x30] sm:$0xf]
    %v8345 = vld [vmem:[#allocation9 + $0x34] sm:$0xf]
    %v8346 = vld [vmem:[#allocation9 + $0x38] sm:$0xf]
    %v8347 = vld [vmem:[#allocation9 + $0x3c] sm:$0xf]
    %v8348 = vld [vmem:[#allocation9 + $0x40] sm:$0xf]
    %v8349 = vld [vmem:[#allocation9 + $0x44] sm:$0xf]
    %v8350 = vld [vmem:[#allocation9 + $0x48] sm:$0xf]
    %v8351 = vld [vmem:[#allocation9 + $0x4c] sm:$0xf]
    %v8352 = vld [vmem:[#allocation9 + $0x50] sm:$0xf]
    %v8353 = vld [vmem:[#allocation9 + $0x54] sm:$0xf]
    %v8354 = vld [vmem:[#allocation9 + $0x58] sm:$0xf]
    %v8355 = vld [vmem:[#allocation9 + $0x5c] sm:$0xf]
    %v8356 = vld [vmem:[#allocation9 + $0x60] sm:$0xf]
    %v8357 = vld [vmem:[#allocation9 + $0x64] sm:$0xf]
    %v8358 = vld [vmem:[#allocation9 + $0x68] sm:$0xf]
    %v8359 = vld [vmem:[#allocation9 + $0x6c] sm:$0xf]
    %v8360 = vld [vmem:[#allocation9 + $0x70] sm:$0xf]
    %v8361 = vld [vmem:[#allocation9 + $0x74] sm:$0xf]
    %v8362 = vld [vmem:[#allocation9 + $0x78] sm:$0xf]
    %v8363 = vld [vmem:[#allocation9 + $0x7c] sm:$0xf]
    %v8364 = vld [vmem:[#allocation9 + $0x80] sm:$0xf]
    %v8365 = vld [vmem:[#allocation9 + $0x84] sm:$0xf]
    %v8366 = vld [vmem:[#allocation9 + $0x88] sm:$0xf]
    %v8367 = vld [vmem:[#allocation9 + $0x8c] sm:$0xf]
    %v8368 = vld [vmem:[#allocation9 + $0x90] sm:$0xf]
    %v8369 = vld [vmem:[#allocation9 + $0x94] sm:$0xf]
    %v8370 = vld [vmem:[#allocation9 + $0x98] sm:$0xf]
    %v8371 = vld [vmem:[#allocation9 + $0x9c] sm:$0xf]
    %v8372 = vld [vmem:[#allocation9 + $0xa0] sm:$0xf]
    %v8373 = vld [vmem:[#allocation9 + $0xa4] sm:$0xf]
    %v8374 = vld [vmem:[#allocation9 + $0xa8] sm:$0xf]
    %v8375 = vld [vmem:[#allocation9 + $0xac] sm:$0xf]
    %v8376 = vld [vmem:[#allocation9 + $0xb0] sm:$0xf]
    %v8377 = vld [vmem:[#allocation9 + $0xb4] sm:$0xf]
    %v8378 = vld [vmem:[#allocation9 + $0xb8] sm:$0xf]
    %v8379 = vld [vmem:[#allocation9 + $0xbc] sm:$0xf]
    %v8380 = vld [vmem:[#allocation9 + $0xc0] sm:$0xf]
    %v8381 = vld [vmem:[#allocation9 + $0xc4] sm:$0xf]
    %v8382 = vld [vmem:[#allocation9 + $0xc8] sm:$0xf]
    %v8383 = vld [vmem:[#allocation9 + $0xcc] sm:$0xf]
    %v8384 = vld [vmem:[#allocation9 + $0xd0] sm:$0xf]
    %v8385 = vld [vmem:[#allocation9 + $0xd4] sm:$0xf]
    %v8386 = vld [vmem:[#allocation9 + $0xd8] sm:$0xf]
    %v8387 = vld [vmem:[#allocation9 + $0xdc] sm:$0xf]
    %v8388 = vld [vmem:[#allocation9 + $0xe0] sm:$0xf]
    %v8389 = vld [vmem:[#allocation9 + $0xe4] sm:$0xf]
    %v8390 = vld [vmem:[#allocation9 + $0xe8] sm:$0xf]
    %v8391 = vld [vmem:[#allocation9 + $0xec] sm:$0xf]
    %v8392 = vld [vmem:[#allocation9 + $0xf0] sm:$0xf]
    %v8393 = vld [vmem:[#allocation9 + $0xf4] sm:$0xf]
    %v8394 = vld [vmem:[#allocation9 + $0xf8] sm:$0xf]
    %v8395 = vld [vmem:[#allocation9 + $0xfc] sm:$0xf]
    %v8396 = vld [vmem:[#allocation9 + $0x100] sm:$0xf]
    %v8397 = vld [vmem:[#allocation9 + $0x104] sm:$0xf]
    %v8398 = vld [vmem:[#allocation9 + $0x108] sm:$0xf]
    %v8399 = vld [vmem:[#allocation9 + $0x10c] sm:$0xf]
    %v8400 = vld [vmem:[#allocation9 + $0x110] sm:$0xf]
    %v8401 = vld [vmem:[#allocation9 + $0x114] sm:$0xf]
    %v8402 = vld [vmem:[#allocation9 + $0x118] sm:$0xf]
    %v8403 = vld [vmem:[#allocation9 + $0x11c] sm:$0xf]
    %v8404 = vld [vmem:[#allocation9 + $0x120] sm:$0xf]
    %v8405 = vld [vmem:[#allocation9 + $0x124] sm:$0xf]
    %v8406 = vld [vmem:[#allocation9 + $0x128] sm:$0xf]
    %v8407 = vld [vmem:[#allocation9 + $0x12c] sm:$0xf]
    %v8408 = vld [vmem:[#allocation9 + $0x130] sm:$0xf]
    %v8409 = vld [vmem:[#allocation9 + $0x134] sm:$0xf]
    %v8410 = vld [vmem:[#allocation9 + $0x138] sm:$0xf]
    %v8411 = vld [vmem:[#allocation9 + $0x13c] sm:$0xf]
    %v8412 = vld [vmem:[#allocation9 + $0x140] sm:$0xf]
    %v8413 = vld [vmem:[#allocation9 + $0x144] sm:$0xf]
    %v8414 = vld [vmem:[#allocation9 + $0x148] sm:$0xf]
    %v8415 = vld [vmem:[#allocation9 + $0x14c] sm:$0xf]
    %v8416 = vld [vmem:[#allocation9 + $0x150] sm:$0xf]
    %v8417 = vld [vmem:[#allocation9 + $0x154] sm:$0xf]
    %v8418 = vld [vmem:[#allocation9 + $0x158] sm:$0xf]
    %v8419 = vld [vmem:[#allocation9 + $0x15c] sm:$0xf]
    %v8420 = vld [vmem:[#allocation9 + $0x160] sm:$0xf]
    %v8421 = vld [vmem:[#allocation9 + $0x164] sm:$0xf]
    %v8422 = vld [vmem:[#allocation9 + $0x168] sm:$0xf]
    %v8423 = vld [vmem:[#allocation9 + $0x16c] sm:$0xf]
    %v8424 = vld [vmem:[#allocation9 + $0x170] sm:$0xf]
    %v8425 = vld [vmem:[#allocation9 + $0x174] sm:$0xf]
    %v8426 = vld [vmem:[#allocation9 + $0x178] sm:$0xf]
    %v8427 = vld [vmem:[#allocation9 + $0x17c] sm:$0xf]
    %v8428 = vld [vmem:[#allocation9 + $0x180] sm:$0xf]
    %v8429 = vld [vmem:[#allocation9 + $0x184] sm:$0xf]
    %v8430 = vld [vmem:[#allocation9 + $0x188] sm:$0xf]
    %v8431 = vld [vmem:[#allocation9 + $0x18c] sm:$0xf]
    %v8432 = vld [vmem:[#allocation9 + $0x190] sm:$0xf]
    %v8433 = vld [vmem:[#allocation9 + $0x194] sm:$0xf]
    %v8434 = vld [vmem:[#allocation9 + $0x198] sm:$0xf]
    %v8435 = vld [vmem:[#allocation9 + $0x19c] sm:$0xf]
    %v8436 = vld [vmem:[#allocation9 + $0x1a0] sm:$0xf]
    %v8437 = vld [vmem:[#allocation9 + $0x1a4] sm:$0xf]
    %v8438 = vld [vmem:[#allocation9 + $0x1a8] sm:$0xf]
    %v8439 = vld [vmem:[#allocation9 + $0x1ac] sm:$0xf]
    %v8440 = vld [vmem:[#allocation9 + $0x1b0] sm:$0xf]
    %v8441 = vld [vmem:[#allocation9 + $0x1b4] sm:$0xf]
    %v8442 = vld [vmem:[#allocation9 + $0x1b8] sm:$0xf]
    %v8443 = vld [vmem:[#allocation9 + $0x1bc] sm:$0xf]
    %v8444 = vld [vmem:[#allocation9 + $0x1c0] sm:$0xf]
    %v8445 = vld [vmem:[#allocation9 + $0x1c4] sm:$0xf]
    %v8446 = vld [vmem:[#allocation9 + $0x1c8] sm:$0xf]
    %v8447 = vld [vmem:[#allocation9 + $0x1cc] sm:$0xf]
    %v8448 = vld [vmem:[#allocation9 + $0x1d0] sm:$0xf]
    %v8449 = vld [vmem:[#allocation9 + $0x1d4] sm:$0xf]
    %v8450 = vld [vmem:[#allocation9 + $0x1d8] sm:$0xf]
    %v8451 = vld [vmem:[#allocation9 + $0x1dc] sm:$0xf]
    %v8452 = vld [vmem:[#allocation9 + $0x1e0] sm:$0xf]
    %v8453 = vld [vmem:[#allocation9 + $0x1e4] sm:$0xf]
    %v8454 = vld [vmem:[#allocation9 + $0x1e8] sm:$0xf]
    %v8455 = vld [vmem:[#allocation9 + $0x1ec] sm:$0xf]
    %v8456 = vld [vmem:[#allocation9 + $0x1f0] sm:$0xf]
    %v8457 = vld [vmem:[#allocation9 + $0x1f4] sm:$0xf]
    %v8458 = vld [vmem:[#allocation9 + $0x1f8] sm:$0xf]
    %v8459 = vld [vmem:[#allocation9 + $0x1fc] sm:$0xf]
    %v8460 = vld [vmem:[#allocation9 + $0x200] sm:$0xf]
    %v8461 = vld [vmem:[#allocation9 + $0x204] sm:$0xf]
    %v8462 = vld [vmem:[#allocation9 + $0x208] sm:$0xf]
    %v8463 = vld [vmem:[#allocation9 + $0x20c] sm:$0xf]
    %v8464 = vld [vmem:[#allocation9 + $0x210] sm:$0xf]
    %v8465 = vld [vmem:[#allocation9 + $0x214] sm:$0xf]
    %v8466 = vld [vmem:[#allocation9 + $0x218] sm:$0xf]
    %v8467 = vld [vmem:[#allocation9 + $0x21c] sm:$0xf]
    %v8468 = vld [vmem:[#allocation9 + $0x220] sm:$0xf]
    %v8469 = vld [vmem:[#allocation9 + $0x224] sm:$0xf]
    %v8470 = vld [vmem:[#allocation9 + $0x228] sm:$0xf]
    %v8471 = vld [vmem:[#allocation9 + $0x22c] sm:$0xf]
    %v8472 = vld [vmem:[#allocation9 + $0x230] sm:$0xf]
    %v8473 = vld [vmem:[#allocation9 + $0x234] sm:$0xf]
    %v8474 = vld [vmem:[#allocation9 + $0x238] sm:$0xf]
    %v8475 = vld [vmem:[#allocation9 + $0x23c] sm:$0xf]
    %v8476 = vld [vmem:[#allocation9 + $0x240] sm:$0xf]
    %v8477 = vld [vmem:[#allocation9 + $0x244] sm:$0xf]
    %v8478 = vld [vmem:[#allocation9 + $0x248] sm:$0xf]
    %v8479 = vld [vmem:[#allocation9 + $0x24c] sm:$0xf]
    %v8480 = vld [vmem:[#allocation9 + $0x250] sm:$0xf]
    %v8481 = vld [vmem:[#allocation9 + $0x254] sm:$0xf]
    %v8482 = vld [vmem:[#allocation9 + $0x258] sm:$0xf]
    %v8483 = vld [vmem:[#allocation9 + $0x25c] sm:$0xf]
    %v8484 = vld [vmem:[#allocation9 + $0x260] sm:$0xf]
    %v8485 = vld [vmem:[#allocation9 + $0x264] sm:$0xf]
    %v8486 = vld [vmem:[#allocation9 + $0x268] sm:$0xf]
    %v8487 = vld [vmem:[#allocation9 + $0x26c] sm:$0xf]
    %v8488 = vld [vmem:[#allocation9 + $0x270] sm:$0xf]
    %v8489 = vld [vmem:[#allocation9 + $0x274] sm:$0xf]
    %v8490 = vld [vmem:[#allocation9 + $0x278] sm:$0xf]
    %v8491 = vld [vmem:[#allocation9 + $0x27c] sm:$0xf]
    %v8492 = vld [vmem:[#allocation9 + $0x280] sm:$0xf]
    %v8493 = vld [vmem:[#allocation9 + $0x284] sm:$0xf]
    %v8494 = vld [vmem:[#allocation9 + $0x288] sm:$0xf]
    %v8495 = vld [vmem:[#allocation9 + $0x28c] sm:$0xf]
    %v8496 = vld [vmem:[#allocation9 + $0x290] sm:$0xf]
    %v8497 = vld [vmem:[#allocation9 + $0x294] sm:$0xf]
    %v8498 = vld [vmem:[#allocation9 + $0x298] sm:$0xf]
    %v8499 = vld [vmem:[#allocation9 + $0x29c] sm:$0xf]
    %v8500 = vld [vmem:[#allocation9 + $0x2a0] sm:$0xf]
    %v8501 = vld [vmem:[#allocation9 + $0x2a4] sm:$0xf]
    %v8502 = vld [vmem:[#allocation9 + $0x2a8] sm:$0xf]
    %v8503 = vld [vmem:[#allocation9 + $0x2ac] sm:$0xf]
    %v8504 = vld [vmem:[#allocation9 + $0x2b0] sm:$0xf]
    %v8505 = vld [vmem:[#allocation9 + $0x2b4] sm:$0xf]
    %v8506 = vld [vmem:[#allocation9 + $0x2b8] sm:$0xf]
    %v8507 = vld [vmem:[#allocation9 + $0x2bc] sm:$0xf]
    %v8508 = vld [vmem:[#allocation9 + $0x2c0] sm:$0xf]
    %v8509 = vld [vmem:[#allocation9 + $0x2c4] sm:$0xf]
    %v8510 = vld [vmem:[#allocation9 + $0x2c8] sm:$0xf]
    %v8511 = vld [vmem:[#allocation9 + $0x2cc] sm:$0xf]
    %v8512 = vld [vmem:[#allocation9 + $0x2d0] sm:$0xf]
    %v8513 = vld [vmem:[#allocation9 + $0x2d4] sm:$0xf]
    %v8514 = vld [vmem:[#allocation9 + $0x2d8] sm:$0xf]
    %v8515 = vld [vmem:[#allocation9 + $0x2dc] sm:$0xf]
    %v8516 = vld [vmem:[#allocation9 + $0x2e0] sm:$0xf]
    %v8517 = vld [vmem:[#allocation9 + $0x2e4] sm:$0xf]
    %v8518 = vld [vmem:[#allocation9 + $0x2e8] sm:$0xf]
    %v8519 = vld [vmem:[#allocation9 + $0x2ec] sm:$0xf]
    %v8520 = vld [vmem:[#allocation9 + $0x2f0] sm:$0xf]
    %v8521 = vld [vmem:[#allocation9 + $0x2f4] sm:$0xf]
    %v8522 = vld [vmem:[#allocation9 + $0x2f8] sm:$0xf]
    %v8523 = vld [vmem:[#allocation9 + $0x2fc] sm:$0xf]
    %v8524 = vld [vmem:[#allocation9 + $0x300] sm:$0xf]
    %v8525 = vld [vmem:[#allocation9 + $0x304] sm:$0xf]
    %v8526 = vld [vmem:[#allocation9 + $0x308] sm:$0xf]
    %v8527 = vld [vmem:[#allocation9 + $0x30c] sm:$0xf]
    %v8528 = vld [vmem:[#allocation9 + $0x310] sm:$0xf]
    %v8529 = vld [vmem:[#allocation9 + $0x314] sm:$0xf]
    %v8530 = vld [vmem:[#allocation9 + $0x318] sm:$0xf]
    %v8531 = vld [vmem:[#allocation9 + $0x31c] sm:$0xf]
    %v8532 = vld [vmem:[#allocation9 + $0x320] sm:$0xf]
    %v8533 = vld [vmem:[#allocation9 + $0x324] sm:$0xf]
    %v8534 = vld [vmem:[#allocation9 + $0x328] sm:$0xf]
    %v8535 = vld [vmem:[#allocation9 + $0x32c] sm:$0xf]
    %v8536 = vld [vmem:[#allocation9 + $0x330] sm:$0xf]
    %v8537 = vld [vmem:[#allocation9 + $0x334] sm:$0xf]
    %v8538 = vld [vmem:[#allocation9 + $0x338] sm:$0xf]
    %v8539 = vld [vmem:[#allocation9 + $0x33c] sm:$0xf]
    %v8540 = vld [vmem:[#allocation9 + $0x340] sm:$0xf]
    %v8541 = vld [vmem:[#allocation9 + $0x344] sm:$0xf]
    %v8542 = vld [vmem:[#allocation9 + $0x348] sm:$0xf]
    %v8543 = vld [vmem:[#allocation9 + $0x34c] sm:$0xf]
    %v8544 = vld [vmem:[#allocation9 + $0x350] sm:$0xf]
    %v8545 = vld [vmem:[#allocation9 + $0x354] sm:$0xf]
    %v8546 = vld [vmem:[#allocation9 + $0x358] sm:$0xf]
    %v8547 = vld [vmem:[#allocation9 + $0x35c] sm:$0xf]
    %v8548 = vld [vmem:[#allocation9 + $0x360] sm:$0xf]
    %v8549 = vld [vmem:[#allocation9 + $0x364] sm:$0xf]
    %v8550 = vld [vmem:[#allocation9 + $0x368] sm:$0xf]
    %v8551 = vld [vmem:[#allocation9 + $0x36c] sm:$0xf]
    %v8552 = vld [vmem:[#allocation9 + $0x370] sm:$0xf]
    %v8553 = vld [vmem:[#allocation9 + $0x374] sm:$0xf]
    %v8554 = vld [vmem:[#allocation9 + $0x378] sm:$0xf]
    %v8555 = vld [vmem:[#allocation9 + $0x37c] sm:$0xf]
    %v8556 = vld [vmem:[#allocation9 + $0x380] sm:$0xf]
    %v8557 = vld [vmem:[#allocation9 + $0x384] sm:$0xf]
    %v8558 = vld [vmem:[#allocation9 + $0x388] sm:$0xf]
    %v8559 = vld [vmem:[#allocation9 + $0x38c] sm:$0xf]
    %v8560 = vld [vmem:[#allocation9 + $0x390] sm:$0xf]
    %v8561 = vld [vmem:[#allocation9 + $0x394] sm:$0xf]
    %v8562 = vld [vmem:[#allocation9 + $0x398] sm:$0xf]
    %v8563 = vld [vmem:[#allocation9 + $0x39c] sm:$0xf]
    %v8564 = vld [vmem:[#allocation9 + $0x3a0] sm:$0xf]
    %v8565 = vld [vmem:[#allocation9 + $0x3a4] sm:$0xf]
    %v8566 = vld [vmem:[#allocation9 + $0x3a8] sm:$0xf]
    %v8567 = vld [vmem:[#allocation9 + $0x3ac] sm:$0xf]
    %v8568 = vld [vmem:[#allocation9 + $0x3b0] sm:$0xf]
    %v8569 = vld [vmem:[#allocation9 + $0x3b4] sm:$0xf]
    %v8570 = vld [vmem:[#allocation9 + $0x3b8] sm:$0xf]
    %v8571 = vld [vmem:[#allocation9 + $0x3bc] sm:$0xf]
    %v8572 = vld [vmem:[#allocation9 + $0x3c0] sm:$0xf]
    %v8573 = vld [vmem:[#allocation9 + $0x3c4] sm:$0xf]
    %v8574 = vld [vmem:[#allocation9 + $0x3c8] sm:$0xf]
    %v8575 = vld [vmem:[#allocation9 + $0x3cc] sm:$0xf]
    %v8576 = vld [vmem:[#allocation9 + $0x3d0] sm:$0xf]
    %v8577 = vld [vmem:[#allocation9 + $0x3d4] sm:$0xf]
    %v8578 = vld [vmem:[#allocation9 + $0x3d8] sm:$0xf]
    %v8579 = vld [vmem:[#allocation9 + $0x3dc] sm:$0xf]
    %v8580 = vld [vmem:[#allocation9 + $0x3e0] sm:$0xf]
    %v8581 = vld [vmem:[#allocation9 + $0x3e4] sm:$0xf]
    %v8582 = vld [vmem:[#allocation9 + $0x3e8] sm:$0xf]
    %v8583 = vld [vmem:[#allocation9 + $0x3ec] sm:$0xf]
    %v8584 = vld [vmem:[#allocation9 + $0x3f0] sm:$0xf]
    %v8585 = vld [vmem:[#allocation9 + $0x3f4] sm:$0xf]
    %v8586 = vld [vmem:[#allocation9 + $0x3f8] sm:$0xf]
    %v8587 = vld [vmem:[#allocation9 + $0x3fc] sm:$0xf]
    %v8588 = vld [vmem:[#allocation10] sm:$0x1]
    %v8590 = vlaneseq
    %v8591 = vshrl.u32 %v8590, 7
    %v8592 = vsub.s32 0, %v8591
    %v8593 = vrot.slane %v8588, %v8592
    %v8851 = vunpack.c.l.b16 %v8332
    %v8852 = vunpack.c.l.b16 %v8333
    %v8853 = vunpack.c.l.b16 %v8334
    %v8854 = vunpack.c.l.b16 %v8335
    %v8855 = vunpack.c.l.b16 %v8336
    %v8856 = vunpack.c.l.b16 %v8337
    %v8857 = vunpack.c.l.b16 %v8338
    %v8858 = vunpack.c.l.b16 %v8339
    %v8859 = vunpack.c.l.b16 %v8340
    %v8860 = vunpack.c.l.b16 %v8341
    %v8861 = vunpack.c.l.b16 %v8342
    %v8862 = vunpack.c.l.b16 %v8343
    %v8863 = vunpack.c.l.b16 %v8344
    %v8864 = vunpack.c.l.b16 %v8345
    %v8865 = vunpack.c.l.b16 %v8346
    %v8866 = vunpack.c.l.b16 %v8347
    %v8867 = vunpack.c.l.b16 %v8348
    %v8868 = vunpack.c.l.b16 %v8349
    %v8869 = vunpack.c.l.b16 %v8350
    %v8870 = vunpack.c.l.b16 %v8351
    %v8871 = vunpack.c.l.b16 %v8352
    %v8872 = vunpack.c.l.b16 %v8353
    %v8873 = vunpack.c.l.b16 %v8354
    %v8874 = vunpack.c.l.b16 %v8355
    %v8875 = vunpack.c.l.b16 %v8356
    %v8876 = vunpack.c.l.b16 %v8357
    %v8877 = vunpack.c.l.b16 %v8358
    %v8878 = vunpack.c.l.b16 %v8359
    %v8879 = vunpack.c.l.b16 %v8360
    %v8880 = vunpack.c.l.b16 %v8361
    %v8881 = vunpack.c.l.b16 %v8362
    %v8882 = vunpack.c.l.b16 %v8363
    %v8883 = vunpack.c.l.b16 %v8364
    %v8884 = vunpack.c.l.b16 %v8365
    %v8885 = vunpack.c.l.b16 %v8366
    %v8886 = vunpack.c.l.b16 %v8367
    %v8887 = vunpack.c.l.b16 %v8368
    %v8888 = vunpack.c.l.b16 %v8369
    %v8889 = vunpack.c.l.b16 %v8370
    %v8890 = vunpack.c.l.b16 %v8371
    %v8891 = vunpack.c.l.b16 %v8372
    %v8892 = vunpack.c.l.b16 %v8373
    %v8893 = vunpack.c.l.b16 %v8374
    %v8894 = vunpack.c.l.b16 %v8375
    %v8895 = vunpack.c.l.b16 %v8376
    %v8896 = vunpack.c.l.b16 %v8377
    %v8897 = vunpack.c.l.b16 %v8378
    %v8898 = vunpack.c.l.b16 %v8379
    %v8899 = vunpack.c.l.b16 %v8380
    %v8900 = vunpack.c.l.b16 %v8381
    %v8901 = vunpack.c.l.b16 %v8382
    %v8902 = vunpack.c.l.b16 %v8383
    %v8903 = vunpack.c.l.b16 %v8384
    %v8904 = vunpack.c.l.b16 %v8385
    %v8905 = vunpack.c.l.b16 %v8386
    %v8906 = vunpack.c.l.b16 %v8387
    %v8907 = vunpack.c.l.b16 %v8388
    %v8908 = vunpack.c.l.b16 %v8389
    %v8909 = vunpack.c.l.b16 %v8390
    %v8910 = vunpack.c.l.b16 %v8391
    %v8911 = vunpack.c.l.b16 %v8392
    %v8912 = vunpack.c.l.b16 %v8393
    %v8913 = vunpack.c.l.b16 %v8394
    %v8914 = vunpack.c.l.b16 %v8395
    %v8915 = vunpack.c.l.b16 %v8396
    %v8916 = vunpack.c.l.b16 %v8397
    %v8917 = vunpack.c.l.b16 %v8398
    %v8918 = vunpack.c.l.b16 %v8399
    %v8919 = vunpack.c.l.b16 %v8400
    %v8920 = vunpack.c.l.b16 %v8401
    %v8921 = vunpack.c.l.b16 %v8402
    %v8922 = vunpack.c.l.b16 %v8403
    %v8923 = vunpack.c.l.b16 %v8404
    %v8924 = vunpack.c.l.b16 %v8405
    %v8925 = vunpack.c.l.b16 %v8406
    %v8926 = vunpack.c.l.b16 %v8407
    %v8927 = vunpack.c.l.b16 %v8408
    %v8928 = vunpack.c.l.b16 %v8409
    %v8929 = vunpack.c.l.b16 %v8410
    %v8930 = vunpack.c.l.b16 %v8411
    %v8931 = vunpack.c.l.b16 %v8412
    %v8932 = vunpack.c.l.b16 %v8413
    %v8933 = vunpack.c.l.b16 %v8414
    %v8934 = vunpack.c.l.b16 %v8415
    %v8935 = vunpack.c.l.b16 %v8416
    %v8936 = vunpack.c.l.b16 %v8417
    %v8937 = vunpack.c.l.b16 %v8418
    %v8938 = vunpack.c.l.b16 %v8419
    %v8939 = vunpack.c.l.b16 %v8420
    %v8940 = vunpack.c.l.b16 %v8421
    %v8941 = vunpack.c.l.b16 %v8422
    %v8942 = vunpack.c.l.b16 %v8423
    %v8943 = vunpack.c.l.b16 %v8424
    %v8944 = vunpack.c.l.b16 %v8425
    %v8945 = vunpack.c.l.b16 %v8426
    %v8946 = vunpack.c.l.b16 %v8427
    %v8947 = vunpack.c.l.b16 %v8428
    %v8948 = vunpack.c.l.b16 %v8429
    %v8949 = vunpack.c.l.b16 %v8430
    %v8950 = vunpack.c.l.b16 %v8431
    %v8951 = vunpack.c.l.b16 %v8432
    %v8952 = vunpack.c.l.b16 %v8433
    %v8953 = vunpack.c.l.b16 %v8434
    %v8954 = vunpack.c.l.b16 %v8435
    %v8955 = vunpack.c.l.b16 %v8436
    %v8956 = vunpack.c.l.b16 %v8437
    %v8957 = vunpack.c.l.b16 %v8438
    %v8958 = vunpack.c.l.b16 %v8439
    %v8959 = vunpack.c.l.b16 %v8440
    %v8960 = vunpack.c.l.b16 %v8441
    %v8961 = vunpack.c.l.b16 %v8442
    %v8962 = vunpack.c.l.b16 %v8443
    %v8963 = vunpack.c.l.b16 %v8444
    %v8964 = vunpack.c.l.b16 %v8445
    %v8965 = vunpack.c.l.b16 %v8446
    %v8966 = vunpack.c.l.b16 %v8447
    %v8967 = vunpack.c.l.b16 %v8448
    %v8968 = vunpack.c.l.b16 %v8449
    %v8969 = vunpack.c.l.b16 %v8450
    %v8970 = vunpack.c.l.b16 %v8451
    %v8971 = vunpack.c.l.b16 %v8452
    %v8972 = vunpack.c.l.b16 %v8453
    %v8973 = vunpack.c.l.b16 %v8454
    %v8974 = vunpack.c.l.b16 %v8455
    %v8975 = vunpack.c.l.b16 %v8456
    %v8976 = vunpack.c.l.b16 %v8457
    %v8977 = vunpack.c.l.b16 %v8458
    %v8978 = vunpack.c.l.b16 %v8459
    %v8979 = vunpack.c.l.b16 %v8460
    %v8980 = vunpack.c.l.b16 %v8461
    %v8981 = vunpack.c.l.b16 %v8462
    %v8982 = vunpack.c.l.b16 %v8463
    %v8983 = vunpack.c.l.b16 %v8464
    %v8984 = vunpack.c.l.b16 %v8465
    %v8985 = vunpack.c.l.b16 %v8466
    %v8986 = vunpack.c.l.b16 %v8467
    %v8987 = vunpack.c.l.b16 %v8468
    %v8988 = vunpack.c.l.b16 %v8469
    %v8989 = vunpack.c.l.b16 %v8470
    %v8990 = vunpack.c.l.b16 %v8471
    %v8991 = vunpack.c.l.b16 %v8472
    %v8992 = vunpack.c.l.b16 %v8473
    %v8993 = vunpack.c.l.b16 %v8474
    %v8994 = vunpack.c.l.b16 %v8475
    %v8995 = vunpack.c.l.b16 %v8476
    %v8996 = vunpack.c.l.b16 %v8477
    %v8997 = vunpack.c.l.b16 %v8478
    %v8998 = vunpack.c.l.b16 %v8479
    %v8999 = vunpack.c.l.b16 %v8480
    %v9000 = vunpack.c.l.b16 %v8481
    %v9001 = vunpack.c.l.b16 %v8482
    %v9002 = vunpack.c.l.b16 %v8483
    %v9003 = vunpack.c.l.b16 %v8484
    %v9004 = vunpack.c.l.b16 %v8485
    %v9005 = vunpack.c.l.b16 %v8486
    %v9006 = vunpack.c.l.b16 %v8487
    %v9007 = vunpack.c.l.b16 %v8488
    %v9008 = vunpack.c.l.b16 %v8489
    %v9009 = vunpack.c.l.b16 %v8490
    %v9010 = vunpack.c.l.b16 %v8491
    %v9011 = vunpack.c.l.b16 %v8492
    %v9012 = vunpack.c.l.b16 %v8493
    %v9013 = vunpack.c.l.b16 %v8494
    %v9014 = vunpack.c.l.b16 %v8495
    %v9015 = vunpack.c.l.b16 %v8496
    %v9016 = vunpack.c.l.b16 %v8497
    %v9017 = vunpack.c.l.b16 %v8498
    %v9018 = vunpack.c.l.b16 %v8499
    %v9019 = vunpack.c.l.b16 %v8500
    %v9020 = vunpack.c.l.b16 %v8501
    %v9021 = vunpack.c.l.b16 %v8502
    %v9022 = vunpack.c.l.b16 %v8503
    %v9023 = vunpack.c.l.b16 %v8504
    %v9024 = vunpack.c.l.b16 %v8505
    %v9025 = vunpack.c.l.b16 %v8506
    %v9026 = vunpack.c.l.b16 %v8507
    %v9027 = vunpack.c.l.b16 %v8508
    %v9028 = vunpack.c.l.b16 %v8509
    %v9029 = vunpack.c.l.b16 %v8510
    %v9030 = vunpack.c.l.b16 %v8511
    %v9031 = vunpack.c.l.b16 %v8512
    %v9032 = vunpack.c.l.b16 %v8513
    %v9033 = vunpack.c.l.b16 %v8514
    %v9034 = vunpack.c.l.b16 %v8515
    %v9035 = vunpack.c.l.b16 %v8516
    %v9036 = vunpack.c.l.b16 %v8517
    %v9037 = vunpack.c.l.b16 %v8518
    %v9038 = vunpack.c.l.b16 %v8519
    %v9039 = vunpack.c.l.b16 %v8520
    %v9040 = vunpack.c.l.b16 %v8521
    %v9041 = vunpack.c.l.b16 %v8522
    %v9042 = vunpack.c.l.b16 %v8523
    %v9043 = vunpack.c.l.b16 %v8524
    %v9044 = vunpack.c.l.b16 %v8525
    %v9045 = vunpack.c.l.b16 %v8526
    %v9046 = vunpack.c.l.b16 %v8527
    %v9047 = vunpack.c.l.b16 %v8528
    %v9048 = vunpack.c.l.b16 %v8529
    %v9049 = vunpack.c.l.b16 %v8530
    %v9050 = vunpack.c.l.b16 %v8531
    %v9051 = vunpack.c.l.b16 %v8532
    %v9052 = vunpack.c.l.b16 %v8533
    %v9053 = vunpack.c.l.b16 %v8534
    %v9054 = vunpack.c.l.b16 %v8535
    %v9055 = vunpack.c.l.b16 %v8536
    %v9056 = vunpack.c.l.b16 %v8537
    %v9057 = vunpack.c.l.b16 %v8538
    %v9058 = vunpack.c.l.b16 %v8539
    %v9059 = vunpack.c.l.b16 %v8540
    %v9060 = vunpack.c.l.b16 %v8541
    %v9061 = vunpack.c.l.b16 %v8542
    %v9062 = vunpack.c.l.b16 %v8543
    %v9063 = vunpack.c.l.b16 %v8544
    %v9064 = vunpack.c.l.b16 %v8545
    %v9065 = vunpack.c.l.b16 %v8546
    %v9066 = vunpack.c.l.b16 %v8547
    %v9067 = vunpack.c.l.b16 %v8548
    %v9068 = vunpack.c.l.b16 %v8549
    %v9069 = vunpack.c.l.b16 %v8550
    %v9070 = vunpack.c.l.b16 %v8551
    %v9071 = vunpack.c.l.b16 %v8552
    %v9072 = vunpack.c.l.b16 %v8553
    %v9073 = vunpack.c.l.b16 %v8554
    %v9074 = vunpack.c.l.b16 %v8555
    %v9075 = vunpack.c.l.b16 %v8556
    %v9076 = vunpack.c.l.b16 %v8557
    %v9077 = vunpack.c.l.b16 %v8558
    %v9078 = vunpack.c.l.b16 %v8559
    %v9079 = vunpack.c.l.b16 %v8560
    %v9080 = vunpack.c.l.b16 %v8561
    %v9081 = vunpack.c.l.b16 %v8562
    %v9082 = vunpack.c.l.b16 %v8563
    %v9083 = vunpack.c.l.b16 %v8564
    %v9084 = vunpack.c.l.b16 %v8565
    %v9085 = vunpack.c.l.b16 %v8566
    %v9086 = vunpack.c.l.b16 %v8567
    %v9087 = vunpack.c.l.b16 %v8568
    %v9088 = vunpack.c.l.b16 %v8569
    %v9089 = vunpack.c.l.b16 %v8570
    %v9090 = vunpack.c.l.b16 %v8571
    %v9091 = vunpack.c.l.b16 %v8572
    %v9092 = vunpack.c.l.b16 %v8573
    %v9093 = vunpack.c.l.b16 %v8574
    %v9094 = vunpack.c.l.b16 %v8575
    %v9095 = vunpack.c.l.b16 %v8576
    %v9096 = vunpack.c.l.b16 %v8577
    %v9097 = vunpack.c.l.b16 %v8578
    %v9098 = vunpack.c.l.b16 %v8579
    %v9099 = vunpack.c.l.b16 %v8580
    %v9100 = vunpack.c.l.b16 %v8581
    %v9101 = vunpack.c.l.b16 %v8582
    %v9102 = vunpack.c.l.b16 %v8583
    %v9103 = vunpack.c.l.b16 %v8584
    %v9104 = vunpack.c.l.b16 %v8585
    %v9105 = vunpack.c.l.b16 %v8586
    %v9106 = vunpack.c.l.b16 %v8587
    %v9107 = vpack.c.b16 %v8852, %v8851
    %v9108 = vpack.c.b16 %v8854, %v8853
    %v9109 = vpack.c.b16 %v8856, %v8855
    %v9110 = vpack.c.b16 %v8858, %v8857
    %v9111 = vpack.c.b16 %v8860, %v8859
    %v9112 = vpack.c.b16 %v8862, %v8861
    %v9113 = vpack.c.b16 %v8864, %v8863
    %v9114 = vpack.c.b16 %v8866, %v8865
    %v9115 = vpack.c.b16 %v8868, %v8867
    %v9116 = vpack.c.b16 %v8870, %v8869
    %v9117 = vpack.c.b16 %v8872, %v8871
    %v9118 = vpack.c.b16 %v8874, %v8873
    %v9119 = vpack.c.b16 %v8876, %v8875
    %v9120 = vpack.c.b16 %v8878, %v8877
    %v9121 = vpack.c.b16 %v8880, %v8879
    %v9122 = vpack.c.b16 %v8882, %v8881
    %v9123 = vpack.c.b16 %v8884, %v8883
    %v9124 = vpack.c.b16 %v8886, %v8885
    %v9125 = vpack.c.b16 %v8888, %v8887
    %v9126 = vpack.c.b16 %v8890, %v8889
    %v9127 = vpack.c.b16 %v8892, %v8891
    %v9128 = vpack.c.b16 %v8894, %v8893
    %v9129 = vpack.c.b16 %v8896, %v8895
    %v9130 = vpack.c.b16 %v8898, %v8897
    %v9131 = vpack.c.b16 %v8900, %v8899
    %v9132 = vpack.c.b16 %v8902, %v8901
    %v9133 = vpack.c.b16 %v8904, %v8903
    %v9134 = vpack.c.b16 %v8906, %v8905
    %v9135 = vpack.c.b16 %v8908, %v8907
    %v9136 = vpack.c.b16 %v8910, %v8909
    %v9137 = vpack.c.b16 %v8912, %v8911
    %v9138 = vpack.c.b16 %v8914, %v8913
    %v9139 = vpack.c.b16 %v8916, %v8915
    %v9140 = vpack.c.b16 %v8918, %v8917
    %v9141 = vpack.c.b16 %v8920, %v8919
    %v9142 = vpack.c.b16 %v8922, %v8921
    %v9143 = vpack.c.b16 %v8924, %v8923
    %v9144 = vpack.c.b16 %v8926, %v8925
    %v9145 = vpack.c.b16 %v8928, %v8927
    %v9146 = vpack.c.b16 %v8930, %v8929
    %v9147 = vpack.c.b16 %v8932, %v8931
    %v9148 = vpack.c.b16 %v8934, %v8933
    %v9149 = vpack.c.b16 %v8936, %v8935
    %v9150 = vpack.c.b16 %v8938, %v8937
    %v9151 = vpack.c.b16 %v8940, %v8939
    %v9152 = vpack.c.b16 %v8942, %v8941
    %v9153 = vpack.c.b16 %v8944, %v8943
    %v9154 = vpack.c.b16 %v8946, %v8945
    %v9155 = vpack.c.b16 %v8948, %v8947
    %v9156 = vpack.c.b16 %v8950, %v8949
    %v9157 = vpack.c.b16 %v8952, %v8951
    %v9158 = vpack.c.b16 %v8954, %v8953
    %v9159 = vpack.c.b16 %v8956, %v8955
    %v9160 = vpack.c.b16 %v8958, %v8957
    %v9161 = vpack.c.b16 %v8960, %v8959
    %v9162 = vpack.c.b16 %v8962, %v8961
    %v9163 = vpack.c.b16 %v8964, %v8963
    %v9164 = vpack.c.b16 %v8966, %v8965
    %v9165 = vpack.c.b16 %v8968, %v8967
    %v9166 = vpack.c.b16 %v8970, %v8969
    %v9167 = vpack.c.b16 %v8972, %v8971
    %v9168 = vpack.c.b16 %v8974, %v8973
    %v9169 = vpack.c.b16 %v8976, %v8975
    %v9170 = vpack.c.b16 %v8978, %v8977
    %v9171 = vpack.c.b16 %v8980, %v8979
    %v9172 = vpack.c.b16 %v8982, %v8981
    %v9173 = vpack.c.b16 %v8984, %v8983
    %v9174 = vpack.c.b16 %v8986, %v8985
    %v9175 = vpack.c.b16 %v8988, %v8987
    %v9176 = vpack.c.b16 %v8990, %v8989
    %v9177 = vpack.c.b16 %v8992, %v8991
    %v9178 = vpack.c.b16 %v8994, %v8993
    %v9179 = vpack.c.b16 %v8996, %v8995
    %v9180 = vpack.c.b16 %v8998, %v8997
    %v9181 = vpack.c.b16 %v9000, %v8999
    %v9182 = vpack.c.b16 %v9002, %v9001
    %v9183 = vpack.c.b16 %v9004, %v9003
    %v9184 = vpack.c.b16 %v9006, %v9005
    %v9185 = vpack.c.b16 %v9008, %v9007
    %v9186 = vpack.c.b16 %v9010, %v9009
    %v9187 = vpack.c.b16 %v9012, %v9011
    %v9188 = vpack.c.b16 %v9014, %v9013
    %v9189 = vpack.c.b16 %v9016, %v9015
    %v9190 = vpack.c.b16 %v9018, %v9017
    %v9191 = vpack.c.b16 %v9020, %v9019
    %v9192 = vpack.c.b16 %v9022, %v9021
    %v9193 = vpack.c.b16 %v9024, %v9023
    %v9194 = vpack.c.b16 %v9026, %v9025
    %v9195 = vpack.c.b16 %v9028, %v9027
    %v9196 = vpack.c.b16 %v9030, %v9029
    %v9197 = vpack.c.b16 %v9032, %v9031
    %v9198 = vpack.c.b16 %v9034, %v9033
    %v9199 = vpack.c.b16 %v9036, %v9035
    %v9200 = vpack.c.b16 %v9038, %v9037
    %v9201 = vpack.c.b16 %v9040, %v9039
    %v9202 = vpack.c.b16 %v9042, %v9041
    %v9203 = vpack.c.b16 %v9044, %v9043
    %v9204 = vpack.c.b16 %v9046, %v9045
    %v9205 = vpack.c.b16 %v9048, %v9047
    %v9206 = vpack.c.b16 %v9050, %v9049
    %v9207 = vpack.c.b16 %v9052, %v9051
    %v9208 = vpack.c.b16 %v9054, %v9053
    %v9209 = vpack.c.b16 %v9056, %v9055
    %v9210 = vpack.c.b16 %v9058, %v9057
    %v9211 = vpack.c.b16 %v9060, %v9059
    %v9212 = vpack.c.b16 %v9062, %v9061
    %v9213 = vpack.c.b16 %v9064, %v9063
    %v9214 = vpack.c.b16 %v9066, %v9065
    %v9215 = vpack.c.b16 %v9068, %v9067
    %v9216 = vpack.c.b16 %v9070, %v9069
    %v9217 = vpack.c.b16 %v9072, %v9071
    %v9218 = vpack.c.b16 %v9074, %v9073
    %v9219 = vpack.c.b16 %v9076, %v9075
    %v9220 = vpack.c.b16 %v9078, %v9077
    %v9221 = vpack.c.b16 %v9080, %v9079
    %v9222 = vpack.c.b16 %v9082, %v9081
    %v9223 = vpack.c.b16 %v9084, %v9083
    %v9224 = vpack.c.b16 %v9086, %v9085
    %v9225 = vpack.c.b16 %v9088, %v9087
    %v9226 = vpack.c.b16 %v9090, %v9089
    %v9227 = vpack.c.b16 %v9092, %v9091
    %v9228 = vpack.c.b16 %v9094, %v9093
    %v9229 = vpack.c.b16 %v9096, %v9095
    %v9230 = vpack.c.b16 %v9098, %v9097
    %v9231 = vpack.c.b16 %v9100, %v9099
    %v9232 = vpack.c.b16 %v9102, %v9101
    %v9233 = vpack.c.b16 %v9104, %v9103
    %v9234 = vpack.c.b16 %v9106, %v9105
    %9363 = vmatprep.subr.bf16.mxu0 0
    %9364 = vmatpush1.bf16.msra.mxu0 %v9107
    %9365 = vmatprep.subr.bf16.mxu0 0
    %9366 = vmatpush1.bf16.msra.mxu0 %v9108
    %9367 = vmatprep.subr.bf16.mxu0 0
    %9368 = vmatpush1.bf16.msra.mxu0 %v9109
    %9369 = vmatprep.subr.bf16.mxu0 0
    %9370 = vmatpush1.bf16.msra.mxu0 %v9110
    %9371 = vmatprep.subr.bf16.mxu0 0
    %9372 = vmatpush1.bf16.msra.mxu0 %v9111
    %9373 = vmatprep.subr.bf16.mxu0 0
    %9374 = vmatpush1.bf16.msra.mxu0 %v9112
    %9375 = vmatprep.subr.bf16.mxu0 0
    %9376 = vmatpush1.bf16.msra.mxu0 %v9113
    %9377 = vmatprep.subr.bf16.mxu0 0
    %9378 = vmatpush1.bf16.msra.mxu0 %v9114
    %9379 = vmatprep.subr.bf16.mxu0 0
    %9380 = vmatpush1.bf16.msra.mxu0 %v9115
    %9381 = vmatprep.subr.bf16.mxu0 0
    %9382 = vmatpush1.bf16.msra.mxu0 %v9116
    %9383 = vmatprep.subr.bf16.mxu0 0
    %9384 = vmatpush1.bf16.msra.mxu0 %v9117
    %9385 = vmatprep.subr.bf16.mxu0 0
    %9386 = vmatpush1.bf16.msra.mxu0 %v9118
    %9387 = vmatprep.subr.bf16.mxu0 0
    %9388 = vmatpush1.bf16.msra.mxu0 %v9119
    %9389 = vmatprep.subr.bf16.mxu0 0
    %9390 = vmatpush1.bf16.msra.mxu0 %v9120
    %9391 = vmatprep.subr.bf16.mxu0 0
    %9392 = vmatpush1.bf16.msra.mxu0 %v9121
    %9393 = vmatprep.subr.bf16.mxu0 0
    %9394 = vmatpush1.bf16.msra.mxu0 %v9122
    %9395 = vmatprep.mubr.bf16.mxu0 %v8317
    %9396 = vmatmul.mubr.bf16.gmra.mrb[0].mxu0 %v8316
    %v9397 = vpop.f32.mrb[0].mxu0
    %v9398 = vadd.f32 %v8593, %v9397
    %v9399 = vpop.f32.mrb[0].mxu0
    %v9400 = vpop.f32.mrb[0].mxu0
    %v9401 = vadd.f32 %v8593, %v9400
    %v9402 = vpop.f32.mrb[0].mxu0
    %9403 = vdwg.mxu0
    %9404 = vmatprep.subr.bf16.mxu0 0
    %9405 = vmatpush1.bf16.msra.mxu0 %v9123
    %9406 = vmatprep.subr.bf16.mxu0 0
    %9407 = vmatpush1.bf16.msra.mxu0 %v9124
    %9408 = vmatprep.subr.bf16.mxu0 0
    %9409 = vmatpush1.bf16.msra.mxu0 %v9125
    %9410 = vmatprep.subr.bf16.mxu0 0
    %9411 = vmatpush1.bf16.msra.mxu0 %v9126
    %9412 = vmatprep.subr.bf16.mxu0 0
    %9413 = vmatpush1.bf16.msra.mxu0 %v9127
    %9414 = vmatprep.subr.bf16.mxu0 0
    %9415 = vmatpush1.bf16.msra.mxu0 %v9128
    %9416 = vmatprep.subr.bf16.mxu0 0
    %9417 = vmatpush1.bf16.msra.mxu0 %v9129
    %9418 = vmatprep.subr.bf16.mxu0 0
    %9419 = vmatpush1.bf16.msra.mxu0 %v9130
    %9420 = vmatprep.subr.bf16.mxu0 0
    %9421 = vmatpush1.bf16.msra.mxu0 %v9131
    %9422 = vmatprep.subr.bf16.mxu0 0
    %9423 = vmatpush1.bf16.msra.mxu0 %v9132
    %9424 = vmatprep.subr.bf16.mxu0 0
    %9425 = vmatpush1.bf16.msra.mxu0 %v9133
    %9426 = vmatprep.subr.bf16.mxu0 0
    %9427 = vmatpush1.bf16.msra.mxu0 %v9134
    %9428 = vmatprep.subr.bf16.mxu0 0
    %9429 = vmatpush1.bf16.msra.mxu0 %v9135
    %9430 = vmatprep.subr.bf16.mxu0 0
    %9431 = vmatpush1.bf16.msra.mxu0 %v9136
    %9432 = vmatprep.subr.bf16.mxu0 0
    %9433 = vmatpush1.bf16.msra.mxu0 %v9137
    %9434 = vmatprep.subr.bf16.mxu0 0
    %9435 = vmatpush1.bf16.msra.mxu0 %v9138
    %9436 = vmatprep.mubr.bf16.mxu0 %v8319
    %9437 = vmatmul.mubr.bf16.gmra.mrb[0].mxu0 %v8318
    %v9438 = vpop.f32.mrb[0].mxu0
    %v9439 = vadd.f32 %v9398, %v9438
    %v9440 = vpop.f32.mrb[0].mxu0
    %v9441 = vpop.f32.mrb[0].mxu0
    %v9442 = vadd.f32 %v9401, %v9441
    %v9443 = vpop.f32.mrb[0].mxu0
    %9444 = vdwg.mxu0
    %9445 = vmatprep.subr.bf16.mxu0 0
    %9446 = vmatpush1.bf16.msra.mxu0 %v9139
    %9447 = vmatprep.subr.bf16.mxu0 0
    %9448 = vmatpush1.bf16.msra.mxu0 %v9140
    %9449 = vmatprep.subr.bf16.mxu0 0
    %9450 = vmatpush1.bf16.msra.mxu0 %v9141
    %9451 = vmatprep.subr.bf16.mxu0 0
    %9452 = vmatpush1.bf16.msra.mxu0 %v9142
    %9453 = vmatprep.subr.bf16.mxu0 0
    %9454 = vmatpush1.bf16.msra.mxu0 %v9143
    %9455 = vmatprep.subr.bf16.mxu0 0
    %9456 = vmatpush1.bf16.msra.mxu0 %v9144
    %9457 = vmatprep.subr.bf16.mxu0 0
    %9458 = vmatpush1.bf16.msra.mxu0 %v9145
    %9459 = vmatprep.subr.bf16.mxu0 0
    %9460 = vmatpush1.bf16.msra.mxu0 %v9146
    %9461 = vmatprep.subr.bf16.mxu0 0
    %9462 = vmatpush1.bf16.msra.mxu0 %v9147
    %9463 = vmatprep.subr.bf16.mxu0 0
    %9464 = vmatpush1.bf16.msra.mxu0 %v9148
    %9465 = vmatprep.subr.bf16.mxu0 0
    %9466 = vmatpush1.bf16.msra.mxu0 %v9149
    %9467 = vmatprep.subr.bf16.mxu0 0
    %9468 = vmatpush1.bf16.msra.mxu0 %v9150
    %9469 = vmatprep.subr.bf16.mxu0 0
    %9470 = vmatpush1.bf16.msra.mxu0 %v9151
    %9471 = vmatprep.subr.bf16.mxu0 0
    %9472 = vmatpush1.bf16.msra.mxu0 %v9152
    %9473 = vmatprep.subr.bf16.mxu0 0
    %9474 = vmatpush1.bf16.msra.mxu0 %v9153
    %9475 = vmatprep.subr.bf16.mxu0 0
    %9476 = vmatpush1.bf16.msra.mxu0 %v9154
    %9477 = vmatprep.mubr.bf16.mxu0 %v8321
    %9478 = vmatmul.mubr.bf16.gmra.mrb[0].mxu0 %v8320
    %v9479 = vpop.f32.mrb[0].mxu0
    %v9480 = vadd.f32 %v9439, %v9479
    %v9481 = vpop.f32.mrb[0].mxu0
    %v9482 = vpop.f32.mrb[0].mxu0
    %v9483 = vadd.f32 %v9442, %v9482
    %v9484 = vpop.f32.mrb[0].mxu0
    %9485 = vdwg.mxu0
    %9486 = vmatprep.subr.bf16.mxu0 0
    %9487 = vmatpush1.bf16.msra.mxu0 %v9155
    %9488 = vmatprep.subr.bf16.mxu0 0
    %9489 = vmatpush1.bf16.msra.mxu0 %v9156
    %9490 = vmatprep.subr.bf16.mxu0 0
    %9491 = vmatpush1.bf16.msra.mxu0 %v9157
    %9492 = vmatprep.subr.bf16.mxu0 0
    %9493 = vmatpush1.bf16.msra.mxu0 %v9158
    %9494 = vmatprep.subr.bf16.mxu0 0
    %9495 = vmatpush1.bf16.msra.mxu0 %v9159
    %9496 = vmatprep.subr.bf16.mxu0 0
    %9497 = vmatpush1.bf16.msra.mxu0 %v9160
    %9498 = vmatprep.subr.bf16.mxu0 0
    %9499 = vmatpush1.bf16.msra.mxu0 %v9161
    %9500 = vmatprep.subr.bf16.mxu0 0
    %9501 = vmatpush1.bf16.msra.mxu0 %v9162
    %9502 = vmatprep.subr.bf16.mxu0 0
    %9503 = vmatpush1.bf16.msra.mxu0 %v9163
    %9504 = vmatprep.subr.bf16.mxu0 0
    %9505 = vmatpush1.bf16.msra.mxu0 %v9164
    %9506 = vmatprep.subr.bf16.mxu0 0
    %9507 = vmatpush1.bf16.msra.mxu0 %v9165
    %9508 = vmatprep.subr.bf16.mxu0 0
    %9509 = vmatpush1.bf16.msra.mxu0 %v9166
    %9510 = vmatprep.subr.bf16.mxu0 0
    %9511 = vmatpush1.bf16.msra.mxu0 %v9167
    %9512 = vmatprep.subr.bf16.mxu0 0
    %9513 = vmatpush1.bf16.msra.mxu0 %v9168
    %9514 = vmatprep.subr.bf16.mxu0 0
    %9515 = vmatpush1.bf16.msra.mxu0 %v9169
    %9516 = vmatprep.subr.bf16.mxu0 0
    %9517 = vmatpush1.bf16.msra.mxu0 %v9170
    %9518 = vmatprep.mubr.bf16.mxu0 %v8323
    %9519 = vmatmul.mubr.bf16.gmra.mrb[0].mxu0 %v8322
    %v9520 = vpop.f32.mrb[0].mxu0
    %v9521 = vadd.f32 %v9480, %v9520
    %v9522 = vpop.f32.mrb[0].mxu0
    %v9523 = vpop.f32.mrb[0].mxu0
    %v9524 = vadd.f32 %v9483, %v9523
    %v9525 = vpop.f32.mrb[0].mxu0
    %9526 = vdwg.mxu0
    %9527 = vmatprep.subr.bf16.mxu0 0
    %9528 = vmatpush1.bf16.msra.mxu0 %v9171
    %9529 = vmatprep.subr.bf16.mxu0 0
    %9530 = vmatpush1.bf16.msra.mxu0 %v9172
    %9531 = vmatprep.subr.bf16.mxu0 0
    %9532 = vmatpush1.bf16.msra.mxu0 %v9173
    %9533 = vmatprep.subr.bf16.mxu0 0
    %9534 = vmatpush1.bf16.msra.mxu0 %v9174
    %9535 = vmatprep.subr.bf16.mxu0 0
    %9536 = vmatpush1.bf16.msra.mxu0 %v9175
    %9537 = vmatprep.subr.bf16.mxu0 0
    %9538 = vmatpush1.bf16.msra.mxu0 %v9176
    %9539 = vmatprep.subr.bf16.mxu0 0
    %9540 = vmatpush1.bf16.msra.mxu0 %v9177
    %9541 = vmatprep.subr.bf16.mxu0 0
    %9542 = vmatpush1.bf16.msra.mxu0 %v9178
    %9543 = vmatprep.subr.bf16.mxu0 0
    %9544 = vmatpush1.bf16.msra.mxu0 %v9179
    %9545 = vmatprep.subr.bf16.mxu0 0
    %9546 = vmatpush1.bf16.msra.mxu0 %v9180
    %9547 = vmatprep.subr.bf16.mxu0 0
    %9548 = vmatpush1.bf16.msra.mxu0 %v9181
    %9549 = vmatprep.subr.bf16.mxu0 0
    %9550 = vmatpush1.bf16.msra.mxu0 %v9182
    %9551 = vmatprep.subr.bf16.mxu0 0
    %9552 = vmatpush1.bf16.msra.mxu0 %v9183
    %9553 = vmatprep.subr.bf16.mxu0 0
    %9554 = vmatpush1.bf16.msra.mxu0 %v9184
    %9555 = vmatprep.subr.bf16.mxu0 0
    %9556 = vmatpush1.bf16.msra.mxu0 %v9185
    %9557 = vmatprep.subr.bf16.mxu0 0
    %9558 = vmatpush1.bf16.msra.mxu0 %v9186
    %9559 = vmatprep.mubr.bf16.mxu0 %v8325
    %9560 = vmatmul.mubr.bf16.gmra.mrb[0].mxu0 %v8324
    %v9561 = vpop.f32.mrb[0].mxu0
    %v9562 = vadd.f32 %v9521, %v9561
    %v9563 = vpop.f32.mrb[0].mxu0
    %v9564 = vpop.f32.mrb[0].mxu0
    %v9565 = vadd.f32 %v9524, %v9564
    %v9566 = vpop.f32.mrb[0].mxu0
    %9567 = vdwg.mxu0
    %9568 = vmatprep.subr.bf16.mxu0 0
    %9569 = vmatpush1.bf16.msra.mxu0 %v9187
    %9570 = vmatprep.subr.bf16.mxu0 0
    %9571 = vmatpush1.bf16.msra.mxu0 %v9188
    %9572 = vmatprep.subr.bf16.mxu0 0
    %9573 = vmatpush1.bf16.msra.mxu0 %v9189
    %9574 = vmatprep.subr.bf16.mxu0 0
    %9575 = vmatpush1.bf16.msra.mxu0 %v9190
    %9576 = vmatprep.subr.bf16.mxu0 0
    %9577 = vmatpush1.bf16.msra.mxu0 %v9191
    %9578 = vmatprep.subr.bf16.mxu0 0
    %9579 = vmatpush1.bf16.msra.mxu0 %v9192
    %9580 = vmatprep.subr.bf16.mxu0 0
    %9581 = vmatpush1.bf16.msra.mxu0 %v9193
    %9582 = vmatprep.subr.bf16.mxu0 0
    %9583 = vmatpush1.bf16.msra.mxu0 %v9194
    %9584 = vmatprep.subr.bf16.mxu0 0
    %9585 = vmatpush1.bf16.msra.mxu0 %v9195
    %9586 = vmatprep.subr.bf16.mxu0 0
    %9587 = vmatpush1.bf16.msra.mxu0 %v9196
    %9588 = vmatprep.subr.bf16.mxu0 0
    %9589 = vmatpush1.bf16.msra.mxu0 %v9197
    %9590 = vmatprep.subr.bf16.mxu0 0
    %9591 = vmatpush1.bf16.msra.mxu0 %v9198
    %9592 = vmatprep.subr.bf16.mxu0 0
    %9593 = vmatpush1.bf16.msra.mxu0 %v9199
    %9594 = vmatprep.subr.bf16.mxu0 0
    %9595 = vmatpush1.bf16.msra.mxu0 %v9200
    %9596 = vmatprep.subr.bf16.mxu0 0
    %9597 = vmatpush1.bf16.msra.mxu0 %v9201
    %9598 = vmatprep.subr.bf16.mxu0 0
    %9599 = vmatpush1.bf16.msra.mxu0 %v9202
    %9600 = vmatprep.mubr.bf16.mxu0 %v8327
    %9601 = vmatmul.mubr.bf16.gmra.mrb[0].mxu0 %v8326
    %v9602 = vpop.f32.mrb[0].mxu0
    %v9603 = vadd.f32 %v9562, %v9602
    %v9604 = vpop.f32.mrb[0].mxu0
    %v9605 = vpop.f32.mrb[0].mxu0
    %v9606 = vadd.f32 %v9565, %v9605
    %v9607 = vpop.f32.mrb[0].mxu0
    %9608 = vdwg.mxu0
    %9609 = vmatprep.subr.bf16.mxu0 0
    %9610 = vmatpush1.bf16.msra.mxu0 %v9203
    %9611 = vmatprep.subr.bf16.mxu0 0
    %9612 = vmatpush1.bf16.msra.mxu0 %v9204
    %9613 = vmatprep.subr.bf16.mxu0 0
    %9614 = vmatpush1.bf16.msra.mxu0 %v9205
    %9615 = vmatprep.subr.bf16.mxu0 0
    %9616 = vmatpush1.bf16.msra.mxu0 %v9206
    %9617 = vmatprep.subr.bf16.mxu0 0
    %9618 = vmatpush1.bf16.msra.mxu0 %v9207
    %9619 = vmatprep.subr.bf16.mxu0 0
    %9620 = vmatpush1.bf16.msra.mxu0 %v9208
    %9621 = vmatprep.subr.bf16.mxu0 0
    %9622 = vmatpush1.bf16.msra.mxu0 %v9209
    %9623 = vmatprep.subr.bf16.mxu0 0
    %9624 = vmatpush1.bf16.msra.mxu0 %v9210
    %9625 = vmatprep.subr.bf16.mxu0 0
    %9626 = vmatpush1.bf16.msra.mxu0 %v9211
    %9627 = vmatprep.subr.bf16.mxu0 0
    %9628 = vmatpush1.bf16.msra.mxu0 %v9212
    %9629 = vmatprep.subr.bf16.mxu0 0
    %9630 = vmatpush1.bf16.msra.mxu0 %v9213
    %9631 = vmatprep.subr.bf16.mxu0 0
    %9632 = vmatpush1.bf16.msra.mxu0 %v9214
    %9633 = vmatprep.subr.bf16.mxu0 0
    %9634 = vmatpush1.bf16.msra.mxu0 %v9215
    %9635 = vmatprep.subr.bf16.mxu0 0
    %9636 = vmatpush1.bf16.msra.mxu0 %v9216
    %9637 = vmatprep.subr.bf16.mxu0 0
    %9638 = vmatpush1.bf16.msra.mxu0 %v9217
    %9639 = vmatprep.subr.bf16.mxu0 0
    %9640 = vmatpush1.bf16.msra.mxu0 %v9218
    %9641 = vmatprep.mubr.bf16.mxu0 %v8329
    %9642 = vmatmul.mubr.bf16.gmra.mrb[0].mxu0 %v8328
    %v9643 = vpop.f32.mrb[0].mxu0
    %v9644 = vadd.f32 %v9603, %v9643
    %v9645 = vpop.f32.mrb[0].mxu0
    %v9646 = vpop.f32.mrb[0].mxu0
    %v9647 = vadd.f32 %v9606, %v9646
    %v9648 = vpop.f32.mrb[0].mxu0
    %9649 = vdwg.mxu0
    %9650 = vmatprep.subr.bf16.mxu0 0
    %9651 = vmatpush1.bf16.msra.mxu0 %v9219
    %9652 = vmatprep.subr.bf16.mxu0 0
    %9653 = vmatpush1.bf16.msra.mxu0 %v9220
    %9654 = vmatprep.subr.bf16.mxu0 0
    %9655 = vmatpush1.bf16.msra.mxu0 %v9221
    %9656 = vmatprep.subr.bf16.mxu0 0
    %9657 = vmatpush1.bf16.msra.mxu0 %v9222
    %9658 = vmatprep.subr.bf16.mxu0 0
    %9659 = vmatpush1.bf16.msra.mxu0 %v9223
    %9660 = vmatprep.subr.bf16.mxu0 0
    %9661 = vmatpush1.bf16.msra.mxu0 %v9224
    %9662 = vmatprep.subr.bf16.mxu0 0
    %9663 = vmatpush1.bf16.msra.mxu0 %v9225
    %9664 = vmatprep.subr.bf16.mxu0 0
    %9665 = vmatpush1.bf16.msra.mxu0 %v9226
    %9666 = vmatprep.subr.bf16.mxu0 0
    %9667 = vmatpush1.bf16.msra.mxu0 %v9227
    %9668 = vmatprep.subr.bf16.mxu0 0
    %9669 = vmatpush1.bf16.msra.mxu0 %v9228
    %9670 = vmatprep.subr.bf16.mxu0 0
    %9671 = vmatpush1.bf16.msra.mxu0 %v9229
    %9672 = vmatprep.subr.bf16.mxu0 0
    %9673 = vmatpush1.bf16.msra.mxu0 %v9230
    %9674 = vmatprep.subr.bf16.mxu0 0
    %9675 = vmatpush1.bf16.msra.mxu0 %v9231
    %9676 = vmatprep.subr.bf16.mxu0 0
    %9677 = vmatpush1.bf16.msra.mxu0 %v9232
    %9678 = vmatprep.subr.bf16.mxu0 0
    %9679 = vmatpush1.bf16.msra.mxu0 %v9233
    %9680 = vmatprep.subr.bf16.mxu0 0
    %9681 = vmatpush1.bf16.msra.mxu0 %v9234
    %9682 = vmatprep.mubr.bf16.mxu0 %v8331
    %9683 = vmatmul.mubr.bf16.gmra.mrb[0].mxu0 %v8330
    %v9684 = vpop.f32.mrb[0].mxu0
    %v9685 = vadd.f32 %v9644, %v9684
    %v9686 = vpop.f32.mrb[0].mxu0
    %v9687 = vpop.f32.mrb[0].mxu0
    %v9688 = vadd.f32 %v9647, %v9687
    %v9689 = vpop.f32.mrb[0].mxu0
    %9690 = vdwg.mxu0
    %9691 = vst [vmem:[%s7] sm:$0xff] %v9685
    %9692 = vst [vmem:[%s7 + $0x8] sm:$0xff] %v9688
    // Predicated region
    $region54: #{bert_classifier_forward.1} parent=1 // pred_check
      _
    $region55: #{bert_classifier_forward.1} parent=1 // pred_check_branch
      %9694 = sbr.rel (0) target = $region57
    $region56: #{bert_classifier_forward.1} parent=1 // pred_region
      _
    $region57: #{bert_classifier_forward.1} parent=1 // pred_fallthru
      _
    // Predicated region
    $region58: #{bert_classifier_forward.1} parent=1 // pred_check
      _
    $region59: #{bert_classifier_forward.1} parent=1 // pred_check_branch
      %9696 = sbr.rel (0) target = $region61
    $region60: #{bert_classifier_forward.1} parent=1 // pred_region
      _
    $region61: #{bert_classifier_forward.1} parent=1 // pred_fallthru
      _
    %9697 = vsyncpa [#allocation3], 1
    %9698 = vsyncpa [#allocation5], 1
    %9699 = vsyncpa [#allocation8], 1
    %9700 = vsyncpa [#allocation11], 1

</llo_original>
